<compile_context>
chip_gen: v6e
topology: v6e:2x2x1
jax: 0.10.0
libtpu: 0.0.40
codegen_flags: <defaults>
</compile_context>

<pallas_src>
import functools

import jax
import jax.numpy as jnp
from jax.experimental import pallas as pl
from jax.experimental.pallas import tpu as pltpu

_VMEM_LIMIT = 48 * 1024 * 1024  # explicit scoped-VMEM budget (fits v5e/v6e/v7x); tiles are tiny vs this.
_LANES = 128                    # lane width: pad channel dims to multiples of 128.


# ------------------------------ small helpers -------------------------------

def _round_up(x, m):
    return ((x + m - 1) // m) * m


def _pad_to(arr, axis, target):
    """Zero-pad `axis` of `arr` up to `target` (no-op if already there)."""
    pad = target - arr.shape[axis]
    if pad <= 0:
        return arr
    widths = [(0, 0)] * arr.ndim
    widths[axis] = (0, pad)
    return jnp.pad(arr, widths)


# ----------------------------- Pallas kernels ------------------------------

def _mm_bias_kernel(x_ref, w_ref, b_ref, o_ref, *, relu):
    # bf16 operands -> MXU, f32 accumulation; bias/ReLU epilogue in f32.
    acc = jnp.dot(x_ref[...], w_ref[...], preferred_element_type=jnp.float32)
    acc = acc + b_ref[...]
    if relu:
        acc = jnp.maximum(acc, 0.0)
    o_ref[...] = acc.astype(o_ref.dtype)


def _mm_bias_res_kernel(x_ref, w_ref, b_ref, r_ref, o_ref, *, relu):
    acc = jnp.dot(x_ref[...], w_ref[...], preferred_element_type=jnp.float32)
    acc = acc + b_ref[...] + r_ref[...].astype(jnp.float32)
    if relu:
        acc = jnp.maximum(acc, 0.0)
    o_ref[...] = acc.astype(o_ref.dtype)


def _conv3x3_kernel(x_ref, w_ref, b_ref, o_ref, acc_ref, *, ho, wo, relu):
    """Direct 3x3 / stride-1 / pad-1 conv for one image: 9 shifted MXU matmuls,
    accumulated in a f32 VMEM scratch (no im2col materialization in HBM)."""
    acc_ref[...] = jnp.zeros_like(acc_ref)
    k = 0
    for di in range(3):
        for dj in range(3):
            xs = x_ref[0, di:di + ho, dj:dj + wo, :].reshape(ho * wo, -1)
            acc_ref[...] += jnp.dot(xs, w_ref[k],
                                    preferred_element_type=jnp.float32)
            k += 1
    acc = acc_ref[...] + b_ref[...]
    if relu:
        acc = jnp.maximum(acc, 0.0)
    o_ref[0] = acc.astype(o_ref.dtype)


def _maxpool_kernel(x_ref, o_ref):
    o_ref[...] = jnp.max(x_ref[...], axis=1)


def _gap_embed_kernel(x_ref, w_ref, b_ref, o_ref):
    # Fused AdaptiveAvgPool2d(1) + embed Linear (tiny; single kernel, single launch).
    feat = jnp.mean(x_ref[...].astype(jnp.float32), axis=1)          # (B, C)
    o_ref[...] = jnp.dot(feat, w_ref[...],
                         preferred_element_type=jnp.float32) + b_ref[...]


# ----------------------------- kernel wrappers ------------------------------

def pallas_matmul_bias(x, w, b, residual=None, relu=False, out_dtype=jnp.bfloat16):
    """(M,K)@(K,N) + bias [+ residual] [+ ReLU], fused, tiled over M.

    Operands are cast to bf16 (f32 accumulation) and K/N are padded to 128 so the
    MXU is fed lane-dense tiles and output stores are unmasked."""
    M, K = x.shape
    Kw, N = w.shape
    Kp = _round_up(max(K, Kw), _LANES)
    Np = _round_up(N, _LANES)
    TM = min(512, _round_up(M, 8))          # row-tile; pipelined over the grid
    Mp = _round_up(M, TM)

    xp = _pad_to(_pad_to(x, 1, Kp), 0, Mp).astype(jnp.bfloat16)
    wp = _pad_to(_pad_to(w, 0, Kp), 1, Np).astype(jnp.bfloat16)
    bp = _pad_to(b.reshape(1, N).astype(jnp.float32), 1, Np)

    grid = (Mp // TM,)
    cp = pltpu.CompilerParams(dimension_semantics=("parallel",),
                              vmem_limit_bytes=_VMEM_LIMIT)
    out_shape = jax.ShapeDtypeStruct((Mp, Np), out_dtype)

    if residual is None:
        y = pl.pallas_call(
            functools.partial(_mm_bias_kernel, relu=relu),
            grid=grid,
            in_specs=[
                pl.BlockSpec((TM, Kp), lambda i: (i, 0)),
                pl.BlockSpec((Kp, Np), lambda i: (0, 0)),
                pl.BlockSpec((1, Np), lambda i: (0, 0)),
            ],
            out_specs=pl.BlockSpec((TM, Np), lambda i: (i, 0)),
            out_shape=out_shape,
            compiler_params=cp,
        )(xp, wp, bp)
    else:
        rp = _pad_to(_pad_to(residual, 1, Np), 0, Mp)
        y = pl.pallas_call(
            functools.partial(_mm_bias_res_kernel, relu=relu),
            grid=grid,
            in_specs=[
                pl.BlockSpec((TM, Kp), lambda i: (i, 0)),
                pl.BlockSpec((Kp, Np), lambda i: (0, 0)),
                pl.BlockSpec((1, Np), lambda i: (0, 0)),
                pl.BlockSpec((TM, Np), lambda i: (i, 0)),
            ],
            out_specs=pl.BlockSpec((TM, Np), lambda i: (i, 0)),
            out_shape=out_shape,
            compiler_params=cp,
        )(xp, wp, bp, rp)

    return y[:M] if Mp != M else y


def conv3x3_direct(x, p, relu, out_dtype=jnp.bfloat16):
    """3x3, stride 1, pad 1 conv with folded BN: window reduction done in-kernel
    (grid over batch, one image's feature map per grid step)."""
    B, H, W, C = x.shape
    _, _, cin, cout = p['w'].shape
    Np = _round_up(cout, _LANES)
    HW = H * W
    Hp, Wp = H + 2, W + 2

    wp = _pad_to(_pad_to(p['w'], 2, C), 3, Np).reshape(9, C, Np).astype(jnp.bfloat16)
    bp = _pad_to(p['b'].reshape(1, cout).astype(jnp.float32), 1, Np)
    xp = jnp.pad(x.astype(jnp.bfloat16), ((0, 0), (1, 1), (1, 1), (0, 0)))

    out = pl.pallas_call(
        functools.partial(_conv3x3_kernel, ho=H, wo=W, relu=relu),
        grid=(B,),
        in_specs=[
            pl.BlockSpec((1, Hp, Wp, C), lambda b: (b, 0, 0, 0)),
            pl.BlockSpec((9, C, Np), lambda b: (0, 0, 0)),
            pl.BlockSpec((1, Np), lambda b: (0, 0)),
        ],
        out_specs=pl.BlockSpec((1, HW, Np), lambda b: (b, 0, 0)),
        out_shape=jax.ShapeDtypeStruct((B, HW, Np), out_dtype),
        scratch_shapes=[pltpu.VMEM((HW, Np), jnp.float32)],
        compiler_params=pltpu.CompilerParams(dimension_semantics=("parallel",),
                                             vmem_limit_bytes=_VMEM_LIMIT),
    )(xp, wp, bp)
    return out.reshape(B, H, W, Np)


def pallas_maxpool_tiled(patches, out_dtype):
    """patches (M, KK, C) -> (M, C), max over window positions, tiled over M."""
    M, KK, C = patches.shape
    TM = min(512, _round_up(M, 8))
    Mp = _round_up(M, TM)
    p2 = _pad_to(patches, 0, Mp)
    y = pl.pallas_call(
        _maxpool_kernel,
        grid=(Mp // TM,),
        in_specs=[pl.BlockSpec((TM, KK, C), lambda i: (i, 0, 0))],
        out_specs=pl.BlockSpec((TM, C), lambda i: (i, 0)),
        out_shape=jax.ShapeDtypeStruct((Mp, C), out_dtype),
        compiler_params=pltpu.CompilerParams(dimension_semantics=("parallel",),
                                             vmem_limit_bytes=_VMEM_LIMIT),
    )(p2)
    return y[:M] if Mp != M else y


def pallas_gap_embed(x, w, b):
    """Fused global average pool + embed Linear; final features in f32."""
    B, H, W, C = x.shape
    cin, E = w.shape
    Ep = _round_up(E, _LANES)
    wp = _pad_to(_pad_to(w.astype(jnp.float32), 0, C), 1, Ep)
    bp = _pad_to(b.reshape(1, E).astype(jnp.float32), 1, Ep)
    x3 = x.reshape(B, H * W, C)
    y = pl.pallas_call(
        _gap_embed_kernel,
        grid=(1,),
        in_specs=[
            pl.BlockSpec((B, H * W, C), lambda i: (0, 0, 0)),
            pl.BlockSpec((C, Ep), lambda i: (0, 0)),
            pl.BlockSpec((1, Ep), lambda i: (0, 0)),
        ],
        out_specs=pl.BlockSpec((B, Ep), lambda i: (0, 0)),
        out_shape=jax.ShapeDtypeStruct((B, Ep), jnp.float32),
        compiler_params=pltpu.CompilerParams(dimension_semantics=("arbitrary",),
                                             vmem_limit_bytes=_VMEM_LIMIT),
    )(x3, wp, bp)
    return y[:, :E]


# ------------------------------- JAX glue -----------------------------------

def _im2col(x, kh, kw, stride, pad, pad_value=0.0):
    """x NHWC -> patches (B, Ho, Wo, kh*kw, C). Pure layout plumbing (glue)."""
    B, H, W, C = x.shape
    xp = jnp.pad(x, ((0, 0), (pad, pad), (pad, pad), (0, 0)),
                 constant_values=pad_value)
    Ho = (H + 2 * pad - kh) // stride + 1
    Wo = (W + 2 * pad - kw) // stride + 1
    cols = []
    for i in range(kh):
        for j in range(kw):
            cols.append(xp[:, i:i + stride * Ho:stride, j:j + stride * Wo:stride, :])
    patches = jnp.stack(cols, axis=3)
    return patches, Ho, Wo


def conv_bn(x, p, stride, pad, relu=True, residual=None, out_dtype=jnp.bfloat16):
    """Conv with folded eval-mode BatchNorm (+ optional residual + ReLU) as Pallas kernels.

    - 3x3/stride-1 convs use the direct in-kernel window reduction (no im2col).
    - 1x1 convs go through the tiled matmul with no window duplication (KK=1).
    - Only the 7x7/stride-2 stem falls back to glue im2col + tiled matmul.
    """
    kh, kw, cin, cout = p['w'].shape
    B, H, W, C = x.shape  # C may be lane-padded (extra channels are exact zeros)

    if (kh, kw, stride, pad) == (3, 3, 1, 1) and residual is None:
        return conv3x3_direct(x, p, relu=relu, out_dtype=out_dtype)

    # TODO(synk): the strided stem conv still uses glue im2col; folding its window
    # reduction into the kernel (strided in-kernel gather) is left for a later pass.
    w_full = _pad_to(p['w'], 2, C)                     # align weight Cin to activation channels
    patches, Ho, Wo = _im2col(x, kh, kw, stride, pad)
    M = B * Ho * Wo
    x2 = patches.reshape(M, kh * kw * C)
    w2 = w_full.reshape(kh * kw * C, cout)
    r2 = None if residual is None else residual.reshape(M, -1)
    y = pallas_matmul_bias(x2, w2, p['b'], residual=r2, relu=relu, out_dtype=out_dtype)
    return y.reshape(B, Ho, Wo, y.shape[1])


def maxpool(x, k=3, stride=2, pad=1):
    # TODO(synk): window extraction still happens in glue (im2col); the Pallas kernel
    # itself is tiled over rows per the review's fallback recommendation.
    B, H, W, C = x.shape
    patches, Ho, Wo = _im2col(x, k, k, stride, pad, pad_value=-1e30)
    y = pallas_maxpool_tiled(patches.reshape(B * Ho * Wo, k * k, C), out_dtype=x.dtype)
    return y.reshape(B, Ho, Wo, C)


def bottleneck(x, p, downsample=False, stride=1):
    identity = x
    out = conv_bn(x, p['conv1'], stride=1, pad=0, relu=True)          # 1x1 (no im2col)
    out = conv_bn(out, p['conv2'], stride=stride, pad=1, relu=True)   # 3x3 direct kernel
    if downsample:
        identity = conv_bn(x, p['down'], stride=stride, pad=0, relu=False)
    # 1x1 conv + BN, residual add, ReLU -- fused in one tiled matmul kernel.
    out = conv_bn(out, p['conv3'], stride=1, pad=0, relu=True, residual=identity)
    return out


def encoder_cnn_forward(images_nchw, params):
    """EncoderCNN.forward: resnet(images) -> flatten -> embed Linear."""
    x = jnp.transpose(images_nchw, (0, 2, 3, 1)).astype(jnp.float32)   # NCHW -> NHWC
    x = conv_bn(x, params['stem'], stride=2, pad=3, relu=True)          # 7x7 / 2
    x = maxpool(x)                                                      # 3x3 / 2
    x = bottleneck(x, params['block1'], downsample=True, stride=1)
    x = bottleneck(x, params['block2'], downsample=False, stride=1)
    # AdaptiveAvgPool2d(1) + view(B,-1) + embed Linear, fused in one kernel.
    return pallas_gap_embed(x, params['embed']['w'], params['embed']['b'])


# --------------------------- deterministic params ---------------------------

def _init_conv_bn(key, kh, kw, cin, cout, eps=1e-5):
    k1, k2, k3, k4, k5 = jax.random.split(key, 5)
    w = jax.random.normal(k1, (kh, kw, cin, cout), jnp.float32) / ((kh * kw * cin) ** 0.5)
    gamma = 1.0 + 0.1 * jax.random.normal(k2, (cout,), jnp.float32)
    beta = 0.1 * jax.random.normal(k3, (cout,), jnp.float32)
    mean = 0.1 * jax.random.normal(k4, (cout,), jnp.float32)
    var = jax.random.uniform(k5, (cout,), jnp.float32, 0.5, 1.5)
    scale = gamma / jnp.sqrt(var + eps)            # fold eval-mode BN into conv
    return {'w': w * scale, 'b': beta - mean * scale}


def init_params(key, embed_size, in_c=3, stem_c=32, mid_c=16, out_c=64):
    ks = jax.random.split(key, 10)
    params = {
        'stem': _init_conv_bn(ks[0], 7, 7, in_c, stem_c),
        'block1': {
            'conv1': _init_conv_bn(ks[1], 1, 1, stem_c, mid_c),
            'conv2': _init_conv_bn(ks[2], 3, 3, mid_c, mid_c),
            'conv3': _init_conv_bn(ks[3], 1, 1, mid_c, out_c),
            'down':  _init_conv_bn(ks[4], 1, 1, stem_c, out_c),
        },
        'block2': {
            'conv1': _init_conv_bn(ks[5], 1, 1, out_c, mid_c),
            'conv2': _init_conv_bn(ks[6], 3, 3, mid_c, mid_c),
            'conv3': _init_conv_bn(ks[7], 1, 1, mid_c, out_c),
        },
    }
    lim = 1.0 / (out_c ** 0.5)                     # PyTorch nn.Linear default init
    params['embed'] = {
        'w': jax.random.uniform(ks[8], (out_c, embed_size), jnp.float32, -lim, lim),
        'b': jax.random.uniform(ks[9], (embed_size,), jnp.float32, -lim, lim),
    }
    return params


# ---------------------------------- main -------------------------------------

if __name__ == "__main__":
    key = jax.random.PRNGKey(0)
    kx, kp = jax.random.split(key)

    batch, embed_size = 2, 32
    images = jax.random.normal(kx, (batch, 3, 32, 32), jnp.float32)   # NCHW like PyTorch
    params = init_params(kp, embed_size=embed_size)

    fwd = jax.jit(encoder_cnn_forward)
    features = jax.block_until_ready(fwd(images, params))

    assert features.shape == (batch, embed_size), features.shape
    assert features.dtype == jnp.float32
    assert bool(jnp.all(jnp.isfinite(features)))
    print("KERNEL_OK")
</pallas_src>

<mosaic_0001>
module attributes {stable_mosaic.version = 11 : i64} {
  func.func @_mm_bias_kernel(%arg0: i32, %arg1: memref<512x256xbf16, #tpu.memory_space<vmem>>, %arg2: memref<256x128xbf16, #tpu.memory_space<vmem>>, %arg3: memref<1x128xf32, #tpu.memory_space<vmem>>, %arg4: memref<512x128xbf16, #tpu.memory_space<vmem>>) attributes {dimension_semantics = [#tpu.dimension_semantics<parallel>], iteration_bounds = array<i64: 1>, scalar_prefetch = 0 : i64, scratch_operands = 0 : i64, tpu.core_type = #tpu.core_type<tc>, window_params = [{transform_indices = @transform_0, window_bounds = array<i64: 512, 256>}, {pipeline_mode = #tpu.pipeline_mode<synchronous>, transform_indices = @transform_1, window_bounds = array<i64: 256, 128>}, {pipeline_mode = #tpu.pipeline_mode<synchronous>, transform_indices = @transform_2, window_bounds = array<i64: 1, 128>}, {transform_indices = @transform_3, window_bounds = array<i64: 512, 128>}]} {
    %c0 = arith.constant 0 : index
    %c0_0 = arith.constant 0 : index
    %0 = vector.load %arg1[%c0, %c0_0] : memref<512x256xbf16, #tpu.memory_space<vmem>>, vector<512x256xbf16>
    %c0_1 = arith.constant 0 : index
    %c0_2 = arith.constant 0 : index
    %1 = vector.load %arg2[%c0_1, %c0_2] : memref<256x128xbf16, #tpu.memory_space<vmem>>, vector<256x128xbf16>
    %cst = arith.constant dense<0.000000e+00> : vector<512x128xf32>
    %2 = tpu.matmul %0, %1, %cst {dimension_numbers = #tpu.dot_dimension_numbers<[1], [0], [0], [1], [0, 0, 1, 1], [], []>} : vector<512x256xbf16>, vector<256x128xbf16>, vector<512x128xf32> -> vector<512x128xf32>
    %c0_3 = arith.constant 0 : index
    %c0_4 = arith.constant 0 : index
    %3 = vector.load %arg3[%c0_3, %c0_4] : memref<1x128xf32, #tpu.memory_space<vmem>>, vector<1x128xf32>
    %4 = vector.broadcast %3 : vector<1x128xf32> to vector<512x128xf32>
    %5 = arith.addf %2, %4 : vector<512x128xf32>
    %cst_5 = arith.constant 0.000000e+00 : f32
    %6 = vector.broadcast %cst_5 : f32 to vector<512x128xf32>
    %7 = arith.maximumf %5, %6 : vector<512x128xf32>
    %8 = arith.truncf %7 : vector<512x128xf32> to vector<512x128xbf16>
    %c0_6 = arith.constant 0 : index
    %c0_7 = arith.constant 0 : index
    %9 = vector.load %arg4[%c0_6, %c0_7] : memref<512x128xbf16, #tpu.memory_space<vmem>>, vector<512x128xbf16>
    tpu.vector_store %arg4[%c0_6, %c0_7], %8 {strides = array<i32>} : memref<512x128xbf16, #tpu.memory_space<vmem>>, vector<512x128xbf16>,
    return
  }
  func.func @transform_0(%arg0: i32) -> (i32, i32) {
    %c0_i32 = arith.constant 0 : i32
    %c0_i32_0 = arith.constant 0 : i32
    return %arg0, %c0_i32 : i32, i32
  }
  func.func @transform_1(%arg0: i32) -> (i32, i32) {
    %c0_i32 = arith.constant 0 : i32
    %c0_i32_0 = arith.constant 0 : i32
    %c0_i32_1 = arith.constant 0 : i32
    return %c0_i32, %c0_i32_0 : i32, i32
  }
  func.func @transform_2(%arg0: i32) -> (i32, i32) {
    %c0_i32 = arith.constant 0 : i32
    %c0_i32_0 = arith.constant 0 : i32
    %c0_i32_1 = arith.constant 0 : i32
    return %c0_i32, %c0_i32_0 : i32, i32
  }
  func.func @transform_3(%arg0: i32) -> (i32, i32) {
    %c0_i32 = arith.constant 0 : i32
    %c0_i32_0 = arith.constant 0 : i32
    return %arg0, %c0_i32 : i32, i32
  }
}

module attributes {stable_mosaic.version = 11 : i64} {
  func.func @_maxpool_kernel(%arg0: i32, %arg1: memref<128x9x128xbf16, #tpu.memory_space<vmem>>, %arg2: memref<128x128xbf16, #tpu.memory_space<vmem>>) attributes {dimension_semantics = [#tpu.dimension_semantics<parallel>], iteration_bounds = array<i64: 1>, scalar_prefetch = 0 : i64, scratch_operands = 0 : i64, tpu.core_type = #tpu.core_type<tc>, window_params = [{transform_indices = @transform_0, window_bounds = array<i64: 128, 9, 128>}, {transform_indices = @transform_1, window_bounds = array<i64: 128, 128>}]} {
    %c0 = arith.constant 0 : index
    %c0_0 = arith.constant 0 : index
    %c0_1 = arith.constant 0 : index
    %0 = vector.load %arg1[%c0, %c0_0, %c0_1] : memref<128x9x128xbf16, #tpu.memory_space<vmem>>, vector<128x9x128xbf16>
    %cst = arith.constant dense<0xFF80> : vector<128x128xbf16>
    %1 = vector.multi_reduction <maximumf>, %0, %cst [1] : vector<128x9x128xbf16> to vector<128x128xbf16>
    %c0_2 = arith.constant 0 : index
    %c0_3 = arith.constant 0 : index
    %2 = vector.load %arg2[%c0_2, %c0_3] : memref<128x128xbf16, #tpu.memory_space<vmem>>, vector<128x128xbf16>
    tpu.vector_store %arg2[%c0_2, %c0_3], %1 {strides = array<i32>} : memref<128x128xbf16, #tpu.memory_space<vmem>>, vector<128x128xbf16>,
    return
  }
  func.func @transform_0(%arg0: i32) -> (i32, i32, i32) {
    %c0_i32 = arith.constant 0 : i32
    %c0_i32_0 = arith.constant 0 : i32
    %c0_i32_1 = arith.constant 0 : i32
    return %arg0, %c0_i32, %c0_i32_0 : i32, i32, i32
  }
  func.func @transform_1(%arg0: i32) -> (i32, i32) {
    %c0_i32 = arith.constant 0 : i32
    %c0_i32_0 = arith.constant 0 : i32
    return %arg0, %c0_i32 : i32, i32
  }
}

module attributes {stable_mosaic.version = 11 : i64} {
  func.func @_mm_bias_kernel(%arg0: i32, %arg1: memref<128x128xbf16, #tpu.memory_space<vmem>>, %arg2: memref<128x128xbf16, #tpu.memory_space<vmem>>, %arg3: memref<1x128xf32, #tpu.memory_space<vmem>>, %arg4: memref<128x128xbf16, #tpu.memory_space<vmem>>) attributes {dimension_semantics = [#tpu.dimension_semantics<parallel>], iteration_bounds = array<i64: 1>, scalar_prefetch = 0 : i64, scratch_operands = 0 : i64, tpu.core_type = #tpu.core_type<tc>, window_params = [{transform_indices = @transform_0, window_bounds = array<i64: 128, 128>}, {pipeline_mode = #tpu.pipeline_mode<synchronous>, transform_indices = @transform_1, window_bounds = array<i64: 128, 128>}, {pipeline_mode = #tpu.pipeline_mode<synchronous>, transform_indices = @transform_2, window_bounds = array<i64: 1, 128>}, {transform_indices = @transform_3, window_bounds = array<i64: 128, 128>}]} {
    %c0 = arith.constant 0 : index
    %c0_0 = arith.constant 0 : index
    %0 = vector.load %arg1[%c0, %c0_0] : memref<128x128xbf16, #tpu.memory_space<vmem>>, vector<128x128xbf16>
    %c0_1 = arith.constant 0 : index
    %c0_2 = arith.constant 0 : index
    %1 = vector.load %arg2[%c0_1, %c0_2] : memref<128x128xbf16, #tpu.memory_space<vmem>>, vector<128x128xbf16>
    %cst = arith.constant dense<0.000000e+00> : vector<128x128xf32>
    %2 = tpu.matmul %0, %1, %cst {dimension_numbers = #tpu.dot_dimension_numbers<[1], [0], [0], [1], [0, 0, 1, 1], [], []>} : vector<128x128xbf16>, vector<128x128xbf16>, vector<128x128xf32> -> vector<128x128xf32>
    %c0_3 = arith.constant 0 : index
    %c0_4 = arith.constant 0 : index
    %3 = vector.load %arg3[%c0_3, %c0_4] : memref<1x128xf32, #tpu.memory_space<vmem>>, vector<1x128xf32>
    %4 = vector.broadcast %3 : vector<1x128xf32> to vector<128x128xf32>
    %5 = arith.addf %2, %4 : vector<128x128xf32>
    %cst_5 = arith.constant 0.000000e+00 : f32
    %6 = vector.broadcast %cst_5 : f32 to vector<128x128xf32>
    %7 = arith.maximumf %5, %6 : vector<128x128xf32>
    %8 = arith.truncf %7 : vector<128x128xf32> to vector<128x128xbf16>
    %c0_6 = arith.constant 0 : index
    %c0_7 = arith.constant 0 : index
    %9 = vector.load %arg4[%c0_6, %c0_7] : memref<128x128xbf16, #tpu.memory_space<vmem>>, vector<128x128xbf16>
    tpu.vector_store %arg4[%c0_6, %c0_7], %8 {strides = array<i32>} : memref<128x128xbf16, #tpu.memory_space<vmem>>, vector<128x128xbf16>,
    return
  }
  func.func @transform_0(%arg0: i32) -> (i32, i32) {
    %c0_i32 = arith.constant 0 : i32
    %c0_i32_0 = arith.constant 0 : i32
    return %arg0, %c0_i32 : i32, i32
  }
  func.func @transform_1(%arg0: i32) -> (i32, i32) {
    %c0_i32 = arith.constant 0 : i32
    %c0_i32_0 = arith.constant 0 : i32
    %c0_i32_1 = arith.constant 0 : i32
    return %c0_i32, %c0_i32_0 : i32, i32
  }
  func.func @transform_2(%arg0: i32) -> (i32, i32) {
    %c0_i32 = arith.constant 0 : i32
    %c0_i32_0 = arith.constant 0 : i32
    %c0_i32_1 = arith.constant 0 : i32
    return %c0_i32, %c0_i32_0 : i32, i32
  }
  func.func @transform_3(%arg0: i32) -> (i32, i32) {
    %c0_i32 = arith.constant 0 : i32
    %c0_i32_0 = arith.constant 0 : i32
    return %arg0, %c0_i32 : i32, i32
  }
}

module attributes {stable_mosaic.version = 11 : i64} {
  func.func @_conv3x3_kernel(%arg0: i32, %arg1: memref<1x10x10x128xbf16, #tpu.memory_space<vmem>>, %arg2: memref<9x128x128xbf16, #tpu.memory_space<vmem>>, %arg3: memref<1x128xf32, #tpu.memory_space<vmem>>, %arg4: memref<1x64x128xbf16, #tpu.memory_space<vmem>>, %arg5: memref<64x128xf32, #tpu.memory_space<vmem>>) attributes {dimension_semantics = [#tpu.dimension_semantics<parallel>], iteration_bounds = array<i64: 2>, scalar_prefetch = 0 : i64, scratch_operands = 1 : i64, tpu.core_type = #tpu.core_type<tc>, window_params = [{transform_indices = @transform_0, window_bounds = array<i64: 1, 10, 10, 128>}, {pipeline_mode = #tpu.pipeline_mode<synchronous>, transform_indices = @transform_1, window_bounds = array<i64: 9, 128, 128>}, {pipeline_mode = #tpu.pipeline_mode<synchronous>, transform_indices = @transform_2, window_bounds = array<i64: 1, 128>}, {transform_indices = @transform_3, window_bounds = array<i64: 1, 64, 128>}]} {
    %cst = arith.constant 0.000000e+00 : f32
    %0 = vector.broadcast %cst : f32 to vector<64x128xf32>
    %c0 = arith.constant 0 : index
    %c0_0 = arith.constant 0 : index
    %1 = vector.load %arg5[%c0, %c0_0] : memref<64x128xf32, #tpu.memory_space<vmem>>, vector<64x128xf32>
    tpu.vector_store %arg5[%c0, %c0_0], %0 {strides = array<i32>} : memref<64x128xf32, #tpu.memory_space<vmem>>, vector<64x128xf32>,
    %c0_1 = arith.constant 0 : index
    %c0_2 = arith.constant 0 : index
    %c0_3 = arith.constant 0 : index
    %c0_4 = arith.constant 0 : index
    %2 = vector.load %arg1[%c0_1, %c0_2, %c0_3, %c0_4] : memref<1x10x10x128xbf16, #tpu.memory_space<vmem>>, vector<1x8x8x128xbf16>
    %3 = vector.shape_cast %2 : vector<1x8x8x128xbf16> to vector<8x8x128xbf16>
    %4 = vector.shape_cast %3 : vector<8x8x128xbf16> to vector<64x128xbf16>
    %c0_5 = arith.constant 0 : index
    %c0_6 = arith.constant 0 : index
    %5 = vector.load %arg5[%c0_5, %c0_6] : memref<64x128xf32, #tpu.memory_space<vmem>>, vector<64x128xf32>
    %c0_7 = arith.constant 0 : index
    %c0_8 = arith.constant 0 : index
    %c0_9 = arith.constant 0 : index
    %6 = vector.load %arg2[%c0_7, %c0_8, %c0_9] : memref<9x128x128xbf16, #tpu.memory_space<vmem>>, vector<1x128x128xbf16>
    %7 = vector.shape_cast %6 : vector<1x128x128xbf16> to vector<128x128xbf16>
    %cst_10 = arith.constant dense<0.000000e+00> : vector<64x128xf32>
    %8 = tpu.matmul %4, %7, %cst_10 {dimension_numbers = #tpu.dot_dimension_numbers<[1], [0], [0], [1], [0, 0, 1, 1], [], []>} : vector<64x128xbf16>, vector<128x128xbf16>, vector<64x128xf32> -> vector<64x128xf32>
    %9 = arith.addf %5, %8 : vector<64x128xf32>
    %c0_11 = arith.constant 0 : index
    %c0_12 = arith.constant 0 : index
    %10 = vector.load %arg5[%c0_11, %c0_12] : memref<64x128xf32, #tpu.memory_space<vmem>>, vector<64x128xf32>
    tpu.vector_store %arg5[%c0_11, %c0_12], %9 {strides = array<i32>} : memref<64x128xf32, #tpu.memory_space<vmem>>, vector<64x128xf32>,
    %c0_13 = arith.constant 0 : index
    %c0_14 = arith.constant 0 : index
    %c1 = arith.constant 1 : index
    %c0_15 = arith.constant 0 : index
    %11 = vector.load %arg1[%c0_13, %c0_14, %c1, %c0_15] : memref<1x10x10x128xbf16, #tpu.memory_space<vmem>>, vector<1x8x8x128xbf16>
    %12 = vector.shape_cast %11 : vector<1x8x8x128xbf16> to vector<8x8x128xbf16>
    %13 = vector.shape_cast %12 : vector<8x8x128xbf16> to vector<64x128xbf16>
    %c0_16 = arith.constant 0 : index
    %c0_17 = arith.constant 0 : index
    %14 = vector.load %arg5[%c0_16, %c0_17] : memref<64x128xf32, #tpu.memory_space<vmem>>, vector<64x128xf32>
    %c1_18 = arith.constant 1 : index
    %c0_19 = arith.constant 0 : index
    %c0_20 = arith.constant 0 : index
    %15 = vector.load %arg2[%c1_18, %c0_19, %c0_20] : memref<9x128x128xbf16, #tpu.memory_space<vmem>>, vector<1x128x128xbf16>
    %16 = vector.shape_cast %15 : vector<1x128x128xbf16> to vector<128x128xbf16>
    %cst_21 = arith.constant dense<0.000000e+00> : vector<64x128xf32>
    %17 = tpu.matmul %13, %16, %cst_21 {dimension_numbers = #tpu.dot_dimension_numbers<[1], [0], [0], [1], [0, 0, 1, 1], [], []>} : vector<64x128xbf16>, vector<128x128xbf16>, vector<64x128xf32> -> vector<64x128xf32>
    %18 = arith.addf %14, %17 : vector<64x128xf32>
    %c0_22 = arith.constant 0 : index
    %c0_23 = arith.constant 0 : index
    %19 = vector.load %arg5[%c0_22, %c0_23] : memref<64x128xf32, #tpu.memory_space<vmem>>, vector<64x128xf32>
    tpu.vector_store %arg5[%c0_22, %c0_23], %18 {strides = array<i32>} : memref<64x128xf32, #tpu.memory_space<vmem>>, vector<64x128xf32>,
    %c0_24 = arith.constant 0 : index
    %c0_25 = arith.constant 0 : index
    %c2 = arith.constant 2 : index
    %c0_26 = arith.constant 0 : index
    %20 = vector.load %arg1[%c0_24, %c0_25, %c2, %c0_26] : memref<1x10x10x128xbf16, #tpu.memory_space<vmem>>, vector<1x8x8x128xbf16>
    %21 = vector.shape_cast %20 : vector<1x8x8x128xbf16> to vector<8x8x128xbf16>
    %22 = vector.shape_cast %21 : vector<8x8x128xbf16> to vector<64x128xbf16>
    %c0_27 = arith.constant 0 : index
    %c0_28 = arith.constant 0 : index
    %23 = vector.load %arg5[%c0_27, %c0_28] : memref<64x128xf32, #tpu.memory_space<vmem>>, vector<64x128xf32>
    %c2_29 = arith.constant 2 : index
    %c0_30 = arith.constant 0 : index
    %c0_31 = arith.constant 0 : index
    %24 = vector.load %arg2[%c2_29, %c0_30, %c0_31] : memref<9x128x128xbf16, #tpu.memory_space<vmem>>, vector<1x128x128xbf16>
    %25 = vector.shape_cast %24 : vector<1x128x128xbf16> to vector<128x128xbf16>
    %cst_32 = arith.constant dense<0.000000e+00> : vector<64x128xf32>
    %26 = tpu.matmul %22, %25, %cst_32 {dimension_numbers = #tpu.dot_dimension_numbers<[1], [0], [0], [1], [0, 0, 1, 1], [], []>} : vector<64x128xbf16>, vector<128x128xbf16>, vector<64x128xf32> -> vector<64x128xf32>
    %27 = arith.addf %23, %26 : vector<64x128xf32>
    %c0_33 = arith.constant 0 : index
    %c0_34 = arith.constant 0 : index
    %28 = vector.load %arg5[%c0_33, %c0_34] : memref<64x128xf32, #tpu.memory_space<vmem>>, vector<64x128xf32>
    tpu.vector_store %arg5[%c0_33, %c0_34], %27 {strides = array<i32>} : memref<64x128xf32, #tpu.memory_space<vmem>>, vector<64x128xf32>,
    %c0_35 = arith.constant 0 : index
    %c1_36 = arith.constant 1 : index
    %c0_37 = arith.constant 0 : index
    %c0_38 = arith.constant 0 : index
    %29 = vector.load %arg1[%c0_35, %c1_36, %c0_37, %c0_38] : memref<1x10x10x128xbf16, #tpu.memory_space<vmem>>, vector<1x8x8x128xbf16>
    %30 = vector.shape_cast %29 : vector<1x8x8x128xbf16> to vector<8x8x128xbf16>
    %31 = vector.shape_cast %30 : vector<8x8x128xbf16> to vector<64x128xbf16>
    %c0_39 = arith.constant 0 : index
    %c0_40 = arith.constant 0 : index
    %32 = vector.load %arg5[%c0_39, %c0_40] : memref<64x128xf32, #tpu.memory_space<vmem>>, vector<64x128xf32>
    %c3 = arith.constant 3 : index
    %c0_41 = arith.constant 0 : index
    %c0_42 = arith.constant 0 : index
    %33 = vector.load %arg2[%c3, %c0_41, %c0_42] : memref<9x128x128xbf16, #tpu.memory_space<vmem>>, vector<1x128x128xbf16>
    %34 = vector.shape_cast %33 : vector<1x128x128xbf16> to vector<128x128xbf16>
    %cst_43 = arith.constant dense<0.000000e+00> : vector<64x128xf32>
    %35 = tpu.matmul %31, %34, %cst_43 {dimension_numbers = #tpu.dot_dimension_numbers<[1], [0], [0], [1], [0, 0, 1, 1], [], []>} : vector<64x128xbf16>, vector<128x128xbf16>, vector<64x128xf32> -> vector<64x128xf32>
    %36 = arith.addf %32, %35 : vector<64x128xf32>
    %c0_44 = arith.constant 0 : index
    %c0_45 = arith.constant 0 : index
    %37 = vector.load %arg5[%c0_44, %c0_45] : memref<64x128xf32, #tpu.memory_space<vmem>>, vector<64x128xf32>
    tpu.vector_store %arg5[%c0_44, %c0_45], %36 {strides = array<i32>} : memref<64x128xf32, #tpu.memory_space<vmem>>, vector<64x128xf32>,
    %c0_46 = arith.constant 0 : index
    %c1_47 = arith.constant 1 : index
    %c1_48 = arith.constant 1 : index
    %c0_49 = arith.constant 0 : index
    %38 = vector.load %arg1[%c0_46, %c1_47, %c1_48, %c0_49] : memref<1x10x10x128xbf16, #tpu.memory_space<vmem>>, vector<1x8x8x128xbf16>
    %39 = vector.shape_cast %38 : vector<1x8x8x128xbf16> to vector<8x8x128xbf16>
    %40 = vector.shape_cast %39 : vector<8x8x128xbf16> to vector<64x128xbf16>
    %c0_50 = arith.constant 0 : index
    %c0_51 = arith.constant 0 : index
    %41 = vector.load %arg5[%c0_50, %c0_51] : memref<64x128xf32, #tpu.memory_space<vmem>>, vector<64x128xf32>
    %c4 = arith.constant 4 : index
    %c0_52 = arith.constant 0 : index
    %c0_53 = arith.constant 0 : index
    %42 = vector.load %arg2[%c4, %c0_52, %c0_53] : memref<9x128x128xbf16, #tpu.memory_space<vmem>>, vector<1x128x128xbf16>
    %43 = vector.shape_cast %42 : vector<1x128x128xbf16> to vector<128x128xbf16>
    %cst_54 = arith.constant dense<0.000000e+00> : vector<64x128xf32>
    %44 = tpu.matmul %40, %43, %cst_54 {dimension_numbers = #tpu.dot_dimension_numbers<[1], [0], [0], [1], [0, 0, 1, 1], [], []>} : vector<64x128xbf16>, vector<128x128xbf16>, vector<64x128xf32> -> vector<64x128xf32>
    %45 = arith.addf %41, %44 : vector<64x128xf32>
    %c0_55 = arith.constant 0 : index
    %c0_56 = arith.constant 0 : index
    %46 = vector.load %arg5[%c0_55, %c0_56] : memref<64x128xf32, #tpu.memory_space<vmem>>, vector<64x128xf32>
    tpu.vector_store %arg5[%c0_55, %c0_56], %45 {strides = array<i32>} : memref<64x128xf32, #tpu.memory_space<vmem>>, vector<64x128xf32>,
    %c0_57 = arith.constant 0 : index
    %c1_58 = arith.constant 1 : index
    %c2_59 = arith.constant 2 : index
    %c0_60 = arith.constant 0 : index
    %47 = vector.load %arg1[%c0_57, %c1_58, %c2_59, %c0_60] : memref<1x10x10x128xbf16, #tpu.memory_space<vmem>>, vector<1x8x8x128xbf16>
    %48 = vector.shape_cast %47 : vector<1x8x8x128xbf16> to vector<8x8x128xbf16>
    %49 = vector.shape_cast %48 : vector<8x8x128xbf16> to vector<64x128xbf16>
    %c0_61 = arith.constant 0 : index
    %c0_62 = arith.constant 0 : index
    %50 = vector.load %arg5[%c0_61, %c0_62] : memref<64x128xf32, #tpu.memory_space<vmem>>, vector<64x128xf32>
    %c5 = arith.constant 5 : index
    %c0_63 = arith.constant 0 : index
    %c0_64 = arith.constant 0 : index
    %51 = vector.load %arg2[%c5, %c0_63, %c0_64] : memref<9x128x128xbf16, #tpu.memory_space<vmem>>, vector<1x128x128xbf16>
    %52 = vector.shape_cast %51 : vector<1x128x128xbf16> to vector<128x128xbf16>
    %cst_65 = arith.constant dense<0.000000e+00> : vector<64x128xf32>
    %53 = tpu.matmul %49, %52, %cst_65 {dimension_numbers = #tpu.dot_dimension_numbers<[1], [0], [0], [1], [0, 0, 1, 1], [], []>} : vector<64x128xbf16>, vector<128x128xbf16>, vector<64x128xf32> -> vector<64x128xf32>
    %54 = arith.addf %50, %53 : vector<64x128xf32>
    %c0_66 = arith.constant 0 : index
    %c0_67 = arith.constant 0 : index
    %55 = vector.load %arg5[%c0_66, %c0_67] : memref<64x128xf32, #tpu.memory_space<vmem>>, vector<64x128xf32>
    tpu.vector_store %arg5[%c0_66, %c0_67], %54 {strides = array<i32>} : memref<64x128xf32, #tpu.memory_space<vmem>>, vector<64x128xf32>,
    %c0_68 = arith.constant 0 : index
    %c2_69 = arith.constant 2 : index
    %c0_70 = arith.constant 0 : index
    %c0_71 = arith.constant 0 : index
    %56 = vector.load %arg1[%c0_68, %c2_69, %c0_70, %c0_71] : memref<1x10x10x128xbf16, #tpu.memory_space<vmem>>, vector<1x8x8x128xbf16>
    %57 = vector.shape_cast %56 : vector<1x8x8x128xbf16> to vector<8x8x128xbf16>
    %58 = vector.shape_cast %57 : vector<8x8x128xbf16> to vector<64x128xbf16>
    %c0_72 = arith.constant 0 : index
    %c0_73 = arith.constant 0 : index
    %59 = vector.load %arg5[%c0_72, %c0_73] : memref<64x128xf32, #tpu.memory_space<vmem>>, vector<64x128xf32>
    %c6 = arith.constant 6 : index
    %c0_74 = arith.constant 0 : index
    %c0_75 = arith.constant 0 : index
    %60 = vector.load %arg2[%c6, %c0_74, %c0_75] : memref<9x128x128xbf16, #tpu.memory_space<vmem>>, vector<1x128x128xbf16>
    %61 = vector.shape_cast %60 : vector<1x128x128xbf16> to vector<128x128xbf16>
    %cst_76 = arith.constant dense<0.000000e+00> : vector<64x128xf32>
    %62 = tpu.matmul %58, %61, %cst_76 {dimension_numbers = #tpu.dot_dimension_numbers<[1], [0], [0], [1], [0, 0, 1, 1], [], []>} : vector<64x128xbf16>, vector<128x128xbf16>, vector<64x128xf32> -> vector<64x128xf32>
    %63 = arith.addf %59, %62 : vector<64x128xf32>
    %c0_77 = arith.constant 0 : index
    %c0_78 = arith.constant 0 : index
    %64 = vector.load %arg5[%c0_77, %c0_78] : memref<64x128xf32, #tpu.memory_space<vmem>>, vector<64x128xf32>
    tpu.vector_store %arg5[%c0_77, %c0_78], %63 {strides = array<i32>} : memref<64x128xf32, #tpu.memory_space<vmem>>, vector<64x128xf32>,
    %c0_79 = arith.constant 0 : index
    %c2_80 = arith.constant 2 : index
    %c1_81 = arith.constant 1 : index
    %c0_82 = arith.constant 0 : index
    %65 = vector.load %arg1[%c0_79, %c2_80, %c1_81, %c0_82] : memref<1x10x10x128xbf16, #tpu.memory_space<vmem>>, vector<1x8x8x128xbf16>
    %66 = vector.shape_cast %65 : vector<1x8x8x128xbf16> to vector<8x8x128xbf16>
    %67 = vector.shape_cast %66 : vector<8x8x128xbf16> to vector<64x128xbf16>
    %c0_83 = arith.constant 0 : index
    %c0_84 = arith.constant 0 : index
    %68 = vector.load %arg5[%c0_83, %c0_84] : memref<64x128xf32, #tpu.memory_space<vmem>>, vector<64x128xf32>
    %c7 = arith.constant 7 : index
    %c0_85 = arith.constant 0 : index
    %c0_86 = arith.constant 0 : index
    %69 = vector.load %arg2[%c7, %c0_85, %c0_86] : memref<9x128x128xbf16, #tpu.memory_space<vmem>>, vector<1x128x128xbf16>
    %70 = vector.shape_cast %69 : vector<1x128x128xbf16> to vector<128x128xbf16>
    %cst_87 = arith.constant dense<0.000000e+00> : vector<64x128xf32>
    %71 = tpu.matmul %67, %70, %cst_87 {dimension_numbers = #tpu.dot_dimension_numbers<[1], [0], [0], [1], [0, 0, 1, 1], [], []>} : vector<64x128xbf16>, vector<128x128xbf16>, vector<64x128xf32> -> vector<64x128xf32>
    %72 = arith.addf %68, %71 : vector<64x128xf32>
    %c0_88 = arith.constant 0 : index
    %c0_89 = arith.constant 0 : index
    %73 = vector.load %arg5[%c0_88, %c0_89] : memref<64x128xf32, #tpu.memory_space<vmem>>, vector<64x128xf32>
    tpu.vector_store %arg5[%c0_88, %c0_89], %72 {strides = array<i32>} : memref<64x128xf32, #tpu.memory_space<vmem>>, vector<64x128xf32>,
    %c0_90 = arith.constant 0 : index
    %c2_91 = arith.constant 2 : index
    %c2_92 = arith.constant 2 : index
    %c0_93 = arith.constant 0 : index
    %74 = vector.load %arg1[%c0_90, %c2_91, %c2_92, %c0_93] : memref<1x10x10x128xbf16, #tpu.memory_space<vmem>>, vector<1x8x8x128xbf16>
    %75 = vector.shape_cast %74 : vector<1x8x8x128xbf16> to vector<8x8x128xbf16>
    %76 = vector.shape_cast %75 : vector<8x8x128xbf16> to vector<64x128xbf16>
    %c0_94 = arith.constant 0 : index
    %c0_95 = arith.constant 0 : index
    %77 = vector.load %arg5[%c0_94, %c0_95] : memref<64x128xf32, #tpu.memory_space<vmem>>, vector<64x128xf32>
    %c8 = arith.constant 8 : index
    %c0_96 = arith.constant 0 : index
    %c0_97 = arith.constant 0 : index
    %78 = vector.load %arg2[%c8, %c0_96, %c0_97] : memref<9x128x128xbf16, #tpu.memory_space<vmem>>, vector<1x128x128xbf16>
    %79 = vector.shape_cast %78 : vector<1x128x128xbf16> to vector<128x128xbf16>
    %cst_98 = arith.constant dense<0.000000e+00> : vector<64x128xf32>
    %80 = tpu.matmul %76, %79, %cst_98 {dimension_numbers = #tpu.dot_dimension_numbers<[1], [0], [0], [1], [0, 0, 1, 1], [], []>} : vector<64x128xbf16>, vector<128x128xbf16>, vector<64x128xf32> -> vector<64x128xf32>
    %81 = arith.addf %77, %80 : vector<64x128xf32>
    %c0_99 = arith.constant 0 : index
    %c0_100 = arith.constant 0 : index
    %82 = vector.load %arg5[%c0_99, %c0_100] : memref<64x128xf32, #tpu.memory_space<vmem>>, vector<64x128xf32>
    tpu.vector_store %arg5[%c0_99, %c0_100], %81 {strides = array<i32>} : memref<64x128xf32, #tpu.memory_space<vmem>>, vector<64x128xf32>,
    %c0_101 = arith.constant 0 : index
    %c0_102 = arith.constant 0 : index
    %83 = vector.load %arg5[%c0_101, %c0_102] : memref<64x128xf32, #tpu.memory_space<vmem>>, vector<64x128xf32>
    %c0_103 = arith.constant 0 : index
    %c0_104 = arith.constant 0 : index
    %84 = vector.load %arg3[%c0_103, %c0_104] : memref<1x128xf32, #tpu.memory_space<vmem>>, vector<1x128xf32>
    %85 = vector.broadcast %84 : vector<1x128xf32> to vector<64x128xf32>
    %86 = arith.addf %83, %85 : vector<64x128xf32>
    %cst_105 = arith.constant 0.000000e+00 : f32
    %87 = vector.broadcast %cst_105 : f32 to vector<64x128xf32>
    %88 = arith.maximumf %86, %87 : vector<64x128xf32>
    %89 = arith.truncf %88 : vector<64x128xf32> to vector<64x128xbf16>
    %c0_106 = arith.constant 0 : index
    %c0_107 = arith.constant 0 : index
    %c0_108 = arith.constant 0 : index
    %90 = vector.load %arg4[%c0_106, %c0_107, %c0_108] : memref<1x64x128xbf16, #tpu.memory_space<vmem>>, vector<1x64x128xbf16>
    %91 = vector.shape_cast %90 : vector<1x64x128xbf16> to vector<64x128xbf16>
    %92 = vector.shape_cast %89 : vector<64x128xbf16> to vector<1x64x128xbf16>
    tpu.vector_store %arg4[%c0_106, %c0_107, %c0_108], %92 {strides = array<i32>} : memref<1x64x128xbf16, #tpu.memory_space<vmem>>, vector<1x64x128xbf16>,
    return
  }
  func.func @transform_0(%arg0: i32) -> (i32, i32, i32, i32) {
    %c0_i32 = arith.constant 0 : i32
    %c0_i32_0 = arith.constant 0 : i32
    %c0_i32_1 = arith.constant 0 : i32
    %c0_i32_2 = arith.constant 0 : i32
    return %arg0, %c0_i32, %c0_i32_0, %c0_i32_1 : i32, i32, i32, i32
  }
  func.func @transform_1(%arg0: i32) -> (i32, i32, i32) {
    %c0_i32 = arith.constant 0 : i32
    %c0_i32_0 = arith.constant 0 : i32
    %c0_i32_1 = arith.constant 0 : i32
    %c0_i32_2 = arith.constant 0 : i32
    return %c0_i32, %c0_i32_0, %c0_i32_1 : i32, i32, i32
  }
  func.func @transform_2(%arg0: i32) -> (i32, i32) {
    %c0_i32 = arith.constant 0 : i32
    %c0_i32_0 = arith.constant 0 : i32
    %c0_i32_1 = arith.constant 0 : i32
    return %c0_i32, %c0_i32_0 : i32, i32
  }
  func.func @transform_3(%arg0: i32) -> (i32, i32, i32) {
    %c0_i32 = arith.constant 0 : i32
    %c0_i32_0 = arith.constant 0 : i32
    %c0_i32_1 = arith.constant 0 : i32
    return %arg0, %c0_i32, %c0_i32_0 : i32, i32, i32
  }
}

module attributes {stable_mosaic.version = 11 : i64} {
  func.func @_mm_bias_kernel(%arg0: i32, %arg1: memref<128x128xbf16, #tpu.memory_space<vmem>>, %arg2: memref<128x128xbf16, #tpu.memory_space<vmem>>, %arg3: memref<1x128xf32, #tpu.memory_space<vmem>>, %arg4: memref<128x128xbf16, #tpu.memory_space<vmem>>) attributes {dimension_semantics = [#tpu.dimension_semantics<parallel>], iteration_bounds = array<i64: 1>, scalar_prefetch = 0 : i64, scratch_operands = 0 : i64, tpu.core_type = #tpu.core_type<tc>, window_params = [{transform_indices = @transform_0, window_bounds = array<i64: 128, 128>}, {pipeline_mode = #tpu.pipeline_mode<synchronous>, transform_indices = @transform_1, window_bounds = array<i64: 128, 128>}, {pipeline_mode = #tpu.pipeline_mode<synchronous>, transform_indices = @transform_2, window_bounds = array<i64: 1, 128>}, {transform_indices = @transform_3, window_bounds = array<i64: 128, 128>}]} {
    %c0 = arith.constant 0 : index
    %c0_0 = arith.constant 0 : index
    %0 = vector.load %arg1[%c0, %c0_0] : memref<128x128xbf16, #tpu.memory_space<vmem>>, vector<128x128xbf16>
    %c0_1 = arith.constant 0 : index
    %c0_2 = arith.constant 0 : index
    %1 = vector.load %arg2[%c0_1, %c0_2] : memref<128x128xbf16, #tpu.memory_space<vmem>>, vector<128x128xbf16>
    %cst = arith.constant dense<0.000000e+00> : vector<128x128xf32>
    %2 = tpu.matmul %0, %1, %cst {dimension_numbers = #tpu.dot_dimension_numbers<[1], [0], [0], [1], [0, 0, 1, 1], [], []>} : vector<128x128xbf16>, vector<128x128xbf16>, vector<128x128xf32> -> vector<128x128xf32>
    %c0_3 = arith.constant 0 : index
    %c0_4 = arith.constant 0 : index
    %3 = vector.load %arg3[%c0_3, %c0_4] : memref<1x128xf32, #tpu.memory_space<vmem>>, vector<1x128xf32>
    %4 = vector.broadcast %3 : vector<1x128xf32> to vector<128x128xf32>
    %5 = arith.addf %2, %4 : vector<128x128xf32>
    %6 = arith.truncf %5 : vector<128x128xf32> to vector<128x128xbf16>
    %c0_5 = arith.constant 0 : index
    %c0_6 = arith.constant 0 : index
    %7 = vector.load %arg4[%c0_5, %c0_6] : memref<128x128xbf16, #tpu.memory_space<vmem>>, vector<128x128xbf16>
    tpu.vector_store %arg4[%c0_5, %c0_6], %6 {strides = array<i32>} : memref<128x128xbf16, #tpu.memory_space<vmem>>, vector<128x128xbf16>,
    return
  }
  func.func @transform_0(%arg0: i32) -> (i32, i32) {
    %c0_i32 = arith.constant 0 : i32
    %c0_i32_0 = arith.constant 0 : i32
    return %arg0, %c0_i32 : i32, i32
  }
  func.func @transform_1(%arg0: i32) -> (i32, i32) {
    %c0_i32 = arith.constant 0 : i32
    %c0_i32_0 = arith.constant 0 : i32
    %c0_i32_1 = arith.constant 0 : i32
    return %c0_i32, %c0_i32_0 : i32, i32
  }
  func.func @transform_2(%arg0: i32) -> (i32, i32) {
    %c0_i32 = arith.constant 0 : i32
    %c0_i32_0 = arith.constant 0 : i32
    %c0_i32_1 = arith.constant 0 : i32
    return %c0_i32, %c0_i32_0 : i32, i32
  }
  func.func @transform_3(%arg0: i32) -> (i32, i32) {
    %c0_i32 = arith.constant 0 : i32
    %c0_i32_0 = arith.constant 0 : i32
    return %arg0, %c0_i32 : i32, i32
  }
}

module attributes {stable_mosaic.version = 11 : i64} {
  func.func @_mm_bias_res_kernel(%arg0: i32, %arg1: memref<128x128xbf16, #tpu.memory_space<vmem>>, %arg2: memref<128x128xbf16, #tpu.memory_space<vmem>>, %arg3: memref<1x128xf32, #tpu.memory_space<vmem>>, %arg4: memref<128x128xbf16, #tpu.memory_space<vmem>>, %arg5: memref<128x128xbf16, #tpu.memory_space<vmem>>) attributes {dimension_semantics = [#tpu.dimension_semantics<parallel>], iteration_bounds = array<i64: 1>, scalar_prefetch = 0 : i64, scratch_operands = 0 : i64, tpu.core_type = #tpu.core_type<tc>, window_params = [{transform_indices = @transform_0, window_bounds = array<i64: 128, 128>}, {pipeline_mode = #tpu.pipeline_mode<synchronous>, transform_indices = @transform_1, window_bounds = array<i64: 128, 128>}, {pipeline_mode = #tpu.pipeline_mode<synchronous>, transform_indices = @transform_2, window_bounds = array<i64: 1, 128>}, {transform_indices = @transform_3, window_bounds = array<i64: 128, 128>}, {transform_indices = @transform_4, window_bounds = array<i64: 128, 128>}]} {
    %c0 = arith.constant 0 : index
    %c0_0 = arith.constant 0 : index
    %0 = vector.load %arg1[%c0, %c0_0] : memref<128x128xbf16, #tpu.memory_space<vmem>>, vector<128x128xbf16>
    %c0_1 = arith.constant 0 : index
    %c0_2 = arith.constant 0 : index
    %1 = vector.load %arg2[%c0_1, %c0_2] : memref<128x128xbf16, #tpu.memory_space<vmem>>, vector<128x128xbf16>
    %cst = arith.constant dense<0.000000e+00> : vector<128x128xf32>
    %2 = tpu.matmul %0, %1, %cst {dimension_numbers = #tpu.dot_dimension_numbers<[1], [0], [0], [1], [0, 0, 1, 1], [], []>} : vector<128x128xbf16>, vector<128x128xbf16>, vector<128x128xf32> -> vector<128x128xf32>
    %c0_3 = arith.constant 0 : index
    %c0_4 = arith.constant 0 : index
    %3 = vector.load %arg3[%c0_3, %c0_4] : memref<1x128xf32, #tpu.memory_space<vmem>>, vector<1x128xf32>
    %4 = vector.broadcast %3 : vector<1x128xf32> to vector<128x128xf32>
    %5 = arith.addf %2, %4 : vector<128x128xf32>
    %c0_5 = arith.constant 0 : index
    %c0_6 = arith.constant 0 : index
    %6 = vector.load %arg4[%c0_5, %c0_6] : memref<128x128xbf16, #tpu.memory_space<vmem>>, vector<128x128xbf16>
    %7 = arith.extf %6 : vector<128x128xbf16> to vector<128x128xf32>
    %8 = arith.addf %5, %7 : vector<128x128xf32>
    %cst_7 = arith.constant 0.000000e+00 : f32
    %9 = vector.broadcast %cst_7 : f32 to vector<128x128xf32>
    %10 = arith.maximumf %8, %9 : vector<128x128xf32>
    %11 = arith.truncf %10 : vector<128x128xf32> to vector<128x128xbf16>
    %c0_8 = arith.constant 0 : index
    %c0_9 = arith.constant 0 : index
    %12 = vector.load %arg5[%c0_8, %c0_9] : memref<128x128xbf16, #tpu.memory_space<vmem>>, vector<128x128xbf16>
    tpu.vector_store %arg5[%c0_8, %c0_9], %11 {strides = array<i32>} : memref<128x128xbf16, #tpu.memory_space<vmem>>, vector<128x128xbf16>,
    return
  }
  func.func @transform_0(%arg0: i32) -> (i32, i32) {
    %c0_i32 = arith.constant 0 : i32
    %c0_i32_0 = arith.constant 0 : i32
    return %arg0, %c0_i32 : i32, i32
  }
  func.func @transform_1(%arg0: i32) -> (i32, i32) {
    %c0_i32 = arith.constant 0 : i32
    %c0_i32_0 = arith.constant 0 : i32
    %c0_i32_1 = arith.constant 0 : i32
    return %c0_i32, %c0_i32_0 : i32, i32
  }
  func.func @transform_2(%arg0: i32) -> (i32, i32) {
    %c0_i32 = arith.constant 0 : i32
    %c0_i32_0 = arith.constant 0 : i32
    %c0_i32_1 = arith.constant 0 : i32
    return %c0_i32, %c0_i32_0 : i32, i32
  }
  func.func @transform_3(%arg0: i32) -> (i32, i32) {
    %c0_i32 = arith.constant 0 : i32
    %c0_i32_0 = arith.constant 0 : i32
    return %arg0, %c0_i32 : i32, i32
  }
  func.func @transform_4(%arg0: i32) -> (i32, i32) {
    %c0_i32 = arith.constant 0 : i32
    %c0_i32_0 = arith.constant 0 : i32
    return %arg0, %c0_i32 : i32, i32
  }
}

module attributes {stable_mosaic.version = 11 : i64} {
  func.func @_gap_embed_kernel(%arg0: i32, %arg1: memref<2x64x128xbf16, #tpu.memory_space<vmem>>, %arg2: memref<128x128xf32, #tpu.memory_space<vmem>>, %arg3: memref<1x128xf32, #tpu.memory_space<vmem>>, %arg4: memref<2x128xf32, #tpu.memory_space<vmem>>) attributes {dimension_semantics = [#tpu.dimension_semantics<arbitrary>], iteration_bounds = array<i64: 1>, scalar_prefetch = 0 : i64, scratch_operands = 0 : i64, tpu.core_type = #tpu.core_type<tc>, window_params = [{pipeline_mode = #tpu.pipeline_mode<synchronous>, transform_indices = @transform_0, window_bounds = array<i64: 2, 64, 128>}, {pipeline_mode = #tpu.pipeline_mode<synchronous>, transform_indices = @transform_1, window_bounds = array<i64: 128, 128>}, {pipeline_mode = #tpu.pipeline_mode<synchronous>, transform_indices = @transform_2, window_bounds = array<i64: 1, 128>}, {pipeline_mode = #tpu.pipeline_mode<synchronous>, transform_indices = @transform_3, window_bounds = array<i64: 2, 128>}]} {
    %c0 = arith.constant 0 : index
    %c0_0 = arith.constant 0 : index
    %c0_1 = arith.constant 0 : index
    %0 = vector.load %arg1[%c0, %c0_0, %c0_1] : memref<2x64x128xbf16, #tpu.memory_space<vmem>>, vector<2x64x128xbf16>
    %1 = arith.extf %0 : vector<2x64x128xbf16> to vector<2x64x128xf32>
    %cst = arith.constant dense<0.000000e+00> : vector<2x128xf32>
    %2 = vector.multi_reduction <add>, %1, %cst [1] : vector<2x64x128xf32> to vector<2x128xf32>
    %cst_2 = arith.constant 6.400000e+01 : f32
    %3 = vector.broadcast %cst_2 : f32 to vector<2x128xf32>
    %4 = arith.divf %2, %3 : vector<2x128xf32>
    %c0_3 = arith.constant 0 : index
    %c0_4 = arith.constant 0 : index
    %5 = vector.load %arg2[%c0_3, %c0_4] : memref<128x128xf32, #tpu.memory_space<vmem>>, vector<128x128xf32>
    %cst_5 = arith.constant dense<0.000000e+00> : vector<2x128xf32>
    %6 = tpu.matmul %4, %5, %cst_5 {dimension_numbers = #tpu.dot_dimension_numbers<[1], [0], [0], [1], [0, 0, 1, 1], [], []>} : vector<2x128xf32>, vector<128x128xf32>, vector<2x128xf32> -> vector<2x128xf32>
    %c0_6 = arith.constant 0 : index
    %c0_7 = arith.constant 0 : index
    %7 = vector.load %arg3[%c0_6, %c0_7] : memref<1x128xf32, #tpu.memory_space<vmem>>, vector<1x128xf32>
    %8 = vector.broadcast %7 : vector<1x128xf32> to vector<2x128xf32>
    %9 = arith.addf %6, %8 : vector<2x128xf32>
    %c0_8 = arith.constant 0 : index
    %c0_9 = arith.constant 0 : index
    %10 = vector.load %arg4[%c0_8, %c0_9] : memref<2x128xf32, #tpu.memory_space<vmem>>, vector<2x128xf32>
    tpu.vector_store %arg4[%c0_8, %c0_9], %9 {strides = array<i32>} : memref<2x128xf32, #tpu.memory_space<vmem>>, vector<2x128xf32>,
    return
  }
  func.func @transform_0(%arg0: i32) -> (i32, i32, i32) {
    %c0_i32 = arith.constant 0 : i32
    %c0_i32_0 = arith.constant 0 : i32
    %c0_i32_1 = arith.constant 0 : i32
    %c0_i32_2 = arith.constant 0 : i32
    return %c0_i32, %c0_i32_0, %c0_i32_1 : i32, i32, i32
  }
  func.func @transform_1(%arg0: i32) -> (i32, i32) {
    %c0_i32 = arith.constant 0 : i32
    %c0_i32_0 = arith.constant 0 : i32
    %c0_i32_1 = arith.constant 0 : i32
    return %c0_i32, %c0_i32_0 : i32, i32
  }
  func.func @transform_2(%arg0: i32) -> (i32, i32) {
    %c0_i32 = arith.constant 0 : i32
    %c0_i32_0 = arith.constant 0 : i32
    %c0_i32_1 = arith.constant 0 : i32
    return %c0_i32, %c0_i32_0 : i32, i32
  }
  func.func @transform_3(%arg0: i32) -> (i32, i32) {
    %c0_i32 = arith.constant 0 : i32
    %c0_i32_0 = arith.constant 0 : i32
    %c0_i32_1 = arith.constant 0 : i32
    return %c0_i32, %c0_i32_0 : i32, i32
  }
}

</mosaic_0001>

<llo_original>
// kernel: encoder_cnn_forward.10
$region0: #{encoder_cnn_forward.10}
  #allocation0 [shape = 'u32[]', space=smem, size = 0x4, offset = 0x4, fixed_abs, tag = 'smem constant byte address 0x4 - core index']
  #allocation1 [shape = 'u32[144,128]{1,0:T(1,128)}', space=vmem, size = 0x12000, scoped, tag = 'internal scratch']
  %s0 = inlined_call_operand.vmem [shape: bf16[512,256], index: 0, kind: input, shape index: {}]
  %s1 = inlined_call_operand.vmem [shape: bf16[256,128], index: 1, kind: input, shape index: {}]
  %s2 = inlined_call_operand.vmem [shape: f32[1,128], index: 2, kind: input, shape index: {}]
  %s3 = inlined_call_operand.vmem [shape: bf16[512,128], index: 3, kind: output, shape index: {}]
  %s4 = sld [smem:[#allocation0]]
  $region22: #{encoder_cnn_forward.10} parent=0
    _
  %s6 = ssub.s32 1, %s4
  %s7 = scalar_select 0, %s6, %s4
  // Predicated region
  $region2: #{encoder_cnn_forward.10} parent=0 // pred_check
    _
  $region3: #{encoder_cnn_forward.10} parent=0 // pred_check_branch
    %9 = sbr.rel (0) target = $region5
  $region4: #{encoder_cnn_forward.10} parent=0 // pred_region
    _
  $region5: #{encoder_cnn_forward.10} parent=0 // pred_fallthru
    _
  // Predicated region
  $region6: #{encoder_cnn_forward.10} parent=0 // pred_check
    _
  $region7: #{encoder_cnn_forward.10} parent=0 // pred_check_branch
    %11 = sbr.rel (0) target = $region9
  $region8: #{encoder_cnn_forward.10} parent=0 // pred_region
    _
  $region9: #{encoder_cnn_forward.10} parent=0 // pred_fallthru
    _
  // Predicated region
  $region10: #{encoder_cnn_forward.10} parent=0 // pred_check
    _
  $region11: #{encoder_cnn_forward.10} parent=0 // pred_check_branch
    %13 = sbr.rel (0) target = $region13
  $region12: #{encoder_cnn_forward.10} parent=0 // pred_region
    _
  $region13: #{encoder_cnn_forward.10} parent=0 // pred_fallthru
    _
  %v15 = vld [vmem:[%s0] sm:$0xff]
  %v16 = vld [vmem:[%s0 + $0x8] sm:$0xff]
  %v17 = vld [vmem:[%s0 + $0x10] sm:$0xff]
  %v18 = vld [vmem:[%s0 + $0x18] sm:$0xff]
  %v19 = vld [vmem:[%s0 + $0x20] sm:$0xff]
  %v20 = vld [vmem:[%s0 + $0x28] sm:$0xff]
  %v21 = vld [vmem:[%s0 + $0x30] sm:$0xff]
  %v22 = vld [vmem:[%s0 + $0x38] sm:$0xff]
  %v23 = vld [vmem:[%s0 + $0x40] sm:$0xff]
  %v24 = vld [vmem:[%s0 + $0x48] sm:$0xff]
  %v25 = vld [vmem:[%s0 + $0x50] sm:$0xff]
  %v26 = vld [vmem:[%s0 + $0x58] sm:$0xff]
  %v27 = vld [vmem:[%s0 + $0x60] sm:$0xff]
  %v28 = vld [vmem:[%s0 + $0x68] sm:$0xff]
  %v29 = vld [vmem:[%s0 + $0x70] sm:$0xff]
  %v30 = vld [vmem:[%s0 + $0x78] sm:$0xff]
  %v31 = vld [vmem:[%s0 + $0x80] sm:$0xff]
  %v32 = vld [vmem:[%s0 + $0x88] sm:$0xff]
  %v33 = vld [vmem:[%s0 + $0x90] sm:$0xff]
  %v34 = vld [vmem:[%s0 + $0x98] sm:$0xff]
  %v35 = vld [vmem:[%s0 + $0xa0] sm:$0xff]
  %v36 = vld [vmem:[%s0 + $0xa8] sm:$0xff]
  %v37 = vld [vmem:[%s0 + $0xb0] sm:$0xff]
  %v38 = vld [vmem:[%s0 + $0xb8] sm:$0xff]
  %v39 = vld [vmem:[%s0 + $0xc0] sm:$0xff]
  %v40 = vld [vmem:[%s0 + $0xc8] sm:$0xff]
  %v41 = vld [vmem:[%s0 + $0xd0] sm:$0xff]
  %v42 = vld [vmem:[%s0 + $0xd8] sm:$0xff]
  %v43 = vld [vmem:[%s0 + $0xe0] sm:$0xff]
  %v44 = vld [vmem:[%s0 + $0xe8] sm:$0xff]
  %v45 = vld [vmem:[%s0 + $0xf0] sm:$0xff]
  %v46 = vld [vmem:[%s0 + $0xf8] sm:$0xff]
  %v47 = vld [vmem:[%s0 + $0x100] sm:$0xff]
  %v48 = vld [vmem:[%s0 + $0x108] sm:$0xff]
  %v49 = vld [vmem:[%s0 + $0x110] sm:$0xff]
  %v50 = vld [vmem:[%s0 + $0x118] sm:$0xff]
  %v51 = vld [vmem:[%s0 + $0x120] sm:$0xff]
  %v52 = vld [vmem:[%s0 + $0x128] sm:$0xff]
  %v53 = vld [vmem:[%s0 + $0x130] sm:$0xff]
  %v54 = vld [vmem:[%s0 + $0x138] sm:$0xff]
  %v55 = vld [vmem:[%s0 + $0x140] sm:$0xff]
  %v56 = vld [vmem:[%s0 + $0x148] sm:$0xff]
  %v57 = vld [vmem:[%s0 + $0x150] sm:$0xff]
  %v58 = vld [vmem:[%s0 + $0x158] sm:$0xff]
  %v59 = vld [vmem:[%s0 + $0x160] sm:$0xff]
  %v60 = vld [vmem:[%s0 + $0x168] sm:$0xff]
  %v61 = vld [vmem:[%s0 + $0x170] sm:$0xff]
  %v62 = vld [vmem:[%s0 + $0x178] sm:$0xff]
  %v63 = vld [vmem:[%s0 + $0x180] sm:$0xff]
  %v64 = vld [vmem:[%s0 + $0x188] sm:$0xff]
  %v65 = vld [vmem:[%s0 + $0x190] sm:$0xff]
  %v66 = vld [vmem:[%s0 + $0x198] sm:$0xff]
  %v67 = vld [vmem:[%s0 + $0x1a0] sm:$0xff]
  %v68 = vld [vmem:[%s0 + $0x1a8] sm:$0xff]
  %v69 = vld [vmem:[%s0 + $0x1b0] sm:$0xff]
  %v70 = vld [vmem:[%s0 + $0x1b8] sm:$0xff]
  %v71 = vld [vmem:[%s0 + $0x1c0] sm:$0xff]
  %v72 = vld [vmem:[%s0 + $0x1c8] sm:$0xff]
  %v73 = vld [vmem:[%s0 + $0x1d0] sm:$0xff]
  %v74 = vld [vmem:[%s0 + $0x1d8] sm:$0xff]
  %v75 = vld [vmem:[%s0 + $0x1e0] sm:$0xff]
  %v76 = vld [vmem:[%s0 + $0x1e8] sm:$0xff]
  %v77 = vld [vmem:[%s0 + $0x1f0] sm:$0xff]
  %v78 = vld [vmem:[%s0 + $0x1f8] sm:$0xff]
  %v79 = vld [vmem:[%s1] sm:$0xf]
  %v80 = vld [vmem:[%s1 + $0x4] sm:$0xf]
  %v81 = vld [vmem:[%s1 + $0x8] sm:$0xf]
  %v82 = vld [vmem:[%s1 + $0xc] sm:$0xf]
  %v83 = vld [vmem:[%s1 + $0x10] sm:$0xf]
  %v84 = vld [vmem:[%s1 + $0x14] sm:$0xf]
  %v85 = vld [vmem:[%s1 + $0x18] sm:$0xf]
  %v86 = vld [vmem:[%s1 + $0x1c] sm:$0xf]
  %v87 = vld [vmem:[%s1 + $0x20] sm:$0xf]
  %v88 = vld [vmem:[%s1 + $0x24] sm:$0xf]
  %v89 = vld [vmem:[%s1 + $0x28] sm:$0xf]
  %v90 = vld [vmem:[%s1 + $0x2c] sm:$0xf]
  %v91 = vld [vmem:[%s1 + $0x30] sm:$0xf]
  %v92 = vld [vmem:[%s1 + $0x34] sm:$0xf]
  %v93 = vld [vmem:[%s1 + $0x38] sm:$0xf]
  %v94 = vld [vmem:[%s1 + $0x3c] sm:$0xf]
  %v95 = vld [vmem:[%s1 + $0x40] sm:$0xf]
  %v96 = vld [vmem:[%s1 + $0x44] sm:$0xf]
  %v97 = vld [vmem:[%s1 + $0x48] sm:$0xf]
  %v98 = vld [vmem:[%s1 + $0x4c] sm:$0xf]
  %v99 = vld [vmem:[%s1 + $0x50] sm:$0xf]
  %v100 = vld [vmem:[%s1 + $0x54] sm:$0xf]
  %v101 = vld [vmem:[%s1 + $0x58] sm:$0xf]
  %v102 = vld [vmem:[%s1 + $0x5c] sm:$0xf]
  %v103 = vld [vmem:[%s1 + $0x60] sm:$0xf]
  %v104 = vld [vmem:[%s1 + $0x64] sm:$0xf]
  %v105 = vld [vmem:[%s1 + $0x68] sm:$0xf]
  %v106 = vld [vmem:[%s1 + $0x6c] sm:$0xf]
  %v107 = vld [vmem:[%s1 + $0x70] sm:$0xf]
  %v108 = vld [vmem:[%s1 + $0x74] sm:$0xf]
  %v109 = vld [vmem:[%s1 + $0x78] sm:$0xf]
  %v110 = vld [vmem:[%s1 + $0x7c] sm:$0xf]
  %v111 = vld [vmem:[%s2] sm:$0x1]
  %v113 = vlaneseq
  %v114 = vshrl.u32 %v113, 7
  %v115 = vsub.s32 0, %v114
  %v116 = vrot.slane %v111, %v115
  %v182 = vunpack.c.l.b16 %v15
  %v183 = vunpack.c.h.b16 %v15
  %v184 = vunpack.c.l.b16 %v16
  %v185 = vunpack.c.h.b16 %v16
  %v186 = vunpack.c.l.b16 %v17
  %v187 = vunpack.c.h.b16 %v17
  %v188 = vunpack.c.l.b16 %v18
  %v189 = vunpack.c.h.b16 %v18
  %v190 = vunpack.c.l.b16 %v19
  %v191 = vunpack.c.h.b16 %v19
  %v192 = vunpack.c.l.b16 %v20
  %v193 = vunpack.c.h.b16 %v20
  %v194 = vunpack.c.l.b16 %v21
  %v195 = vunpack.c.h.b16 %v21
  %v196 = vunpack.c.l.b16 %v22
  %v197 = vunpack.c.h.b16 %v22
  %v198 = vunpack.c.l.b16 %v23
  %v199 = vunpack.c.h.b16 %v23
  %v200 = vunpack.c.l.b16 %v24
  %v201 = vunpack.c.h.b16 %v24
  %v202 = vunpack.c.l.b16 %v25
  %v203 = vunpack.c.h.b16 %v25
  %v204 = vunpack.c.l.b16 %v26
  %v205 = vunpack.c.h.b16 %v26
  %v206 = vunpack.c.l.b16 %v27
  %v207 = vunpack.c.h.b16 %v27
  %v208 = vunpack.c.l.b16 %v28
  %v209 = vunpack.c.h.b16 %v28
  %v210 = vunpack.c.l.b16 %v29
  %v211 = vunpack.c.h.b16 %v29
  %v212 = vunpack.c.l.b16 %v30
  %v213 = vunpack.c.h.b16 %v30
  %v214 = vunpack.c.l.b16 %v31
  %v215 = vunpack.c.h.b16 %v31
  %v216 = vunpack.c.l.b16 %v32
  %v217 = vunpack.c.h.b16 %v32
  %v218 = vunpack.c.l.b16 %v33
  %v219 = vunpack.c.h.b16 %v33
  %v220 = vunpack.c.l.b16 %v34
  %v221 = vunpack.c.h.b16 %v34
  %v222 = vunpack.c.l.b16 %v35
  %v223 = vunpack.c.h.b16 %v35
  %v224 = vunpack.c.l.b16 %v36
  %v225 = vunpack.c.h.b16 %v36
  %v226 = vunpack.c.l.b16 %v37
  %v227 = vunpack.c.h.b16 %v37
  %v228 = vunpack.c.l.b16 %v38
  %v229 = vunpack.c.h.b16 %v38
  %v230 = vunpack.c.l.b16 %v39
  %v231 = vunpack.c.h.b16 %v39
  %v232 = vunpack.c.l.b16 %v40
  %v233 = vunpack.c.h.b16 %v40
  %v234 = vunpack.c.l.b16 %v41
  %v235 = vunpack.c.h.b16 %v41
  %v236 = vunpack.c.l.b16 %v42
  %v237 = vunpack.c.h.b16 %v42
  %v238 = vunpack.c.l.b16 %v43
  %v239 = vunpack.c.h.b16 %v43
  %v240 = vunpack.c.l.b16 %v44
  %v241 = vunpack.c.h.b16 %v44
  %v242 = vunpack.c.l.b16 %v45
  %v243 = vunpack.c.h.b16 %v45
  %v244 = vunpack.c.l.b16 %v46
  %v245 = vunpack.c.h.b16 %v46
  %v246 = vunpack.c.l.b16 %v47
  %v247 = vunpack.c.h.b16 %v47
  %v248 = vunpack.c.l.b16 %v48
  %v249 = vunpack.c.h.b16 %v48
  %v250 = vunpack.c.l.b16 %v49
  %v251 = vunpack.c.h.b16 %v49
  %v252 = vunpack.c.l.b16 %v50
  %v253 = vunpack.c.h.b16 %v50
  %v254 = vunpack.c.l.b16 %v51
  %v255 = vunpack.c.h.b16 %v51
  %v256 = vunpack.c.l.b16 %v52
  %v257 = vunpack.c.h.b16 %v52
  %v258 = vunpack.c.l.b16 %v53
  %v259 = vunpack.c.h.b16 %v53
  %v260 = vunpack.c.l.b16 %v54
  %v261 = vunpack.c.h.b16 %v54
  %v262 = vunpack.c.l.b16 %v55
  %v263 = vunpack.c.h.b16 %v55
  %v264 = vunpack.c.l.b16 %v56
  %v265 = vunpack.c.h.b16 %v56
  %v266 = vunpack.c.l.b16 %v57
  %v267 = vunpack.c.h.b16 %v57
  %v268 = vunpack.c.l.b16 %v58
  %v269 = vunpack.c.h.b16 %v58
  %v270 = vunpack.c.l.b16 %v59
  %v271 = vunpack.c.h.b16 %v59
  %v272 = vunpack.c.l.b16 %v60
  %v273 = vunpack.c.h.b16 %v60
  %v274 = vunpack.c.l.b16 %v61
  %v275 = vunpack.c.h.b16 %v61
  %v276 = vunpack.c.l.b16 %v62
  %v277 = vunpack.c.h.b16 %v62
  %v278 = vunpack.c.l.b16 %v63
  %v279 = vunpack.c.h.b16 %v63
  %v280 = vunpack.c.l.b16 %v64
  %v281 = vunpack.c.h.b16 %v64
  %v282 = vunpack.c.l.b16 %v65
  %v283 = vunpack.c.h.b16 %v65
  %v284 = vunpack.c.l.b16 %v66
  %v285 = vunpack.c.h.b16 %v66
  %v286 = vunpack.c.l.b16 %v67
  %v287 = vunpack.c.h.b16 %v67
  %v288 = vunpack.c.l.b16 %v68
  %v289 = vunpack.c.h.b16 %v68
  %v290 = vunpack.c.l.b16 %v69
  %v291 = vunpack.c.h.b16 %v69
  %v292 = vunpack.c.l.b16 %v70
  %v293 = vunpack.c.h.b16 %v70
  %v294 = vunpack.c.l.b16 %v71
  %v295 = vunpack.c.h.b16 %v71
  %v296 = vunpack.c.l.b16 %v72
  %v297 = vunpack.c.h.b16 %v72
  %v298 = vunpack.c.l.b16 %v73
  %v299 = vunpack.c.h.b16 %v73
  %v300 = vunpack.c.l.b16 %v74
  %v301 = vunpack.c.h.b16 %v74
  %v302 = vunpack.c.l.b16 %v75
  %v303 = vunpack.c.h.b16 %v75
  %v304 = vunpack.c.l.b16 %v76
  %v305 = vunpack.c.h.b16 %v76
  %v306 = vunpack.c.l.b16 %v77
  %v307 = vunpack.c.h.b16 %v77
  %v308 = vunpack.c.l.b16 %v78
  %v309 = vunpack.c.h.b16 %v78
  %v310 = vpack.c.b16 %v184, %v182
  %v311 = vpack.c.b16 %v185, %v183
  %v312 = vpack.c.b16 %v188, %v186
  %v313 = vpack.c.b16 %v189, %v187
  %v314 = vpack.c.b16 %v192, %v190
  %v315 = vpack.c.b16 %v193, %v191
  %v316 = vpack.c.b16 %v196, %v194
  %v317 = vpack.c.b16 %v197, %v195
  %v318 = vpack.c.b16 %v200, %v198
  %v319 = vpack.c.b16 %v201, %v199
  %v320 = vpack.c.b16 %v204, %v202
  %v321 = vpack.c.b16 %v205, %v203
  %v322 = vpack.c.b16 %v208, %v206
  %v323 = vpack.c.b16 %v209, %v207
  %v324 = vpack.c.b16 %v212, %v210
  %v325 = vpack.c.b16 %v213, %v211
  %v326 = vpack.c.b16 %v216, %v214
  %v327 = vpack.c.b16 %v217, %v215
  %v328 = vpack.c.b16 %v220, %v218
  %v329 = vpack.c.b16 %v221, %v219
  %v330 = vpack.c.b16 %v224, %v222
  %v331 = vpack.c.b16 %v225, %v223
  %v332 = vpack.c.b16 %v228, %v226
  %v333 = vpack.c.b16 %v229, %v227
  %v334 = vpack.c.b16 %v232, %v230
  %v335 = vpack.c.b16 %v233, %v231
  %v336 = vpack.c.b16 %v236, %v234
  %v337 = vpack.c.b16 %v237, %v235
  %v338 = vpack.c.b16 %v240, %v238
  %v339 = vpack.c.b16 %v241, %v239
  %v340 = vpack.c.b16 %v244, %v242
  %v341 = vpack.c.b16 %v245, %v243
  %v342 = vpack.c.b16 %v248, %v246
  %v343 = vpack.c.b16 %v249, %v247
  %v344 = vpack.c.b16 %v252, %v250
  %v345 = vpack.c.b16 %v253, %v251
  %v346 = vpack.c.b16 %v256, %v254
  %v347 = vpack.c.b16 %v257, %v255
  %v348 = vpack.c.b16 %v260, %v258
  %v349 = vpack.c.b16 %v261, %v259
  %v350 = vpack.c.b16 %v264, %v262
  %v351 = vpack.c.b16 %v265, %v263
  %v352 = vpack.c.b16 %v268, %v266
  %v353 = vpack.c.b16 %v269, %v267
  %v354 = vpack.c.b16 %v272, %v270
  %v355 = vpack.c.b16 %v273, %v271
  %v356 = vpack.c.b16 %v276, %v274
  %v357 = vpack.c.b16 %v277, %v275
  %v358 = vpack.c.b16 %v280, %v278
  %v359 = vpack.c.b16 %v281, %v279
  %v360 = vpack.c.b16 %v284, %v282
  %v361 = vpack.c.b16 %v285, %v283
  %v362 = vpack.c.b16 %v288, %v286
  %v363 = vpack.c.b16 %v289, %v287
  %v364 = vpack.c.b16 %v292, %v290
  %v365 = vpack.c.b16 %v293, %v291
  %v366 = vpack.c.b16 %v296, %v294
  %v367 = vpack.c.b16 %v297, %v295
  %v368 = vpack.c.b16 %v300, %v298
  %v369 = vpack.c.b16 %v301, %v299
  %v370 = vpack.c.b16 %v304, %v302
  %v371 = vpack.c.b16 %v305, %v303
  %v372 = vpack.c.b16 %v308, %v306
  %v373 = vpack.c.b16 %v309, %v307
  %v470 = vunpack.c.l.b16 %v79
  %v471 = vunpack.c.l.b16 %v80
  %v472 = vunpack.c.l.b16 %v81
  %v473 = vunpack.c.l.b16 %v82
  %v474 = vunpack.c.l.b16 %v83
  %v475 = vunpack.c.l.b16 %v84
  %v476 = vunpack.c.l.b16 %v85
  %v477 = vunpack.c.l.b16 %v86
  %v478 = vunpack.c.l.b16 %v87
  %v479 = vunpack.c.l.b16 %v88
  %v480 = vunpack.c.l.b16 %v89
  %v481 = vunpack.c.l.b16 %v90
  %v482 = vunpack.c.l.b16 %v91
  %v483 = vunpack.c.l.b16 %v92
  %v484 = vunpack.c.l.b16 %v93
  %v485 = vunpack.c.l.b16 %v94
  %v486 = vunpack.c.l.b16 %v95
  %v487 = vunpack.c.l.b16 %v96
  %v488 = vunpack.c.l.b16 %v97
  %v489 = vunpack.c.l.b16 %v98
  %v490 = vunpack.c.l.b16 %v99
  %v491 = vunpack.c.l.b16 %v100
  %v492 = vunpack.c.l.b16 %v101
  %v493 = vunpack.c.l.b16 %v102
  %v494 = vunpack.c.l.b16 %v103
  %v495 = vunpack.c.l.b16 %v104
  %v496 = vunpack.c.l.b16 %v105
  %v497 = vunpack.c.l.b16 %v106
  %v498 = vunpack.c.l.b16 %v107
  %v499 = vunpack.c.l.b16 %v108
  %v500 = vunpack.c.l.b16 %v109
  %v501 = vunpack.c.l.b16 %v110
  %v502 = vpack.c.b16 %v471, %v470
  %v503 = vpack.c.b16 %v473, %v472
  %v504 = vpack.c.b16 %v475, %v474
  %v505 = vpack.c.b16 %v477, %v476
  %v506 = vpack.c.b16 %v479, %v478
  %v507 = vpack.c.b16 %v481, %v480
  %v508 = vpack.c.b16 %v483, %v482
  %v509 = vpack.c.b16 %v485, %v484
  %v510 = vpack.c.b16 %v487, %v486
  %v511 = vpack.c.b16 %v489, %v488
  %v512 = vpack.c.b16 %v491, %v490
  %v513 = vpack.c.b16 %v493, %v492
  %v514 = vpack.c.b16 %v495, %v494
  %v515 = vpack.c.b16 %v497, %v496
  %v516 = vpack.c.b16 %v499, %v498
  %v517 = vpack.c.b16 %v501, %v500
  %534 = vmatprep.subr.bf16.mxu0 0
  %535 = vmatpush1.bf16.msra.mxu0 %v509
  %536 = vmatprep.subr.bf16.mxu0 0
  %537 = vmatpush1.bf16.msra.mxu0 %v508
  %538 = vmatprep.subr.bf16.mxu0 0
  %539 = vmatpush1.bf16.msra.mxu0 %v507
  %540 = vmatprep.subr.bf16.mxu0 0
  %541 = vmatpush1.bf16.msra.mxu0 %v506
  %542 = vmatprep.subr.bf16.mxu0 0
  %543 = vmatpush1.bf16.msra.mxu0 %v505
  %544 = vmatprep.subr.bf16.mxu0 0
  %545 = vmatpush1.bf16.msra.mxu0 %v504
  %546 = vmatprep.subr.bf16.mxu0 0
  %547 = vmatpush1.bf16.msra.mxu0 %v503
  %548 = vmatprep.subr.bf16.mxu0 0
  %549 = vmatpush1.bf16.msra.mxu0 %v502
  %550 = vmatprep.subr.bf16.mxu0 0
  %551 = vmatpush2.bf16.msra.mxu0 %v517
  %552 = vmatprep.subr.bf16.mxu0 0
  %553 = vmatpush2.bf16.msra.mxu0 %v516
  %554 = vmatprep.subr.bf16.mxu0 0
  %555 = vmatpush2.bf16.msra.mxu0 %v515
  %556 = vmatprep.subr.bf16.mxu0 0
  %557 = vmatpush2.bf16.msra.mxu0 %v514
  %558 = vmatprep.subr.bf16.mxu0 0
  %559 = vmatpush2.bf16.msra.mxu0 %v513
  %560 = vmatprep.subr.bf16.mxu0 0
  %561 = vmatpush2.bf16.msra.mxu0 %v512
  %562 = vmatprep.subr.bf16.mxu0 0
  %563 = vmatpush2.bf16.msra.mxu0 %v511
  %564 = vmatprep.subr.bf16.mxu0 0
  %565 = vmatpush2.bf16.msra.mxu0 %v510
  %566 = vmatprep.mubr.bf16.mxu0 %v311
  %567 = vmatmul.mubr.bf16.gmra.mxu0 %v310
  %v568 = vpop.f32.mrf.mxu0
  %v569 = vadd.f32 %v116, %v568
  %v570 = vpop.f32.mrf.mxu0
  %v571 = vpop.f32.mrf.mxu0
  %v572 = vadd.f32 %v116, %v571
  %v573 = vpop.f32.mrf.mxu0
  %574 = vmatprep.mubr.bf16.mxu0 %v313
  %575 = vmatmul.mubr.bf16.gmra.mxu0 %v312
  %v576 = vpop.f32.mrf.mxu0
  %v577 = vadd.f32 %v116, %v576
  %v578 = vpop.f32.mrf.mxu0
  %v579 = vpop.f32.mrf.mxu0
  %v580 = vadd.f32 %v116, %v579
  %v581 = vpop.f32.mrf.mxu0
  %582 = vmatprep.mubr.bf16.mxu0 %v315
  %583 = vmatmul.mubr.bf16.gmra.mxu0 %v314
  %v584 = vpop.f32.mrf.mxu0
  %v585 = vadd.f32 %v116, %v584
  %v586 = vpop.f32.mrf.mxu0
  %v587 = vpop.f32.mrf.mxu0
  %v588 = vadd.f32 %v116, %v587
  %v589 = vpop.f32.mrf.mxu0
  %590 = vmatprep.mubr.bf16.mxu0 %v317
  %591 = vmatmul.mubr.bf16.gmra.mxu0 %v316
  %v592 = vpop.f32.mrf.mxu0
  %v593 = vadd.f32 %v116, %v592
  %v594 = vpop.f32.mrf.mxu0
  %v595 = vpop.f32.mrf.mxu0
  %v596 = vadd.f32 %v116, %v595
  %v597 = vpop.f32.mrf.mxu0
  %598 = vmatprep.mubr.bf16.mxu0 %v319
  %599 = vmatmul.mubr.bf16.gmra.mxu0 %v318
  %v600 = vpop.f32.mrf.mxu0
  %v601 = vadd.f32 %v116, %v600
  %v602 = vpop.f32.mrf.mxu0
  %v603 = vpop.f32.mrf.mxu0
  %v604 = vadd.f32 %v116, %v603
  %v605 = vpop.f32.mrf.mxu0
  %606 = vmatprep.mubr.bf16.mxu0 %v321
  %607 = vmatmul.mubr.bf16.gmra.mxu0 %v320
  %v608 = vpop.f32.mrf.mxu0
  %v609 = vadd.f32 %v116, %v608
  %v610 = vpop.f32.mrf.mxu0
  %v611 = vpop.f32.mrf.mxu0
  %v612 = vadd.f32 %v116, %v611
  %v613 = vpop.f32.mrf.mxu0
  %614 = vmatprep.mubr.bf16.mxu0 %v323
  %615 = vmatmul.mubr.bf16.gmra.mxu0 %v322
  %v616 = vpop.f32.mrf.mxu0
  %v617 = vadd.f32 %v116, %v616
  %v618 = vpop.f32.mrf.mxu0
  %v619 = vpop.f32.mrf.mxu0
  %v620 = vadd.f32 %v116, %v619
  %v621 = vpop.f32.mrf.mxu0
  %622 = vmatprep.mubr.bf16.mxu0 %v325
  %623 = vmatmul.mubr.bf16.gmra.mxu0 %v324
  %v624 = vpop.f32.mrf.mxu0
  %v625 = vadd.f32 %v116, %v624
  %v626 = vpop.f32.mrf.mxu0
  %v627 = vpop.f32.mrf.mxu0
  %v628 = vadd.f32 %v116, %v627
  %v629 = vpop.f32.mrf.mxu0
  %630 = vmatprep.mubr.bf16.mxu0 %v327
  %631 = vmatmul.mubr.bf16.gmra.mxu0 %v326
  %v632 = vpop.f32.mrf.mxu0
  %v633 = vadd.f32 %v116, %v632
  %v634 = vpop.f32.mrf.mxu0
  %v635 = vpop.f32.mrf.mxu0
  %v636 = vadd.f32 %v116, %v635
  %v637 = vpop.f32.mrf.mxu0
  %638 = vmatprep.mubr.bf16.mxu0 %v329
  %639 = vmatmul.mubr.bf16.gmra.mxu0 %v328
  %v640 = vpop.f32.mrf.mxu0
  %v641 = vadd.f32 %v116, %v640
  %v642 = vpop.f32.mrf.mxu0
  %v643 = vpop.f32.mrf.mxu0
  %v644 = vadd.f32 %v116, %v643
  %v645 = vpop.f32.mrf.mxu0
  %646 = vmatprep.mubr.bf16.mxu0 %v331
  %647 = vmatmul.mubr.bf16.gmra.mxu0 %v330
  %v648 = vpop.f32.mrf.mxu0
  %v649 = vadd.f32 %v116, %v648
  %v650 = vpop.f32.mrf.mxu0
  %v651 = vpop.f32.mrf.mxu0
  %v652 = vadd.f32 %v116, %v651
  %v653 = vpop.f32.mrf.mxu0
  %654 = vmatprep.mubr.bf16.mxu0 %v333
  %655 = vmatmul.mubr.bf16.gmra.mxu0 %v332
  %v656 = vpop.f32.mrf.mxu0
  %v657 = vadd.f32 %v116, %v656
  %v658 = vpop.f32.mrf.mxu0
  %v659 = vpop.f32.mrf.mxu0
  %v660 = vadd.f32 %v116, %v659
  %v661 = vpop.f32.mrf.mxu0
  %662 = vmatprep.mubr.bf16.mxu0 %v335
  %663 = vmatmul.mubr.bf16.gmra.mxu0 %v334
  %v664 = vpop.f32.mrf.mxu0
  %v665 = vadd.f32 %v116, %v664
  %v666 = vpop.f32.mrf.mxu0
  %v667 = vpop.f32.mrf.mxu0
  %v668 = vadd.f32 %v116, %v667
  %v669 = vpop.f32.mrf.mxu0
  %670 = vmatprep.mubr.bf16.mxu0 %v337
  %671 = vmatmul.mubr.bf16.gmra.mxu0 %v336
  %v672 = vpop.f32.mrf.mxu0
  %v673 = vadd.f32 %v116, %v672
  %v674 = vpop.f32.mrf.mxu0
  %v675 = vpop.f32.mrf.mxu0
  %v676 = vadd.f32 %v116, %v675
  %v677 = vpop.f32.mrf.mxu0
  %678 = vmatprep.mubr.bf16.mxu0 %v339
  %679 = vmatmul.mubr.bf16.gmra.mxu0 %v338
  %v680 = vpop.f32.mrf.mxu0
  %v681 = vadd.f32 %v116, %v680
  %v682 = vpop.f32.mrf.mxu0
  %v683 = vpop.f32.mrf.mxu0
  %v684 = vadd.f32 %v116, %v683
  %v685 = vpop.f32.mrf.mxu0
  %686 = vmatprep.mubr.bf16.mxu0 %v341
  %687 = vmatmul.mubr.bf16.gmra.mxu0 %v340
  %v688 = vpop.f32.mrf.mxu0
  %v689 = vadd.f32 %v116, %v688
  %v690 = vpop.f32.mrf.mxu0
  %v691 = vpop.f32.mrf.mxu0
  %v692 = vadd.f32 %v116, %v691
  %v693 = vpop.f32.mrf.mxu0
  %694 = vmatprep.mubr.bf16.mxu0 %v343
  %695 = vmatmul.mubr.bf16.gmra.mxu0 %v342
  %v696 = vpop.f32.mrf.mxu0
  %v697 = vadd.f32 %v116, %v696
  %v698 = vpop.f32.mrf.mxu0
  %v699 = vpop.f32.mrf.mxu0
  %v700 = vadd.f32 %v116, %v699
  %v701 = vpop.f32.mrf.mxu0
  %702 = vmatprep.mubr.bf16.mxu0 %v345
  %703 = vmatmul.mubr.bf16.gmra.mxu0 %v344
  %v704 = vpop.f32.mrf.mxu0
  %v705 = vadd.f32 %v116, %v704
  %v706 = vpop.f32.mrf.mxu0
  %v707 = vpop.f32.mrf.mxu0
  %v708 = vadd.f32 %v116, %v707
  %v709 = vpop.f32.mrf.mxu0
  %710 = vmatprep.mubr.bf16.mxu0 %v347
  %711 = vmatmul.mubr.bf16.gmra.mxu0 %v346
  %v712 = vpop.f32.mrf.mxu0
  %v713 = vadd.f32 %v116, %v712
  %v714 = vpop.f32.mrf.mxu0
  %v715 = vpop.f32.mrf.mxu0
  %v716 = vadd.f32 %v116, %v715
  %v717 = vpop.f32.mrf.mxu0
  %718 = vmatprep.mubr.bf16.mxu0 %v349
  %719 = vmatmul.mubr.bf16.gmra.mxu0 %v348
  %v720 = vpop.f32.mrf.mxu0
  %v721 = vadd.f32 %v116, %v720
  %v722 = vpop.f32.mrf.mxu0
  %v723 = vpop.f32.mrf.mxu0
  %v724 = vadd.f32 %v116, %v723
  %v725 = vpop.f32.mrf.mxu0
  %726 = vmatprep.mubr.bf16.mxu0 %v351
  %727 = vmatmul.mubr.bf16.gmra.mxu0 %v350
  %v728 = vpop.f32.mrf.mxu0
  %v729 = vadd.f32 %v116, %v728
  %v730 = vpop.f32.mrf.mxu0
  %v731 = vpop.f32.mrf.mxu0
  %v732 = vadd.f32 %v116, %v731
  %v733 = vpop.f32.mrf.mxu0
  %734 = vmatprep.mubr.bf16.mxu0 %v353
  %735 = vmatmul.mubr.bf16.gmra.mxu0 %v352
  %v736 = vpop.f32.mrf.mxu0
  %v737 = vadd.f32 %v116, %v736
  %v738 = vpop.f32.mrf.mxu0
  %v739 = vpop.f32.mrf.mxu0
  %v740 = vadd.f32 %v116, %v739
  %v741 = vpop.f32.mrf.mxu0
  %742 = vmatprep.mubr.bf16.mxu0 %v355
  %743 = vmatmul.mubr.bf16.gmra.mxu0 %v354
  %v744 = vpop.f32.mrf.mxu0
  %v745 = vadd.f32 %v116, %v744
  %v746 = vpop.f32.mrf.mxu0
  %v747 = vpop.f32.mrf.mxu0
  %v748 = vadd.f32 %v116, %v747
  %v749 = vpop.f32.mrf.mxu0
  %750 = vmatprep.mubr.bf16.mxu0 %v357
  %751 = vmatmul.mubr.bf16.gmra.mxu0 %v356
  %v752 = vpop.f32.mrf.mxu0
  %v753 = vadd.f32 %v116, %v752
  %v754 = vpop.f32.mrf.mxu0
  %v755 = vpop.f32.mrf.mxu0
  %v756 = vadd.f32 %v116, %v755
  %v757 = vpop.f32.mrf.mxu0
  %758 = vmatprep.mubr.bf16.mxu0 %v359
  %759 = vmatmul.mubr.bf16.gmra.mxu0 %v358
  %v760 = vpop.f32.mrf.mxu0
  %v761 = vadd.f32 %v116, %v760
  %v762 = vpop.f32.mrf.mxu0
  %v763 = vpop.f32.mrf.mxu0
  %v764 = vadd.f32 %v116, %v763
  %v765 = vpop.f32.mrf.mxu0
  %766 = vmatprep.mubr.bf16.mxu0 %v361
  %767 = vmatmul.mubr.bf16.gmra.mxu0 %v360
  %v768 = vpop.f32.mrf.mxu0
  %v769 = vadd.f32 %v116, %v768
  %v770 = vpop.f32.mrf.mxu0
  %v771 = vpop.f32.mrf.mxu0
  %v772 = vadd.f32 %v116, %v771
  %v773 = vpop.f32.mrf.mxu0
  %774 = vmatprep.mubr.bf16.mxu0 %v363
  %775 = vmatmul.mubr.bf16.gmra.mxu0 %v362
  %v776 = vpop.f32.mrf.mxu0
  %v777 = vadd.f32 %v116, %v776
  %v778 = vpop.f32.mrf.mxu0
  %v779 = vpop.f32.mrf.mxu0
  %v780 = vadd.f32 %v116, %v779
  %v781 = vpop.f32.mrf.mxu0
  %782 = vmatprep.mubr.bf16.mxu0 %v365
  %783 = vmatmul.mubr.bf16.gmra.mxu0 %v364
  %v784 = vpop.f32.mrf.mxu0
  %v785 = vadd.f32 %v116, %v784
  %v786 = vpop.f32.mrf.mxu0
  %v787 = vpop.f32.mrf.mxu0
  %v788 = vadd.f32 %v116, %v787
  %v789 = vpop.f32.mrf.mxu0
  %790 = vmatprep.mubr.bf16.mxu0 %v367
  %791 = vmatmul.mubr.bf16.gmra.mxu0 %v366
  %v792 = vpop.f32.mrf.mxu0
  %v793 = vadd.f32 %v116, %v792
  %v794 = vpop.f32.mrf.mxu0
  %v795 = vpop.f32.mrf.mxu0
  %v796 = vadd.f32 %v116, %v795
  %v797 = vpop.f32.mrf.mxu0
  %798 = vmatprep.mubr.bf16.mxu0 %v369
  %799 = vmatmul.mubr.bf16.gmra.mxu0 %v368
  %v800 = vpop.f32.mrf.mxu0
  %v801 = vadd.f32 %v116, %v800
  %v802 = vpop.f32.mrf.mxu0
  %v803 = vpop.f32.mrf.mxu0
  %v804 = vadd.f32 %v116, %v803
  %v805 = vpop.f32.mrf.mxu0
  %806 = vmatprep.mubr.bf16.mxu0 %v371
  %807 = vmatmul.mubr.bf16.gmra.mxu0 %v370
  %v808 = vpop.f32.mrf.mxu0
  %v809 = vadd.f32 %v116, %v808
  %v810 = vpop.f32.mrf.mxu0
  %v811 = vpop.f32.mrf.mxu0
  %v812 = vadd.f32 %v116, %v811
  %v813 = vpop.f32.mrf.mxu0
  %814 = vmatprep.mubr.bf16.mxu0 %v373
  %815 = vmatmul.mubr.bf16.gmra.mxu0 %v372
  %v816 = vpop.f32.mrf.mxu0
  %v817 = vadd.f32 %v116, %v816
  %v818 = vpop.f32.mrf.mxu0
  %v819 = vpop.f32.mrf.mxu0
  %v820 = vadd.f32 %v116, %v819
  %v821 = vpop.f32.mrf.mxu0
  %822 = vdwg.mxu0
  %v823 = vmax.f32 %v569, 0.0
  %v824 = vmax.f32 %v572, 0.0
  %v825 = vmax.f32 %v577, 0.0
  %v826 = vmax.f32 %v580, 0.0
  %v827 = vmax.f32 %v585, 0.0
  %v828 = vmax.f32 %v588, 0.0
  %v829 = vmax.f32 %v593, 0.0
  %v830 = vmax.f32 %v596, 0.0
  %v831 = vmax.f32 %v601, 0.0
  %v832 = vmax.f32 %v604, 0.0
  %v833 = vmax.f32 %v609, 0.0
  %v834 = vmax.f32 %v612, 0.0
  %v835 = vmax.f32 %v617, 0.0
  %v836 = vmax.f32 %v620, 0.0
  %v837 = vmax.f32 %v625, 0.0
  %v838 = vmax.f32 %v628, 0.0
  %v839 = vmax.f32 %v633, 0.0
  %v840 = vmax.f32 %v636, 0.0
  %v841 = vmax.f32 %v641, 0.0
  %v842 = vmax.f32 %v644, 0.0
  %v843 = vmax.f32 %v649, 0.0
  %v844 = vmax.f32 %v652, 0.0
  %v845 = vmax.f32 %v657, 0.0
  %v846 = vmax.f32 %v660, 0.0
  %v847 = vmax.f32 %v665, 0.0
  %v848 = vmax.f32 %v668, 0.0
  %v849 = vmax.f32 %v673, 0.0
  %v850 = vmax.f32 %v676, 0.0
  %v851 = vmax.f32 %v681, 0.0
  %v852 = vmax.f32 %v684, 0.0
  %v853 = vmax.f32 %v689, 0.0
  %v854 = vmax.f32 %v692, 0.0
  %v855 = vmax.f32 %v697, 0.0
  %v856 = vmax.f32 %v700, 0.0
  %v857 = vmax.f32 %v705, 0.0
  %v858 = vmax.f32 %v708, 0.0
  %v859 = vmax.f32 %v713, 0.0
  %v860 = vmax.f32 %v716, 0.0
  %v861 = vmax.f32 %v721, 0.0
  %v862 = vmax.f32 %v724, 0.0
  %v863 = vmax.f32 %v729, 0.0
  %v864 = vmax.f32 %v732, 0.0
  %v865 = vmax.f32 %v737, 0.0
  %v866 = vmax.f32 %v740, 0.0
  %v867 = vmax.f32 %v745, 0.0
  %v868 = vmax.f32 %v748, 0.0
  %v869 = vmax.f32 %v753, 0.0
  %v870 = vmax.f32 %v756, 0.0
  %v871 = vmax.f32 %v761, 0.0
  %v872 = vmax.f32 %v764, 0.0
  %v873 = vmax.f32 %v769, 0.0
  %v874 = vmax.f32 %v772, 0.0
  %v875 = vmax.f32 %v777, 0.0
  %v876 = vmax.f32 %v780, 0.0
  %v877 = vmax.f32 %v785, 0.0
  %v878 = vmax.f32 %v788, 0.0
  %v879 = vmax.f32 %v793, 0.0
  %v880 = vmax.f32 %v796, 0.0
  %v881 = vmax.f32 %v801, 0.0
  %v882 = vmax.f32 %v804, 0.0
  %v883 = vmax.f32 %v809, 0.0
  %v884 = vmax.f32 %v812, 0.0
  %v885 = vmax.f32 %v817, 0.0
  %v886 = vmax.f32 %v820, 0.0
  %v887 = vpack.c.bf16 %v824, %v823
  %v888 = vpack.c.bf16 %v826, %v825
  %v889 = vpack.c.bf16 %v828, %v827
  %v890 = vpack.c.bf16 %v830, %v829
  %v891 = vpack.c.bf16 %v832, %v831
  %v892 = vpack.c.bf16 %v834, %v833
  %v893 = vpack.c.bf16 %v836, %v835
  %v894 = vpack.c.bf16 %v838, %v837
  %v895 = vpack.c.bf16 %v840, %v839
  %v896 = vpack.c.bf16 %v842, %v841
  %v897 = vpack.c.bf16 %v844, %v843
  %v898 = vpack.c.bf16 %v846, %v845
  %v899 = vpack.c.bf16 %v848, %v847
  %v900 = vpack.c.bf16 %v850, %v849
  %v901 = vpack.c.bf16 %v852, %v851
  %v902 = vpack.c.bf16 %v854, %v853
  %v903 = vpack.c.bf16 %v856, %v855
  %v904 = vpack.c.bf16 %v858, %v857
  %v905 = vpack.c.bf16 %v860, %v859
  %v906 = vpack.c.bf16 %v862, %v861
  %v907 = vpack.c.bf16 %v864, %v863
  %v908 = vpack.c.bf16 %v866, %v865
  %v909 = vpack.c.bf16 %v868, %v867
  %v910 = vpack.c.bf16 %v870, %v869
  %v911 = vpack.c.bf16 %v872, %v871
  %v912 = vpack.c.bf16 %v874, %v873
  %v913 = vpack.c.bf16 %v876, %v875
  %v914 = vpack.c.bf16 %v878, %v877
  %v915 = vpack.c.bf16 %v880, %v879
  %v916 = vpack.c.bf16 %v882, %v881
  %v917 = vpack.c.bf16 %v884, %v883
  %v918 = vpack.c.bf16 %v886, %v885
  %v951 = vunpack.c.l.b16 %v887
  %v952 = vunpack.c.h.b16 %v887
  %v953 = vunpack.c.l.b16 %v888
  %v954 = vunpack.c.h.b16 %v888
  %v955 = vunpack.c.l.b16 %v889
  %v956 = vunpack.c.h.b16 %v889
  %v957 = vunpack.c.l.b16 %v890
  %v958 = vunpack.c.h.b16 %v890
  %v959 = vunpack.c.l.b16 %v891
  %v960 = vunpack.c.h.b16 %v891
  %v961 = vunpack.c.l.b16 %v892
  %v962 = vunpack.c.h.b16 %v892
  %v963 = vunpack.c.l.b16 %v893
  %v964 = vunpack.c.h.b16 %v893
  %v965 = vunpack.c.l.b16 %v894
  %v966 = vunpack.c.h.b16 %v894
  %v967 = vunpack.c.l.b16 %v895
  %v968 = vunpack.c.h.b16 %v895
  %v969 = vunpack.c.l.b16 %v896
  %v970 = vunpack.c.h.b16 %v896
  %v971 = vunpack.c.l.b16 %v897
  %v972 = vunpack.c.h.b16 %v897
  %v973 = vunpack.c.l.b16 %v898
  %v974 = vunpack.c.h.b16 %v898
  %v975 = vunpack.c.l.b16 %v899
  %v976 = vunpack.c.h.b16 %v899
  %v977 = vunpack.c.l.b16 %v900
  %v978 = vunpack.c.h.b16 %v900
  %v979 = vunpack.c.l.b16 %v901
  %v980 = vunpack.c.h.b16 %v901
  %v981 = vunpack.c.l.b16 %v902
  %v982 = vunpack.c.h.b16 %v902
  %v983 = vunpack.c.l.b16 %v903
  %v984 = vunpack.c.h.b16 %v903
  %v985 = vunpack.c.l.b16 %v904
  %v986 = vunpack.c.h.b16 %v904
  %v987 = vunpack.c.l.b16 %v905
  %v988 = vunpack.c.h.b16 %v905
  %v989 = vunpack.c.l.b16 %v906
  %v990 = vunpack.c.h.b16 %v906
  %v991 = vunpack.c.l.b16 %v907
  %v992 = vunpack.c.h.b16 %v907
  %v993 = vunpack.c.l.b16 %v908
  %v994 = vunpack.c.h.b16 %v908
  %v995 = vunpack.c.l.b16 %v909
  %v996 = vunpack.c.h.b16 %v909
  %v997 = vunpack.c.l.b16 %v910
  %v998 = vunpack.c.h.b16 %v910
  %v999 = vunpack.c.l.b16 %v911
  %v1000 = vunpack.c.h.b16 %v911
  %v1001 = vunpack.c.l.b16 %v912
  %v1002 = vunpack.c.h.b16 %v912
  %v1003 = vunpack.c.l.b16 %v913
  %v1004 = vunpack.c.h.b16 %v913
  %v1005 = vunpack.c.l.b16 %v914
  %v1006 = vunpack.c.h.b16 %v914
  %v1007 = vunpack.c.l.b16 %v915
  %v1008 = vunpack.c.h.b16 %v915
  %v1009 = vunpack.c.l.b16 %v916
  %v1010 = vunpack.c.h.b16 %v916
  %v1011 = vunpack.c.l.b16 %v917
  %v1012 = vunpack.c.h.b16 %v917
  %v1013 = vunpack.c.l.b16 %v918
  %v1014 = vunpack.c.h.b16 %v918
  %v1015 = vpack.c.b16 %v951, %v951
  %v1016 = vpack.c.b16 %v952, %v952
  %v1017 = vpack.c.b16 %v953, %v953
  %v1018 = vpack.c.b16 %v954, %v954
  %v1019 = vpack.c.b16 %v955, %v955
  %v1020 = vpack.c.b16 %v956, %v956
  %v1021 = vpack.c.b16 %v957, %v957
  %v1022 = vpack.c.b16 %v958, %v958
  %v1023 = vpack.c.b16 %v959, %v959
  %v1024 = vpack.c.b16 %v960, %v960
  %v1025 = vpack.c.b16 %v961, %v961
  %v1026 = vpack.c.b16 %v962, %v962
  %v1027 = vpack.c.b16 %v963, %v963
  %v1028 = vpack.c.b16 %v964, %v964
  %v1029 = vpack.c.b16 %v965, %v965
  %v1030 = vpack.c.b16 %v966, %v966
  %v1031 = vpack.c.b16 %v967, %v967
  %v1032 = vpack.c.b16 %v968, %v968
  %v1033 = vpack.c.b16 %v969, %v969
  %v1034 = vpack.c.b16 %v970, %v970
  %v1035 = vpack.c.b16 %v971, %v971
  %v1036 = vpack.c.b16 %v972, %v972
  %v1037 = vpack.c.b16 %v973, %v973
  %v1038 = vpack.c.b16 %v974, %v974
  %v1039 = vpack.c.b16 %v975, %v975
  %v1040 = vpack.c.b16 %v976, %v976
  %v1041 = vpack.c.b16 %v977, %v977
  %v1042 = vpack.c.b16 %v978, %v978
  %v1043 = vpack.c.b16 %v979, %v979
  %v1044 = vpack.c.b16 %v980, %v980
  %v1045 = vpack.c.b16 %v981, %v981
  %v1046 = vpack.c.b16 %v982, %v982
  %v1047 = vpack.c.b16 %v983, %v983
  %v1048 = vpack.c.b16 %v984, %v984
  %v1049 = vpack.c.b16 %v985, %v985
  %v1050 = vpack.c.b16 %v986, %v986
  %v1051 = vpack.c.b16 %v987, %v987
  %v1052 = vpack.c.b16 %v988, %v988
  %v1053 = vpack.c.b16 %v989, %v989
  %v1054 = vpack.c.b16 %v990, %v990
  %v1055 = vpack.c.b16 %v991, %v991
  %v1056 = vpack.c.b16 %v992, %v992
  %v1057 = vpack.c.b16 %v993, %v993
  %v1058 = vpack.c.b16 %v994, %v994
  %v1059 = vpack.c.b16 %v995, %v995
  %v1060 = vpack.c.b16 %v996, %v996
  %v1061 = vpack.c.b16 %v997, %v997
  %v1062 = vpack.c.b16 %v998, %v998
  %v1063 = vpack.c.b16 %v999, %v999
  %v1064 = vpack.c.b16 %v1000, %v1000
  %v1065 = vpack.c.b16 %v1001, %v1001
  %v1066 = vpack.c.b16 %v1002, %v1002
  %v1067 = vpack.c.b16 %v1003, %v1003
  %v1068 = vpack.c.b16 %v1004, %v1004
  %v1069 = vpack.c.b16 %v1005, %v1005
  %v1070 = vpack.c.b16 %v1006, %v1006
  %v1071 = vpack.c.b16 %v1007, %v1007
  %v1072 = vpack.c.b16 %v1008, %v1008
  %v1073 = vpack.c.b16 %v1009, %v1009
  %v1074 = vpack.c.b16 %v1010, %v1010
  %v1075 = vpack.c.b16 %v1011, %v1011
  %v1076 = vpack.c.b16 %v1012, %v1012
  %v1077 = vpack.c.b16 %v1013, %v1013
  %v1078 = vpack.c.b16 %v1014, %v1014
  %1143 = vst [vmem:[%s3] sm:$0xf] %v1015
  %1144 = vst [vmem:[%s3 + $0x4] sm:$0xf] %v1016
  %1145 = vst [vmem:[%s3 + $0x8] sm:$0xf] %v1017
  %1146 = vst [vmem:[%s3 + $0xc] sm:$0xf] %v1018
  %1147 = vst [vmem:[%s3 + $0x10] sm:$0xf] %v1019
  %1148 = vst [vmem:[%s3 + $0x14] sm:$0xf] %v1020
  %1149 = vst [vmem:[%s3 + $0x18] sm:$0xf] %v1021
  %1150 = vst [vmem:[%s3 + $0x1c] sm:$0xf] %v1022
  %1151 = vst [vmem:[%s3 + $0x20] sm:$0xf] %v1023
  %1152 = vst [vmem:[%s3 + $0x24] sm:$0xf] %v1024
  %1153 = vst [vmem:[%s3 + $0x28] sm:$0xf] %v1025
  %1154 = vst [vmem:[%s3 + $0x2c] sm:$0xf] %v1026
  %1155 = vst [vmem:[%s3 + $0x30] sm:$0xf] %v1027
  %1156 = vst [vmem:[%s3 + $0x34] sm:$0xf] %v1028
  %1157 = vst [vmem:[%s3 + $0x38] sm:$0xf] %v1029
  %1158 = vst [vmem:[%s3 + $0x3c] sm:$0xf] %v1030
  %1159 = vst [vmem:[%s3 + $0x40] sm:$0xf] %v1031
  %1160 = vst [vmem:[%s3 + $0x44] sm:$0xf] %v1032
  %1161 = vst [vmem:[%s3 + $0x48] sm:$0xf] %v1033
  %1162 = vst [vmem:[%s3 + $0x4c] sm:$0xf] %v1034
  %1163 = vst [vmem:[%s3 + $0x50] sm:$0xf] %v1035
  %1164 = vst [vmem:[%s3 + $0x54] sm:$0xf] %v1036
  %1165 = vst [vmem:[%s3 + $0x58] sm:$0xf] %v1037
  %1166 = vst [vmem:[%s3 + $0x5c] sm:$0xf] %v1038
  %1167 = vst [vmem:[%s3 + $0x60] sm:$0xf] %v1039
  %1168 = vst [vmem:[%s3 + $0x64] sm:$0xf] %v1040
  %1169 = vst [vmem:[%s3 + $0x68] sm:$0xf] %v1041
  %1170 = vst [vmem:[%s3 + $0x6c] sm:$0xf] %v1042
  %1171 = vst [vmem:[%s3 + $0x70] sm:$0xf] %v1043
  %1172 = vst [vmem:[%s3 + $0x74] sm:$0xf] %v1044
  %1173 = vst [vmem:[%s3 + $0x78] sm:$0xf] %v1045
  %1174 = vst [vmem:[%s3 + $0x7c] sm:$0xf] %v1046
  %1175 = vst [vmem:[%s3 + $0x80] sm:$0xf] %v1047
  %1176 = vst [vmem:[%s3 + $0x84] sm:$0xf] %v1048
  %1177 = vst [vmem:[%s3 + $0x88] sm:$0xf] %v1049
  %1178 = vst [vmem:[%s3 + $0x8c] sm:$0xf] %v1050
  %1179 = vst [vmem:[%s3 + $0x90] sm:$0xf] %v1051
  %1180 = vst [vmem:[%s3 + $0x94] sm:$0xf] %v1052
  %1181 = vst [vmem:[%s3 + $0x98] sm:$0xf] %v1053
  %1182 = vst [vmem:[%s3 + $0x9c] sm:$0xf] %v1054
  %1183 = vst [vmem:[%s3 + $0xa0] sm:$0xf] %v1055
  %1184 = vst [vmem:[%s3 + $0xa4] sm:$0xf] %v1056
  %1185 = vst [vmem:[%s3 + $0xa8] sm:$0xf] %v1057
  %1186 = vst [vmem:[%s3 + $0xac] sm:$0xf] %v1058
  %1187 = vst [vmem:[%s3 + $0xb0] sm:$0xf] %v1059
  %1188 = vst [vmem:[%s3 + $0xb4] sm:$0xf] %v1060
  %1189 = vst [vmem:[%s3 + $0xb8] sm:$0xf] %v1061
  %1190 = vst [vmem:[%s3 + $0xbc] sm:$0xf] %v1062
  %1191 = vst [vmem:[%s3 + $0xc0] sm:$0xf] %v1063
  %1192 = vst [vmem:[%s3 + $0xc4] sm:$0xf] %v1064
  %1193 = vst [vmem:[%s3 + $0xc8] sm:$0xf] %v1065
  %1194 = vst [vmem:[%s3 + $0xcc] sm:$0xf] %v1066
  %1195 = vst [vmem:[%s3 + $0xd0] sm:$0xf] %v1067
  %1196 = vst [vmem:[%s3 + $0xd4] sm:$0xf] %v1068
  %1197 = vst [vmem:[%s3 + $0xd8] sm:$0xf] %v1069
  %1198 = vst [vmem:[%s3 + $0xdc] sm:$0xf] %v1070
  %1199 = vst [vmem:[%s3 + $0xe0] sm:$0xf] %v1071
  %1200 = vst [vmem:[%s3 + $0xe4] sm:$0xf] %v1072
  %1201 = vst [vmem:[%s3 + $0xe8] sm:$0xf] %v1073
  %1202 = vst [vmem:[%s3 + $0xec] sm:$0xf] %v1074
  %1203 = vst [vmem:[%s3 + $0xf0] sm:$0xf] %v1075
  %1204 = vst [vmem:[%s3 + $0xf4] sm:$0xf] %v1076
  %1205 = vst [vmem:[%s3 + $0xf8] sm:$0xf] %v1077
  %1206 = vst [vmem:[%s3 + $0xfc] sm:$0xf] %v1078
  // Predicated region
  $region14: #{encoder_cnn_forward.10} parent=0 // pred_check
    _
  $region15: #{encoder_cnn_forward.10} parent=0 // pred_check_branch
    %1208 = sbr.rel (0) target = $region17
  $region16: #{encoder_cnn_forward.10} parent=0 // pred_region
    _
  $region17: #{encoder_cnn_forward.10} parent=0 // pred_fallthru
    _
  // Predicated region
  $region18: #{encoder_cnn_forward.10} parent=0 // pred_check
    _
  $region19: #{encoder_cnn_forward.10} parent=0 // pred_check_branch
    %1210 = sbr.rel (0) target = $region21
  $region20: #{encoder_cnn_forward.10} parent=0 // pred_region
    _
  $region21: #{encoder_cnn_forward.10} parent=0 // pred_fallthru
    _

// kernel: encoder_cnn_forward.12
$region0: #{encoder_cnn_forward.12}
  #allocation0 [shape = 'u32[]', space=smem, size = 0x4, offset = 0x4, fixed_abs, tag = 'smem constant byte address 0x4 - core index']
  #allocation1 [shape = 'u32[144,128]{1,0:T(1,128)}', space=vmem, size = 0x12000, scoped, tag = 'internal scratch']
  %s0 = inlined_call_operand.vmem [shape: bf16[128,128], index: 0, kind: input, shape index: {}]
  %s1 = inlined_call_operand.vmem [shape: bf16[128,128], index: 1, kind: input, shape index: {}]
  %s2 = inlined_call_operand.vmem [shape: f32[1,128], index: 2, kind: input, shape index: {}]
  %s3 = inlined_call_operand.vmem [shape: bf16[128,128], index: 3, kind: output, shape index: {}]
  %s4 = sld [smem:[#allocation0]]
  $region22: #{encoder_cnn_forward.12} parent=0
    _
  %s6 = ssub.s32 1, %s4
  %s7 = scalar_select 0, %s6, %s4
  // Predicated region
  $region2: #{encoder_cnn_forward.12} parent=0 // pred_check
    _
  $region3: #{encoder_cnn_forward.12} parent=0 // pred_check_branch
    %9 = sbr.rel (0) target = $region5
  $region4: #{encoder_cnn_forward.12} parent=0 // pred_region
    _
  $region5: #{encoder_cnn_forward.12} parent=0 // pred_fallthru
    _
  // Predicated region
  $region6: #{encoder_cnn_forward.12} parent=0 // pred_check
    _
  $region7: #{encoder_cnn_forward.12} parent=0 // pred_check_branch
    %11 = sbr.rel (0) target = $region9
  $region8: #{encoder_cnn_forward.12} parent=0 // pred_region
    _
  $region9: #{encoder_cnn_forward.12} parent=0 // pred_fallthru
    _
  // Predicated region
  $region10: #{encoder_cnn_forward.12} parent=0 // pred_check
    _
  $region11: #{encoder_cnn_forward.12} parent=0 // pred_check_branch
    %13 = sbr.rel (0) target = $region13
  $region12: #{encoder_cnn_forward.12} parent=0 // pred_region
    _
  $region13: #{encoder_cnn_forward.12} parent=0 // pred_fallthru
    _
  %v15 = vld [vmem:[%s0] sm:$0xf]
  %v16 = vld [vmem:[%s0 + $0x4] sm:$0xf]
  %v17 = vld [vmem:[%s0 + $0x8] sm:$0xf]
  %v18 = vld [vmem:[%s0 + $0xc] sm:$0xf]
  %v19 = vld [vmem:[%s0 + $0x10] sm:$0xf]
  %v20 = vld [vmem:[%s0 + $0x14] sm:$0xf]
  %v21 = vld [vmem:[%s0 + $0x18] sm:$0xf]
  %v22 = vld [vmem:[%s0 + $0x1c] sm:$0xf]
  %v23 = vld [vmem:[%s0 + $0x20] sm:$0xf]
  %v24 = vld [vmem:[%s0 + $0x24] sm:$0xf]
  %v25 = vld [vmem:[%s0 + $0x28] sm:$0xf]
  %v26 = vld [vmem:[%s0 + $0x2c] sm:$0xf]
  %v27 = vld [vmem:[%s0 + $0x30] sm:$0xf]
  %v28 = vld [vmem:[%s0 + $0x34] sm:$0xf]
  %v29 = vld [vmem:[%s0 + $0x38] sm:$0xf]
  %v30 = vld [vmem:[%s0 + $0x3c] sm:$0xf]
  %v31 = vld [vmem:[%s1] sm:$0xf]
  %v32 = vld [vmem:[%s1 + $0x4] sm:$0xf]
  %v33 = vld [vmem:[%s1 + $0x8] sm:$0xf]
  %v34 = vld [vmem:[%s1 + $0xc] sm:$0xf]
  %v35 = vld [vmem:[%s1 + $0x10] sm:$0xf]
  %v36 = vld [vmem:[%s1 + $0x14] sm:$0xf]
  %v37 = vld [vmem:[%s1 + $0x18] sm:$0xf]
  %v38 = vld [vmem:[%s1 + $0x1c] sm:$0xf]
  %v39 = vld [vmem:[%s1 + $0x20] sm:$0xf]
  %v40 = vld [vmem:[%s1 + $0x24] sm:$0xf]
  %v41 = vld [vmem:[%s1 + $0x28] sm:$0xf]
  %v42 = vld [vmem:[%s1 + $0x2c] sm:$0xf]
  %v43 = vld [vmem:[%s1 + $0x30] sm:$0xf]
  %v44 = vld [vmem:[%s1 + $0x34] sm:$0xf]
  %v45 = vld [vmem:[%s1 + $0x38] sm:$0xf]
  %v46 = vld [vmem:[%s1 + $0x3c] sm:$0xf]
  %v47 = vld [vmem:[%s2] sm:$0x1]
  %v49 = vlaneseq
  %v50 = vshrl.u32 %v49, 7
  %v51 = vsub.s32 0, %v50
  %v52 = vrot.slane %v47, %v51
  %v70 = vunpack.c.l.b16 %v15
  %v71 = vunpack.c.l.b16 %v16
  %v72 = vunpack.c.l.b16 %v17
  %v73 = vunpack.c.l.b16 %v18
  %v74 = vunpack.c.l.b16 %v19
  %v75 = vunpack.c.l.b16 %v20
  %v76 = vunpack.c.l.b16 %v21
  %v77 = vunpack.c.l.b16 %v22
  %v78 = vunpack.c.l.b16 %v23
  %v79 = vunpack.c.l.b16 %v24
  %v80 = vunpack.c.l.b16 %v25
  %v81 = vunpack.c.l.b16 %v26
  %v82 = vunpack.c.l.b16 %v27
  %v83 = vunpack.c.l.b16 %v28
  %v84 = vunpack.c.l.b16 %v29
  %v85 = vunpack.c.l.b16 %v30
  %v86 = vpack.c.b16 %v71, %v70
  %v87 = vpack.c.b16 %v73, %v72
  %v88 = vpack.c.b16 %v75, %v74
  %v89 = vpack.c.b16 %v77, %v76
  %v90 = vpack.c.b16 %v79, %v78
  %v91 = vpack.c.b16 %v81, %v80
  %v92 = vpack.c.b16 %v83, %v82
  %v93 = vpack.c.b16 %v85, %v84
  %v118 = vunpack.c.l.b16 %v31
  %v119 = vunpack.c.l.b16 %v32
  %v120 = vunpack.c.l.b16 %v33
  %v121 = vunpack.c.l.b16 %v34
  %v122 = vunpack.c.l.b16 %v35
  %v123 = vunpack.c.l.b16 %v36
  %v124 = vunpack.c.l.b16 %v37
  %v125 = vunpack.c.l.b16 %v38
  %v126 = vunpack.c.l.b16 %v39
  %v127 = vunpack.c.l.b16 %v40
  %v128 = vunpack.c.l.b16 %v41
  %v129 = vunpack.c.l.b16 %v42
  %v130 = vunpack.c.l.b16 %v43
  %v131 = vunpack.c.l.b16 %v44
  %v132 = vunpack.c.l.b16 %v45
  %v133 = vunpack.c.l.b16 %v46
  %v134 = vpack.c.b16 %v119, %v118
  %v135 = vpack.c.b16 %v121, %v120
  %v136 = vpack.c.b16 %v123, %v122
  %v137 = vpack.c.b16 %v125, %v124
  %v138 = vpack.c.b16 %v127, %v126
  %v139 = vpack.c.b16 %v129, %v128
  %v140 = vpack.c.b16 %v131, %v130
  %v141 = vpack.c.b16 %v133, %v132
  %150 = vmatprep.subr.bf16.mxu0 0
  %151 = vmatpush1.bf16.msra.mxu0 %v141
  %152 = vmatprep.subr.bf16.mxu0 0
  %153 = vmatpush1.bf16.msra.mxu0 %v140
  %154 = vmatprep.subr.bf16.mxu0 0
  %155 = vmatpush1.bf16.msra.mxu0 %v139
  %156 = vmatprep.subr.bf16.mxu0 0
  %157 = vmatpush1.bf16.msra.mxu0 %v138
  %158 = vmatprep.subr.bf16.mxu0 0
  %159 = vmatpush1.bf16.msra.mxu0 %v137
  %160 = vmatprep.subr.bf16.mxu0 0
  %161 = vmatpush1.bf16.msra.mxu0 %v136
  %162 = vmatprep.subr.bf16.mxu0 0
  %163 = vmatpush1.bf16.msra.mxu0 %v135
  %164 = vmatprep.subr.bf16.mxu0 0
  %165 = vmatpush1.bf16.msra.mxu0 %v134
  %166 = vmatprep.subr.bf16.mxu0 0
  %167 = vmatpush2.bf16.msra.mxu0 0
  %168 = vmatprep.subr.bf16.mxu0 0
  %169 = vmatpush2.bf16.msra.mxu0 0
  %170 = vmatprep.subr.bf16.mxu0 0
  %171 = vmatpush2.bf16.msra.mxu0 0
  %172 = vmatprep.subr.bf16.mxu0 0
  %173 = vmatpush2.bf16.msra.mxu0 0
  %174 = vmatprep.subr.bf16.mxu0 0
  %175 = vmatpush2.bf16.msra.mxu0 0
  %176 = vmatprep.subr.bf16.mxu0 0
  %177 = vmatpush2.bf16.msra.mxu0 0
  %178 = vmatprep.subr.bf16.mxu0 0
  %179 = vmatpush2.bf16.msra.mxu0 0
  %180 = vmatprep.subr.bf16.mxu0 0
  %181 = vmatpush2.bf16.msra.mxu0 0
  %182 = vmatprep.mubr.bf16.mxu0 0
  %183 = vmatmul.mubr.bf16.gmra.mxu0 %v86
  %v184 = vpop.f32.mrf.mxu0
  %v185 = vadd.f32 %v52, %v184
  %v186 = vpop.f32.mrf.mxu0
  %v187 = vpop.f32.mrf.mxu0
  %v188 = vadd.f32 %v52, %v187
  %v189 = vpop.f32.mrf.mxu0
  %190 = vmatprep.mubr.bf16.mxu0 0
  %191 = vmatmul.mubr.bf16.gmra.mxu0 %v87
  %v192 = vpop.f32.mrf.mxu0
  %v193 = vadd.f32 %v52, %v192
  %v194 = vpop.f32.mrf.mxu0
  %v195 = vpop.f32.mrf.mxu0
  %v196 = vadd.f32 %v52, %v195
  %v197 = vpop.f32.mrf.mxu0
  %198 = vmatprep.mubr.bf16.mxu0 0
  %199 = vmatmul.mubr.bf16.gmra.mxu0 %v88
  %v200 = vpop.f32.mrf.mxu0
  %v201 = vadd.f32 %v52, %v200
  %v202 = vpop.f32.mrf.mxu0
  %v203 = vpop.f32.mrf.mxu0
  %v204 = vadd.f32 %v52, %v203
  %v205 = vpop.f32.mrf.mxu0
  %206 = vmatprep.mubr.bf16.mxu0 0
  %207 = vmatmul.mubr.bf16.gmra.mxu0 %v89
  %v208 = vpop.f32.mrf.mxu0
  %v209 = vadd.f32 %v52, %v208
  %v210 = vpop.f32.mrf.mxu0
  %v211 = vpop.f32.mrf.mxu0
  %v212 = vadd.f32 %v52, %v211
  %v213 = vpop.f32.mrf.mxu0
  %214 = vmatprep.mubr.bf16.mxu0 0
  %215 = vmatmul.mubr.bf16.gmra.mxu0 %v90
  %v216 = vpop.f32.mrf.mxu0
  %v217 = vadd.f32 %v52, %v216
  %v218 = vpop.f32.mrf.mxu0
  %v219 = vpop.f32.mrf.mxu0
  %v220 = vadd.f32 %v52, %v219
  %v221 = vpop.f32.mrf.mxu0
  %222 = vmatprep.mubr.bf16.mxu0 0
  %223 = vmatmul.mubr.bf16.gmra.mxu0 %v91
  %v224 = vpop.f32.mrf.mxu0
  %v225 = vadd.f32 %v52, %v224
  %v226 = vpop.f32.mrf.mxu0
  %v227 = vpop.f32.mrf.mxu0
  %v228 = vadd.f32 %v52, %v227
  %v229 = vpop.f32.mrf.mxu0
  %230 = vmatprep.mubr.bf16.mxu0 0
  %231 = vmatmul.mubr.bf16.gmra.mxu0 %v92
  %v232 = vpop.f32.mrf.mxu0
  %v233 = vadd.f32 %v52, %v232
  %v234 = vpop.f32.mrf.mxu0
  %v235 = vpop.f32.mrf.mxu0
  %v236 = vadd.f32 %v52, %v235
  %v237 = vpop.f32.mrf.mxu0
  %238 = vmatprep.mubr.bf16.mxu0 0
  %239 = vmatmul.mubr.bf16.gmra.mxu0 %v93
  %v240 = vpop.f32.mrf.mxu0
  %v241 = vadd.f32 %v52, %v240
  %v242 = vpop.f32.mrf.mxu0
  %v243 = vpop.f32.mrf.mxu0
  %v244 = vadd.f32 %v52, %v243
  %v245 = vpop.f32.mrf.mxu0
  %246 = vdwg.mxu0
  %v247 = vmax.f32 %v185, 0.0
  %v248 = vmax.f32 %v188, 0.0
  %v249 = vmax.f32 %v193, 0.0
  %v250 = vmax.f32 %v196, 0.0
  %v251 = vmax.f32 %v201, 0.0
  %v252 = vmax.f32 %v204, 0.0
  %v253 = vmax.f32 %v209, 0.0
  %v254 = vmax.f32 %v212, 0.0
  %v255 = vmax.f32 %v217, 0.0
  %v256 = vmax.f32 %v220, 0.0
  %v257 = vmax.f32 %v225, 0.0
  %v258 = vmax.f32 %v228, 0.0
  %v259 = vmax.f32 %v233, 0.0
  %v260 = vmax.f32 %v236, 0.0
  %v261 = vmax.f32 %v241, 0.0
  %v262 = vmax.f32 %v244, 0.0
  %v263 = vpack.c.bf16 %v248, %v247
  %v264 = vpack.c.bf16 %v250, %v249
  %v265 = vpack.c.bf16 %v252, %v251
  %v266 = vpack.c.bf16 %v254, %v253
  %v267 = vpack.c.bf16 %v256, %v255
  %v268 = vpack.c.bf16 %v258, %v257
  %v269 = vpack.c.bf16 %v260, %v259
  %v270 = vpack.c.bf16 %v262, %v261
  %v279 = vunpack.c.l.b16 %v263
  %v280 = vunpack.c.h.b16 %v263
  %v281 = vunpack.c.l.b16 %v264
  %v282 = vunpack.c.h.b16 %v264
  %v283 = vunpack.c.l.b16 %v265
  %v284 = vunpack.c.h.b16 %v265
  %v285 = vunpack.c.l.b16 %v266
  %v286 = vunpack.c.h.b16 %v266
  %v287 = vunpack.c.l.b16 %v267
  %v288 = vunpack.c.h.b16 %v267
  %v289 = vunpack.c.l.b16 %v268
  %v290 = vunpack.c.h.b16 %v268
  %v291 = vunpack.c.l.b16 %v269
  %v292 = vunpack.c.h.b16 %v269
  %v293 = vunpack.c.l.b16 %v270
  %v294 = vunpack.c.h.b16 %v270
  %v295 = vpack.c.b16 %v279, %v279
  %v296 = vpack.c.b16 %v280, %v280
  %v297 = vpack.c.b16 %v281, %v281
  %v298 = vpack.c.b16 %v282, %v282
  %v299 = vpack.c.b16 %v283, %v283
  %v300 = vpack.c.b16 %v284, %v284
  %v301 = vpack.c.b16 %v285, %v285
  %v302 = vpack.c.b16 %v286, %v286
  %v303 = vpack.c.b16 %v287, %v287
  %v304 = vpack.c.b16 %v288, %v288
  %v305 = vpack.c.b16 %v289, %v289
  %v306 = vpack.c.b16 %v290, %v290
  %v307 = vpack.c.b16 %v291, %v291
  %v308 = vpack.c.b16 %v292, %v292
  %v309 = vpack.c.b16 %v293, %v293
  %v310 = vpack.c.b16 %v294, %v294
  %327 = vst [vmem:[%s3] sm:$0xf] %v295
  %328 = vst [vmem:[%s3 + $0x4] sm:$0xf] %v296
  %329 = vst [vmem:[%s3 + $0x8] sm:$0xf] %v297
  %330 = vst [vmem:[%s3 + $0xc] sm:$0xf] %v298
  %331 = vst [vmem:[%s3 + $0x10] sm:$0xf] %v299
  %332 = vst [vmem:[%s3 + $0x14] sm:$0xf] %v300
  %333 = vst [vmem:[%s3 + $0x18] sm:$0xf] %v301
  %334 = vst [vmem:[%s3 + $0x1c] sm:$0xf] %v302
  %335 = vst [vmem:[%s3 + $0x20] sm:$0xf] %v303
  %336 = vst [vmem:[%s3 + $0x24] sm:$0xf] %v304
  %337 = vst [vmem:[%s3 + $0x28] sm:$0xf] %v305
  %338 = vst [vmem:[%s3 + $0x2c] sm:$0xf] %v306
  %339 = vst [vmem:[%s3 + $0x30] sm:$0xf] %v307
  %340 = vst [vmem:[%s3 + $0x34] sm:$0xf] %v308
  %341 = vst [vmem:[%s3 + $0x38] sm:$0xf] %v309
  %342 = vst [vmem:[%s3 + $0x3c] sm:$0xf] %v310
  // Predicated region
  $region14: #{encoder_cnn_forward.12} parent=0 // pred_check
    _
  $region15: #{encoder_cnn_forward.12} parent=0 // pred_check_branch
    %344 = sbr.rel (0) target = $region17
  $region16: #{encoder_cnn_forward.12} parent=0 // pred_region
    _
  $region17: #{encoder_cnn_forward.12} parent=0 // pred_fallthru
    _
  // Predicated region
  $region18: #{encoder_cnn_forward.12} parent=0 // pred_check
    _
  $region19: #{encoder_cnn_forward.12} parent=0 // pred_check_branch
    %346 = sbr.rel (0) target = $region21
  $region20: #{encoder_cnn_forward.12} parent=0 // pred_region
    _
  $region21: #{encoder_cnn_forward.12} parent=0 // pred_fallthru
    _

// kernel: encoder_cnn_forward.11
$region0: #{encoder_cnn_forward.11}
  #allocation0 [shape = 'u32[]', space=smem, size = 0x4, offset = 0x4, fixed_abs, tag = 'smem constant byte address 0x4 - core index']
  #allocation1 [shape = 'u32[144,128]{1,0:T(1,128)}', space=vmem, size = 0x12000, scoped, tag = 'internal scratch']
  %s0 = inlined_call_operand.vmem [shape: bf16[128,9,128], index: 0, kind: input, shape index: {}]
  %s1 = inlined_call_operand.vmem [shape: bf16[128,128], index: 1, kind: output, shape index: {}]
  %s2 = sld [smem:[#allocation0]]
  $region14: #{encoder_cnn_forward.11} parent=0
    _
  %s4 = ssub.s32 1, %s2
  %s5 = scalar_select 0, %s4, %s2
  // Predicated region
  $region2: #{encoder_cnn_forward.11} parent=0 // pred_check
    _
  $region3: #{encoder_cnn_forward.11} parent=0 // pred_check_branch
    %7 = sbr.rel (0) target = $region5
  $region4: #{encoder_cnn_forward.11} parent=0 // pred_region
    _
  $region5: #{encoder_cnn_forward.11} parent=0 // pred_fallthru
    _
  %v9 = vld [vmem:[%s0] sm:$0xf]
  %v10 = vld [vmem:[%s0 + $0x4] sm:$0x1]
  %v11 = vld [vmem:[%s0 + $0x8] sm:$0xf]
  %v12 = vld [vmem:[%s0 + $0xc] sm:$0x1]
  %v13 = vld [vmem:[%s0 + $0x10] sm:$0xf]
  %v14 = vld [vmem:[%s0 + $0x14] sm:$0x1]
  %v15 = vld [vmem:[%s0 + $0x18] sm:$0xf]
  %v16 = vld [vmem:[%s0 + $0x1c] sm:$0x1]
  %v17 = vld [vmem:[%s0 + $0x20] sm:$0xf]
  %v18 = vld [vmem:[%s0 + $0x24] sm:$0x1]
  %v19 = vld [vmem:[%s0 + $0x28] sm:$0xf]
  %v20 = vld [vmem:[%s0 + $0x2c] sm:$0x1]
  %v21 = vld [vmem:[%s0 + $0x30] sm:$0xf]
  %v22 = vld [vmem:[%s0 + $0x34] sm:$0x1]
  %v23 = vld [vmem:[%s0 + $0x38] sm:$0xf]
  %v24 = vld [vmem:[%s0 + $0x3c] sm:$0x1]
  %v25 = vld [vmem:[%s0 + $0x40] sm:$0xf]
  %v26 = vld [vmem:[%s0 + $0x44] sm:$0x1]
  %v27 = vld [vmem:[%s0 + $0x48] sm:$0xf]
  %v28 = vld [vmem:[%s0 + $0x4c] sm:$0x1]
  %v29 = vld [vmem:[%s0 + $0x50] sm:$0xf]
  %v30 = vld [vmem:[%s0 + $0x54] sm:$0x1]
  %v31 = vld [vmem:[%s0 + $0x58] sm:$0xf]
  %v32 = vld [vmem:[%s0 + $0x5c] sm:$0x1]
  %v33 = vld [vmem:[%s0 + $0x60] sm:$0xf]
  %v34 = vld [vmem:[%s0 + $0x64] sm:$0x1]
  %v35 = vld [vmem:[%s0 + $0x68] sm:$0xf]
  %v36 = vld [vmem:[%s0 + $0x6c] sm:$0x1]
  %v37 = vld [vmem:[%s0 + $0x70] sm:$0xf]
  %v38 = vld [vmem:[%s0 + $0x74] sm:$0x1]
  %v39 = vld [vmem:[%s0 + $0x78] sm:$0xf]
  %v40 = vld [vmem:[%s0 + $0x7c] sm:$0x1]
  %v41 = vld [vmem:[%s0 + $0x80] sm:$0xf]
  %v42 = vld [vmem:[%s0 + $0x84] sm:$0x1]
  %v43 = vld [vmem:[%s0 + $0x88] sm:$0xf]
  %v44 = vld [vmem:[%s0 + $0x8c] sm:$0x1]
  %v45 = vld [vmem:[%s0 + $0x90] sm:$0xf]
  %v46 = vld [vmem:[%s0 + $0x94] sm:$0x1]
  %v47 = vld [vmem:[%s0 + $0x98] sm:$0xf]
  %v48 = vld [vmem:[%s0 + $0x9c] sm:$0x1]
  %v49 = vld [vmem:[%s0 + $0xa0] sm:$0xf]
  %v50 = vld [vmem:[%s0 + $0xa4] sm:$0x1]
  %v51 = vld [vmem:[%s0 + $0xa8] sm:$0xf]
  %v52 = vld [vmem:[%s0 + $0xac] sm:$0x1]
  %v53 = vld [vmem:[%s0 + $0xb0] sm:$0xf]
  %v54 = vld [vmem:[%s0 + $0xb4] sm:$0x1]
  %v55 = vld [vmem:[%s0 + $0xb8] sm:$0xf]
  %v56 = vld [vmem:[%s0 + $0xbc] sm:$0x1]
  %v57 = vld [vmem:[%s0 + $0xc0] sm:$0xf]
  %v58 = vld [vmem:[%s0 + $0xc4] sm:$0x1]
  %v59 = vld [vmem:[%s0 + $0xc8] sm:$0xf]
  %v60 = vld [vmem:[%s0 + $0xcc] sm:$0x1]
  %v61 = vld [vmem:[%s0 + $0xd0] sm:$0xf]
  %v62 = vld [vmem:[%s0 + $0xd4] sm:$0x1]
  %v63 = vld [vmem:[%s0 + $0xd8] sm:$0xf]
  %v64 = vld [vmem:[%s0 + $0xdc] sm:$0x1]
  %v65 = vld [vmem:[%s0 + $0xe0] sm:$0xf]
  %v66 = vld [vmem:[%s0 + $0xe4] sm:$0x1]
  %v67 = vld [vmem:[%s0 + $0xe8] sm:$0xf]
  %v68 = vld [vmem:[%s0 + $0xec] sm:$0x1]
  %v69 = vld [vmem:[%s0 + $0xf0] sm:$0xf]
  %v70 = vld [vmem:[%s0 + $0xf4] sm:$0x1]
  %v71 = vld [vmem:[%s0 + $0xf8] sm:$0xf]
  %v72 = vld [vmem:[%s0 + $0xfc] sm:$0x1]
  %v73 = vld [vmem:[%s0 + $0x100] sm:$0xf]
  %v74 = vld [vmem:[%s0 + $0x104] sm:$0x1]
  %v75 = vld [vmem:[%s0 + $0x108] sm:$0xf]
  %v76 = vld [vmem:[%s0 + $0x10c] sm:$0x1]
  %v77 = vld [vmem:[%s0 + $0x110] sm:$0xf]
  %v78 = vld [vmem:[%s0 + $0x114] sm:$0x1]
  %v79 = vld [vmem:[%s0 + $0x118] sm:$0xf]
  %v80 = vld [vmem:[%s0 + $0x11c] sm:$0x1]
  %v81 = vld [vmem:[%s0 + $0x120] sm:$0xf]
  %v82 = vld [vmem:[%s0 + $0x124] sm:$0x1]
  %v83 = vld [vmem:[%s0 + $0x128] sm:$0xf]
  %v84 = vld [vmem:[%s0 + $0x12c] sm:$0x1]
  %v85 = vld [vmem:[%s0 + $0x130] sm:$0xf]
  %v86 = vld [vmem:[%s0 + $0x134] sm:$0x1]
  %v87 = vld [vmem:[%s0 + $0x138] sm:$0xf]
  %v88 = vld [vmem:[%s0 + $0x13c] sm:$0x1]
  %v89 = vld [vmem:[%s0 + $0x140] sm:$0xf]
  %v90 = vld [vmem:[%s0 + $0x144] sm:$0x1]
  %v91 = vld [vmem:[%s0 + $0x148] sm:$0xf]
  %v92 = vld [vmem:[%s0 + $0x14c] sm:$0x1]
  %v93 = vld [vmem:[%s0 + $0x150] sm:$0xf]
  %v94 = vld [vmem:[%s0 + $0x154] sm:$0x1]
  %v95 = vld [vmem:[%s0 + $0x158] sm:$0xf]
  %v96 = vld [vmem:[%s0 + $0x15c] sm:$0x1]
  %v97 = vld [vmem:[%s0 + $0x160] sm:$0xf]
  %v98 = vld [vmem:[%s0 + $0x164] sm:$0x1]
  %v99 = vld [vmem:[%s0 + $0x168] sm:$0xf]
  %v100 = vld [vmem:[%s0 + $0x16c] sm:$0x1]
  %v101 = vld [vmem:[%s0 + $0x170] sm:$0xf]
  %v102 = vld [vmem:[%s0 + $0x174] sm:$0x1]
  %v103 = vld [vmem:[%s0 + $0x178] sm:$0xf]
  %v104 = vld [vmem:[%s0 + $0x17c] sm:$0x1]
  %v105 = vld [vmem:[%s0 + $0x180] sm:$0xf]
  %v106 = vld [vmem:[%s0 + $0x184] sm:$0x1]
  %v107 = vld [vmem:[%s0 + $0x188] sm:$0xf]
  %v108 = vld [vmem:[%s0 + $0x18c] sm:$0x1]
  %v109 = vld [vmem:[%s0 + $0x190] sm:$0xf]
  %v110 = vld [vmem:[%s0 + $0x194] sm:$0x1]
  %v111 = vld [vmem:[%s0 + $0x198] sm:$0xf]
  %v112 = vld [vmem:[%s0 + $0x19c] sm:$0x1]
  %v113 = vld [vmem:[%s0 + $0x1a0] sm:$0xf]
  %v114 = vld [vmem:[%s0 + $0x1a4] sm:$0x1]
  %v115 = vld [vmem:[%s0 + $0x1a8] sm:$0xf]
  %v116 = vld [vmem:[%s0 + $0x1ac] sm:$0x1]
  %v117 = vld [vmem:[%s0 + $0x1b0] sm:$0xf]
  %v118 = vld [vmem:[%s0 + $0x1b4] sm:$0x1]
  %v119 = vld [vmem:[%s0 + $0x1b8] sm:$0xf]
  %v120 = vld [vmem:[%s0 + $0x1bc] sm:$0x1]
  %v121 = vld [vmem:[%s0 + $0x1c0] sm:$0xf]
  %v122 = vld [vmem:[%s0 + $0x1c4] sm:$0x1]
  %v123 = vld [vmem:[%s0 + $0x1c8] sm:$0xf]
  %v124 = vld [vmem:[%s0 + $0x1cc] sm:$0x1]
  %v125 = vld [vmem:[%s0 + $0x1d0] sm:$0xf]
  %v126 = vld [vmem:[%s0 + $0x1d4] sm:$0x1]
  %v127 = vld [vmem:[%s0 + $0x1d8] sm:$0xf]
  %v128 = vld [vmem:[%s0 + $0x1dc] sm:$0x1]
  %v129 = vld [vmem:[%s0 + $0x1e0] sm:$0xf]
  %v130 = vld [vmem:[%s0 + $0x1e4] sm:$0x1]
  %v131 = vld [vmem:[%s0 + $0x1e8] sm:$0xf]
  %v132 = vld [vmem:[%s0 + $0x1ec] sm:$0x1]
  %v133 = vld [vmem:[%s0 + $0x1f0] sm:$0xf]
  %v134 = vld [vmem:[%s0 + $0x1f4] sm:$0x1]
  %v135 = vld [vmem:[%s0 + $0x1f8] sm:$0xf]
  %v136 = vld [vmem:[%s0 + $0x1fc] sm:$0x1]
  %v137 = vld [vmem:[%s0 + $0x200] sm:$0xf]
  %v138 = vld [vmem:[%s0 + $0x204] sm:$0x1]
  %v139 = vld [vmem:[%s0 + $0x208] sm:$0xf]
  %v140 = vld [vmem:[%s0 + $0x20c] sm:$0x1]
  %v141 = vld [vmem:[%s0 + $0x210] sm:$0xf]
  %v142 = vld [vmem:[%s0 + $0x214] sm:$0x1]
  %v143 = vld [vmem:[%s0 + $0x218] sm:$0xf]
  %v144 = vld [vmem:[%s0 + $0x21c] sm:$0x1]
  %v145 = vld [vmem:[%s0 + $0x220] sm:$0xf]
  %v146 = vld [vmem:[%s0 + $0x224] sm:$0x1]
  %v147 = vld [vmem:[%s0 + $0x228] sm:$0xf]
  %v148 = vld [vmem:[%s0 + $0x22c] sm:$0x1]
  %v149 = vld [vmem:[%s0 + $0x230] sm:$0xf]
  %v150 = vld [vmem:[%s0 + $0x234] sm:$0x1]
  %v151 = vld [vmem:[%s0 + $0x238] sm:$0xf]
  %v152 = vld [vmem:[%s0 + $0x23c] sm:$0x1]
  %v153 = vld [vmem:[%s0 + $0x240] sm:$0xf]
  %v154 = vld [vmem:[%s0 + $0x244] sm:$0x1]
  %v155 = vld [vmem:[%s0 + $0x248] sm:$0xf]
  %v156 = vld [vmem:[%s0 + $0x24c] sm:$0x1]
  %v157 = vld [vmem:[%s0 + $0x250] sm:$0xf]
  %v158 = vld [vmem:[%s0 + $0x254] sm:$0x1]
  %v159 = vld [vmem:[%s0 + $0x258] sm:$0xf]
  %v160 = vld [vmem:[%s0 + $0x25c] sm:$0x1]
  %v161 = vld [vmem:[%s0 + $0x260] sm:$0xf]
  %v162 = vld [vmem:[%s0 + $0x264] sm:$0x1]
  %v163 = vld [vmem:[%s0 + $0x268] sm:$0xf]
  %v164 = vld [vmem:[%s0 + $0x26c] sm:$0x1]
  %v165 = vld [vmem:[%s0 + $0x270] sm:$0xf]
  %v166 = vld [vmem:[%s0 + $0x274] sm:$0x1]
  %v167 = vld [vmem:[%s0 + $0x278] sm:$0xf]
  %v168 = vld [vmem:[%s0 + $0x27c] sm:$0x1]
  %v169 = vld [vmem:[%s0 + $0x280] sm:$0xf]
  %v170 = vld [vmem:[%s0 + $0x284] sm:$0x1]
  %v171 = vld [vmem:[%s0 + $0x288] sm:$0xf]
  %v172 = vld [vmem:[%s0 + $0x28c] sm:$0x1]
  %v173 = vld [vmem:[%s0 + $0x290] sm:$0xf]
  %v174 = vld [vmem:[%s0 + $0x294] sm:$0x1]
  %v175 = vld [vmem:[%s0 + $0x298] sm:$0xf]
  %v176 = vld [vmem:[%s0 + $0x29c] sm:$0x1]
  %v177 = vld [vmem:[%s0 + $0x2a0] sm:$0xf]
  %v178 = vld [vmem:[%s0 + $0x2a4] sm:$0x1]
  %v179 = vld [vmem:[%s0 + $0x2a8] sm:$0xf]
  %v180 = vld [vmem:[%s0 + $0x2ac] sm:$0x1]
  %v181 = vld [vmem:[%s0 + $0x2b0] sm:$0xf]
  %v182 = vld [vmem:[%s0 + $0x2b4] sm:$0x1]
  %v183 = vld [vmem:[%s0 + $0x2b8] sm:$0xf]
  %v184 = vld [vmem:[%s0 + $0x2bc] sm:$0x1]
  %v185 = vld [vmem:[%s0 + $0x2c0] sm:$0xf]
  %v186 = vld [vmem:[%s0 + $0x2c4] sm:$0x1]
  %v187 = vld [vmem:[%s0 + $0x2c8] sm:$0xf]
  %v188 = vld [vmem:[%s0 + $0x2cc] sm:$0x1]
  %v189 = vld [vmem:[%s0 + $0x2d0] sm:$0xf]
  %v190 = vld [vmem:[%s0 + $0x2d4] sm:$0x1]
  %v191 = vld [vmem:[%s0 + $0x2d8] sm:$0xf]
  %v192 = vld [vmem:[%s0 + $0x2dc] sm:$0x1]
  %v193 = vld [vmem:[%s0 + $0x2e0] sm:$0xf]
  %v194 = vld [vmem:[%s0 + $0x2e4] sm:$0x1]
  %v195 = vld [vmem:[%s0 + $0x2e8] sm:$0xf]
  %v196 = vld [vmem:[%s0 + $0x2ec] sm:$0x1]
  %v197 = vld [vmem:[%s0 + $0x2f0] sm:$0xf]
  %v198 = vld [vmem:[%s0 + $0x2f4] sm:$0x1]
  %v199 = vld [vmem:[%s0 + $0x2f8] sm:$0xf]
  %v200 = vld [vmem:[%s0 + $0x2fc] sm:$0x1]
  %v201 = vld [vmem:[%s0 + $0x300] sm:$0xf]
  %v202 = vld [vmem:[%s0 + $0x304] sm:$0x1]
  %v203 = vld [vmem:[%s0 + $0x308] sm:$0xf]
  %v204 = vld [vmem:[%s0 + $0x30c] sm:$0x1]
  %v205 = vld [vmem:[%s0 + $0x310] sm:$0xf]
  %v206 = vld [vmem:[%s0 + $0x314] sm:$0x1]
  %v207 = vld [vmem:[%s0 + $0x318] sm:$0xf]
  %v208 = vld [vmem:[%s0 + $0x31c] sm:$0x1]
  %v209 = vld [vmem:[%s0 + $0x320] sm:$0xf]
  %v210 = vld [vmem:[%s0 + $0x324] sm:$0x1]
  %v211 = vld [vmem:[%s0 + $0x328] sm:$0xf]
  %v212 = vld [vmem:[%s0 + $0x32c] sm:$0x1]
  %v213 = vld [vmem:[%s0 + $0x330] sm:$0xf]
  %v214 = vld [vmem:[%s0 + $0x334] sm:$0x1]
  %v215 = vld [vmem:[%s0 + $0x338] sm:$0xf]
  %v216 = vld [vmem:[%s0 + $0x33c] sm:$0x1]
  %v217 = vld [vmem:[%s0 + $0x340] sm:$0xf]
  %v218 = vld [vmem:[%s0 + $0x344] sm:$0x1]
  %v219 = vld [vmem:[%s0 + $0x348] sm:$0xf]
  %v220 = vld [vmem:[%s0 + $0x34c] sm:$0x1]
  %v221 = vld [vmem:[%s0 + $0x350] sm:$0xf]
  %v222 = vld [vmem:[%s0 + $0x354] sm:$0x1]
  %v223 = vld [vmem:[%s0 + $0x358] sm:$0xf]
  %v224 = vld [vmem:[%s0 + $0x35c] sm:$0x1]
  %v225 = vld [vmem:[%s0 + $0x360] sm:$0xf]
  %v226 = vld [vmem:[%s0 + $0x364] sm:$0x1]
  %v227 = vld [vmem:[%s0 + $0x368] sm:$0xf]
  %v228 = vld [vmem:[%s0 + $0x36c] sm:$0x1]
  %v229 = vld [vmem:[%s0 + $0x370] sm:$0xf]
  %v230 = vld [vmem:[%s0 + $0x374] sm:$0x1]
  %v231 = vld [vmem:[%s0 + $0x378] sm:$0xf]
  %v232 = vld [vmem:[%s0 + $0x37c] sm:$0x1]
  %v233 = vld [vmem:[%s0 + $0x380] sm:$0xf]
  %v234 = vld [vmem:[%s0 + $0x384] sm:$0x1]
  %v235 = vld [vmem:[%s0 + $0x388] sm:$0xf]
  %v236 = vld [vmem:[%s0 + $0x38c] sm:$0x1]
  %v237 = vld [vmem:[%s0 + $0x390] sm:$0xf]
  %v238 = vld [vmem:[%s0 + $0x394] sm:$0x1]
  %v239 = vld [vmem:[%s0 + $0x398] sm:$0xf]
  %v240 = vld [vmem:[%s0 + $0x39c] sm:$0x1]
  %v241 = vld [vmem:[%s0 + $0x3a0] sm:$0xf]
  %v242 = vld [vmem:[%s0 + $0x3a4] sm:$0x1]
  %v243 = vld [vmem:[%s0 + $0x3a8] sm:$0xf]
  %v244 = vld [vmem:[%s0 + $0x3ac] sm:$0x1]
  %v245 = vld [vmem:[%s0 + $0x3b0] sm:$0xf]
  %v246 = vld [vmem:[%s0 + $0x3b4] sm:$0x1]
  %v247 = vld [vmem:[%s0 + $0x3b8] sm:$0xf]
  %v248 = vld [vmem:[%s0 + $0x3bc] sm:$0x1]
  %v249 = vld [vmem:[%s0 + $0x3c0] sm:$0xf]
  %v250 = vld [vmem:[%s0 + $0x3c4] sm:$0x1]
  %v251 = vld [vmem:[%s0 + $0x3c8] sm:$0xf]
  %v252 = vld [vmem:[%s0 + $0x3cc] sm:$0x1]
  %v253 = vld [vmem:[%s0 + $0x3d0] sm:$0xf]
  %v254 = vld [vmem:[%s0 + $0x3d4] sm:$0x1]
  %v255 = vld [vmem:[%s0 + $0x3d8] sm:$0xf]
  %v256 = vld [vmem:[%s0 + $0x3dc] sm:$0x1]
  %v257 = vld [vmem:[%s0 + $0x3e0] sm:$0xf]
  %v258 = vld [vmem:[%s0 + $0x3e4] sm:$0x1]
  %v259 = vld [vmem:[%s0 + $0x3e8] sm:$0xf]
  %v260 = vld [vmem:[%s0 + $0x3ec] sm:$0x1]
  %v261 = vld [vmem:[%s0 + $0x3f0] sm:$0xf]
  %v262 = vld [vmem:[%s0 + $0x3f4] sm:$0x1]
  %v263 = vld [vmem:[%s0 + $0x3f8] sm:$0xf]
  %v264 = vld [vmem:[%s0 + $0x3fc] sm:$0x1]
  %v521 = vunpack.c.l.b16 %v9
  %v522 = vunpack.c.l.b16 %v10
  %v523 = vunpack.c.l.b16 %v11
  %v524 = vunpack.c.l.b16 %v12
  %v525 = vunpack.c.l.b16 %v13
  %v526 = vunpack.c.l.b16 %v14
  %v527 = vunpack.c.l.b16 %v15
  %v528 = vunpack.c.l.b16 %v16
  %v529 = vunpack.c.l.b16 %v17
  %v530 = vunpack.c.l.b16 %v18
  %v531 = vunpack.c.l.b16 %v19
  %v532 = vunpack.c.l.b16 %v20
  %v533 = vunpack.c.l.b16 %v21
  %v534 = vunpack.c.l.b16 %v22
  %v535 = vunpack.c.l.b16 %v23
  %v536 = vunpack.c.l.b16 %v24
  %v537 = vunpack.c.l.b16 %v25
  %v538 = vunpack.c.l.b16 %v26
  %v539 = vunpack.c.l.b16 %v27
  %v540 = vunpack.c.l.b16 %v28
  %v541 = vunpack.c.l.b16 %v29
  %v542 = vunpack.c.l.b16 %v30
  %v543 = vunpack.c.l.b16 %v31
  %v544 = vunpack.c.l.b16 %v32
  %v545 = vunpack.c.l.b16 %v33
  %v546 = vunpack.c.l.b16 %v34
  %v547 = vunpack.c.l.b16 %v35
  %v548 = vunpack.c.l.b16 %v36
  %v549 = vunpack.c.l.b16 %v37
  %v550 = vunpack.c.l.b16 %v38
  %v551 = vunpack.c.l.b16 %v39
  %v552 = vunpack.c.l.b16 %v40
  %v553 = vunpack.c.l.b16 %v41
  %v554 = vunpack.c.l.b16 %v42
  %v555 = vunpack.c.l.b16 %v43
  %v556 = vunpack.c.l.b16 %v44
  %v557 = vunpack.c.l.b16 %v45
  %v558 = vunpack.c.l.b16 %v46
  %v559 = vunpack.c.l.b16 %v47
  %v560 = vunpack.c.l.b16 %v48
  %v561 = vunpack.c.l.b16 %v49
  %v562 = vunpack.c.l.b16 %v50
  %v563 = vunpack.c.l.b16 %v51
  %v564 = vunpack.c.l.b16 %v52
  %v565 = vunpack.c.l.b16 %v53
  %v566 = vunpack.c.l.b16 %v54
  %v567 = vunpack.c.l.b16 %v55
  %v568 = vunpack.c.l.b16 %v56
  %v569 = vunpack.c.l.b16 %v57
  %v570 = vunpack.c.l.b16 %v58
  %v571 = vunpack.c.l.b16 %v59
  %v572 = vunpack.c.l.b16 %v60
  %v573 = vunpack.c.l.b16 %v61
  %v574 = vunpack.c.l.b16 %v62
  %v575 = vunpack.c.l.b16 %v63
  %v576 = vunpack.c.l.b16 %v64
  %v577 = vunpack.c.l.b16 %v65
  %v578 = vunpack.c.l.b16 %v66
  %v579 = vunpack.c.l.b16 %v67
  %v580 = vunpack.c.l.b16 %v68
  %v581 = vunpack.c.l.b16 %v69
  %v582 = vunpack.c.l.b16 %v70
  %v583 = vunpack.c.l.b16 %v71
  %v584 = vunpack.c.l.b16 %v72
  %v585 = vunpack.c.l.b16 %v73
  %v586 = vunpack.c.l.b16 %v74
  %v587 = vunpack.c.l.b16 %v75
  %v588 = vunpack.c.l.b16 %v76
  %v589 = vunpack.c.l.b16 %v77
  %v590 = vunpack.c.l.b16 %v78
  %v591 = vunpack.c.l.b16 %v79
  %v592 = vunpack.c.l.b16 %v80
  %v593 = vunpack.c.l.b16 %v81
  %v594 = vunpack.c.l.b16 %v82
  %v595 = vunpack.c.l.b16 %v83
  %v596 = vunpack.c.l.b16 %v84
  %v597 = vunpack.c.l.b16 %v85
  %v598 = vunpack.c.l.b16 %v86
  %v599 = vunpack.c.l.b16 %v87
  %v600 = vunpack.c.l.b16 %v88
  %v601 = vunpack.c.l.b16 %v89
  %v602 = vunpack.c.l.b16 %v90
  %v603 = vunpack.c.l.b16 %v91
  %v604 = vunpack.c.l.b16 %v92
  %v605 = vunpack.c.l.b16 %v93
  %v606 = vunpack.c.l.b16 %v94
  %v607 = vunpack.c.l.b16 %v95
  %v608 = vunpack.c.l.b16 %v96
  %v609 = vunpack.c.l.b16 %v97
  %v610 = vunpack.c.l.b16 %v98
  %v611 = vunpack.c.l.b16 %v99
  %v612 = vunpack.c.l.b16 %v100
  %v613 = vunpack.c.l.b16 %v101
  %v614 = vunpack.c.l.b16 %v102
  %v615 = vunpack.c.l.b16 %v103
  %v616 = vunpack.c.l.b16 %v104
  %v617 = vunpack.c.l.b16 %v105
  %v618 = vunpack.c.l.b16 %v106
  %v619 = vunpack.c.l.b16 %v107
  %v620 = vunpack.c.l.b16 %v108
  %v621 = vunpack.c.l.b16 %v109
  %v622 = vunpack.c.l.b16 %v110
  %v623 = vunpack.c.l.b16 %v111
  %v624 = vunpack.c.l.b16 %v112
  %v625 = vunpack.c.l.b16 %v113
  %v626 = vunpack.c.l.b16 %v114
  %v627 = vunpack.c.l.b16 %v115
  %v628 = vunpack.c.l.b16 %v116
  %v629 = vunpack.c.l.b16 %v117
  %v630 = vunpack.c.l.b16 %v118
  %v631 = vunpack.c.l.b16 %v119
  %v632 = vunpack.c.l.b16 %v120
  %v633 = vunpack.c.l.b16 %v121
  %v634 = vunpack.c.l.b16 %v122
  %v635 = vunpack.c.l.b16 %v123
  %v636 = vunpack.c.l.b16 %v124
  %v637 = vunpack.c.l.b16 %v125
  %v638 = vunpack.c.l.b16 %v126
  %v639 = vunpack.c.l.b16 %v127
  %v640 = vunpack.c.l.b16 %v128
  %v641 = vunpack.c.l.b16 %v129
  %v642 = vunpack.c.l.b16 %v130
  %v643 = vunpack.c.l.b16 %v131
  %v644 = vunpack.c.l.b16 %v132
  %v645 = vunpack.c.l.b16 %v133
  %v646 = vunpack.c.l.b16 %v134
  %v647 = vunpack.c.l.b16 %v135
  %v648 = vunpack.c.l.b16 %v136
  %v649 = vunpack.c.l.b16 %v137
  %v650 = vunpack.c.l.b16 %v138
  %v651 = vunpack.c.l.b16 %v139
  %v652 = vunpack.c.l.b16 %v140
  %v653 = vunpack.c.l.b16 %v141
  %v654 = vunpack.c.l.b16 %v142
  %v655 = vunpack.c.l.b16 %v143
  %v656 = vunpack.c.l.b16 %v144
  %v657 = vunpack.c.l.b16 %v145
  %v658 = vunpack.c.l.b16 %v146
  %v659 = vunpack.c.l.b16 %v147
  %v660 = vunpack.c.l.b16 %v148
  %v661 = vunpack.c.l.b16 %v149
  %v662 = vunpack.c.l.b16 %v150
  %v663 = vunpack.c.l.b16 %v151
  %v664 = vunpack.c.l.b16 %v152
  %v665 = vunpack.c.l.b16 %v153
  %v666 = vunpack.c.l.b16 %v154
  %v667 = vunpack.c.l.b16 %v155
  %v668 = vunpack.c.l.b16 %v156
  %v669 = vunpack.c.l.b16 %v157
  %v670 = vunpack.c.l.b16 %v158
  %v671 = vunpack.c.l.b16 %v159
  %v672 = vunpack.c.l.b16 %v160
  %v673 = vunpack.c.l.b16 %v161
  %v674 = vunpack.c.l.b16 %v162
  %v675 = vunpack.c.l.b16 %v163
  %v676 = vunpack.c.l.b16 %v164
  %v677 = vunpack.c.l.b16 %v165
  %v678 = vunpack.c.l.b16 %v166
  %v679 = vunpack.c.l.b16 %v167
  %v680 = vunpack.c.l.b16 %v168
  %v681 = vunpack.c.l.b16 %v169
  %v682 = vunpack.c.l.b16 %v170
  %v683 = vunpack.c.l.b16 %v171
  %v684 = vunpack.c.l.b16 %v172
  %v685 = vunpack.c.l.b16 %v173
  %v686 = vunpack.c.l.b16 %v174
  %v687 = vunpack.c.l.b16 %v175
  %v688 = vunpack.c.l.b16 %v176
  %v689 = vunpack.c.l.b16 %v177
  %v690 = vunpack.c.l.b16 %v178
  %v691 = vunpack.c.l.b16 %v179
  %v692 = vunpack.c.l.b16 %v180
  %v693 = vunpack.c.l.b16 %v181
  %v694 = vunpack.c.l.b16 %v182
  %v695 = vunpack.c.l.b16 %v183
  %v696 = vunpack.c.l.b16 %v184
  %v697 = vunpack.c.l.b16 %v185
  %v698 = vunpack.c.l.b16 %v186
  %v699 = vunpack.c.l.b16 %v187
  %v700 = vunpack.c.l.b16 %v188
  %v701 = vunpack.c.l.b16 %v189
  %v702 = vunpack.c.l.b16 %v190
  %v703 = vunpack.c.l.b16 %v191
  %v704 = vunpack.c.l.b16 %v192
  %v705 = vunpack.c.l.b16 %v193
  %v706 = vunpack.c.l.b16 %v194
  %v707 = vunpack.c.l.b16 %v195
  %v708 = vunpack.c.l.b16 %v196
  %v709 = vunpack.c.l.b16 %v197
  %v710 = vunpack.c.l.b16 %v198
  %v711 = vunpack.c.l.b16 %v199
  %v712 = vunpack.c.l.b16 %v200
  %v713 = vunpack.c.l.b16 %v201
  %v714 = vunpack.c.l.b16 %v202
  %v715 = vunpack.c.l.b16 %v203
  %v716 = vunpack.c.l.b16 %v204
  %v717 = vunpack.c.l.b16 %v205
  %v718 = vunpack.c.l.b16 %v206
  %v719 = vunpack.c.l.b16 %v207
  %v720 = vunpack.c.l.b16 %v208
  %v721 = vunpack.c.l.b16 %v209
  %v722 = vunpack.c.l.b16 %v210
  %v723 = vunpack.c.l.b16 %v211
  %v724 = vunpack.c.l.b16 %v212
  %v725 = vunpack.c.l.b16 %v213
  %v726 = vunpack.c.l.b16 %v214
  %v727 = vunpack.c.l.b16 %v215
  %v728 = vunpack.c.l.b16 %v216
  %v729 = vunpack.c.l.b16 %v217
  %v730 = vunpack.c.l.b16 %v218
  %v731 = vunpack.c.l.b16 %v219
  %v732 = vunpack.c.l.b16 %v220
  %v733 = vunpack.c.l.b16 %v221
  %v734 = vunpack.c.l.b16 %v222
  %v735 = vunpack.c.l.b16 %v223
  %v736 = vunpack.c.l.b16 %v224
  %v737 = vunpack.c.l.b16 %v225
  %v738 = vunpack.c.l.b16 %v226
  %v739 = vunpack.c.l.b16 %v227
  %v740 = vunpack.c.l.b16 %v228
  %v741 = vunpack.c.l.b16 %v229
  %v742 = vunpack.c.l.b16 %v230
  %v743 = vunpack.c.l.b16 %v231
  %v744 = vunpack.c.l.b16 %v232
  %v745 = vunpack.c.l.b16 %v233
  %v746 = vunpack.c.l.b16 %v234
  %v747 = vunpack.c.l.b16 %v235
  %v748 = vunpack.c.l.b16 %v236
  %v749 = vunpack.c.l.b16 %v237
  %v750 = vunpack.c.l.b16 %v238
  %v751 = vunpack.c.l.b16 %v239
  %v752 = vunpack.c.l.b16 %v240
  %v753 = vunpack.c.l.b16 %v241
  %v754 = vunpack.c.l.b16 %v242
  %v755 = vunpack.c.l.b16 %v243
  %v756 = vunpack.c.l.b16 %v244
  %v757 = vunpack.c.l.b16 %v245
  %v758 = vunpack.c.l.b16 %v246
  %v759 = vunpack.c.l.b16 %v247
  %v760 = vunpack.c.l.b16 %v248
  %v761 = vunpack.c.l.b16 %v249
  %v762 = vunpack.c.l.b16 %v250
  %v763 = vunpack.c.l.b16 %v251
  %v764 = vunpack.c.l.b16 %v252
  %v765 = vunpack.c.l.b16 %v253
  %v766 = vunpack.c.l.b16 %v254
  %v767 = vunpack.c.l.b16 %v255
  %v768 = vunpack.c.l.b16 %v256
  %v769 = vunpack.c.l.b16 %v257
  %v770 = vunpack.c.l.b16 %v258
  %v771 = vunpack.c.l.b16 %v259
  %v772 = vunpack.c.l.b16 %v260
  %v773 = vunpack.c.l.b16 %v261
  %v774 = vunpack.c.l.b16 %v262
  %v775 = vunpack.c.l.b16 %v263
  %v776 = vunpack.c.l.b16 %v264
  %v777 = vpack.c.b16 %v522, %v521
  %v778 = vpack.c.b16 %v524, %v523
  %v779 = vpack.c.b16 %v526, %v525
  %v780 = vpack.c.b16 %v528, %v527
  %v781 = vpack.c.b16 %v530, %v529
  %v782 = vpack.c.b16 %v532, %v531
  %v783 = vpack.c.b16 %v534, %v533
  %v784 = vpack.c.b16 %v536, %v535
  %v785 = vpack.c.b16 %v538, %v537
  %v786 = vpack.c.b16 %v540, %v539
  %v787 = vpack.c.b16 %v542, %v541
  %v788 = vpack.c.b16 %v544, %v543
  %v789 = vpack.c.b16 %v546, %v545
  %v790 = vpack.c.b16 %v548, %v547
  %v791 = vpack.c.b16 %v550, %v549
  %v792 = vpack.c.b16 %v552, %v551
  %v793 = vpack.c.b16 %v554, %v553
  %v794 = vpack.c.b16 %v556, %v555
  %v795 = vpack.c.b16 %v558, %v557
  %v796 = vpack.c.b16 %v560, %v559
  %v797 = vpack.c.b16 %v562, %v561
  %v798 = vpack.c.b16 %v564, %v563
  %v799 = vpack.c.b16 %v566, %v565
  %v800 = vpack.c.b16 %v568, %v567
  %v801 = vpack.c.b16 %v570, %v569
  %v802 = vpack.c.b16 %v572, %v571
  %v803 = vpack.c.b16 %v574, %v573
  %v804 = vpack.c.b16 %v576, %v575
  %v805 = vpack.c.b16 %v578, %v577
  %v806 = vpack.c.b16 %v580, %v579
  %v807 = vpack.c.b16 %v582, %v581
  %v808 = vpack.c.b16 %v584, %v583
  %v809 = vpack.c.b16 %v586, %v585
  %v810 = vpack.c.b16 %v588, %v587
  %v811 = vpack.c.b16 %v590, %v589
  %v812 = vpack.c.b16 %v592, %v591
  %v813 = vpack.c.b16 %v594, %v593
  %v814 = vpack.c.b16 %v596, %v595
  %v815 = vpack.c.b16 %v598, %v597
  %v816 = vpack.c.b16 %v600, %v599
  %v817 = vpack.c.b16 %v602, %v601
  %v818 = vpack.c.b16 %v604, %v603
  %v819 = vpack.c.b16 %v606, %v605
  %v820 = vpack.c.b16 %v608, %v607
  %v821 = vpack.c.b16 %v610, %v609
  %v822 = vpack.c.b16 %v612, %v611
  %v823 = vpack.c.b16 %v614, %v613
  %v824 = vpack.c.b16 %v616, %v615
  %v825 = vpack.c.b16 %v618, %v617
  %v826 = vpack.c.b16 %v620, %v619
  %v827 = vpack.c.b16 %v622, %v621
  %v828 = vpack.c.b16 %v624, %v623
  %v829 = vpack.c.b16 %v626, %v625
  %v830 = vpack.c.b16 %v628, %v627
  %v831 = vpack.c.b16 %v630, %v629
  %v832 = vpack.c.b16 %v632, %v631
  %v833 = vpack.c.b16 %v634, %v633
  %v834 = vpack.c.b16 %v636, %v635
  %v835 = vpack.c.b16 %v638, %v637
  %v836 = vpack.c.b16 %v640, %v639
  %v837 = vpack.c.b16 %v642, %v641
  %v838 = vpack.c.b16 %v644, %v643
  %v839 = vpack.c.b16 %v646, %v645
  %v840 = vpack.c.b16 %v648, %v647
  %v841 = vpack.c.b16 %v650, %v649
  %v842 = vpack.c.b16 %v652, %v651
  %v843 = vpack.c.b16 %v654, %v653
  %v844 = vpack.c.b16 %v656, %v655
  %v845 = vpack.c.b16 %v658, %v657
  %v846 = vpack.c.b16 %v660, %v659
  %v847 = vpack.c.b16 %v662, %v661
  %v848 = vpack.c.b16 %v664, %v663
  %v849 = vpack.c.b16 %v666, %v665
  %v850 = vpack.c.b16 %v668, %v667
  %v851 = vpack.c.b16 %v670, %v669
  %v852 = vpack.c.b16 %v672, %v671
  %v853 = vpack.c.b16 %v674, %v673
  %v854 = vpack.c.b16 %v676, %v675
  %v855 = vpack.c.b16 %v678, %v677
  %v856 = vpack.c.b16 %v680, %v679
  %v857 = vpack.c.b16 %v682, %v681
  %v858 = vpack.c.b16 %v684, %v683
  %v859 = vpack.c.b16 %v686, %v685
  %v860 = vpack.c.b16 %v688, %v687
  %v861 = vpack.c.b16 %v690, %v689
  %v862 = vpack.c.b16 %v692, %v691
  %v863 = vpack.c.b16 %v694, %v693
  %v864 = vpack.c.b16 %v696, %v695
  %v865 = vpack.c.b16 %v698, %v697
  %v866 = vpack.c.b16 %v700, %v699
  %v867 = vpack.c.b16 %v702, %v701
  %v868 = vpack.c.b16 %v704, %v703
  %v869 = vpack.c.b16 %v706, %v705
  %v870 = vpack.c.b16 %v708, %v707
  %v871 = vpack.c.b16 %v710, %v709
  %v872 = vpack.c.b16 %v712, %v711
  %v873 = vpack.c.b16 %v714, %v713
  %v874 = vpack.c.b16 %v716, %v715
  %v875 = vpack.c.b16 %v718, %v717
  %v876 = vpack.c.b16 %v720, %v719
  %v877 = vpack.c.b16 %v722, %v721
  %v878 = vpack.c.b16 %v724, %v723
  %v879 = vpack.c.b16 %v726, %v725
  %v880 = vpack.c.b16 %v728, %v727
  %v881 = vpack.c.b16 %v730, %v729
  %v882 = vpack.c.b16 %v732, %v731
  %v883 = vpack.c.b16 %v734, %v733
  %v884 = vpack.c.b16 %v736, %v735
  %v885 = vpack.c.b16 %v738, %v737
  %v886 = vpack.c.b16 %v740, %v739
  %v887 = vpack.c.b16 %v742, %v741
  %v888 = vpack.c.b16 %v744, %v743
  %v889 = vpack.c.b16 %v746, %v745
  %v890 = vpack.c.b16 %v748, %v747
  %v891 = vpack.c.b16 %v750, %v749
  %v892 = vpack.c.b16 %v752, %v751
  %v893 = vpack.c.b16 %v754, %v753
  %v894 = vpack.c.b16 %v756, %v755
  %v895 = vpack.c.b16 %v758, %v757
  %v896 = vpack.c.b16 %v760, %v759
  %v897 = vpack.c.b16 %v762, %v761
  %v898 = vpack.c.b16 %v764, %v763
  %v899 = vpack.c.b16 %v766, %v765
  %v900 = vpack.c.b16 %v768, %v767
  %v901 = vpack.c.b16 %v770, %v769
  %v902 = vpack.c.b16 %v772, %v771
  %v903 = vpack.c.b16 %v774, %v773
  %v904 = vpack.c.b16 %v776, %v775
  %vm1033 = vcmask 1044480
  %vm1034 = vsmask.f32 4352
  %vm1035 = vmand %vm1033, %vm1034
  %v1036 = vsel %vm1035, %v777, 4286644096
  %v1037 = vunpack.i.l.bf16 %v1036
  %v1038 = vunpack.i.h.bf16 %v1036
  %v1039 = vmax.f32 %v1037, %v1038
  %v1040 = vrot.slane %v1039, 4
  %v1041 = vmax.f32 %v1039, %v1040
  %v1042 = vrot.slane %v1041, 2
  %v1043 = vmax.f32 %v1041, %v1042
  %v1044 = vrot.slane %v1043, 1
  %v1045 = vmax.f32 %v1043, %v1044
  %v1046 = vpack.i.bf16 %v1045, %v1045
  %v1047 = vsel %vm1035, %v778, 4286644096
  %v1048 = vunpack.i.l.bf16 %v1047
  %v1049 = vunpack.i.h.bf16 %v1047
  %v1050 = vmax.f32 %v1048, %v1049
  %v1051 = vrot.slane %v1050, 4
  %v1052 = vmax.f32 %v1050, %v1051
  %v1053 = vrot.slane %v1052, 2
  %v1054 = vmax.f32 %v1052, %v1053
  %v1055 = vrot.slane %v1054, 1
  %v1056 = vmax.f32 %v1054, %v1055
  %v1057 = vpack.i.bf16 %v1056, %v1056
  %v1058 = vsel %vm1035, %v779, 4286644096
  %v1059 = vunpack.i.l.bf16 %v1058
  %v1060 = vunpack.i.h.bf16 %v1058
  %v1061 = vmax.f32 %v1059, %v1060
  %v1062 = vrot.slane %v1061, 4
  %v1063 = vmax.f32 %v1061, %v1062
  %v1064 = vrot.slane %v1063, 2
  %v1065 = vmax.f32 %v1063, %v1064
  %v1066 = vrot.slane %v1065, 1
  %v1067 = vmax.f32 %v1065, %v1066
  %v1068 = vpack.i.bf16 %v1067, %v1067
  %v1069 = vsel %vm1035, %v780, 4286644096
  %v1070 = vunpack.i.l.bf16 %v1069
  %v1071 = vunpack.i.h.bf16 %v1069
  %v1072 = vmax.f32 %v1070, %v1071
  %v1073 = vrot.slane %v1072, 4
  %v1074 = vmax.f32 %v1072, %v1073
  %v1075 = vrot.slane %v1074, 2
  %v1076 = vmax.f32 %v1074, %v1075
  %v1077 = vrot.slane %v1076, 1
  %v1078 = vmax.f32 %v1076, %v1077
  %v1079 = vpack.i.bf16 %v1078, %v1078
  %v1080 = vsel %vm1035, %v781, 4286644096
  %v1081 = vunpack.i.l.bf16 %v1080
  %v1082 = vunpack.i.h.bf16 %v1080
  %v1083 = vmax.f32 %v1081, %v1082
  %v1084 = vrot.slane %v1083, 4
  %v1085 = vmax.f32 %v1083, %v1084
  %v1086 = vrot.slane %v1085, 2
  %v1087 = vmax.f32 %v1085, %v1086
  %v1088 = vrot.slane %v1087, 1
  %v1089 = vmax.f32 %v1087, %v1088
  %v1090 = vpack.i.bf16 %v1089, %v1089
  %v1091 = vsel %vm1035, %v782, 4286644096
  %v1092 = vunpack.i.l.bf16 %v1091
  %v1093 = vunpack.i.h.bf16 %v1091
  %v1094 = vmax.f32 %v1092, %v1093
  %v1095 = vrot.slane %v1094, 4
  %v1096 = vmax.f32 %v1094, %v1095
  %v1097 = vrot.slane %v1096, 2
  %v1098 = vmax.f32 %v1096, %v1097
  %v1099 = vrot.slane %v1098, 1
  %v1100 = vmax.f32 %v1098, %v1099
  %v1101 = vpack.i.bf16 %v1100, %v1100
  %v1102 = vsel %vm1035, %v783, 4286644096
  %v1103 = vunpack.i.l.bf16 %v1102
  %v1104 = vunpack.i.h.bf16 %v1102
  %v1105 = vmax.f32 %v1103, %v1104
  %v1106 = vrot.slane %v1105, 4
  %v1107 = vmax.f32 %v1105, %v1106
  %v1108 = vrot.slane %v1107, 2
  %v1109 = vmax.f32 %v1107, %v1108
  %v1110 = vrot.slane %v1109, 1
  %v1111 = vmax.f32 %v1109, %v1110
  %v1112 = vpack.i.bf16 %v1111, %v1111
  %v1113 = vsel %vm1035, %v784, 4286644096
  %v1114 = vunpack.i.l.bf16 %v1113
  %v1115 = vunpack.i.h.bf16 %v1113
  %v1116 = vmax.f32 %v1114, %v1115
  %v1117 = vrot.slane %v1116, 4
  %v1118 = vmax.f32 %v1116, %v1117
  %v1119 = vrot.slane %v1118, 2
  %v1120 = vmax.f32 %v1118, %v1119
  %v1121 = vrot.slane %v1120, 1
  %v1122 = vmax.f32 %v1120, %v1121
  %v1123 = vpack.i.bf16 %v1122, %v1122
  %v1124 = vsel %vm1035, %v785, 4286644096
  %v1125 = vunpack.i.l.bf16 %v1124
  %v1126 = vunpack.i.h.bf16 %v1124
  %v1127 = vmax.f32 %v1125, %v1126
  %v1128 = vrot.slane %v1127, 4
  %v1129 = vmax.f32 %v1127, %v1128
  %v1130 = vrot.slane %v1129, 2
  %v1131 = vmax.f32 %v1129, %v1130
  %v1132 = vrot.slane %v1131, 1
  %v1133 = vmax.f32 %v1131, %v1132
  %v1134 = vpack.i.bf16 %v1133, %v1133
  %v1135 = vsel %vm1035, %v786, 4286644096
  %v1136 = vunpack.i.l.bf16 %v1135
  %v1137 = vunpack.i.h.bf16 %v1135
  %v1138 = vmax.f32 %v1136, %v1137
  %v1139 = vrot.slane %v1138, 4
  %v1140 = vmax.f32 %v1138, %v1139
  %v1141 = vrot.slane %v1140, 2
  %v1142 = vmax.f32 %v1140, %v1141
  %v1143 = vrot.slane %v1142, 1
  %v1144 = vmax.f32 %v1142, %v1143
  %v1145 = vpack.i.bf16 %v1144, %v1144
  %v1146 = vsel %vm1035, %v787, 4286644096
  %v1147 = vunpack.i.l.bf16 %v1146
  %v1148 = vunpack.i.h.bf16 %v1146
  %v1149 = vmax.f32 %v1147, %v1148
  %v1150 = vrot.slane %v1149, 4
  %v1151 = vmax.f32 %v1149, %v1150
  %v1152 = vrot.slane %v1151, 2
  %v1153 = vmax.f32 %v1151, %v1152
  %v1154 = vrot.slane %v1153, 1
  %v1155 = vmax.f32 %v1153, %v1154
  %v1156 = vpack.i.bf16 %v1155, %v1155
  %v1157 = vsel %vm1035, %v788, 4286644096
  %v1158 = vunpack.i.l.bf16 %v1157
  %v1159 = vunpack.i.h.bf16 %v1157
  %v1160 = vmax.f32 %v1158, %v1159
  %v1161 = vrot.slane %v1160, 4
  %v1162 = vmax.f32 %v1160, %v1161
  %v1163 = vrot.slane %v1162, 2
  %v1164 = vmax.f32 %v1162, %v1163
  %v1165 = vrot.slane %v1164, 1
  %v1166 = vmax.f32 %v1164, %v1165
  %v1167 = vpack.i.bf16 %v1166, %v1166
  %v1168 = vsel %vm1035, %v789, 4286644096
  %v1169 = vunpack.i.l.bf16 %v1168
  %v1170 = vunpack.i.h.bf16 %v1168
  %v1171 = vmax.f32 %v1169, %v1170
  %v1172 = vrot.slane %v1171, 4
  %v1173 = vmax.f32 %v1171, %v1172
  %v1174 = vrot.slane %v1173, 2
  %v1175 = vmax.f32 %v1173, %v1174
  %v1176 = vrot.slane %v1175, 1
  %v1177 = vmax.f32 %v1175, %v1176
  %v1178 = vpack.i.bf16 %v1177, %v1177
  %v1179 = vsel %vm1035, %v790, 4286644096
  %v1180 = vunpack.i.l.bf16 %v1179
  %v1181 = vunpack.i.h.bf16 %v1179
  %v1182 = vmax.f32 %v1180, %v1181
  %v1183 = vrot.slane %v1182, 4
  %v1184 = vmax.f32 %v1182, %v1183
  %v1185 = vrot.slane %v1184, 2
  %v1186 = vmax.f32 %v1184, %v1185
  %v1187 = vrot.slane %v1186, 1
  %v1188 = vmax.f32 %v1186, %v1187
  %v1189 = vpack.i.bf16 %v1188, %v1188
  %v1190 = vsel %vm1035, %v791, 4286644096
  %v1191 = vunpack.i.l.bf16 %v1190
  %v1192 = vunpack.i.h.bf16 %v1190
  %v1193 = vmax.f32 %v1191, %v1192
  %v1194 = vrot.slane %v1193, 4
  %v1195 = vmax.f32 %v1193, %v1194
  %v1196 = vrot.slane %v1195, 2
  %v1197 = vmax.f32 %v1195, %v1196
  %v1198 = vrot.slane %v1197, 1
  %v1199 = vmax.f32 %v1197, %v1198
  %v1200 = vpack.i.bf16 %v1199, %v1199
  %v1201 = vsel %vm1035, %v792, 4286644096
  %v1202 = vunpack.i.l.bf16 %v1201
  %v1203 = vunpack.i.h.bf16 %v1201
  %v1204 = vmax.f32 %v1202, %v1203
  %v1205 = vrot.slane %v1204, 4
  %v1206 = vmax.f32 %v1204, %v1205
  %v1207 = vrot.slane %v1206, 2
  %v1208 = vmax.f32 %v1206, %v1207
  %v1209 = vrot.slane %v1208, 1
  %v1210 = vmax.f32 %v1208, %v1209
  %v1211 = vpack.i.bf16 %v1210, %v1210
  %v1212 = vsel %vm1035, %v793, 4286644096
  %v1213 = vunpack.i.l.bf16 %v1212
  %v1214 = vunpack.i.h.bf16 %v1212
  %v1215 = vmax.f32 %v1213, %v1214
  %v1216 = vrot.slane %v1215, 4
  %v1217 = vmax.f32 %v1215, %v1216
  %v1218 = vrot.slane %v1217, 2
  %v1219 = vmax.f32 %v1217, %v1218
  %v1220 = vrot.slane %v1219, 1
  %v1221 = vmax.f32 %v1219, %v1220
  %v1222 = vpack.i.bf16 %v1221, %v1221
  %v1223 = vsel %vm1035, %v794, 4286644096
  %v1224 = vunpack.i.l.bf16 %v1223
  %v1225 = vunpack.i.h.bf16 %v1223
  %v1226 = vmax.f32 %v1224, %v1225
  %v1227 = vrot.slane %v1226, 4
  %v1228 = vmax.f32 %v1226, %v1227
  %v1229 = vrot.slane %v1228, 2
  %v1230 = vmax.f32 %v1228, %v1229
  %v1231 = vrot.slane %v1230, 1
  %v1232 = vmax.f32 %v1230, %v1231
  %v1233 = vpack.i.bf16 %v1232, %v1232
  %v1234 = vsel %vm1035, %v795, 4286644096
  %v1235 = vunpack.i.l.bf16 %v1234
  %v1236 = vunpack.i.h.bf16 %v1234
  %v1237 = vmax.f32 %v1235, %v1236
  %v1238 = vrot.slane %v1237, 4
  %v1239 = vmax.f32 %v1237, %v1238
  %v1240 = vrot.slane %v1239, 2
  %v1241 = vmax.f32 %v1239, %v1240
  %v1242 = vrot.slane %v1241, 1
  %v1243 = vmax.f32 %v1241, %v1242
  %v1244 = vpack.i.bf16 %v1243, %v1243
  %v1245 = vsel %vm1035, %v796, 4286644096
  %v1246 = vunpack.i.l.bf16 %v1245
  %v1247 = vunpack.i.h.bf16 %v1245
  %v1248 = vmax.f32 %v1246, %v1247
  %v1249 = vrot.slane %v1248, 4
  %v1250 = vmax.f32 %v1248, %v1249
  %v1251 = vrot.slane %v1250, 2
  %v1252 = vmax.f32 %v1250, %v1251
  %v1253 = vrot.slane %v1252, 1
  %v1254 = vmax.f32 %v1252, %v1253
  %v1255 = vpack.i.bf16 %v1254, %v1254
  %v1256 = vsel %vm1035, %v797, 4286644096
  %v1257 = vunpack.i.l.bf16 %v1256
  %v1258 = vunpack.i.h.bf16 %v1256
  %v1259 = vmax.f32 %v1257, %v1258
  %v1260 = vrot.slane %v1259, 4
  %v1261 = vmax.f32 %v1259, %v1260
  %v1262 = vrot.slane %v1261, 2
  %v1263 = vmax.f32 %v1261, %v1262
  %v1264 = vrot.slane %v1263, 1
  %v1265 = vmax.f32 %v1263, %v1264
  %v1266 = vpack.i.bf16 %v1265, %v1265
  %v1267 = vsel %vm1035, %v798, 4286644096
  %v1268 = vunpack.i.l.bf16 %v1267
  %v1269 = vunpack.i.h.bf16 %v1267
  %v1270 = vmax.f32 %v1268, %v1269
  %v1271 = vrot.slane %v1270, 4
  %v1272 = vmax.f32 %v1270, %v1271
  %v1273 = vrot.slane %v1272, 2
  %v1274 = vmax.f32 %v1272, %v1273
  %v1275 = vrot.slane %v1274, 1
  %v1276 = vmax.f32 %v1274, %v1275
  %v1277 = vpack.i.bf16 %v1276, %v1276
  %v1278 = vsel %vm1035, %v799, 4286644096
  %v1279 = vunpack.i.l.bf16 %v1278
  %v1280 = vunpack.i.h.bf16 %v1278
  %v1281 = vmax.f32 %v1279, %v1280
  %v1282 = vrot.slane %v1281, 4
  %v1283 = vmax.f32 %v1281, %v1282
  %v1284 = vrot.slane %v1283, 2
  %v1285 = vmax.f32 %v1283, %v1284
  %v1286 = vrot.slane %v1285, 1
  %v1287 = vmax.f32 %v1285, %v1286
  %v1288 = vpack.i.bf16 %v1287, %v1287
  %v1289 = vsel %vm1035, %v800, 4286644096
  %v1290 = vunpack.i.l.bf16 %v1289
  %v1291 = vunpack.i.h.bf16 %v1289
  %v1292 = vmax.f32 %v1290, %v1291
  %v1293 = vrot.slane %v1292, 4
  %v1294 = vmax.f32 %v1292, %v1293
  %v1295 = vrot.slane %v1294, 2
  %v1296 = vmax.f32 %v1294, %v1295
  %v1297 = vrot.slane %v1296, 1
  %v1298 = vmax.f32 %v1296, %v1297
  %v1299 = vpack.i.bf16 %v1298, %v1298
  %v1300 = vsel %vm1035, %v801, 4286644096
  %v1301 = vunpack.i.l.bf16 %v1300
  %v1302 = vunpack.i.h.bf16 %v1300
  %v1303 = vmax.f32 %v1301, %v1302
  %v1304 = vrot.slane %v1303, 4
  %v1305 = vmax.f32 %v1303, %v1304
  %v1306 = vrot.slane %v1305, 2
  %v1307 = vmax.f32 %v1305, %v1306
  %v1308 = vrot.slane %v1307, 1
  %v1309 = vmax.f32 %v1307, %v1308
  %v1310 = vpack.i.bf16 %v1309, %v1309
  %v1311 = vsel %vm1035, %v802, 4286644096
  %v1312 = vunpack.i.l.bf16 %v1311
  %v1313 = vunpack.i.h.bf16 %v1311
  %v1314 = vmax.f32 %v1312, %v1313
  %v1315 = vrot.slane %v1314, 4
  %v1316 = vmax.f32 %v1314, %v1315
  %v1317 = vrot.slane %v1316, 2
  %v1318 = vmax.f32 %v1316, %v1317
  %v1319 = vrot.slane %v1318, 1
  %v1320 = vmax.f32 %v1318, %v1319
  %v1321 = vpack.i.bf16 %v1320, %v1320
  %v1322 = vsel %vm1035, %v803, 4286644096
  %v1323 = vunpack.i.l.bf16 %v1322
  %v1324 = vunpack.i.h.bf16 %v1322
  %v1325 = vmax.f32 %v1323, %v1324
  %v1326 = vrot.slane %v1325, 4
  %v1327 = vmax.f32 %v1325, %v1326
  %v1328 = vrot.slane %v1327, 2
  %v1329 = vmax.f32 %v1327, %v1328
  %v1330 = vrot.slane %v1329, 1
  %v1331 = vmax.f32 %v1329, %v1330
  %v1332 = vpack.i.bf16 %v1331, %v1331
  %v1333 = vsel %vm1035, %v804, 4286644096
  %v1334 = vunpack.i.l.bf16 %v1333
  %v1335 = vunpack.i.h.bf16 %v1333
  %v1336 = vmax.f32 %v1334, %v1335
  %v1337 = vrot.slane %v1336, 4
  %v1338 = vmax.f32 %v1336, %v1337
  %v1339 = vrot.slane %v1338, 2
  %v1340 = vmax.f32 %v1338, %v1339
  %v1341 = vrot.slane %v1340, 1
  %v1342 = vmax.f32 %v1340, %v1341
  %v1343 = vpack.i.bf16 %v1342, %v1342
  %v1344 = vsel %vm1035, %v805, 4286644096
  %v1345 = vunpack.i.l.bf16 %v1344
  %v1346 = vunpack.i.h.bf16 %v1344
  %v1347 = vmax.f32 %v1345, %v1346
  %v1348 = vrot.slane %v1347, 4
  %v1349 = vmax.f32 %v1347, %v1348
  %v1350 = vrot.slane %v1349, 2
  %v1351 = vmax.f32 %v1349, %v1350
  %v1352 = vrot.slane %v1351, 1
  %v1353 = vmax.f32 %v1351, %v1352
  %v1354 = vpack.i.bf16 %v1353, %v1353
  %v1355 = vsel %vm1035, %v806, 4286644096
  %v1356 = vunpack.i.l.bf16 %v1355
  %v1357 = vunpack.i.h.bf16 %v1355
  %v1358 = vmax.f32 %v1356, %v1357
  %v1359 = vrot.slane %v1358, 4
  %v1360 = vmax.f32 %v1358, %v1359
  %v1361 = vrot.slane %v1360, 2
  %v1362 = vmax.f32 %v1360, %v1361
  %v1363 = vrot.slane %v1362, 1
  %v1364 = vmax.f32 %v1362, %v1363
  %v1365 = vpack.i.bf16 %v1364, %v1364
  %v1366 = vsel %vm1035, %v807, 4286644096
  %v1367 = vunpack.i.l.bf16 %v1366
  %v1368 = vunpack.i.h.bf16 %v1366
  %v1369 = vmax.f32 %v1367, %v1368
  %v1370 = vrot.slane %v1369, 4
  %v1371 = vmax.f32 %v1369, %v1370
  %v1372 = vrot.slane %v1371, 2
  %v1373 = vmax.f32 %v1371, %v1372
  %v1374 = vrot.slane %v1373, 1
  %v1375 = vmax.f32 %v1373, %v1374
  %v1376 = vpack.i.bf16 %v1375, %v1375
  %v1377 = vsel %vm1035, %v808, 4286644096
  %v1378 = vunpack.i.l.bf16 %v1377
  %v1379 = vunpack.i.h.bf16 %v1377
  %v1380 = vmax.f32 %v1378, %v1379
  %v1381 = vrot.slane %v1380, 4
  %v1382 = vmax.f32 %v1380, %v1381
  %v1383 = vrot.slane %v1382, 2
  %v1384 = vmax.f32 %v1382, %v1383
  %v1385 = vrot.slane %v1384, 1
  %v1386 = vmax.f32 %v1384, %v1385
  %v1387 = vpack.i.bf16 %v1386, %v1386
  %v1388 = vsel %vm1035, %v809, 4286644096
  %v1389 = vunpack.i.l.bf16 %v1388
  %v1390 = vunpack.i.h.bf16 %v1388
  %v1391 = vmax.f32 %v1389, %v1390
  %v1392 = vrot.slane %v1391, 4
  %v1393 = vmax.f32 %v1391, %v1392
  %v1394 = vrot.slane %v1393, 2
  %v1395 = vmax.f32 %v1393, %v1394
  %v1396 = vrot.slane %v1395, 1
  %v1397 = vmax.f32 %v1395, %v1396
  %v1398 = vpack.i.bf16 %v1397, %v1397
  %v1399 = vsel %vm1035, %v810, 4286644096
  %v1400 = vunpack.i.l.bf16 %v1399
  %v1401 = vunpack.i.h.bf16 %v1399
  %v1402 = vmax.f32 %v1400, %v1401
  %v1403 = vrot.slane %v1402, 4
  %v1404 = vmax.f32 %v1402, %v1403
  %v1405 = vrot.slane %v1404, 2
  %v1406 = vmax.f32 %v1404, %v1405
  %v1407 = vrot.slane %v1406, 1
  %v1408 = vmax.f32 %v1406, %v1407
  %v1409 = vpack.i.bf16 %v1408, %v1408
  %v1410 = vsel %vm1035, %v811, 4286644096
  %v1411 = vunpack.i.l.bf16 %v1410
  %v1412 = vunpack.i.h.bf16 %v1410
  %v1413 = vmax.f32 %v1411, %v1412
  %v1414 = vrot.slane %v1413, 4
  %v1415 = vmax.f32 %v1413, %v1414
  %v1416 = vrot.slane %v1415, 2
  %v1417 = vmax.f32 %v1415, %v1416
  %v1418 = vrot.slane %v1417, 1
  %v1419 = vmax.f32 %v1417, %v1418
  %v1420 = vpack.i.bf16 %v1419, %v1419
  %v1421 = vsel %vm1035, %v812, 4286644096
  %v1422 = vunpack.i.l.bf16 %v1421
  %v1423 = vunpack.i.h.bf16 %v1421
  %v1424 = vmax.f32 %v1422, %v1423
  %v1425 = vrot.slane %v1424, 4
  %v1426 = vmax.f32 %v1424, %v1425
  %v1427 = vrot.slane %v1426, 2
  %v1428 = vmax.f32 %v1426, %v1427
  %v1429 = vrot.slane %v1428, 1
  %v1430 = vmax.f32 %v1428, %v1429
  %v1431 = vpack.i.bf16 %v1430, %v1430
  %v1432 = vsel %vm1035, %v813, 4286644096
  %v1433 = vunpack.i.l.bf16 %v1432
  %v1434 = vunpack.i.h.bf16 %v1432
  %v1435 = vmax.f32 %v1433, %v1434
  %v1436 = vrot.slane %v1435, 4
  %v1437 = vmax.f32 %v1435, %v1436
  %v1438 = vrot.slane %v1437, 2
  %v1439 = vmax.f32 %v1437, %v1438
  %v1440 = vrot.slane %v1439, 1
  %v1441 = vmax.f32 %v1439, %v1440
  %v1442 = vpack.i.bf16 %v1441, %v1441
  %v1443 = vsel %vm1035, %v814, 4286644096
  %v1444 = vunpack.i.l.bf16 %v1443
  %v1445 = vunpack.i.h.bf16 %v1443
  %v1446 = vmax.f32 %v1444, %v1445
  %v1447 = vrot.slane %v1446, 4
  %v1448 = vmax.f32 %v1446, %v1447
  %v1449 = vrot.slane %v1448, 2
  %v1450 = vmax.f32 %v1448, %v1449
  %v1451 = vrot.slane %v1450, 1
  %v1452 = vmax.f32 %v1450, %v1451
  %v1453 = vpack.i.bf16 %v1452, %v1452
  %v1454 = vsel %vm1035, %v815, 4286644096
  %v1455 = vunpack.i.l.bf16 %v1454
  %v1456 = vunpack.i.h.bf16 %v1454
  %v1457 = vmax.f32 %v1455, %v1456
  %v1458 = vrot.slane %v1457, 4
  %v1459 = vmax.f32 %v1457, %v1458
  %v1460 = vrot.slane %v1459, 2
  %v1461 = vmax.f32 %v1459, %v1460
  %v1462 = vrot.slane %v1461, 1
  %v1463 = vmax.f32 %v1461, %v1462
  %v1464 = vpack.i.bf16 %v1463, %v1463
  %v1465 = vsel %vm1035, %v816, 4286644096
  %v1466 = vunpack.i.l.bf16 %v1465
  %v1467 = vunpack.i.h.bf16 %v1465
  %v1468 = vmax.f32 %v1466, %v1467
  %v1469 = vrot.slane %v1468, 4
  %v1470 = vmax.f32 %v1468, %v1469
  %v1471 = vrot.slane %v1470, 2
  %v1472 = vmax.f32 %v1470, %v1471
  %v1473 = vrot.slane %v1472, 1
  %v1474 = vmax.f32 %v1472, %v1473
  %v1475 = vpack.i.bf16 %v1474, %v1474
  %v1476 = vsel %vm1035, %v817, 4286644096
  %v1477 = vunpack.i.l.bf16 %v1476
  %v1478 = vunpack.i.h.bf16 %v1476
  %v1479 = vmax.f32 %v1477, %v1478
  %v1480 = vrot.slane %v1479, 4
  %v1481 = vmax.f32 %v1479, %v1480
  %v1482 = vrot.slane %v1481, 2
  %v1483 = vmax.f32 %v1481, %v1482
  %v1484 = vrot.slane %v1483, 1
  %v1485 = vmax.f32 %v1483, %v1484
  %v1486 = vpack.i.bf16 %v1485, %v1485
  %v1487 = vsel %vm1035, %v818, 4286644096
  %v1488 = vunpack.i.l.bf16 %v1487
  %v1489 = vunpack.i.h.bf16 %v1487
  %v1490 = vmax.f32 %v1488, %v1489
  %v1491 = vrot.slane %v1490, 4
  %v1492 = vmax.f32 %v1490, %v1491
  %v1493 = vrot.slane %v1492, 2
  %v1494 = vmax.f32 %v1492, %v1493
  %v1495 = vrot.slane %v1494, 1
  %v1496 = vmax.f32 %v1494, %v1495
  %v1497 = vpack.i.bf16 %v1496, %v1496
  %v1498 = vsel %vm1035, %v819, 4286644096
  %v1499 = vunpack.i.l.bf16 %v1498
  %v1500 = vunpack.i.h.bf16 %v1498
  %v1501 = vmax.f32 %v1499, %v1500
  %v1502 = vrot.slane %v1501, 4
  %v1503 = vmax.f32 %v1501, %v1502
  %v1504 = vrot.slane %v1503, 2
  %v1505 = vmax.f32 %v1503, %v1504
  %v1506 = vrot.slane %v1505, 1
  %v1507 = vmax.f32 %v1505, %v1506
  %v1508 = vpack.i.bf16 %v1507, %v1507
  %v1509 = vsel %vm1035, %v820, 4286644096
  %v1510 = vunpack.i.l.bf16 %v1509
  %v1511 = vunpack.i.h.bf16 %v1509
  %v1512 = vmax.f32 %v1510, %v1511
  %v1513 = vrot.slane %v1512, 4
  %v1514 = vmax.f32 %v1512, %v1513
  %v1515 = vrot.slane %v1514, 2
  %v1516 = vmax.f32 %v1514, %v1515
  %v1517 = vrot.slane %v1516, 1
  %v1518 = vmax.f32 %v1516, %v1517
  %v1519 = vpack.i.bf16 %v1518, %v1518
  %v1520 = vsel %vm1035, %v821, 4286644096
  %v1521 = vunpack.i.l.bf16 %v1520
  %v1522 = vunpack.i.h.bf16 %v1520
  %v1523 = vmax.f32 %v1521, %v1522
  %v1524 = vrot.slane %v1523, 4
  %v1525 = vmax.f32 %v1523, %v1524
  %v1526 = vrot.slane %v1525, 2
  %v1527 = vmax.f32 %v1525, %v1526
  %v1528 = vrot.slane %v1527, 1
  %v1529 = vmax.f32 %v1527, %v1528
  %v1530 = vpack.i.bf16 %v1529, %v1529
  %v1531 = vsel %vm1035, %v822, 4286644096
  %v1532 = vunpack.i.l.bf16 %v1531
  %v1533 = vunpack.i.h.bf16 %v1531
  %v1534 = vmax.f32 %v1532, %v1533
  %v1535 = vrot.slane %v1534, 4
  %v1536 = vmax.f32 %v1534, %v1535
  %v1537 = vrot.slane %v1536, 2
  %v1538 = vmax.f32 %v1536, %v1537
  %v1539 = vrot.slane %v1538, 1
  %v1540 = vmax.f32 %v1538, %v1539
  %v1541 = vpack.i.bf16 %v1540, %v1540
  %v1542 = vsel %vm1035, %v823, 4286644096
  %v1543 = vunpack.i.l.bf16 %v1542
  %v1544 = vunpack.i.h.bf16 %v1542
  %v1545 = vmax.f32 %v1543, %v1544
  %v1546 = vrot.slane %v1545, 4
  %v1547 = vmax.f32 %v1545, %v1546
  %v1548 = vrot.slane %v1547, 2
  %v1549 = vmax.f32 %v1547, %v1548
  %v1550 = vrot.slane %v1549, 1
  %v1551 = vmax.f32 %v1549, %v1550
  %v1552 = vpack.i.bf16 %v1551, %v1551
  %v1553 = vsel %vm1035, %v824, 4286644096
  %v1554 = vunpack.i.l.bf16 %v1553
  %v1555 = vunpack.i.h.bf16 %v1553
  %v1556 = vmax.f32 %v1554, %v1555
  %v1557 = vrot.slane %v1556, 4
  %v1558 = vmax.f32 %v1556, %v1557
  %v1559 = vrot.slane %v1558, 2
  %v1560 = vmax.f32 %v1558, %v1559
  %v1561 = vrot.slane %v1560, 1
  %v1562 = vmax.f32 %v1560, %v1561
  %v1563 = vpack.i.bf16 %v1562, %v1562
  %v1564 = vsel %vm1035, %v825, 4286644096
  %v1565 = vunpack.i.l.bf16 %v1564
  %v1566 = vunpack.i.h.bf16 %v1564
  %v1567 = vmax.f32 %v1565, %v1566
  %v1568 = vrot.slane %v1567, 4
  %v1569 = vmax.f32 %v1567, %v1568
  %v1570 = vrot.slane %v1569, 2
  %v1571 = vmax.f32 %v1569, %v1570
  %v1572 = vrot.slane %v1571, 1
  %v1573 = vmax.f32 %v1571, %v1572
  %v1574 = vpack.i.bf16 %v1573, %v1573
  %v1575 = vsel %vm1035, %v826, 4286644096
  %v1576 = vunpack.i.l.bf16 %v1575
  %v1577 = vunpack.i.h.bf16 %v1575
  %v1578 = vmax.f32 %v1576, %v1577
  %v1579 = vrot.slane %v1578, 4
  %v1580 = vmax.f32 %v1578, %v1579
  %v1581 = vrot.slane %v1580, 2
  %v1582 = vmax.f32 %v1580, %v1581
  %v1583 = vrot.slane %v1582, 1
  %v1584 = vmax.f32 %v1582, %v1583
  %v1585 = vpack.i.bf16 %v1584, %v1584
  %v1586 = vsel %vm1035, %v827, 4286644096
  %v1587 = vunpack.i.l.bf16 %v1586
  %v1588 = vunpack.i.h.bf16 %v1586
  %v1589 = vmax.f32 %v1587, %v1588
  %v1590 = vrot.slane %v1589, 4
  %v1591 = vmax.f32 %v1589, %v1590
  %v1592 = vrot.slane %v1591, 2
  %v1593 = vmax.f32 %v1591, %v1592
  %v1594 = vrot.slane %v1593, 1
  %v1595 = vmax.f32 %v1593, %v1594
  %v1596 = vpack.i.bf16 %v1595, %v1595
  %v1597 = vsel %vm1035, %v828, 4286644096
  %v1598 = vunpack.i.l.bf16 %v1597
  %v1599 = vunpack.i.h.bf16 %v1597
  %v1600 = vmax.f32 %v1598, %v1599
  %v1601 = vrot.slane %v1600, 4
  %v1602 = vmax.f32 %v1600, %v1601
  %v1603 = vrot.slane %v1602, 2
  %v1604 = vmax.f32 %v1602, %v1603
  %v1605 = vrot.slane %v1604, 1
  %v1606 = vmax.f32 %v1604, %v1605
  %v1607 = vpack.i.bf16 %v1606, %v1606
  %v1608 = vsel %vm1035, %v829, 4286644096
  %v1609 = vunpack.i.l.bf16 %v1608
  %v1610 = vunpack.i.h.bf16 %v1608
  %v1611 = vmax.f32 %v1609, %v1610
  %v1612 = vrot.slane %v1611, 4
  %v1613 = vmax.f32 %v1611, %v1612
  %v1614 = vrot.slane %v1613, 2
  %v1615 = vmax.f32 %v1613, %v1614
  %v1616 = vrot.slane %v1615, 1
  %v1617 = vmax.f32 %v1615, %v1616
  %v1618 = vpack.i.bf16 %v1617, %v1617
  %v1619 = vsel %vm1035, %v830, 4286644096
  %v1620 = vunpack.i.l.bf16 %v1619
  %v1621 = vunpack.i.h.bf16 %v1619
  %v1622 = vmax.f32 %v1620, %v1621
  %v1623 = vrot.slane %v1622, 4
  %v1624 = vmax.f32 %v1622, %v1623
  %v1625 = vrot.slane %v1624, 2
  %v1626 = vmax.f32 %v1624, %v1625
  %v1627 = vrot.slane %v1626, 1
  %v1628 = vmax.f32 %v1626, %v1627
  %v1629 = vpack.i.bf16 %v1628, %v1628
  %v1630 = vsel %vm1035, %v831, 4286644096
  %v1631 = vunpack.i.l.bf16 %v1630
  %v1632 = vunpack.i.h.bf16 %v1630
  %v1633 = vmax.f32 %v1631, %v1632
  %v1634 = vrot.slane %v1633, 4
  %v1635 = vmax.f32 %v1633, %v1634
  %v1636 = vrot.slane %v1635, 2
  %v1637 = vmax.f32 %v1635, %v1636
  %v1638 = vrot.slane %v1637, 1
  %v1639 = vmax.f32 %v1637, %v1638
  %v1640 = vpack.i.bf16 %v1639, %v1639
  %v1641 = vsel %vm1035, %v832, 4286644096
  %v1642 = vunpack.i.l.bf16 %v1641
  %v1643 = vunpack.i.h.bf16 %v1641
  %v1644 = vmax.f32 %v1642, %v1643
  %v1645 = vrot.slane %v1644, 4
  %v1646 = vmax.f32 %v1644, %v1645
  %v1647 = vrot.slane %v1646, 2
  %v1648 = vmax.f32 %v1646, %v1647
  %v1649 = vrot.slane %v1648, 1
  %v1650 = vmax.f32 %v1648, %v1649
  %v1651 = vpack.i.bf16 %v1650, %v1650
  %v1652 = vsel %vm1035, %v833, 4286644096
  %v1653 = vunpack.i.l.bf16 %v1652
  %v1654 = vunpack.i.h.bf16 %v1652
  %v1655 = vmax.f32 %v1653, %v1654
  %v1656 = vrot.slane %v1655, 4
  %v1657 = vmax.f32 %v1655, %v1656
  %v1658 = vrot.slane %v1657, 2
  %v1659 = vmax.f32 %v1657, %v1658
  %v1660 = vrot.slane %v1659, 1
  %v1661 = vmax.f32 %v1659, %v1660
  %v1662 = vpack.i.bf16 %v1661, %v1661
  %v1663 = vsel %vm1035, %v834, 4286644096
  %v1664 = vunpack.i.l.bf16 %v1663
  %v1665 = vunpack.i.h.bf16 %v1663
  %v1666 = vmax.f32 %v1664, %v1665
  %v1667 = vrot.slane %v1666, 4
  %v1668 = vmax.f32 %v1666, %v1667
  %v1669 = vrot.slane %v1668, 2
  %v1670 = vmax.f32 %v1668, %v1669
  %v1671 = vrot.slane %v1670, 1
  %v1672 = vmax.f32 %v1670, %v1671
  %v1673 = vpack.i.bf16 %v1672, %v1672
  %v1674 = vsel %vm1035, %v835, 4286644096
  %v1675 = vunpack.i.l.bf16 %v1674
  %v1676 = vunpack.i.h.bf16 %v1674
  %v1677 = vmax.f32 %v1675, %v1676
  %v1678 = vrot.slane %v1677, 4
  %v1679 = vmax.f32 %v1677, %v1678
  %v1680 = vrot.slane %v1679, 2
  %v1681 = vmax.f32 %v1679, %v1680
  %v1682 = vrot.slane %v1681, 1
  %v1683 = vmax.f32 %v1681, %v1682
  %v1684 = vpack.i.bf16 %v1683, %v1683
  %v1685 = vsel %vm1035, %v836, 4286644096
  %v1686 = vunpack.i.l.bf16 %v1685
  %v1687 = vunpack.i.h.bf16 %v1685
  %v1688 = vmax.f32 %v1686, %v1687
  %v1689 = vrot.slane %v1688, 4
  %v1690 = vmax.f32 %v1688, %v1689
  %v1691 = vrot.slane %v1690, 2
  %v1692 = vmax.f32 %v1690, %v1691
  %v1693 = vrot.slane %v1692, 1
  %v1694 = vmax.f32 %v1692, %v1693
  %v1695 = vpack.i.bf16 %v1694, %v1694
  %v1696 = vsel %vm1035, %v837, 4286644096
  %v1697 = vunpack.i.l.bf16 %v1696
  %v1698 = vunpack.i.h.bf16 %v1696
  %v1699 = vmax.f32 %v1697, %v1698
  %v1700 = vrot.slane %v1699, 4
  %v1701 = vmax.f32 %v1699, %v1700
  %v1702 = vrot.slane %v1701, 2
  %v1703 = vmax.f32 %v1701, %v1702
  %v1704 = vrot.slane %v1703, 1
  %v1705 = vmax.f32 %v1703, %v1704
  %v1706 = vpack.i.bf16 %v1705, %v1705
  %v1707 = vsel %vm1035, %v838, 4286644096
  %v1708 = vunpack.i.l.bf16 %v1707
  %v1709 = vunpack.i.h.bf16 %v1707
  %v1710 = vmax.f32 %v1708, %v1709
  %v1711 = vrot.slane %v1710, 4
  %v1712 = vmax.f32 %v1710, %v1711
  %v1713 = vrot.slane %v1712, 2
  %v1714 = vmax.f32 %v1712, %v1713
  %v1715 = vrot.slane %v1714, 1
  %v1716 = vmax.f32 %v1714, %v1715
  %v1717 = vpack.i.bf16 %v1716, %v1716
  %v1718 = vsel %vm1035, %v839, 4286644096
  %v1719 = vunpack.i.l.bf16 %v1718
  %v1720 = vunpack.i.h.bf16 %v1718
  %v1721 = vmax.f32 %v1719, %v1720
  %v1722 = vrot.slane %v1721, 4
  %v1723 = vmax.f32 %v1721, %v1722
  %v1724 = vrot.slane %v1723, 2
  %v1725 = vmax.f32 %v1723, %v1724
  %v1726 = vrot.slane %v1725, 1
  %v1727 = vmax.f32 %v1725, %v1726
  %v1728 = vpack.i.bf16 %v1727, %v1727
  %v1729 = vsel %vm1035, %v840, 4286644096
  %v1730 = vunpack.i.l.bf16 %v1729
  %v1731 = vunpack.i.h.bf16 %v1729
  %v1732 = vmax.f32 %v1730, %v1731
  %v1733 = vrot.slane %v1732, 4
  %v1734 = vmax.f32 %v1732, %v1733
  %v1735 = vrot.slane %v1734, 2
  %v1736 = vmax.f32 %v1734, %v1735
  %v1737 = vrot.slane %v1736, 1
  %v1738 = vmax.f32 %v1736, %v1737
  %v1739 = vpack.i.bf16 %v1738, %v1738
  %v1740 = vsel %vm1035, %v841, 4286644096
  %v1741 = vunpack.i.l.bf16 %v1740
  %v1742 = vunpack.i.h.bf16 %v1740
  %v1743 = vmax.f32 %v1741, %v1742
  %v1744 = vrot.slane %v1743, 4
  %v1745 = vmax.f32 %v1743, %v1744
  %v1746 = vrot.slane %v1745, 2
  %v1747 = vmax.f32 %v1745, %v1746
  %v1748 = vrot.slane %v1747, 1
  %v1749 = vmax.f32 %v1747, %v1748
  %v1750 = vpack.i.bf16 %v1749, %v1749
  %v1751 = vsel %vm1035, %v842, 4286644096
  %v1752 = vunpack.i.l.bf16 %v1751
  %v1753 = vunpack.i.h.bf16 %v1751
  %v1754 = vmax.f32 %v1752, %v1753
  %v1755 = vrot.slane %v1754, 4
  %v1756 = vmax.f32 %v1754, %v1755
  %v1757 = vrot.slane %v1756, 2
  %v1758 = vmax.f32 %v1756, %v1757
  %v1759 = vrot.slane %v1758, 1
  %v1760 = vmax.f32 %v1758, %v1759
  %v1761 = vpack.i.bf16 %v1760, %v1760
  %v1762 = vsel %vm1035, %v843, 4286644096
  %v1763 = vunpack.i.l.bf16 %v1762
  %v1764 = vunpack.i.h.bf16 %v1762
  %v1765 = vmax.f32 %v1763, %v1764
  %v1766 = vrot.slane %v1765, 4
  %v1767 = vmax.f32 %v1765, %v1766
  %v1768 = vrot.slane %v1767, 2
  %v1769 = vmax.f32 %v1767, %v1768
  %v1770 = vrot.slane %v1769, 1
  %v1771 = vmax.f32 %v1769, %v1770
  %v1772 = vpack.i.bf16 %v1771, %v1771
  %v1773 = vsel %vm1035, %v844, 4286644096
  %v1774 = vunpack.i.l.bf16 %v1773
  %v1775 = vunpack.i.h.bf16 %v1773
  %v1776 = vmax.f32 %v1774, %v1775
  %v1777 = vrot.slane %v1776, 4
  %v1778 = vmax.f32 %v1776, %v1777
  %v1779 = vrot.slane %v1778, 2
  %v1780 = vmax.f32 %v1778, %v1779
  %v1781 = vrot.slane %v1780, 1
  %v1782 = vmax.f32 %v1780, %v1781
  %v1783 = vpack.i.bf16 %v1782, %v1782
  %v1784 = vsel %vm1035, %v845, 4286644096
  %v1785 = vunpack.i.l.bf16 %v1784
  %v1786 = vunpack.i.h.bf16 %v1784
  %v1787 = vmax.f32 %v1785, %v1786
  %v1788 = vrot.slane %v1787, 4
  %v1789 = vmax.f32 %v1787, %v1788
  %v1790 = vrot.slane %v1789, 2
  %v1791 = vmax.f32 %v1789, %v1790
  %v1792 = vrot.slane %v1791, 1
  %v1793 = vmax.f32 %v1791, %v1792
  %v1794 = vpack.i.bf16 %v1793, %v1793
  %v1795 = vsel %vm1035, %v846, 4286644096
  %v1796 = vunpack.i.l.bf16 %v1795
  %v1797 = vunpack.i.h.bf16 %v1795
  %v1798 = vmax.f32 %v1796, %v1797
  %v1799 = vrot.slane %v1798, 4
  %v1800 = vmax.f32 %v1798, %v1799
  %v1801 = vrot.slane %v1800, 2
  %v1802 = vmax.f32 %v1800, %v1801
  %v1803 = vrot.slane %v1802, 1
  %v1804 = vmax.f32 %v1802, %v1803
  %v1805 = vpack.i.bf16 %v1804, %v1804
  %v1806 = vsel %vm1035, %v847, 4286644096
  %v1807 = vunpack.i.l.bf16 %v1806
  %v1808 = vunpack.i.h.bf16 %v1806
  %v1809 = vmax.f32 %v1807, %v1808
  %v1810 = vrot.slane %v1809, 4
  %v1811 = vmax.f32 %v1809, %v1810
  %v1812 = vrot.slane %v1811, 2
  %v1813 = vmax.f32 %v1811, %v1812
  %v1814 = vrot.slane %v1813, 1
  %v1815 = vmax.f32 %v1813, %v1814
  %v1816 = vpack.i.bf16 %v1815, %v1815
  %v1817 = vsel %vm1035, %v848, 4286644096
  %v1818 = vunpack.i.l.bf16 %v1817
  %v1819 = vunpack.i.h.bf16 %v1817
  %v1820 = vmax.f32 %v1818, %v1819
  %v1821 = vrot.slane %v1820, 4
  %v1822 = vmax.f32 %v1820, %v1821
  %v1823 = vrot.slane %v1822, 2
  %v1824 = vmax.f32 %v1822, %v1823
  %v1825 = vrot.slane %v1824, 1
  %v1826 = vmax.f32 %v1824, %v1825
  %v1827 = vpack.i.bf16 %v1826, %v1826
  %v1828 = vsel %vm1035, %v849, 4286644096
  %v1829 = vunpack.i.l.bf16 %v1828
  %v1830 = vunpack.i.h.bf16 %v1828
  %v1831 = vmax.f32 %v1829, %v1830
  %v1832 = vrot.slane %v1831, 4
  %v1833 = vmax.f32 %v1831, %v1832
  %v1834 = vrot.slane %v1833, 2
  %v1835 = vmax.f32 %v1833, %v1834
  %v1836 = vrot.slane %v1835, 1
  %v1837 = vmax.f32 %v1835, %v1836
  %v1838 = vpack.i.bf16 %v1837, %v1837
  %v1839 = vsel %vm1035, %v850, 4286644096
  %v1840 = vunpack.i.l.bf16 %v1839
  %v1841 = vunpack.i.h.bf16 %v1839
  %v1842 = vmax.f32 %v1840, %v1841
  %v1843 = vrot.slane %v1842, 4
  %v1844 = vmax.f32 %v1842, %v1843
  %v1845 = vrot.slane %v1844, 2
  %v1846 = vmax.f32 %v1844, %v1845
  %v1847 = vrot.slane %v1846, 1
  %v1848 = vmax.f32 %v1846, %v1847
  %v1849 = vpack.i.bf16 %v1848, %v1848
  %v1850 = vsel %vm1035, %v851, 4286644096
  %v1851 = vunpack.i.l.bf16 %v1850
  %v1852 = vunpack.i.h.bf16 %v1850
  %v1853 = vmax.f32 %v1851, %v1852
  %v1854 = vrot.slane %v1853, 4
  %v1855 = vmax.f32 %v1853, %v1854
  %v1856 = vrot.slane %v1855, 2
  %v1857 = vmax.f32 %v1855, %v1856
  %v1858 = vrot.slane %v1857, 1
  %v1859 = vmax.f32 %v1857, %v1858
  %v1860 = vpack.i.bf16 %v1859, %v1859
  %v1861 = vsel %vm1035, %v852, 4286644096
  %v1862 = vunpack.i.l.bf16 %v1861
  %v1863 = vunpack.i.h.bf16 %v1861
  %v1864 = vmax.f32 %v1862, %v1863
  %v1865 = vrot.slane %v1864, 4
  %v1866 = vmax.f32 %v1864, %v1865
  %v1867 = vrot.slane %v1866, 2
  %v1868 = vmax.f32 %v1866, %v1867
  %v1869 = vrot.slane %v1868, 1
  %v1870 = vmax.f32 %v1868, %v1869
  %v1871 = vpack.i.bf16 %v1870, %v1870
  %v1872 = vsel %vm1035, %v853, 4286644096
  %v1873 = vunpack.i.l.bf16 %v1872
  %v1874 = vunpack.i.h.bf16 %v1872
  %v1875 = vmax.f32 %v1873, %v1874
  %v1876 = vrot.slane %v1875, 4
  %v1877 = vmax.f32 %v1875, %v1876
  %v1878 = vrot.slane %v1877, 2
  %v1879 = vmax.f32 %v1877, %v1878
  %v1880 = vrot.slane %v1879, 1
  %v1881 = vmax.f32 %v1879, %v1880
  %v1882 = vpack.i.bf16 %v1881, %v1881
  %v1883 = vsel %vm1035, %v854, 4286644096
  %v1884 = vunpack.i.l.bf16 %v1883
  %v1885 = vunpack.i.h.bf16 %v1883
  %v1886 = vmax.f32 %v1884, %v1885
  %v1887 = vrot.slane %v1886, 4
  %v1888 = vmax.f32 %v1886, %v1887
  %v1889 = vrot.slane %v1888, 2
  %v1890 = vmax.f32 %v1888, %v1889
  %v1891 = vrot.slane %v1890, 1
  %v1892 = vmax.f32 %v1890, %v1891
  %v1893 = vpack.i.bf16 %v1892, %v1892
  %v1894 = vsel %vm1035, %v855, 4286644096
  %v1895 = vunpack.i.l.bf16 %v1894
  %v1896 = vunpack.i.h.bf16 %v1894
  %v1897 = vmax.f32 %v1895, %v1896
  %v1898 = vrot.slane %v1897, 4
  %v1899 = vmax.f32 %v1897, %v1898
  %v1900 = vrot.slane %v1899, 2
  %v1901 = vmax.f32 %v1899, %v1900
  %v1902 = vrot.slane %v1901, 1
  %v1903 = vmax.f32 %v1901, %v1902
  %v1904 = vpack.i.bf16 %v1903, %v1903
  %v1905 = vsel %vm1035, %v856, 4286644096
  %v1906 = vunpack.i.l.bf16 %v1905
  %v1907 = vunpack.i.h.bf16 %v1905
  %v1908 = vmax.f32 %v1906, %v1907
  %v1909 = vrot.slane %v1908, 4
  %v1910 = vmax.f32 %v1908, %v1909
  %v1911 = vrot.slane %v1910, 2
  %v1912 = vmax.f32 %v1910, %v1911
  %v1913 = vrot.slane %v1912, 1
  %v1914 = vmax.f32 %v1912, %v1913
  %v1915 = vpack.i.bf16 %v1914, %v1914
  %v1916 = vsel %vm1035, %v857, 4286644096
  %v1917 = vunpack.i.l.bf16 %v1916
  %v1918 = vunpack.i.h.bf16 %v1916
  %v1919 = vmax.f32 %v1917, %v1918
  %v1920 = vrot.slane %v1919, 4
  %v1921 = vmax.f32 %v1919, %v1920
  %v1922 = vrot.slane %v1921, 2
  %v1923 = vmax.f32 %v1921, %v1922
  %v1924 = vrot.slane %v1923, 1
  %v1925 = vmax.f32 %v1923, %v1924
  %v1926 = vpack.i.bf16 %v1925, %v1925
  %v1927 = vsel %vm1035, %v858, 4286644096
  %v1928 = vunpack.i.l.bf16 %v1927
  %v1929 = vunpack.i.h.bf16 %v1927
  %v1930 = vmax.f32 %v1928, %v1929
  %v1931 = vrot.slane %v1930, 4
  %v1932 = vmax.f32 %v1930, %v1931
  %v1933 = vrot.slane %v1932, 2
  %v1934 = vmax.f32 %v1932, %v1933
  %v1935 = vrot.slane %v1934, 1
  %v1936 = vmax.f32 %v1934, %v1935
  %v1937 = vpack.i.bf16 %v1936, %v1936
  %v1938 = vsel %vm1035, %v859, 4286644096
  %v1939 = vunpack.i.l.bf16 %v1938
  %v1940 = vunpack.i.h.bf16 %v1938
  %v1941 = vmax.f32 %v1939, %v1940
  %v1942 = vrot.slane %v1941, 4
  %v1943 = vmax.f32 %v1941, %v1942
  %v1944 = vrot.slane %v1943, 2
  %v1945 = vmax.f32 %v1943, %v1944
  %v1946 = vrot.slane %v1945, 1
  %v1947 = vmax.f32 %v1945, %v1946
  %v1948 = vpack.i.bf16 %v1947, %v1947
  %v1949 = vsel %vm1035, %v860, 4286644096
  %v1950 = vunpack.i.l.bf16 %v1949
  %v1951 = vunpack.i.h.bf16 %v1949
  %v1952 = vmax.f32 %v1950, %v1951
  %v1953 = vrot.slane %v1952, 4
  %v1954 = vmax.f32 %v1952, %v1953
  %v1955 = vrot.slane %v1954, 2
  %v1956 = vmax.f32 %v1954, %v1955
  %v1957 = vrot.slane %v1956, 1
  %v1958 = vmax.f32 %v1956, %v1957
  %v1959 = vpack.i.bf16 %v1958, %v1958
  %v1960 = vsel %vm1035, %v861, 4286644096
  %v1961 = vunpack.i.l.bf16 %v1960
  %v1962 = vunpack.i.h.bf16 %v1960
  %v1963 = vmax.f32 %v1961, %v1962
  %v1964 = vrot.slane %v1963, 4
  %v1965 = vmax.f32 %v1963, %v1964
  %v1966 = vrot.slane %v1965, 2
  %v1967 = vmax.f32 %v1965, %v1966
  %v1968 = vrot.slane %v1967, 1
  %v1969 = vmax.f32 %v1967, %v1968
  %v1970 = vpack.i.bf16 %v1969, %v1969
  %v1971 = vsel %vm1035, %v862, 4286644096
  %v1972 = vunpack.i.l.bf16 %v1971
  %v1973 = vunpack.i.h.bf16 %v1971
  %v1974 = vmax.f32 %v1972, %v1973
  %v1975 = vrot.slane %v1974, 4
  %v1976 = vmax.f32 %v1974, %v1975
  %v1977 = vrot.slane %v1976, 2
  %v1978 = vmax.f32 %v1976, %v1977
  %v1979 = vrot.slane %v1978, 1
  %v1980 = vmax.f32 %v1978, %v1979
  %v1981 = vpack.i.bf16 %v1980, %v1980
  %v1982 = vsel %vm1035, %v863, 4286644096
  %v1983 = vunpack.i.l.bf16 %v1982
  %v1984 = vunpack.i.h.bf16 %v1982
  %v1985 = vmax.f32 %v1983, %v1984
  %v1986 = vrot.slane %v1985, 4
  %v1987 = vmax.f32 %v1985, %v1986
  %v1988 = vrot.slane %v1987, 2
  %v1989 = vmax.f32 %v1987, %v1988
  %v1990 = vrot.slane %v1989, 1
  %v1991 = vmax.f32 %v1989, %v1990
  %v1992 = vpack.i.bf16 %v1991, %v1991
  %v1993 = vsel %vm1035, %v864, 4286644096
  %v1994 = vunpack.i.l.bf16 %v1993
  %v1995 = vunpack.i.h.bf16 %v1993
  %v1996 = vmax.f32 %v1994, %v1995
  %v1997 = vrot.slane %v1996, 4
  %v1998 = vmax.f32 %v1996, %v1997
  %v1999 = vrot.slane %v1998, 2
  %v2000 = vmax.f32 %v1998, %v1999
  %v2001 = vrot.slane %v2000, 1
  %v2002 = vmax.f32 %v2000, %v2001
  %v2003 = vpack.i.bf16 %v2002, %v2002
  %v2004 = vsel %vm1035, %v865, 4286644096
  %v2005 = vunpack.i.l.bf16 %v2004
  %v2006 = vunpack.i.h.bf16 %v2004
  %v2007 = vmax.f32 %v2005, %v2006
  %v2008 = vrot.slane %v2007, 4
  %v2009 = vmax.f32 %v2007, %v2008
  %v2010 = vrot.slane %v2009, 2
  %v2011 = vmax.f32 %v2009, %v2010
  %v2012 = vrot.slane %v2011, 1
  %v2013 = vmax.f32 %v2011, %v2012
  %v2014 = vpack.i.bf16 %v2013, %v2013
  %v2015 = vsel %vm1035, %v866, 4286644096
  %v2016 = vunpack.i.l.bf16 %v2015
  %v2017 = vunpack.i.h.bf16 %v2015
  %v2018 = vmax.f32 %v2016, %v2017
  %v2019 = vrot.slane %v2018, 4
  %v2020 = vmax.f32 %v2018, %v2019
  %v2021 = vrot.slane %v2020, 2
  %v2022 = vmax.f32 %v2020, %v2021
  %v2023 = vrot.slane %v2022, 1
  %v2024 = vmax.f32 %v2022, %v2023
  %v2025 = vpack.i.bf16 %v2024, %v2024
  %v2026 = vsel %vm1035, %v867, 4286644096
  %v2027 = vunpack.i.l.bf16 %v2026
  %v2028 = vunpack.i.h.bf16 %v2026
  %v2029 = vmax.f32 %v2027, %v2028
  %v2030 = vrot.slane %v2029, 4
  %v2031 = vmax.f32 %v2029, %v2030
  %v2032 = vrot.slane %v2031, 2
  %v2033 = vmax.f32 %v2031, %v2032
  %v2034 = vrot.slane %v2033, 1
  %v2035 = vmax.f32 %v2033, %v2034
  %v2036 = vpack.i.bf16 %v2035, %v2035
  %v2037 = vsel %vm1035, %v868, 4286644096
  %v2038 = vunpack.i.l.bf16 %v2037
  %v2039 = vunpack.i.h.bf16 %v2037
  %v2040 = vmax.f32 %v2038, %v2039
  %v2041 = vrot.slane %v2040, 4
  %v2042 = vmax.f32 %v2040, %v2041
  %v2043 = vrot.slane %v2042, 2
  %v2044 = vmax.f32 %v2042, %v2043
  %v2045 = vrot.slane %v2044, 1
  %v2046 = vmax.f32 %v2044, %v2045
  %v2047 = vpack.i.bf16 %v2046, %v2046
  %v2048 = vsel %vm1035, %v869, 4286644096
  %v2049 = vunpack.i.l.bf16 %v2048
  %v2050 = vunpack.i.h.bf16 %v2048
  %v2051 = vmax.f32 %v2049, %v2050
  %v2052 = vrot.slane %v2051, 4
  %v2053 = vmax.f32 %v2051, %v2052
  %v2054 = vrot.slane %v2053, 2
  %v2055 = vmax.f32 %v2053, %v2054
  %v2056 = vrot.slane %v2055, 1
  %v2057 = vmax.f32 %v2055, %v2056
  %v2058 = vpack.i.bf16 %v2057, %v2057
  %v2059 = vsel %vm1035, %v870, 4286644096
  %v2060 = vunpack.i.l.bf16 %v2059
  %v2061 = vunpack.i.h.bf16 %v2059
  %v2062 = vmax.f32 %v2060, %v2061
  %v2063 = vrot.slane %v2062, 4
  %v2064 = vmax.f32 %v2062, %v2063
  %v2065 = vrot.slane %v2064, 2
  %v2066 = vmax.f32 %v2064, %v2065
  %v2067 = vrot.slane %v2066, 1
  %v2068 = vmax.f32 %v2066, %v2067
  %v2069 = vpack.i.bf16 %v2068, %v2068
  %v2070 = vsel %vm1035, %v871, 4286644096
  %v2071 = vunpack.i.l.bf16 %v2070
  %v2072 = vunpack.i.h.bf16 %v2070
  %v2073 = vmax.f32 %v2071, %v2072
  %v2074 = vrot.slane %v2073, 4
  %v2075 = vmax.f32 %v2073, %v2074
  %v2076 = vrot.slane %v2075, 2
  %v2077 = vmax.f32 %v2075, %v2076
  %v2078 = vrot.slane %v2077, 1
  %v2079 = vmax.f32 %v2077, %v2078
  %v2080 = vpack.i.bf16 %v2079, %v2079
  %v2081 = vsel %vm1035, %v872, 4286644096
  %v2082 = vunpack.i.l.bf16 %v2081
  %v2083 = vunpack.i.h.bf16 %v2081
  %v2084 = vmax.f32 %v2082, %v2083
  %v2085 = vrot.slane %v2084, 4
  %v2086 = vmax.f32 %v2084, %v2085
  %v2087 = vrot.slane %v2086, 2
  %v2088 = vmax.f32 %v2086, %v2087
  %v2089 = vrot.slane %v2088, 1
  %v2090 = vmax.f32 %v2088, %v2089
  %v2091 = vpack.i.bf16 %v2090, %v2090
  %v2092 = vsel %vm1035, %v873, 4286644096
  %v2093 = vunpack.i.l.bf16 %v2092
  %v2094 = vunpack.i.h.bf16 %v2092
  %v2095 = vmax.f32 %v2093, %v2094
  %v2096 = vrot.slane %v2095, 4
  %v2097 = vmax.f32 %v2095, %v2096
  %v2098 = vrot.slane %v2097, 2
  %v2099 = vmax.f32 %v2097, %v2098
  %v2100 = vrot.slane %v2099, 1
  %v2101 = vmax.f32 %v2099, %v2100
  %v2102 = vpack.i.bf16 %v2101, %v2101
  %v2103 = vsel %vm1035, %v874, 4286644096
  %v2104 = vunpack.i.l.bf16 %v2103
  %v2105 = vunpack.i.h.bf16 %v2103
  %v2106 = vmax.f32 %v2104, %v2105
  %v2107 = vrot.slane %v2106, 4
  %v2108 = vmax.f32 %v2106, %v2107
  %v2109 = vrot.slane %v2108, 2
  %v2110 = vmax.f32 %v2108, %v2109
  %v2111 = vrot.slane %v2110, 1
  %v2112 = vmax.f32 %v2110, %v2111
  %v2113 = vpack.i.bf16 %v2112, %v2112
  %v2114 = vsel %vm1035, %v875, 4286644096
  %v2115 = vunpack.i.l.bf16 %v2114
  %v2116 = vunpack.i.h.bf16 %v2114
  %v2117 = vmax.f32 %v2115, %v2116
  %v2118 = vrot.slane %v2117, 4
  %v2119 = vmax.f32 %v2117, %v2118
  %v2120 = vrot.slane %v2119, 2
  %v2121 = vmax.f32 %v2119, %v2120
  %v2122 = vrot.slane %v2121, 1
  %v2123 = vmax.f32 %v2121, %v2122
  %v2124 = vpack.i.bf16 %v2123, %v2123
  %v2125 = vsel %vm1035, %v876, 4286644096
  %v2126 = vunpack.i.l.bf16 %v2125
  %v2127 = vunpack.i.h.bf16 %v2125
  %v2128 = vmax.f32 %v2126, %v2127
  %v2129 = vrot.slane %v2128, 4
  %v2130 = vmax.f32 %v2128, %v2129
  %v2131 = vrot.slane %v2130, 2
  %v2132 = vmax.f32 %v2130, %v2131
  %v2133 = vrot.slane %v2132, 1
  %v2134 = vmax.f32 %v2132, %v2133
  %v2135 = vpack.i.bf16 %v2134, %v2134
  %v2136 = vsel %vm1035, %v877, 4286644096
  %v2137 = vunpack.i.l.bf16 %v2136
  %v2138 = vunpack.i.h.bf16 %v2136
  %v2139 = vmax.f32 %v2137, %v2138
  %v2140 = vrot.slane %v2139, 4
  %v2141 = vmax.f32 %v2139, %v2140
  %v2142 = vrot.slane %v2141, 2
  %v2143 = vmax.f32 %v2141, %v2142
  %v2144 = vrot.slane %v2143, 1
  %v2145 = vmax.f32 %v2143, %v2144
  %v2146 = vpack.i.bf16 %v2145, %v2145
  %v2147 = vsel %vm1035, %v878, 4286644096
  %v2148 = vunpack.i.l.bf16 %v2147
  %v2149 = vunpack.i.h.bf16 %v2147
  %v2150 = vmax.f32 %v2148, %v2149
  %v2151 = vrot.slane %v2150, 4
  %v2152 = vmax.f32 %v2150, %v2151
  %v2153 = vrot.slane %v2152, 2
  %v2154 = vmax.f32 %v2152, %v2153
  %v2155 = vrot.slane %v2154, 1
  %v2156 = vmax.f32 %v2154, %v2155
  %v2157 = vpack.i.bf16 %v2156, %v2156
  %v2158 = vsel %vm1035, %v879, 4286644096
  %v2159 = vunpack.i.l.bf16 %v2158
  %v2160 = vunpack.i.h.bf16 %v2158
  %v2161 = vmax.f32 %v2159, %v2160
  %v2162 = vrot.slane %v2161, 4
  %v2163 = vmax.f32 %v2161, %v2162
  %v2164 = vrot.slane %v2163, 2
  %v2165 = vmax.f32 %v2163, %v2164
  %v2166 = vrot.slane %v2165, 1
  %v2167 = vmax.f32 %v2165, %v2166
  %v2168 = vpack.i.bf16 %v2167, %v2167
  %v2169 = vsel %vm1035, %v880, 4286644096
  %v2170 = vunpack.i.l.bf16 %v2169
  %v2171 = vunpack.i.h.bf16 %v2169
  %v2172 = vmax.f32 %v2170, %v2171
  %v2173 = vrot.slane %v2172, 4
  %v2174 = vmax.f32 %v2172, %v2173
  %v2175 = vrot.slane %v2174, 2
  %v2176 = vmax.f32 %v2174, %v2175
  %v2177 = vrot.slane %v2176, 1
  %v2178 = vmax.f32 %v2176, %v2177
  %v2179 = vpack.i.bf16 %v2178, %v2178
  %v2180 = vsel %vm1035, %v881, 4286644096
  %v2181 = vunpack.i.l.bf16 %v2180
  %v2182 = vunpack.i.h.bf16 %v2180
  %v2183 = vmax.f32 %v2181, %v2182
  %v2184 = vrot.slane %v2183, 4
  %v2185 = vmax.f32 %v2183, %v2184
  %v2186 = vrot.slane %v2185, 2
  %v2187 = vmax.f32 %v2185, %v2186
  %v2188 = vrot.slane %v2187, 1
  %v2189 = vmax.f32 %v2187, %v2188
  %v2190 = vpack.i.bf16 %v2189, %v2189
  %v2191 = vsel %vm1035, %v882, 4286644096
  %v2192 = vunpack.i.l.bf16 %v2191
  %v2193 = vunpack.i.h.bf16 %v2191
  %v2194 = vmax.f32 %v2192, %v2193
  %v2195 = vrot.slane %v2194, 4
  %v2196 = vmax.f32 %v2194, %v2195
  %v2197 = vrot.slane %v2196, 2
  %v2198 = vmax.f32 %v2196, %v2197
  %v2199 = vrot.slane %v2198, 1
  %v2200 = vmax.f32 %v2198, %v2199
  %v2201 = vpack.i.bf16 %v2200, %v2200
  %v2202 = vsel %vm1035, %v883, 4286644096
  %v2203 = vunpack.i.l.bf16 %v2202
  %v2204 = vunpack.i.h.bf16 %v2202
  %v2205 = vmax.f32 %v2203, %v2204
  %v2206 = vrot.slane %v2205, 4
  %v2207 = vmax.f32 %v2205, %v2206
  %v2208 = vrot.slane %v2207, 2
  %v2209 = vmax.f32 %v2207, %v2208
  %v2210 = vrot.slane %v2209, 1
  %v2211 = vmax.f32 %v2209, %v2210
  %v2212 = vpack.i.bf16 %v2211, %v2211
  %v2213 = vsel %vm1035, %v884, 4286644096
  %v2214 = vunpack.i.l.bf16 %v2213
  %v2215 = vunpack.i.h.bf16 %v2213
  %v2216 = vmax.f32 %v2214, %v2215
  %v2217 = vrot.slane %v2216, 4
  %v2218 = vmax.f32 %v2216, %v2217
  %v2219 = vrot.slane %v2218, 2
  %v2220 = vmax.f32 %v2218, %v2219
  %v2221 = vrot.slane %v2220, 1
  %v2222 = vmax.f32 %v2220, %v2221
  %v2223 = vpack.i.bf16 %v2222, %v2222
  %v2224 = vsel %vm1035, %v885, 4286644096
  %v2225 = vunpack.i.l.bf16 %v2224
  %v2226 = vunpack.i.h.bf16 %v2224
  %v2227 = vmax.f32 %v2225, %v2226
  %v2228 = vrot.slane %v2227, 4
  %v2229 = vmax.f32 %v2227, %v2228
  %v2230 = vrot.slane %v2229, 2
  %v2231 = vmax.f32 %v2229, %v2230
  %v2232 = vrot.slane %v2231, 1
  %v2233 = vmax.f32 %v2231, %v2232
  %v2234 = vpack.i.bf16 %v2233, %v2233
  %v2235 = vsel %vm1035, %v886, 4286644096
  %v2236 = vunpack.i.l.bf16 %v2235
  %v2237 = vunpack.i.h.bf16 %v2235
  %v2238 = vmax.f32 %v2236, %v2237
  %v2239 = vrot.slane %v2238, 4
  %v2240 = vmax.f32 %v2238, %v2239
  %v2241 = vrot.slane %v2240, 2
  %v2242 = vmax.f32 %v2240, %v2241
  %v2243 = vrot.slane %v2242, 1
  %v2244 = vmax.f32 %v2242, %v2243
  %v2245 = vpack.i.bf16 %v2244, %v2244
  %v2246 = vsel %vm1035, %v887, 4286644096
  %v2247 = vunpack.i.l.bf16 %v2246
  %v2248 = vunpack.i.h.bf16 %v2246
  %v2249 = vmax.f32 %v2247, %v2248
  %v2250 = vrot.slane %v2249, 4
  %v2251 = vmax.f32 %v2249, %v2250
  %v2252 = vrot.slane %v2251, 2
  %v2253 = vmax.f32 %v2251, %v2252
  %v2254 = vrot.slane %v2253, 1
  %v2255 = vmax.f32 %v2253, %v2254
  %v2256 = vpack.i.bf16 %v2255, %v2255
  %v2257 = vsel %vm1035, %v888, 4286644096
  %v2258 = vunpack.i.l.bf16 %v2257
  %v2259 = vunpack.i.h.bf16 %v2257
  %v2260 = vmax.f32 %v2258, %v2259
  %v2261 = vrot.slane %v2260, 4
  %v2262 = vmax.f32 %v2260, %v2261
  %v2263 = vrot.slane %v2262, 2
  %v2264 = vmax.f32 %v2262, %v2263
  %v2265 = vrot.slane %v2264, 1
  %v2266 = vmax.f32 %v2264, %v2265
  %v2267 = vpack.i.bf16 %v2266, %v2266
  %v2268 = vsel %vm1035, %v889, 4286644096
  %v2269 = vunpack.i.l.bf16 %v2268
  %v2270 = vunpack.i.h.bf16 %v2268
  %v2271 = vmax.f32 %v2269, %v2270
  %v2272 = vrot.slane %v2271, 4
  %v2273 = vmax.f32 %v2271, %v2272
  %v2274 = vrot.slane %v2273, 2
  %v2275 = vmax.f32 %v2273, %v2274
  %v2276 = vrot.slane %v2275, 1
  %v2277 = vmax.f32 %v2275, %v2276
  %v2278 = vpack.i.bf16 %v2277, %v2277
  %v2279 = vsel %vm1035, %v890, 4286644096
  %v2280 = vunpack.i.l.bf16 %v2279
  %v2281 = vunpack.i.h.bf16 %v2279
  %v2282 = vmax.f32 %v2280, %v2281
  %v2283 = vrot.slane %v2282, 4
  %v2284 = vmax.f32 %v2282, %v2283
  %v2285 = vrot.slane %v2284, 2
  %v2286 = vmax.f32 %v2284, %v2285
  %v2287 = vrot.slane %v2286, 1
  %v2288 = vmax.f32 %v2286, %v2287
  %v2289 = vpack.i.bf16 %v2288, %v2288
  %v2290 = vsel %vm1035, %v891, 4286644096
  %v2291 = vunpack.i.l.bf16 %v2290
  %v2292 = vunpack.i.h.bf16 %v2290
  %v2293 = vmax.f32 %v2291, %v2292
  %v2294 = vrot.slane %v2293, 4
  %v2295 = vmax.f32 %v2293, %v2294
  %v2296 = vrot.slane %v2295, 2
  %v2297 = vmax.f32 %v2295, %v2296
  %v2298 = vrot.slane %v2297, 1
  %v2299 = vmax.f32 %v2297, %v2298
  %v2300 = vpack.i.bf16 %v2299, %v2299
  %v2301 = vsel %vm1035, %v892, 4286644096
  %v2302 = vunpack.i.l.bf16 %v2301
  %v2303 = vunpack.i.h.bf16 %v2301
  %v2304 = vmax.f32 %v2302, %v2303
  %v2305 = vrot.slane %v2304, 4
  %v2306 = vmax.f32 %v2304, %v2305
  %v2307 = vrot.slane %v2306, 2
  %v2308 = vmax.f32 %v2306, %v2307
  %v2309 = vrot.slane %v2308, 1
  %v2310 = vmax.f32 %v2308, %v2309
  %v2311 = vpack.i.bf16 %v2310, %v2310
  %v2312 = vsel %vm1035, %v893, 4286644096
  %v2313 = vunpack.i.l.bf16 %v2312
  %v2314 = vunpack.i.h.bf16 %v2312
  %v2315 = vmax.f32 %v2313, %v2314
  %v2316 = vrot.slane %v2315, 4
  %v2317 = vmax.f32 %v2315, %v2316
  %v2318 = vrot.slane %v2317, 2
  %v2319 = vmax.f32 %v2317, %v2318
  %v2320 = vrot.slane %v2319, 1
  %v2321 = vmax.f32 %v2319, %v2320
  %v2322 = vpack.i.bf16 %v2321, %v2321
  %v2323 = vsel %vm1035, %v894, 4286644096
  %v2324 = vunpack.i.l.bf16 %v2323
  %v2325 = vunpack.i.h.bf16 %v2323
  %v2326 = vmax.f32 %v2324, %v2325
  %v2327 = vrot.slane %v2326, 4
  %v2328 = vmax.f32 %v2326, %v2327
  %v2329 = vrot.slane %v2328, 2
  %v2330 = vmax.f32 %v2328, %v2329
  %v2331 = vrot.slane %v2330, 1
  %v2332 = vmax.f32 %v2330, %v2331
  %v2333 = vpack.i.bf16 %v2332, %v2332
  %v2334 = vsel %vm1035, %v895, 4286644096
  %v2335 = vunpack.i.l.bf16 %v2334
  %v2336 = vunpack.i.h.bf16 %v2334
  %v2337 = vmax.f32 %v2335, %v2336
  %v2338 = vrot.slane %v2337, 4
  %v2339 = vmax.f32 %v2337, %v2338
  %v2340 = vrot.slane %v2339, 2
  %v2341 = vmax.f32 %v2339, %v2340
  %v2342 = vrot.slane %v2341, 1
  %v2343 = vmax.f32 %v2341, %v2342
  %v2344 = vpack.i.bf16 %v2343, %v2343
  %v2345 = vsel %vm1035, %v896, 4286644096
  %v2346 = vunpack.i.l.bf16 %v2345
  %v2347 = vunpack.i.h.bf16 %v2345
  %v2348 = vmax.f32 %v2346, %v2347
  %v2349 = vrot.slane %v2348, 4
  %v2350 = vmax.f32 %v2348, %v2349
  %v2351 = vrot.slane %v2350, 2
  %v2352 = vmax.f32 %v2350, %v2351
  %v2353 = vrot.slane %v2352, 1
  %v2354 = vmax.f32 %v2352, %v2353
  %v2355 = vpack.i.bf16 %v2354, %v2354
  %v2356 = vsel %vm1035, %v897, 4286644096
  %v2357 = vunpack.i.l.bf16 %v2356
  %v2358 = vunpack.i.h.bf16 %v2356
  %v2359 = vmax.f32 %v2357, %v2358
  %v2360 = vrot.slane %v2359, 4
  %v2361 = vmax.f32 %v2359, %v2360
  %v2362 = vrot.slane %v2361, 2
  %v2363 = vmax.f32 %v2361, %v2362
  %v2364 = vrot.slane %v2363, 1
  %v2365 = vmax.f32 %v2363, %v2364
  %v2366 = vpack.i.bf16 %v2365, %v2365
  %v2367 = vsel %vm1035, %v898, 4286644096
  %v2368 = vunpack.i.l.bf16 %v2367
  %v2369 = vunpack.i.h.bf16 %v2367
  %v2370 = vmax.f32 %v2368, %v2369
  %v2371 = vrot.slane %v2370, 4
  %v2372 = vmax.f32 %v2370, %v2371
  %v2373 = vrot.slane %v2372, 2
  %v2374 = vmax.f32 %v2372, %v2373
  %v2375 = vrot.slane %v2374, 1
  %v2376 = vmax.f32 %v2374, %v2375
  %v2377 = vpack.i.bf16 %v2376, %v2376
  %v2378 = vsel %vm1035, %v899, 4286644096
  %v2379 = vunpack.i.l.bf16 %v2378
  %v2380 = vunpack.i.h.bf16 %v2378
  %v2381 = vmax.f32 %v2379, %v2380
  %v2382 = vrot.slane %v2381, 4
  %v2383 = vmax.f32 %v2381, %v2382
  %v2384 = vrot.slane %v2383, 2
  %v2385 = vmax.f32 %v2383, %v2384
  %v2386 = vrot.slane %v2385, 1
  %v2387 = vmax.f32 %v2385, %v2386
  %v2388 = vpack.i.bf16 %v2387, %v2387
  %v2389 = vsel %vm1035, %v900, 4286644096
  %v2390 = vunpack.i.l.bf16 %v2389
  %v2391 = vunpack.i.h.bf16 %v2389
  %v2392 = vmax.f32 %v2390, %v2391
  %v2393 = vrot.slane %v2392, 4
  %v2394 = vmax.f32 %v2392, %v2393
  %v2395 = vrot.slane %v2394, 2
  %v2396 = vmax.f32 %v2394, %v2395
  %v2397 = vrot.slane %v2396, 1
  %v2398 = vmax.f32 %v2396, %v2397
  %v2399 = vpack.i.bf16 %v2398, %v2398
  %v2400 = vsel %vm1035, %v901, 4286644096
  %v2401 = vunpack.i.l.bf16 %v2400
  %v2402 = vunpack.i.h.bf16 %v2400
  %v2403 = vmax.f32 %v2401, %v2402
  %v2404 = vrot.slane %v2403, 4
  %v2405 = vmax.f32 %v2403, %v2404
  %v2406 = vrot.slane %v2405, 2
  %v2407 = vmax.f32 %v2405, %v2406
  %v2408 = vrot.slane %v2407, 1
  %v2409 = vmax.f32 %v2407, %v2408
  %v2410 = vpack.i.bf16 %v2409, %v2409
  %v2411 = vsel %vm1035, %v902, 4286644096
  %v2412 = vunpack.i.l.bf16 %v2411
  %v2413 = vunpack.i.h.bf16 %v2411
  %v2414 = vmax.f32 %v2412, %v2413
  %v2415 = vrot.slane %v2414, 4
  %v2416 = vmax.f32 %v2414, %v2415
  %v2417 = vrot.slane %v2416, 2
  %v2418 = vmax.f32 %v2416, %v2417
  %v2419 = vrot.slane %v2418, 1
  %v2420 = vmax.f32 %v2418, %v2419
  %v2421 = vpack.i.bf16 %v2420, %v2420
  %v2422 = vsel %vm1035, %v903, 4286644096
  %v2423 = vunpack.i.l.bf16 %v2422
  %v2424 = vunpack.i.h.bf16 %v2422
  %v2425 = vmax.f32 %v2423, %v2424
  %v2426 = vrot.slane %v2425, 4
  %v2427 = vmax.f32 %v2425, %v2426
  %v2428 = vrot.slane %v2427, 2
  %v2429 = vmax.f32 %v2427, %v2428
  %v2430 = vrot.slane %v2429, 1
  %v2431 = vmax.f32 %v2429, %v2430
  %v2432 = vpack.i.bf16 %v2431, %v2431
  %v2433 = vsel %vm1035, %v904, 4286644096
  %v2434 = vunpack.i.l.bf16 %v2433
  %v2435 = vunpack.i.h.bf16 %v2433
  %v2436 = vmax.f32 %v2434, %v2435
  %v2437 = vrot.slane %v2436, 4
  %v2438 = vmax.f32 %v2436, %v2437
  %v2439 = vrot.slane %v2438, 2
  %v2440 = vmax.f32 %v2438, %v2439
  %v2441 = vrot.slane %v2440, 1
  %v2442 = vmax.f32 %v2440, %v2441
  %v2443 = vpack.i.bf16 %v2442, %v2442
  %v2572 = vunpack.c.l.b16 %v1046
  %v2573 = vunpack.c.l.b16 %v1057
  %v2574 = vunpack.c.l.b16 %v1068
  %v2575 = vunpack.c.l.b16 %v1079
  %v2576 = vunpack.c.l.b16 %v1090
  %v2577 = vunpack.c.l.b16 %v1101
  %v2578 = vunpack.c.l.b16 %v1112
  %v2579 = vunpack.c.l.b16 %v1123
  %v2580 = vunpack.c.l.b16 %v1134
  %v2581 = vunpack.c.l.b16 %v1145
  %v2582 = vunpack.c.l.b16 %v1156
  %v2583 = vunpack.c.l.b16 %v1167
  %v2584 = vunpack.c.l.b16 %v1178
  %v2585 = vunpack.c.l.b16 %v1189
  %v2586 = vunpack.c.l.b16 %v1200
  %v2587 = vunpack.c.l.b16 %v1211
  %v2588 = vunpack.c.l.b16 %v1222
  %v2589 = vunpack.c.l.b16 %v1233
  %v2590 = vunpack.c.l.b16 %v1244
  %v2591 = vunpack.c.l.b16 %v1255
  %v2592 = vunpack.c.l.b16 %v1266
  %v2593 = vunpack.c.l.b16 %v1277
  %v2594 = vunpack.c.l.b16 %v1288
  %v2595 = vunpack.c.l.b16 %v1299
  %v2596 = vunpack.c.l.b16 %v1310
  %v2597 = vunpack.c.l.b16 %v1321
  %v2598 = vunpack.c.l.b16 %v1332
  %v2599 = vunpack.c.l.b16 %v1343
  %v2600 = vunpack.c.l.b16 %v1354
  %v2601 = vunpack.c.l.b16 %v1365
  %v2602 = vunpack.c.l.b16 %v1376
  %v2603 = vunpack.c.l.b16 %v1387
  %v2604 = vunpack.c.l.b16 %v1398
  %v2605 = vunpack.c.l.b16 %v1409
  %v2606 = vunpack.c.l.b16 %v1420
  %v2607 = vunpack.c.l.b16 %v1431
  %v2608 = vunpack.c.l.b16 %v1442
  %v2609 = vunpack.c.l.b16 %v1453
  %v2610 = vunpack.c.l.b16 %v1464
  %v2611 = vunpack.c.l.b16 %v1475
  %v2612 = vunpack.c.l.b16 %v1486
  %v2613 = vunpack.c.l.b16 %v1497
  %v2614 = vunpack.c.l.b16 %v1508
  %v2615 = vunpack.c.l.b16 %v1519
  %v2616 = vunpack.c.l.b16 %v1530
  %v2617 = vunpack.c.l.b16 %v1541
  %v2618 = vunpack.c.l.b16 %v1552
  %v2619 = vunpack.c.l.b16 %v1563
  %v2620 = vunpack.c.l.b16 %v1574
  %v2621 = vunpack.c.l.b16 %v1585
  %v2622 = vunpack.c.l.b16 %v1596
  %v2623 = vunpack.c.l.b16 %v1607
  %v2624 = vunpack.c.l.b16 %v1618
  %v2625 = vunpack.c.l.b16 %v1629
  %v2626 = vunpack.c.l.b16 %v1640
  %v2627 = vunpack.c.l.b16 %v1651
  %v2628 = vunpack.c.l.b16 %v1662
  %v2629 = vunpack.c.l.b16 %v1673
  %v2630 = vunpack.c.l.b16 %v1684
  %v2631 = vunpack.c.l.b16 %v1695
  %v2632 = vunpack.c.l.b16 %v1706
  %v2633 = vunpack.c.l.b16 %v1717
  %v2634 = vunpack.c.l.b16 %v1728
  %v2635 = vunpack.c.l.b16 %v1739
  %v2636 = vunpack.c.l.b16 %v1750
  %v2637 = vunpack.c.l.b16 %v1761
  %v2638 = vunpack.c.l.b16 %v1772
  %v2639 = vunpack.c.l.b16 %v1783
  %v2640 = vunpack.c.l.b16 %v1794
  %v2641 = vunpack.c.l.b16 %v1805
  %v2642 = vunpack.c.l.b16 %v1816
  %v2643 = vunpack.c.l.b16 %v1827
  %v2644 = vunpack.c.l.b16 %v1838
  %v2645 = vunpack.c.l.b16 %v1849
  %v2646 = vunpack.c.l.b16 %v1860
  %v2647 = vunpack.c.l.b16 %v1871
  %v2648 = vunpack.c.l.b16 %v1882
  %v2649 = vunpack.c.l.b16 %v1893
  %v2650 = vunpack.c.l.b16 %v1904
  %v2651 = vunpack.c.l.b16 %v1915
  %v2652 = vunpack.c.l.b16 %v1926
  %v2653 = vunpack.c.l.b16 %v1937
  %v2654 = vunpack.c.l.b16 %v1948
  %v2655 = vunpack.c.l.b16 %v1959
  %v2656 = vunpack.c.l.b16 %v1970
  %v2657 = vunpack.c.l.b16 %v1981
  %v2658 = vunpack.c.l.b16 %v1992
  %v2659 = vunpack.c.l.b16 %v2003
  %v2660 = vunpack.c.l.b16 %v2014
  %v2661 = vunpack.c.l.b16 %v2025
  %v2662 = vunpack.c.l.b16 %v2036
  %v2663 = vunpack.c.l.b16 %v2047
  %v2664 = vunpack.c.l.b16 %v2058
  %v2665 = vunpack.c.l.b16 %v2069
  %v2666 = vunpack.c.l.b16 %v2080
  %v2667 = vunpack.c.l.b16 %v2091
  %v2668 = vunpack.c.l.b16 %v2102
  %v2669 = vunpack.c.l.b16 %v2113
  %v2670 = vunpack.c.l.b16 %v2124
  %v2671 = vunpack.c.l.b16 %v2135
  %v2672 = vunpack.c.l.b16 %v2146
  %v2673 = vunpack.c.l.b16 %v2157
  %v2674 = vunpack.c.l.b16 %v2168
  %v2675 = vunpack.c.l.b16 %v2179
  %v2676 = vunpack.c.l.b16 %v2190
  %v2677 = vunpack.c.l.b16 %v2201
  %v2678 = vunpack.c.l.b16 %v2212
  %v2679 = vunpack.c.l.b16 %v2223
  %v2680 = vunpack.c.l.b16 %v2234
  %v2681 = vunpack.c.l.b16 %v2245
  %v2682 = vunpack.c.l.b16 %v2256
  %v2683 = vunpack.c.l.b16 %v2267
  %v2684 = vunpack.c.l.b16 %v2278
  %v2685 = vunpack.c.l.b16 %v2289
  %v2686 = vunpack.c.l.b16 %v2300
  %v2687 = vunpack.c.l.b16 %v2311
  %v2688 = vunpack.c.l.b16 %v2322
  %v2689 = vunpack.c.l.b16 %v2333
  %v2690 = vunpack.c.l.b16 %v2344
  %v2691 = vunpack.c.l.b16 %v2355
  %v2692 = vunpack.c.l.b16 %v2366
  %v2693 = vunpack.c.l.b16 %v2377
  %v2694 = vunpack.c.l.b16 %v2388
  %v2695 = vunpack.c.l.b16 %v2399
  %v2696 = vunpack.c.l.b16 %v2410
  %v2697 = vunpack.c.l.b16 %v2421
  %v2698 = vunpack.c.l.b16 %v2432
  %v2699 = vunpack.c.l.b16 %v2443
  %v2700 = vpack.c.b16 %v2572, %v2572
  %v2701 = vpack.c.b16 %v2573, %v2573
  %v2702 = vpack.c.b16 %v2574, %v2574
  %v2703 = vpack.c.b16 %v2575, %v2575
  %v2704 = vpack.c.b16 %v2576, %v2576
  %v2705 = vpack.c.b16 %v2577, %v2577
  %v2706 = vpack.c.b16 %v2578, %v2578
  %v2707 = vpack.c.b16 %v2579, %v2579
  %v2708 = vpack.c.b16 %v2580, %v2580
  %v2709 = vpack.c.b16 %v2581, %v2581
  %v2710 = vpack.c.b16 %v2582, %v2582
  %v2711 = vpack.c.b16 %v2583, %v2583
  %v2712 = vpack.c.b16 %v2584, %v2584
  %v2713 = vpack.c.b16 %v2585, %v2585
  %v2714 = vpack.c.b16 %v2586, %v2586
  %v2715 = vpack.c.b16 %v2587, %v2587
  %v2716 = vpack.c.b16 %v2588, %v2588
  %v2717 = vpack.c.b16 %v2589, %v2589
  %v2718 = vpack.c.b16 %v2590, %v2590
  %v2719 = vpack.c.b16 %v2591, %v2591
  %v2720 = vpack.c.b16 %v2592, %v2592
  %v2721 = vpack.c.b16 %v2593, %v2593
  %v2722 = vpack.c.b16 %v2594, %v2594
  %v2723 = vpack.c.b16 %v2595, %v2595
  %v2724 = vpack.c.b16 %v2596, %v2596
  %v2725 = vpack.c.b16 %v2597, %v2597
  %v2726 = vpack.c.b16 %v2598, %v2598
  %v2727 = vpack.c.b16 %v2599, %v2599
  %v2728 = vpack.c.b16 %v2600, %v2600
  %v2729 = vpack.c.b16 %v2601, %v2601
  %v2730 = vpack.c.b16 %v2602, %v2602
  %v2731 = vpack.c.b16 %v2603, %v2603
  %v2732 = vpack.c.b16 %v2604, %v2604
  %v2733 = vpack.c.b16 %v2605, %v2605
  %v2734 = vpack.c.b16 %v2606, %v2606
  %v2735 = vpack.c.b16 %v2607, %v2607
  %v2736 = vpack.c.b16 %v2608, %v2608
  %v2737 = vpack.c.b16 %v2609, %v2609
  %v2738 = vpack.c.b16 %v2610, %v2610
  %v2739 = vpack.c.b16 %v2611, %v2611
  %v2740 = vpack.c.b16 %v2612, %v2612
  %v2741 = vpack.c.b16 %v2613, %v2613
  %v2742 = vpack.c.b16 %v2614, %v2614
  %v2743 = vpack.c.b16 %v2615, %v2615
  %v2744 = vpack.c.b16 %v2616, %v2616
  %v2745 = vpack.c.b16 %v2617, %v2617
  %v2746 = vpack.c.b16 %v2618, %v2618
  %v2747 = vpack.c.b16 %v2619, %v2619
  %v2748 = vpack.c.b16 %v2620, %v2620
  %v2749 = vpack.c.b16 %v2621, %v2621
  %v2750 = vpack.c.b16 %v2622, %v2622
  %v2751 = vpack.c.b16 %v2623, %v2623
  %v2752 = vpack.c.b16 %v2624, %v2624
  %v2753 = vpack.c.b16 %v2625, %v2625
  %v2754 = vpack.c.b16 %v2626, %v2626
  %v2755 = vpack.c.b16 %v2627, %v2627
  %v2756 = vpack.c.b16 %v2628, %v2628
  %v2757 = vpack.c.b16 %v2629, %v2629
  %v2758 = vpack.c.b16 %v2630, %v2630
  %v2759 = vpack.c.b16 %v2631, %v2631
  %v2760 = vpack.c.b16 %v2632, %v2632
  %v2761 = vpack.c.b16 %v2633, %v2633
  %v2762 = vpack.c.b16 %v2634, %v2634
  %v2763 = vpack.c.b16 %v2635, %v2635
  %v2764 = vpack.c.b16 %v2636, %v2636
  %v2765 = vpack.c.b16 %v2637, %v2637
  %v2766 = vpack.c.b16 %v2638, %v2638
  %v2767 = vpack.c.b16 %v2639, %v2639
  %v2768 = vpack.c.b16 %v2640, %v2640
  %v2769 = vpack.c.b16 %v2641, %v2641
  %v2770 = vpack.c.b16 %v2642, %v2642
  %v2771 = vpack.c.b16 %v2643, %v2643
  %v2772 = vpack.c.b16 %v2644, %v2644
  %v2773 = vpack.c.b16 %v2645, %v2645
  %v2774 = vpack.c.b16 %v2646, %v2646
  %v2775 = vpack.c.b16 %v2647, %v2647
  %v2776 = vpack.c.b16 %v2648, %v2648
  %v2777 = vpack.c.b16 %v2649, %v2649
  %v2778 = vpack.c.b16 %v2650, %v2650
  %v2779 = vpack.c.b16 %v2651, %v2651
  %v2780 = vpack.c.b16 %v2652, %v2652
  %v2781 = vpack.c.b16 %v2653, %v2653
  %v2782 = vpack.c.b16 %v2654, %v2654
  %v2783 = vpack.c.b16 %v2655, %v2655
  %v2784 = vpack.c.b16 %v2656, %v2656
  %v2785 = vpack.c.b16 %v2657, %v2657
  %v2786 = vpack.c.b16 %v2658, %v2658
  %v2787 = vpack.c.b16 %v2659, %v2659
  %v2788 = vpack.c.b16 %v2660, %v2660
  %v2789 = vpack.c.b16 %v2661, %v2661
  %v2790 = vpack.c.b16 %v2662, %v2662
  %v2791 = vpack.c.b16 %v2663, %v2663
  %v2792 = vpack.c.b16 %v2664, %v2664
  %v2793 = vpack.c.b16 %v2665, %v2665
  %v2794 = vpack.c.b16 %v2666, %v2666
  %v2795 = vpack.c.b16 %v2667, %v2667
  %v2796 = vpack.c.b16 %v2668, %v2668
  %v2797 = vpack.c.b16 %v2669, %v2669
  %v2798 = vpack.c.b16 %v2670, %v2670
  %v2799 = vpack.c.b16 %v2671, %v2671
  %v2800 = vpack.c.b16 %v2672, %v2672
  %v2801 = vpack.c.b16 %v2673, %v2673
  %v2802 = vpack.c.b16 %v2674, %v2674
  %v2803 = vpack.c.b16 %v2675, %v2675
  %v2804 = vpack.c.b16 %v2676, %v2676
  %v2805 = vpack.c.b16 %v2677, %v2677
  %v2806 = vpack.c.b16 %v2678, %v2678
  %v2807 = vpack.c.b16 %v2679, %v2679
  %v2808 = vpack.c.b16 %v2680, %v2680
  %v2809 = vpack.c.b16 %v2681, %v2681
  %v2810 = vpack.c.b16 %v2682, %v2682
  %v2811 = vpack.c.b16 %v2683, %v2683
  %v2812 = vpack.c.b16 %v2684, %v2684
  %v2813 = vpack.c.b16 %v2685, %v2685
  %v2814 = vpack.c.b16 %v2686, %v2686
  %v2815 = vpack.c.b16 %v2687, %v2687
  %v2816 = vpack.c.b16 %v2688, %v2688
  %v2817 = vpack.c.b16 %v2689, %v2689
  %v2818 = vpack.c.b16 %v2690, %v2690
  %v2819 = vpack.c.b16 %v2691, %v2691
  %v2820 = vpack.c.b16 %v2692, %v2692
  %v2821 = vpack.c.b16 %v2693, %v2693
  %v2822 = vpack.c.b16 %v2694, %v2694
  %v2823 = vpack.c.b16 %v2695, %v2695
  %v2824 = vpack.c.b16 %v2696, %v2696
  %v2825 = vpack.c.b16 %v2697, %v2697
  %v2826 = vpack.c.b16 %v2698, %v2698
  %v2827 = vpack.c.b16 %v2699, %v2699
  %v2828 = vunpack.c.l.b16 %v2700
  %v2829 = vunpack.c.l.b16 %v2701
  %v2830 = vunpack.c.l.b16 %v2702
  %v2831 = vunpack.c.l.b16 %v2703
  %v2832 = vunpack.c.l.b16 %v2704
  %v2833 = vunpack.c.l.b16 %v2705
  %v2834 = vunpack.c.l.b16 %v2706
  %v2835 = vunpack.c.l.b16 %v2707
  %v2836 = vunpack.c.l.b16 %v2708
  %v2837 = vunpack.c.l.b16 %v2709
  %v2838 = vunpack.c.l.b16 %v2710
  %v2839 = vunpack.c.l.b16 %v2711
  %v2840 = vunpack.c.l.b16 %v2712
  %v2841 = vunpack.c.l.b16 %v2713
  %v2842 = vunpack.c.l.b16 %v2714
  %v2843 = vunpack.c.l.b16 %v2715
  %v2844 = vunpack.c.l.b16 %v2716
  %v2845 = vunpack.c.l.b16 %v2717
  %v2846 = vunpack.c.l.b16 %v2718
  %v2847 = vunpack.c.l.b16 %v2719
  %v2848 = vunpack.c.l.b16 %v2720
  %v2849 = vunpack.c.l.b16 %v2721
  %v2850 = vunpack.c.l.b16 %v2722
  %v2851 = vunpack.c.l.b16 %v2723
  %v2852 = vunpack.c.l.b16 %v2724
  %v2853 = vunpack.c.l.b16 %v2725
  %v2854 = vunpack.c.l.b16 %v2726
  %v2855 = vunpack.c.l.b16 %v2727
  %v2856 = vunpack.c.l.b16 %v2728
  %v2857 = vunpack.c.l.b16 %v2729
  %v2858 = vunpack.c.l.b16 %v2730
  %v2859 = vunpack.c.l.b16 %v2731
  %v2860 = vunpack.c.l.b16 %v2732
  %v2861 = vunpack.c.l.b16 %v2733
  %v2862 = vunpack.c.l.b16 %v2734
  %v2863 = vunpack.c.l.b16 %v2735
  %v2864 = vunpack.c.l.b16 %v2736
  %v2865 = vunpack.c.l.b16 %v2737
  %v2866 = vunpack.c.l.b16 %v2738
  %v2867 = vunpack.c.l.b16 %v2739
  %v2868 = vunpack.c.l.b16 %v2740
  %v2869 = vunpack.c.l.b16 %v2741
  %v2870 = vunpack.c.l.b16 %v2742
  %v2871 = vunpack.c.l.b16 %v2743
  %v2872 = vunpack.c.l.b16 %v2744
  %v2873 = vunpack.c.l.b16 %v2745
  %v2874 = vunpack.c.l.b16 %v2746
  %v2875 = vunpack.c.l.b16 %v2747
  %v2876 = vunpack.c.l.b16 %v2748
  %v2877 = vunpack.c.l.b16 %v2749
  %v2878 = vunpack.c.l.b16 %v2750
  %v2879 = vunpack.c.l.b16 %v2751
  %v2880 = vunpack.c.l.b16 %v2752
  %v2881 = vunpack.c.l.b16 %v2753
  %v2882 = vunpack.c.l.b16 %v2754
  %v2883 = vunpack.c.l.b16 %v2755
  %v2884 = vunpack.c.l.b16 %v2756
  %v2885 = vunpack.c.l.b16 %v2757
  %v2886 = vunpack.c.l.b16 %v2758
  %v2887 = vunpack.c.l.b16 %v2759
  %v2888 = vunpack.c.l.b16 %v2760
  %v2889 = vunpack.c.l.b16 %v2761
  %v2890 = vunpack.c.l.b16 %v2762
  %v2891 = vunpack.c.l.b16 %v2763
  %v2892 = vunpack.c.l.b16 %v2764
  %v2893 = vunpack.c.l.b16 %v2765
  %v2894 = vunpack.c.l.b16 %v2766
  %v2895 = vunpack.c.l.b16 %v2767
  %v2896 = vunpack.c.l.b16 %v2768
  %v2897 = vunpack.c.l.b16 %v2769
  %v2898 = vunpack.c.l.b16 %v2770
  %v2899 = vunpack.c.l.b16 %v2771
  %v2900 = vunpack.c.l.b16 %v2772
  %v2901 = vunpack.c.l.b16 %v2773
  %v2902 = vunpack.c.l.b16 %v2774
  %v2903 = vunpack.c.l.b16 %v2775
  %v2904 = vunpack.c.l.b16 %v2776
  %v2905 = vunpack.c.l.b16 %v2777
  %v2906 = vunpack.c.l.b16 %v2778
  %v2907 = vunpack.c.l.b16 %v2779
  %v2908 = vunpack.c.l.b16 %v2780
  %v2909 = vunpack.c.l.b16 %v2781
  %v2910 = vunpack.c.l.b16 %v2782
  %v2911 = vunpack.c.l.b16 %v2783
  %v2912 = vunpack.c.l.b16 %v2784
  %v2913 = vunpack.c.l.b16 %v2785
  %v2914 = vunpack.c.l.b16 %v2786
  %v2915 = vunpack.c.l.b16 %v2787
  %v2916 = vunpack.c.l.b16 %v2788
  %v2917 = vunpack.c.l.b16 %v2789
  %v2918 = vunpack.c.l.b16 %v2790
  %v2919 = vunpack.c.l.b16 %v2791
  %v2920 = vunpack.c.l.b16 %v2792
  %v2921 = vunpack.c.l.b16 %v2793
  %v2922 = vunpack.c.l.b16 %v2794
  %v2923 = vunpack.c.l.b16 %v2795
  %v2924 = vunpack.c.l.b16 %v2796
  %v2925 = vunpack.c.l.b16 %v2797
  %v2926 = vunpack.c.l.b16 %v2798
  %v2927 = vunpack.c.l.b16 %v2799
  %v2928 = vunpack.c.l.b16 %v2800
  %v2929 = vunpack.c.l.b16 %v2801
  %v2930 = vunpack.c.l.b16 %v2802
  %v2931 = vunpack.c.l.b16 %v2803
  %v2932 = vunpack.c.l.b16 %v2804
  %v2933 = vunpack.c.l.b16 %v2805
  %v2934 = vunpack.c.l.b16 %v2806
  %v2935 = vunpack.c.l.b16 %v2807
  %v2936 = vunpack.c.l.b16 %v2808
  %v2937 = vunpack.c.l.b16 %v2809
  %v2938 = vunpack.c.l.b16 %v2810
  %v2939 = vunpack.c.l.b16 %v2811
  %v2940 = vunpack.c.l.b16 %v2812
  %v2941 = vunpack.c.l.b16 %v2813
  %v2942 = vunpack.c.l.b16 %v2814
  %v2943 = vunpack.c.l.b16 %v2815
  %v2944 = vunpack.c.l.b16 %v2816
  %v2945 = vunpack.c.l.b16 %v2817
  %v2946 = vunpack.c.l.b16 %v2818
  %v2947 = vunpack.c.l.b16 %v2819
  %v2948 = vunpack.c.l.b16 %v2820
  %v2949 = vunpack.c.l.b16 %v2821
  %v2950 = vunpack.c.l.b16 %v2822
  %v2951 = vunpack.c.l.b16 %v2823
  %v2952 = vunpack.c.l.b16 %v2824
  %v2953 = vunpack.c.l.b16 %v2825
  %v2954 = vunpack.c.l.b16 %v2826
  %v2955 = vunpack.c.l.b16 %v2827
  %vm2956 = vcmask 1041409
  %v2957 = vsel %vm2956, %v2829, %v2828
  %vm2958 = vcmask 1042434
  %v2959 = vsel %vm2958, %v2830, %v2957
  %vm2960 = vcmask 1043459
  %v2961 = vsel %vm2960, %v2831, %v2959
  %vm2962 = vcmask 1044484
  %v2963 = vsel %vm2962, %v2832, %v2961
  %vm2964 = vcmask 1045509
  %v2965 = vsel %vm2964, %v2833, %v2963
  %vm2966 = vcmask 1046534
  %v2967 = vsel %vm2966, %v2834, %v2965
  %vm2968 = vcmask 1047559
  %v2969 = vsel %vm2968, %v2835, %v2967
  %v2970 = vsel %vm2956, %v2837, %v2836
  %v2971 = vsel %vm2958, %v2838, %v2970
  %v2972 = vsel %vm2960, %v2839, %v2971
  %v2973 = vsel %vm2962, %v2840, %v2972
  %v2974 = vsel %vm2964, %v2841, %v2973
  %v2975 = vsel %vm2966, %v2842, %v2974
  %v2976 = vsel %vm2968, %v2843, %v2975
  %v2977 = vsel %vm2956, %v2845, %v2844
  %v2978 = vsel %vm2958, %v2846, %v2977
  %v2979 = vsel %vm2960, %v2847, %v2978
  %v2980 = vsel %vm2962, %v2848, %v2979
  %v2981 = vsel %vm2964, %v2849, %v2980
  %v2982 = vsel %vm2966, %v2850, %v2981
  %v2983 = vsel %vm2968, %v2851, %v2982
  %v2984 = vsel %vm2956, %v2853, %v2852
  %v2985 = vsel %vm2958, %v2854, %v2984
  %v2986 = vsel %vm2960, %v2855, %v2985
  %v2987 = vsel %vm2962, %v2856, %v2986
  %v2988 = vsel %vm2964, %v2857, %v2987
  %v2989 = vsel %vm2966, %v2858, %v2988
  %v2990 = vsel %vm2968, %v2859, %v2989
  %v2991 = vsel %vm2956, %v2861, %v2860
  %v2992 = vsel %vm2958, %v2862, %v2991
  %v2993 = vsel %vm2960, %v2863, %v2992
  %v2994 = vsel %vm2962, %v2864, %v2993
  %v2995 = vsel %vm2964, %v2865, %v2994
  %v2996 = vsel %vm2966, %v2866, %v2995
  %v2997 = vsel %vm2968, %v2867, %v2996
  %v2998 = vsel %vm2956, %v2869, %v2868
  %v2999 = vsel %vm2958, %v2870, %v2998
  %v3000 = vsel %vm2960, %v2871, %v2999
  %v3001 = vsel %vm2962, %v2872, %v3000
  %v3002 = vsel %vm2964, %v2873, %v3001
  %v3003 = vsel %vm2966, %v2874, %v3002
  %v3004 = vsel %vm2968, %v2875, %v3003
  %v3005 = vsel %vm2956, %v2877, %v2876
  %v3006 = vsel %vm2958, %v2878, %v3005
  %v3007 = vsel %vm2960, %v2879, %v3006
  %v3008 = vsel %vm2962, %v2880, %v3007
  %v3009 = vsel %vm2964, %v2881, %v3008
  %v3010 = vsel %vm2966, %v2882, %v3009
  %v3011 = vsel %vm2968, %v2883, %v3010
  %v3012 = vsel %vm2956, %v2885, %v2884
  %v3013 = vsel %vm2958, %v2886, %v3012
  %v3014 = vsel %vm2960, %v2887, %v3013
  %v3015 = vsel %vm2962, %v2888, %v3014
  %v3016 = vsel %vm2964, %v2889, %v3015
  %v3017 = vsel %vm2966, %v2890, %v3016
  %v3018 = vsel %vm2968, %v2891, %v3017
  %v3019 = vsel %vm2956, %v2893, %v2892
  %v3020 = vsel %vm2958, %v2894, %v3019
  %v3021 = vsel %vm2960, %v2895, %v3020
  %v3022 = vsel %vm2962, %v2896, %v3021
  %v3023 = vsel %vm2964, %v2897, %v3022
  %v3024 = vsel %vm2966, %v2898, %v3023
  %v3025 = vsel %vm2968, %v2899, %v3024
  %v3026 = vsel %vm2956, %v2901, %v2900
  %v3027 = vsel %vm2958, %v2902, %v3026
  %v3028 = vsel %vm2960, %v2903, %v3027
  %v3029 = vsel %vm2962, %v2904, %v3028
  %v3030 = vsel %vm2964, %v2905, %v3029
  %v3031 = vsel %vm2966, %v2906, %v3030
  %v3032 = vsel %vm2968, %v2907, %v3031
  %v3033 = vsel %vm2956, %v2909, %v2908
  %v3034 = vsel %vm2958, %v2910, %v3033
  %v3035 = vsel %vm2960, %v2911, %v3034
  %v3036 = vsel %vm2962, %v2912, %v3035
  %v3037 = vsel %vm2964, %v2913, %v3036
  %v3038 = vsel %vm2966, %v2914, %v3037
  %v3039 = vsel %vm2968, %v2915, %v3038
  %v3040 = vsel %vm2956, %v2917, %v2916
  %v3041 = vsel %vm2958, %v2918, %v3040
  %v3042 = vsel %vm2960, %v2919, %v3041
  %v3043 = vsel %vm2962, %v2920, %v3042
  %v3044 = vsel %vm2964, %v2921, %v3043
  %v3045 = vsel %vm2966, %v2922, %v3044
  %v3046 = vsel %vm2968, %v2923, %v3045
  %v3047 = vsel %vm2956, %v2925, %v2924
  %v3048 = vsel %vm2958, %v2926, %v3047
  %v3049 = vsel %vm2960, %v2927, %v3048
  %v3050 = vsel %vm2962, %v2928, %v3049
  %v3051 = vsel %vm2964, %v2929, %v3050
  %v3052 = vsel %vm2966, %v2930, %v3051
  %v3053 = vsel %vm2968, %v2931, %v3052
  %v3054 = vsel %vm2956, %v2933, %v2932
  %v3055 = vsel %vm2958, %v2934, %v3054
  %v3056 = vsel %vm2960, %v2935, %v3055
  %v3057 = vsel %vm2962, %v2936, %v3056
  %v3058 = vsel %vm2964, %v2937, %v3057
  %v3059 = vsel %vm2966, %v2938, %v3058
  %v3060 = vsel %vm2968, %v2939, %v3059
  %v3061 = vsel %vm2956, %v2941, %v2940
  %v3062 = vsel %vm2958, %v2942, %v3061
  %v3063 = vsel %vm2960, %v2943, %v3062
  %v3064 = vsel %vm2962, %v2944, %v3063
  %v3065 = vsel %vm2964, %v2945, %v3064
  %v3066 = vsel %vm2966, %v2946, %v3065
  %v3067 = vsel %vm2968, %v2947, %v3066
  %v3068 = vsel %vm2956, %v2949, %v2948
  %v3069 = vsel %vm2958, %v2950, %v3068
  %v3070 = vsel %vm2960, %v2951, %v3069
  %v3071 = vsel %vm2962, %v2952, %v3070
  %v3072 = vsel %vm2964, %v2953, %v3071
  %v3073 = vsel %vm2966, %v2954, %v3072
  %v3074 = vsel %vm2968, %v2955, %v3073
  %v3075 = vpack.c.b16 %v2969, %v2969
  %v3076 = vpack.c.b16 %v2976, %v2976
  %v3077 = vpack.c.b16 %v2983, %v2983
  %v3078 = vpack.c.b16 %v2990, %v2990
  %v3079 = vpack.c.b16 %v2997, %v2997
  %v3080 = vpack.c.b16 %v3004, %v3004
  %v3081 = vpack.c.b16 %v3011, %v3011
  %v3082 = vpack.c.b16 %v3018, %v3018
  %v3083 = vpack.c.b16 %v3025, %v3025
  %v3084 = vpack.c.b16 %v3032, %v3032
  %v3085 = vpack.c.b16 %v3039, %v3039
  %v3086 = vpack.c.b16 %v3046, %v3046
  %v3087 = vpack.c.b16 %v3053, %v3053
  %v3088 = vpack.c.b16 %v3060, %v3060
  %v3089 = vpack.c.b16 %v3067, %v3067
  %v3090 = vpack.c.b16 %v3074, %v3074
  %3107 = vst [vmem:[%s1] sm:$0xf] %v3075
  %3108 = vst [vmem:[%s1 + $0x4] sm:$0xf] %v3076
  %3109 = vst [vmem:[%s1 + $0x8] sm:$0xf] %v3077
  %3110 = vst [vmem:[%s1 + $0xc] sm:$0xf] %v3078
  %3111 = vst [vmem:[%s1 + $0x10] sm:$0xf] %v3079
  %3112 = vst [vmem:[%s1 + $0x14] sm:$0xf] %v3080
  %3113 = vst [vmem:[%s1 + $0x18] sm:$0xf] %v3081
  %3114 = vst [vmem:[%s1 + $0x1c] sm:$0xf] %v3082
  %3115 = vst [vmem:[%s1 + $0x20] sm:$0xf] %v3083
  %3116 = vst [vmem:[%s1 + $0x24] sm:$0xf] %v3084
  %3117 = vst [vmem:[%s1 + $0x28] sm:$0xf] %v3085
  %3118 = vst [vmem:[%s1 + $0x2c] sm:$0xf] %v3086
  %3119 = vst [vmem:[%s1 + $0x30] sm:$0xf] %v3087
  %3120 = vst [vmem:[%s1 + $0x34] sm:$0xf] %v3088
  %3121 = vst [vmem:[%s1 + $0x38] sm:$0xf] %v3089
  %3122 = vst [vmem:[%s1 + $0x3c] sm:$0xf] %v3090
  // Predicated region
  $region6: #{encoder_cnn_forward.11} parent=0 // pred_check
    _
  $region7: #{encoder_cnn_forward.11} parent=0 // pred_check_branch
    %3124 = sbr.rel (0) target = $region9
  $region8: #{encoder_cnn_forward.11} parent=0 // pred_region
    _
  $region9: #{encoder_cnn_forward.11} parent=0 // pred_fallthru
    _
  // Predicated region
  $region10: #{encoder_cnn_forward.11} parent=0 // pred_check
    _
  $region11: #{encoder_cnn_forward.11} parent=0 // pred_check_branch
    %3126 = sbr.rel (0) target = $region13
  $region12: #{encoder_cnn_forward.11} parent=0 // pred_region
    _
  $region13: #{encoder_cnn_forward.11} parent=0 // pred_fallthru
    _

// kernel: encoder_cnn_forward.14
$region0: #{encoder_cnn_forward.14}
  #allocation0 [shape = 'u32[]', space=smem, size = 0x4, offset = 0x4, fixed_abs, tag = 'smem constant byte address 0x4 - core index']
  #allocation1 [shape = 'u32[144,128]{1,0:T(1,128)}', space=vmem, size = 0x12000, scoped, tag = 'internal scratch']
  %s0 = inlined_call_operand.vmem [shape: bf16[128,128], index: 0, kind: input, shape index: {}]
  %s1 = inlined_call_operand.vmem [shape: bf16[128,128], index: 1, kind: input, shape index: {}]
  %s2 = inlined_call_operand.vmem [shape: f32[1,128], index: 2, kind: input, shape index: {}]
  %s3 = inlined_call_operand.vmem [shape: bf16[128,128], index: 3, kind: output, shape index: {}]
  %s4 = sld [smem:[#allocation0]]
  $region22: #{encoder_cnn_forward.14} parent=0
    _
  %s6 = ssub.s32 1, %s4
  %s7 = scalar_select 0, %s6, %s4
  // Predicated region
  $region2: #{encoder_cnn_forward.14} parent=0 // pred_check
    _
  $region3: #{encoder_cnn_forward.14} parent=0 // pred_check_branch
    %9 = sbr.rel (0) target = $region5
  $region4: #{encoder_cnn_forward.14} parent=0 // pred_region
    _
  $region5: #{encoder_cnn_forward.14} parent=0 // pred_fallthru
    _
  // Predicated region
  $region6: #{encoder_cnn_forward.14} parent=0 // pred_check
    _
  $region7: #{encoder_cnn_forward.14} parent=0 // pred_check_branch
    %11 = sbr.rel (0) target = $region9
  $region8: #{encoder_cnn_forward.14} parent=0 // pred_region
    _
  $region9: #{encoder_cnn_forward.14} parent=0 // pred_fallthru
    _
  // Predicated region
  $region10: #{encoder_cnn_forward.14} parent=0 // pred_check
    _
  $region11: #{encoder_cnn_forward.14} parent=0 // pred_check_branch
    %13 = sbr.rel (0) target = $region13
  $region12: #{encoder_cnn_forward.14} parent=0 // pred_region
    _
  $region13: #{encoder_cnn_forward.14} parent=0 // pred_fallthru
    _
  %v15 = vld [vmem:[%s0] sm:$0xf]
  %v16 = vld [vmem:[%s0 + $0x4] sm:$0xf]
  %v17 = vld [vmem:[%s0 + $0x8] sm:$0xf]
  %v18 = vld [vmem:[%s0 + $0xc] sm:$0xf]
  %v19 = vld [vmem:[%s0 + $0x10] sm:$0xf]
  %v20 = vld [vmem:[%s0 + $0x14] sm:$0xf]
  %v21 = vld [vmem:[%s0 + $0x18] sm:$0xf]
  %v22 = vld [vmem:[%s0 + $0x1c] sm:$0xf]
  %v23 = vld [vmem:[%s0 + $0x20] sm:$0xf]
  %v24 = vld [vmem:[%s0 + $0x24] sm:$0xf]
  %v25 = vld [vmem:[%s0 + $0x28] sm:$0xf]
  %v26 = vld [vmem:[%s0 + $0x2c] sm:$0xf]
  %v27 = vld [vmem:[%s0 + $0x30] sm:$0xf]
  %v28 = vld [vmem:[%s0 + $0x34] sm:$0xf]
  %v29 = vld [vmem:[%s0 + $0x38] sm:$0xf]
  %v30 = vld [vmem:[%s0 + $0x3c] sm:$0xf]
  %v31 = vld [vmem:[%s1] sm:$0xf]
  %v32 = vld [vmem:[%s1 + $0x4] sm:$0xf]
  %v33 = vld [vmem:[%s1 + $0x8] sm:$0xf]
  %v34 = vld [vmem:[%s1 + $0xc] sm:$0xf]
  %v35 = vld [vmem:[%s1 + $0x10] sm:$0xf]
  %v36 = vld [vmem:[%s1 + $0x14] sm:$0xf]
  %v37 = vld [vmem:[%s1 + $0x18] sm:$0xf]
  %v38 = vld [vmem:[%s1 + $0x1c] sm:$0xf]
  %v39 = vld [vmem:[%s1 + $0x20] sm:$0xf]
  %v40 = vld [vmem:[%s1 + $0x24] sm:$0xf]
  %v41 = vld [vmem:[%s1 + $0x28] sm:$0xf]
  %v42 = vld [vmem:[%s1 + $0x2c] sm:$0xf]
  %v43 = vld [vmem:[%s1 + $0x30] sm:$0xf]
  %v44 = vld [vmem:[%s1 + $0x34] sm:$0xf]
  %v45 = vld [vmem:[%s1 + $0x38] sm:$0xf]
  %v46 = vld [vmem:[%s1 + $0x3c] sm:$0xf]
  %v47 = vld [vmem:[%s2] sm:$0x1]
  %v49 = vlaneseq
  %v50 = vshrl.u32 %v49, 7
  %v51 = vsub.s32 0, %v50
  %v52 = vrot.slane %v47, %v51
  %v70 = vunpack.c.l.b16 %v15
  %v71 = vunpack.c.l.b16 %v16
  %v72 = vunpack.c.l.b16 %v17
  %v73 = vunpack.c.l.b16 %v18
  %v74 = vunpack.c.l.b16 %v19
  %v75 = vunpack.c.l.b16 %v20
  %v76 = vunpack.c.l.b16 %v21
  %v77 = vunpack.c.l.b16 %v22
  %v78 = vunpack.c.l.b16 %v23
  %v79 = vunpack.c.l.b16 %v24
  %v80 = vunpack.c.l.b16 %v25
  %v81 = vunpack.c.l.b16 %v26
  %v82 = vunpack.c.l.b16 %v27
  %v83 = vunpack.c.l.b16 %v28
  %v84 = vunpack.c.l.b16 %v29
  %v85 = vunpack.c.l.b16 %v30
  %v86 = vpack.c.b16 %v71, %v70
  %v87 = vpack.c.b16 %v73, %v72
  %v88 = vpack.c.b16 %v75, %v74
  %v89 = vpack.c.b16 %v77, %v76
  %v90 = vpack.c.b16 %v79, %v78
  %v91 = vpack.c.b16 %v81, %v80
  %v92 = vpack.c.b16 %v83, %v82
  %v93 = vpack.c.b16 %v85, %v84
  %v118 = vunpack.c.l.b16 %v31
  %v119 = vunpack.c.l.b16 %v32
  %v120 = vunpack.c.l.b16 %v33
  %v121 = vunpack.c.l.b16 %v34
  %v122 = vunpack.c.l.b16 %v35
  %v123 = vunpack.c.l.b16 %v36
  %v124 = vunpack.c.l.b16 %v37
  %v125 = vunpack.c.l.b16 %v38
  %v126 = vunpack.c.l.b16 %v39
  %v127 = vunpack.c.l.b16 %v40
  %v128 = vunpack.c.l.b16 %v41
  %v129 = vunpack.c.l.b16 %v42
  %v130 = vunpack.c.l.b16 %v43
  %v131 = vunpack.c.l.b16 %v44
  %v132 = vunpack.c.l.b16 %v45
  %v133 = vunpack.c.l.b16 %v46
  %v134 = vpack.c.b16 %v119, %v118
  %v135 = vpack.c.b16 %v121, %v120
  %v136 = vpack.c.b16 %v123, %v122
  %v137 = vpack.c.b16 %v125, %v124
  %v138 = vpack.c.b16 %v127, %v126
  %v139 = vpack.c.b16 %v129, %v128
  %v140 = vpack.c.b16 %v131, %v130
  %v141 = vpack.c.b16 %v133, %v132
  %150 = vmatprep.subr.bf16.mxu0 0
  %151 = vmatpush1.bf16.msra.mxu0 %v141
  %152 = vmatprep.subr.bf16.mxu0 0
  %153 = vmatpush1.bf16.msra.mxu0 %v140
  %154 = vmatprep.subr.bf16.mxu0 0
  %155 = vmatpush1.bf16.msra.mxu0 %v139
  %156 = vmatprep.subr.bf16.mxu0 0
  %157 = vmatpush1.bf16.msra.mxu0 %v138
  %158 = vmatprep.subr.bf16.mxu0 0
  %159 = vmatpush1.bf16.msra.mxu0 %v137
  %160 = vmatprep.subr.bf16.mxu0 0
  %161 = vmatpush1.bf16.msra.mxu0 %v136
  %162 = vmatprep.subr.bf16.mxu0 0
  %163 = vmatpush1.bf16.msra.mxu0 %v135
  %164 = vmatprep.subr.bf16.mxu0 0
  %165 = vmatpush1.bf16.msra.mxu0 %v134
  %166 = vmatprep.subr.bf16.mxu0 0
  %167 = vmatpush2.bf16.msra.mxu0 0
  %168 = vmatprep.subr.bf16.mxu0 0
  %169 = vmatpush2.bf16.msra.mxu0 0
  %170 = vmatprep.subr.bf16.mxu0 0
  %171 = vmatpush2.bf16.msra.mxu0 0
  %172 = vmatprep.subr.bf16.mxu0 0
  %173 = vmatpush2.bf16.msra.mxu0 0
  %174 = vmatprep.subr.bf16.mxu0 0
  %175 = vmatpush2.bf16.msra.mxu0 0
  %176 = vmatprep.subr.bf16.mxu0 0
  %177 = vmatpush2.bf16.msra.mxu0 0
  %178 = vmatprep.subr.bf16.mxu0 0
  %179 = vmatpush2.bf16.msra.mxu0 0
  %180 = vmatprep.subr.bf16.mxu0 0
  %181 = vmatpush2.bf16.msra.mxu0 0
  %182 = vmatprep.mubr.bf16.mxu0 0
  %183 = vmatmul.mubr.bf16.gmra.mxu0 %v86
  %v184 = vpop.f32.mrf.mxu0
  %v185 = vadd.f32 %v52, %v184
  %v186 = vpop.f32.mrf.mxu0
  %v187 = vpop.f32.mrf.mxu0
  %v188 = vadd.f32 %v52, %v187
  %v189 = vpop.f32.mrf.mxu0
  %190 = vmatprep.mubr.bf16.mxu0 0
  %191 = vmatmul.mubr.bf16.gmra.mxu0 %v87
  %v192 = vpop.f32.mrf.mxu0
  %v193 = vadd.f32 %v52, %v192
  %v194 = vpop.f32.mrf.mxu0
  %v195 = vpop.f32.mrf.mxu0
  %v196 = vadd.f32 %v52, %v195
  %v197 = vpop.f32.mrf.mxu0
  %198 = vmatprep.mubr.bf16.mxu0 0
  %199 = vmatmul.mubr.bf16.gmra.mxu0 %v88
  %v200 = vpop.f32.mrf.mxu0
  %v201 = vadd.f32 %v52, %v200
  %v202 = vpop.f32.mrf.mxu0
  %v203 = vpop.f32.mrf.mxu0
  %v204 = vadd.f32 %v52, %v203
  %v205 = vpop.f32.mrf.mxu0
  %206 = vmatprep.mubr.bf16.mxu0 0
  %207 = vmatmul.mubr.bf16.gmra.mxu0 %v89
  %v208 = vpop.f32.mrf.mxu0
  %v209 = vadd.f32 %v52, %v208
  %v210 = vpop.f32.mrf.mxu0
  %v211 = vpop.f32.mrf.mxu0
  %v212 = vadd.f32 %v52, %v211
  %v213 = vpop.f32.mrf.mxu0
  %214 = vmatprep.mubr.bf16.mxu0 0
  %215 = vmatmul.mubr.bf16.gmra.mxu0 %v90
  %v216 = vpop.f32.mrf.mxu0
  %v217 = vadd.f32 %v52, %v216
  %v218 = vpop.f32.mrf.mxu0
  %v219 = vpop.f32.mrf.mxu0
  %v220 = vadd.f32 %v52, %v219
  %v221 = vpop.f32.mrf.mxu0
  %222 = vmatprep.mubr.bf16.mxu0 0
  %223 = vmatmul.mubr.bf16.gmra.mxu0 %v91
  %v224 = vpop.f32.mrf.mxu0
  %v225 = vadd.f32 %v52, %v224
  %v226 = vpop.f32.mrf.mxu0
  %v227 = vpop.f32.mrf.mxu0
  %v228 = vadd.f32 %v52, %v227
  %v229 = vpop.f32.mrf.mxu0
  %230 = vmatprep.mubr.bf16.mxu0 0
  %231 = vmatmul.mubr.bf16.gmra.mxu0 %v92
  %v232 = vpop.f32.mrf.mxu0
  %v233 = vadd.f32 %v52, %v232
  %v234 = vpop.f32.mrf.mxu0
  %v235 = vpop.f32.mrf.mxu0
  %v236 = vadd.f32 %v52, %v235
  %v237 = vpop.f32.mrf.mxu0
  %238 = vmatprep.mubr.bf16.mxu0 0
  %239 = vmatmul.mubr.bf16.gmra.mxu0 %v93
  %v240 = vpop.f32.mrf.mxu0
  %v241 = vadd.f32 %v52, %v240
  %v242 = vpop.f32.mrf.mxu0
  %v243 = vpop.f32.mrf.mxu0
  %v244 = vadd.f32 %v52, %v243
  %v245 = vpop.f32.mrf.mxu0
  %246 = vdwg.mxu0
  %v247 = vpack.c.bf16 %v188, %v185
  %v248 = vpack.c.bf16 %v196, %v193
  %v249 = vpack.c.bf16 %v204, %v201
  %v250 = vpack.c.bf16 %v212, %v209
  %v251 = vpack.c.bf16 %v220, %v217
  %v252 = vpack.c.bf16 %v228, %v225
  %v253 = vpack.c.bf16 %v236, %v233
  %v254 = vpack.c.bf16 %v244, %v241
  %v263 = vunpack.c.l.b16 %v247
  %v264 = vunpack.c.h.b16 %v247
  %v265 = vunpack.c.l.b16 %v248
  %v266 = vunpack.c.h.b16 %v248
  %v267 = vunpack.c.l.b16 %v249
  %v268 = vunpack.c.h.b16 %v249
  %v269 = vunpack.c.l.b16 %v250
  %v270 = vunpack.c.h.b16 %v250
  %v271 = vunpack.c.l.b16 %v251
  %v272 = vunpack.c.h.b16 %v251
  %v273 = vunpack.c.l.b16 %v252
  %v274 = vunpack.c.h.b16 %v252
  %v275 = vunpack.c.l.b16 %v253
  %v276 = vunpack.c.h.b16 %v253
  %v277 = vunpack.c.l.b16 %v254
  %v278 = vunpack.c.h.b16 %v254
  %v279 = vpack.c.b16 %v263, %v263
  %v280 = vpack.c.b16 %v264, %v264
  %v281 = vpack.c.b16 %v265, %v265
  %v282 = vpack.c.b16 %v266, %v266
  %v283 = vpack.c.b16 %v267, %v267
  %v284 = vpack.c.b16 %v268, %v268
  %v285 = vpack.c.b16 %v269, %v269
  %v286 = vpack.c.b16 %v270, %v270
  %v287 = vpack.c.b16 %v271, %v271
  %v288 = vpack.c.b16 %v272, %v272
  %v289 = vpack.c.b16 %v273, %v273
  %v290 = vpack.c.b16 %v274, %v274
  %v291 = vpack.c.b16 %v275, %v275
  %v292 = vpack.c.b16 %v276, %v276
  %v293 = vpack.c.b16 %v277, %v277
  %v294 = vpack.c.b16 %v278, %v278
  %311 = vst [vmem:[%s3] sm:$0xf] %v279
  %312 = vst [vmem:[%s3 + $0x4] sm:$0xf] %v280
  %313 = vst [vmem:[%s3 + $0x8] sm:$0xf] %v281
  %314 = vst [vmem:[%s3 + $0xc] sm:$0xf] %v282
  %315 = vst [vmem:[%s3 + $0x10] sm:$0xf] %v283
  %316 = vst [vmem:[%s3 + $0x14] sm:$0xf] %v284
  %317 = vst [vmem:[%s3 + $0x18] sm:$0xf] %v285
  %318 = vst [vmem:[%s3 + $0x1c] sm:$0xf] %v286
  %319 = vst [vmem:[%s3 + $0x20] sm:$0xf] %v287
  %320 = vst [vmem:[%s3 + $0x24] sm:$0xf] %v288
  %321 = vst [vmem:[%s3 + $0x28] sm:$0xf] %v289
  %322 = vst [vmem:[%s3 + $0x2c] sm:$0xf] %v290
  %323 = vst [vmem:[%s3 + $0x30] sm:$0xf] %v291
  %324 = vst [vmem:[%s3 + $0x34] sm:$0xf] %v292
  %325 = vst [vmem:[%s3 + $0x38] sm:$0xf] %v293
  %326 = vst [vmem:[%s3 + $0x3c] sm:$0xf] %v294
  // Predicated region
  $region14: #{encoder_cnn_forward.14} parent=0 // pred_check
    _
  $region15: #{encoder_cnn_forward.14} parent=0 // pred_check_branch
    %328 = sbr.rel (0) target = $region17
  $region16: #{encoder_cnn_forward.14} parent=0 // pred_region
    _
  $region17: #{encoder_cnn_forward.14} parent=0 // pred_fallthru
    _
  // Predicated region
  $region18: #{encoder_cnn_forward.14} parent=0 // pred_check
    _
  $region19: #{encoder_cnn_forward.14} parent=0 // pred_check_branch
    %330 = sbr.rel (0) target = $region21
  $region20: #{encoder_cnn_forward.14} parent=0 // pred_region
    _
  $region21: #{encoder_cnn_forward.14} parent=0 // pred_fallthru
    _

// kernel: encoder_cnn_forward.15
$region0: #{encoder_cnn_forward.15}
  #allocation0 [shape = 'u32[]', space=smem, size = 0x4, offset = 0x4, fixed_abs, tag = 'smem constant byte address 0x4 - core index']
  #allocation1 [shape = 'u32[144,128]{1,0:T(1,128)}', space=vmem, size = 0x12000, scoped, tag = 'internal scratch']
  %s0 = inlined_call_operand.vmem [shape: bf16[128,128], index: 0, kind: input, shape index: {}]
  %s1 = inlined_call_operand.vmem [shape: bf16[128,128], index: 1, kind: input, shape index: {}]
  %s2 = inlined_call_operand.vmem [shape: f32[1,128], index: 2, kind: input, shape index: {}]
  %s3 = inlined_call_operand.vmem [shape: bf16[128,128], index: 3, kind: input, shape index: {}]
  %s4 = inlined_call_operand.vmem [shape: bf16[128,128], index: 4, kind: output, shape index: {}]
  %s5 = sld [smem:[#allocation0]]
  $region26: #{encoder_cnn_forward.15} parent=0
    _
  %s7 = ssub.s32 1, %s5
  %s8 = scalar_select 0, %s7, %s5
  // Predicated region
  $region2: #{encoder_cnn_forward.15} parent=0 // pred_check
    _
  $region3: #{encoder_cnn_forward.15} parent=0 // pred_check_branch
    %10 = sbr.rel (0) target = $region5
  $region4: #{encoder_cnn_forward.15} parent=0 // pred_region
    _
  $region5: #{encoder_cnn_forward.15} parent=0 // pred_fallthru
    _
  // Predicated region
  $region6: #{encoder_cnn_forward.15} parent=0 // pred_check
    _
  $region7: #{encoder_cnn_forward.15} parent=0 // pred_check_branch
    %12 = sbr.rel (0) target = $region9
  $region8: #{encoder_cnn_forward.15} parent=0 // pred_region
    _
  $region9: #{encoder_cnn_forward.15} parent=0 // pred_fallthru
    _
  // Predicated region
  $region10: #{encoder_cnn_forward.15} parent=0 // pred_check
    _
  $region11: #{encoder_cnn_forward.15} parent=0 // pred_check_branch
    %14 = sbr.rel (0) target = $region13
  $region12: #{encoder_cnn_forward.15} parent=0 // pred_region
    _
  $region13: #{encoder_cnn_forward.15} parent=0 // pred_fallthru
    _
  // Predicated region
  $region14: #{encoder_cnn_forward.15} parent=0 // pred_check
    _
  $region15: #{encoder_cnn_forward.15} parent=0 // pred_check_branch
    %16 = sbr.rel (0) target = $region17
  $region16: #{encoder_cnn_forward.15} parent=0 // pred_region
    _
  $region17: #{encoder_cnn_forward.15} parent=0 // pred_fallthru
    _
  %v18 = vld [vmem:[%s0] sm:$0xf]
  %v19 = vld [vmem:[%s0 + $0x4] sm:$0xf]
  %v20 = vld [vmem:[%s0 + $0x8] sm:$0xf]
  %v21 = vld [vmem:[%s0 + $0xc] sm:$0xf]
  %v22 = vld [vmem:[%s0 + $0x10] sm:$0xf]
  %v23 = vld [vmem:[%s0 + $0x14] sm:$0xf]
  %v24 = vld [vmem:[%s0 + $0x18] sm:$0xf]
  %v25 = vld [vmem:[%s0 + $0x1c] sm:$0xf]
  %v26 = vld [vmem:[%s0 + $0x20] sm:$0xf]
  %v27 = vld [vmem:[%s0 + $0x24] sm:$0xf]
  %v28 = vld [vmem:[%s0 + $0x28] sm:$0xf]
  %v29 = vld [vmem:[%s0 + $0x2c] sm:$0xf]
  %v30 = vld [vmem:[%s0 + $0x30] sm:$0xf]
  %v31 = vld [vmem:[%s0 + $0x34] sm:$0xf]
  %v32 = vld [vmem:[%s0 + $0x38] sm:$0xf]
  %v33 = vld [vmem:[%s0 + $0x3c] sm:$0xf]
  %v34 = vld [vmem:[%s1] sm:$0xf]
  %v35 = vld [vmem:[%s1 + $0x4] sm:$0xf]
  %v36 = vld [vmem:[%s1 + $0x8] sm:$0xf]
  %v37 = vld [vmem:[%s1 + $0xc] sm:$0xf]
  %v38 = vld [vmem:[%s1 + $0x10] sm:$0xf]
  %v39 = vld [vmem:[%s1 + $0x14] sm:$0xf]
  %v40 = vld [vmem:[%s1 + $0x18] sm:$0xf]
  %v41 = vld [vmem:[%s1 + $0x1c] sm:$0xf]
  %v42 = vld [vmem:[%s1 + $0x20] sm:$0xf]
  %v43 = vld [vmem:[%s1 + $0x24] sm:$0xf]
  %v44 = vld [vmem:[%s1 + $0x28] sm:$0xf]
  %v45 = vld [vmem:[%s1 + $0x2c] sm:$0xf]
  %v46 = vld [vmem:[%s1 + $0x30] sm:$0xf]
  %v47 = vld [vmem:[%s1 + $0x34] sm:$0xf]
  %v48 = vld [vmem:[%s1 + $0x38] sm:$0xf]
  %v49 = vld [vmem:[%s1 + $0x3c] sm:$0xf]
  %v50 = vld [vmem:[%s2] sm:$0x1]
  %v52 = vlaneseq
  %v53 = vshrl.u32 %v52, 7
  %v54 = vsub.s32 0, %v53
  %v55 = vrot.slane %v50, %v54
  %v73 = vunpack.c.l.b16 %v18
  %v74 = vunpack.c.l.b16 %v19
  %v75 = vunpack.c.l.b16 %v20
  %v76 = vunpack.c.l.b16 %v21
  %v77 = vunpack.c.l.b16 %v22
  %v78 = vunpack.c.l.b16 %v23
  %v79 = vunpack.c.l.b16 %v24
  %v80 = vunpack.c.l.b16 %v25
  %v81 = vunpack.c.l.b16 %v26
  %v82 = vunpack.c.l.b16 %v27
  %v83 = vunpack.c.l.b16 %v28
  %v84 = vunpack.c.l.b16 %v29
  %v85 = vunpack.c.l.b16 %v30
  %v86 = vunpack.c.l.b16 %v31
  %v87 = vunpack.c.l.b16 %v32
  %v88 = vunpack.c.l.b16 %v33
  %v89 = vpack.c.b16 %v74, %v73
  %v90 = vpack.c.b16 %v76, %v75
  %v91 = vpack.c.b16 %v78, %v77
  %v92 = vpack.c.b16 %v80, %v79
  %v93 = vpack.c.b16 %v82, %v81
  %v94 = vpack.c.b16 %v84, %v83
  %v95 = vpack.c.b16 %v86, %v85
  %v96 = vpack.c.b16 %v88, %v87
  %v121 = vunpack.c.l.b16 %v34
  %v122 = vunpack.c.l.b16 %v35
  %v123 = vunpack.c.l.b16 %v36
  %v124 = vunpack.c.l.b16 %v37
  %v125 = vunpack.c.l.b16 %v38
  %v126 = vunpack.c.l.b16 %v39
  %v127 = vunpack.c.l.b16 %v40
  %v128 = vunpack.c.l.b16 %v41
  %v129 = vunpack.c.l.b16 %v42
  %v130 = vunpack.c.l.b16 %v43
  %v131 = vunpack.c.l.b16 %v44
  %v132 = vunpack.c.l.b16 %v45
  %v133 = vunpack.c.l.b16 %v46
  %v134 = vunpack.c.l.b16 %v47
  %v135 = vunpack.c.l.b16 %v48
  %v136 = vunpack.c.l.b16 %v49
  %v137 = vpack.c.b16 %v122, %v121
  %v138 = vpack.c.b16 %v124, %v123
  %v139 = vpack.c.b16 %v126, %v125
  %v140 = vpack.c.b16 %v128, %v127
  %v141 = vpack.c.b16 %v130, %v129
  %v142 = vpack.c.b16 %v132, %v131
  %v143 = vpack.c.b16 %v134, %v133
  %v144 = vpack.c.b16 %v136, %v135
  %153 = vmatprep.subr.bf16.mxu0 0
  %154 = vmatpush1.bf16.msra.mxu0 %v144
  %155 = vmatprep.subr.bf16.mxu0 0
  %156 = vmatpush1.bf16.msra.mxu0 %v143
  %157 = vmatprep.subr.bf16.mxu0 0
  %158 = vmatpush1.bf16.msra.mxu0 %v142
  %159 = vmatprep.subr.bf16.mxu0 0
  %160 = vmatpush1.bf16.msra.mxu0 %v141
  %161 = vmatprep.subr.bf16.mxu0 0
  %162 = vmatpush1.bf16.msra.mxu0 %v140
  %163 = vmatprep.subr.bf16.mxu0 0
  %164 = vmatpush1.bf16.msra.mxu0 %v139
  %165 = vmatprep.subr.bf16.mxu0 0
  %166 = vmatpush1.bf16.msra.mxu0 %v138
  %167 = vmatprep.subr.bf16.mxu0 0
  %168 = vmatpush1.bf16.msra.mxu0 %v137
  %169 = vmatprep.subr.bf16.mxu0 0
  %170 = vmatpush2.bf16.msra.mxu0 0
  %171 = vmatprep.subr.bf16.mxu0 0
  %172 = vmatpush2.bf16.msra.mxu0 0
  %173 = vmatprep.subr.bf16.mxu0 0
  %174 = vmatpush2.bf16.msra.mxu0 0
  %175 = vmatprep.subr.bf16.mxu0 0
  %176 = vmatpush2.bf16.msra.mxu0 0
  %177 = vmatprep.subr.bf16.mxu0 0
  %178 = vmatpush2.bf16.msra.mxu0 0
  %179 = vmatprep.subr.bf16.mxu0 0
  %180 = vmatpush2.bf16.msra.mxu0 0
  %181 = vmatprep.subr.bf16.mxu0 0
  %182 = vmatpush2.bf16.msra.mxu0 0
  %183 = vmatprep.subr.bf16.mxu0 0
  %184 = vmatpush2.bf16.msra.mxu0 0
  %185 = vmatprep.mubr.bf16.mxu0 0
  %186 = vmatmul.mubr.bf16.gmra.mxu0 %v89
  %v187 = vpop.f32.mrf.mxu0
  %v188 = vadd.f32 %v55, %v187
  %v189 = vpop.f32.mrf.mxu0
  %v190 = vpop.f32.mrf.mxu0
  %v191 = vadd.f32 %v55, %v190
  %v192 = vpop.f32.mrf.mxu0
  %193 = vmatprep.mubr.bf16.mxu0 0
  %194 = vmatmul.mubr.bf16.gmra.mxu0 %v90
  %v195 = vpop.f32.mrf.mxu0
  %v196 = vadd.f32 %v55, %v195
  %v197 = vpop.f32.mrf.mxu0
  %v198 = vpop.f32.mrf.mxu0
  %v199 = vadd.f32 %v55, %v198
  %v200 = vpop.f32.mrf.mxu0
  %201 = vmatprep.mubr.bf16.mxu0 0
  %202 = vmatmul.mubr.bf16.gmra.mxu0 %v91
  %v203 = vpop.f32.mrf.mxu0
  %v204 = vadd.f32 %v55, %v203
  %v205 = vpop.f32.mrf.mxu0
  %v206 = vpop.f32.mrf.mxu0
  %v207 = vadd.f32 %v55, %v206
  %v208 = vpop.f32.mrf.mxu0
  %209 = vmatprep.mubr.bf16.mxu0 0
  %210 = vmatmul.mubr.bf16.gmra.mxu0 %v92
  %v211 = vpop.f32.mrf.mxu0
  %v212 = vadd.f32 %v55, %v211
  %v213 = vpop.f32.mrf.mxu0
  %v214 = vpop.f32.mrf.mxu0
  %v215 = vadd.f32 %v55, %v214
  %v216 = vpop.f32.mrf.mxu0
  %217 = vmatprep.mubr.bf16.mxu0 0
  %218 = vmatmul.mubr.bf16.gmra.mxu0 %v93
  %v219 = vpop.f32.mrf.mxu0
  %v220 = vadd.f32 %v55, %v219
  %v221 = vpop.f32.mrf.mxu0
  %v222 = vpop.f32.mrf.mxu0
  %v223 = vadd.f32 %v55, %v222
  %v224 = vpop.f32.mrf.mxu0
  %225 = vmatprep.mubr.bf16.mxu0 0
  %226 = vmatmul.mubr.bf16.gmra.mxu0 %v94
  %v227 = vpop.f32.mrf.mxu0
  %v228 = vadd.f32 %v55, %v227
  %v229 = vpop.f32.mrf.mxu0
  %v230 = vpop.f32.mrf.mxu0
  %v231 = vadd.f32 %v55, %v230
  %v232 = vpop.f32.mrf.mxu0
  %233 = vmatprep.mubr.bf16.mxu0 0
  %234 = vmatmul.mubr.bf16.gmra.mxu0 %v95
  %v235 = vpop.f32.mrf.mxu0
  %v236 = vadd.f32 %v55, %v235
  %v237 = vpop.f32.mrf.mxu0
  %v238 = vpop.f32.mrf.mxu0
  %v239 = vadd.f32 %v55, %v238
  %v240 = vpop.f32.mrf.mxu0
  %241 = vmatprep.mubr.bf16.mxu0 0
  %242 = vmatmul.mubr.bf16.gmra.mxu0 %v96
  %v243 = vpop.f32.mrf.mxu0
  %v244 = vadd.f32 %v55, %v243
  %v245 = vpop.f32.mrf.mxu0
  %v246 = vpop.f32.mrf.mxu0
  %v247 = vadd.f32 %v55, %v246
  %v248 = vpop.f32.mrf.mxu0
  %249 = vdwg.mxu0
  %v250 = vld [vmem:[%s3] sm:$0xf]
  %v251 = vld [vmem:[%s3 + $0x4] sm:$0xf]
  %v252 = vld [vmem:[%s3 + $0x8] sm:$0xf]
  %v253 = vld [vmem:[%s3 + $0xc] sm:$0xf]
  %v254 = vld [vmem:[%s3 + $0x10] sm:$0xf]
  %v255 = vld [vmem:[%s3 + $0x14] sm:$0xf]
  %v256 = vld [vmem:[%s3 + $0x18] sm:$0xf]
  %v257 = vld [vmem:[%s3 + $0x1c] sm:$0xf]
  %v258 = vld [vmem:[%s3 + $0x20] sm:$0xf]
  %v259 = vld [vmem:[%s3 + $0x24] sm:$0xf]
  %v260 = vld [vmem:[%s3 + $0x28] sm:$0xf]
  %v261 = vld [vmem:[%s3 + $0x2c] sm:$0xf]
  %v262 = vld [vmem:[%s3 + $0x30] sm:$0xf]
  %v263 = vld [vmem:[%s3 + $0x34] sm:$0xf]
  %v264 = vld [vmem:[%s3 + $0x38] sm:$0xf]
  %v265 = vld [vmem:[%s3 + $0x3c] sm:$0xf]
  %v266 = vunpack.c.l.bf16 %v250
  %v267 = vunpack.c.l.bf16 %v251
  %v268 = vunpack.c.l.bf16 %v252
  %v269 = vunpack.c.l.bf16 %v253
  %v270 = vunpack.c.l.bf16 %v254
  %v271 = vunpack.c.l.bf16 %v255
  %v272 = vunpack.c.l.bf16 %v256
  %v273 = vunpack.c.l.bf16 %v257
  %v274 = vunpack.c.l.bf16 %v258
  %v275 = vunpack.c.l.bf16 %v259
  %v276 = vunpack.c.l.bf16 %v260
  %v277 = vunpack.c.l.bf16 %v261
  %v278 = vunpack.c.l.bf16 %v262
  %v279 = vunpack.c.l.bf16 %v263
  %v280 = vunpack.c.l.bf16 %v264
  %v281 = vunpack.c.l.bf16 %v265
  %v282 = vadd.f32 %v188, %v266
  %v283 = vadd.f32 %v191, %v267
  %v284 = vadd.f32 %v196, %v268
  %v285 = vadd.f32 %v199, %v269
  %v286 = vadd.f32 %v204, %v270
  %v287 = vadd.f32 %v207, %v271
  %v288 = vadd.f32 %v212, %v272
  %v289 = vadd.f32 %v215, %v273
  %v290 = vadd.f32 %v220, %v274
  %v291 = vadd.f32 %v223, %v275
  %v292 = vadd.f32 %v228, %v276
  %v293 = vadd.f32 %v231, %v277
  %v294 = vadd.f32 %v236, %v278
  %v295 = vadd.f32 %v239, %v279
  %v296 = vadd.f32 %v244, %v280
  %v297 = vadd.f32 %v247, %v281
  %v298 = vmax.f32 %v282, 0.0
  %v299 = vmax.f32 %v283, 0.0
  %v300 = vmax.f32 %v284, 0.0
  %v301 = vmax.f32 %v285, 0.0
  %v302 = vmax.f32 %v286, 0.0
  %v303 = vmax.f32 %v287, 0.0
  %v304 = vmax.f32 %v288, 0.0
  %v305 = vmax.f32 %v289, 0.0
  %v306 = vmax.f32 %v290, 0.0
  %v307 = vmax.f32 %v291, 0.0
  %v308 = vmax.f32 %v292, 0.0
  %v309 = vmax.f32 %v293, 0.0
  %v310 = vmax.f32 %v294, 0.0
  %v311 = vmax.f32 %v295, 0.0
  %v312 = vmax.f32 %v296, 0.0
  %v313 = vmax.f32 %v297, 0.0
  %v314 = vpack.c.bf16 %v299, %v298
  %v315 = vpack.c.bf16 %v301, %v300
  %v316 = vpack.c.bf16 %v303, %v302
  %v317 = vpack.c.bf16 %v305, %v304
  %v318 = vpack.c.bf16 %v307, %v306
  %v319 = vpack.c.bf16 %v309, %v308
  %v320 = vpack.c.bf16 %v311, %v310
  %v321 = vpack.c.bf16 %v313, %v312
  %v330 = vunpack.c.l.b16 %v314
  %v331 = vunpack.c.h.b16 %v314
  %v332 = vunpack.c.l.b16 %v315
  %v333 = vunpack.c.h.b16 %v315
  %v334 = vunpack.c.l.b16 %v316
  %v335 = vunpack.c.h.b16 %v316
  %v336 = vunpack.c.l.b16 %v317
  %v337 = vunpack.c.h.b16 %v317
  %v338 = vunpack.c.l.b16 %v318
  %v339 = vunpack.c.h.b16 %v318
  %v340 = vunpack.c.l.b16 %v319
  %v341 = vunpack.c.h.b16 %v319
  %v342 = vunpack.c.l.b16 %v320
  %v343 = vunpack.c.h.b16 %v320
  %v344 = vunpack.c.l.b16 %v321
  %v345 = vunpack.c.h.b16 %v321
  %v346 = vpack.c.b16 %v330, %v330
  %v347 = vpack.c.b16 %v331, %v331
  %v348 = vpack.c.b16 %v332, %v332
  %v349 = vpack.c.b16 %v333, %v333
  %v350 = vpack.c.b16 %v334, %v334
  %v351 = vpack.c.b16 %v335, %v335
  %v352 = vpack.c.b16 %v336, %v336
  %v353 = vpack.c.b16 %v337, %v337
  %v354 = vpack.c.b16 %v338, %v338
  %v355 = vpack.c.b16 %v339, %v339
  %v356 = vpack.c.b16 %v340, %v340
  %v357 = vpack.c.b16 %v341, %v341
  %v358 = vpack.c.b16 %v342, %v342
  %v359 = vpack.c.b16 %v343, %v343
  %v360 = vpack.c.b16 %v344, %v344
  %v361 = vpack.c.b16 %v345, %v345
  %378 = vst [vmem:[%s4] sm:$0xf] %v346
  %379 = vst [vmem:[%s4 + $0x4] sm:$0xf] %v347
  %380 = vst [vmem:[%s4 + $0x8] sm:$0xf] %v348
  %381 = vst [vmem:[%s4 + $0xc] sm:$0xf] %v349
  %382 = vst [vmem:[%s4 + $0x10] sm:$0xf] %v350
  %383 = vst [vmem:[%s4 + $0x14] sm:$0xf] %v351
  %384 = vst [vmem:[%s4 + $0x18] sm:$0xf] %v352
  %385 = vst [vmem:[%s4 + $0x1c] sm:$0xf] %v353
  %386 = vst [vmem:[%s4 + $0x20] sm:$0xf] %v354
  %387 = vst [vmem:[%s4 + $0x24] sm:$0xf] %v355
  %388 = vst [vmem:[%s4 + $0x28] sm:$0xf] %v356
  %389 = vst [vmem:[%s4 + $0x2c] sm:$0xf] %v357
  %390 = vst [vmem:[%s4 + $0x30] sm:$0xf] %v358
  %391 = vst [vmem:[%s4 + $0x34] sm:$0xf] %v359
  %392 = vst [vmem:[%s4 + $0x38] sm:$0xf] %v360
  %393 = vst [vmem:[%s4 + $0x3c] sm:$0xf] %v361
  // Predicated region
  $region18: #{encoder_cnn_forward.15} parent=0 // pred_check
    _
  $region19: #{encoder_cnn_forward.15} parent=0 // pred_check_branch
    %395 = sbr.rel (0) target = $region21
  $region20: #{encoder_cnn_forward.15} parent=0 // pred_region
    _
  $region21: #{encoder_cnn_forward.15} parent=0 // pred_fallthru
    _
  // Predicated region
  $region22: #{encoder_cnn_forward.15} parent=0 // pred_check
    _
  $region23: #{encoder_cnn_forward.15} parent=0 // pred_check_branch
    %397 = sbr.rel (0) target = $region25
  $region24: #{encoder_cnn_forward.15} parent=0 // pred_region
    _
  $region25: #{encoder_cnn_forward.15} parent=0 // pred_fallthru
    _

// kernel: encoder_cnn_forward.19
$region0: #{encoder_cnn_forward.19}
  #allocation0 [shape = 'u32[]', space=smem, size = 0x4, offset = 0x4, fixed_abs, tag = 'smem constant byte address 0x4 - core index']
  #allocation1 [shape = 'u32[144,128]{1,0:T(1,128)}', space=vmem, size = 0x12000, scoped, tag = 'internal scratch']
  %s0 = inlined_call_operand.vmem [shape: bf16[2,64,128], index: 0, kind: input, shape index: {}]
  %s1 = inlined_call_operand.vmem [shape: f32[128,128], index: 1, kind: input, shape index: {}]
  %s2 = inlined_call_operand.vmem [shape: f32[1,128], index: 2, kind: input, shape index: {}]
  %s3 = inlined_call_operand.hbm [shape: f32[2,128], index: 3, kind: output, shape index: {}]
  %s4 = sld [smem:[#allocation0]]
  $region22: #{encoder_cnn_forward.19} parent=0
    _
  %s6 = ssub.s32 1, %s4
  %s7 = scalar_select 0, %s6, %s4
  $region1: #{encoder_cnn_forward.19} parent=0
    #allocation2 [shape = 'u8[1024]{0}', space=vmem, size = 0x400, scoped, tag = 'output window, operand 0, single buffered']
    #allocation3 [shape = 's32[1]{0}', space=sflag, size = 0x4, scoped, tag = 'scoped memory for encoder_cnn_forward.19']
    %8 = vsyncpa [#allocation3], 0
    // Predicated region
    $region2: #{encoder_cnn_forward.19} parent=1 // pred_check
      _
    $region3: #{encoder_cnn_forward.19} parent=1 // pred_check_branch
      %10 = sbr.rel (0) target = $region5
    $region4: #{encoder_cnn_forward.19} parent=1 // pred_region
      _
    $region5: #{encoder_cnn_forward.19} parent=1 // pred_fallthru
      _
    // Predicated region
    $region6: #{encoder_cnn_forward.19} parent=1 // pred_check
      _
    $region7: #{encoder_cnn_forward.19} parent=1 // pred_check_branch
      %12 = sbr.rel (0) target = $region9
    $region8: #{encoder_cnn_forward.19} parent=1 // pred_region
      _
    $region9: #{encoder_cnn_forward.19} parent=1 // pred_fallthru
      _
    // Predicated region
    $region10: #{encoder_cnn_forward.19} parent=1 // pred_check
      _
    $region11: #{encoder_cnn_forward.19} parent=1 // pred_check_branch
      %14 = sbr.rel (0) target = $region13
    $region12: #{encoder_cnn_forward.19} parent=1 // pred_region
      _
    $region13: #{encoder_cnn_forward.19} parent=1 // pred_fallthru
      _
    %v15 = vld [vmem:[%s0] sm:$0xf]
    %v16 = vld [vmem:[%s0 + $0x4] sm:$0xf]
    %v17 = vld [vmem:[%s0 + $0x8] sm:$0xf]
    %v18 = vld [vmem:[%s0 + $0xc] sm:$0xf]
    %v19 = vld [vmem:[%s0 + $0x10] sm:$0xf]
    %v20 = vld [vmem:[%s0 + $0x14] sm:$0xf]
    %v21 = vld [vmem:[%s0 + $0x18] sm:$0xf]
    %v22 = vld [vmem:[%s0 + $0x1c] sm:$0xf]
    %v23 = vld [vmem:[%s0 + $0x20] sm:$0xf]
    %v24 = vld [vmem:[%s0 + $0x24] sm:$0xf]
    %v25 = vld [vmem:[%s0 + $0x28] sm:$0xf]
    %v26 = vld [vmem:[%s0 + $0x2c] sm:$0xf]
    %v27 = vld [vmem:[%s0 + $0x30] sm:$0xf]
    %v28 = vld [vmem:[%s0 + $0x34] sm:$0xf]
    %v29 = vld [vmem:[%s0 + $0x38] sm:$0xf]
    %v30 = vld [vmem:[%s0 + $0x3c] sm:$0xf]
    %v31 = vunpack.c.l.bf16 %v15
    %v32 = vunpack.c.l.bf16 %v16
    %v33 = vunpack.c.l.bf16 %v17
    %v34 = vunpack.c.l.bf16 %v18
    %v35 = vunpack.c.l.bf16 %v19
    %v36 = vunpack.c.l.bf16 %v20
    %v37 = vunpack.c.l.bf16 %v21
    %v38 = vunpack.c.l.bf16 %v22
    %v39 = vunpack.c.l.bf16 %v23
    %v40 = vunpack.c.l.bf16 %v24
    %v41 = vunpack.c.l.bf16 %v25
    %v42 = vunpack.c.l.bf16 %v26
    %v43 = vunpack.c.l.bf16 %v27
    %v44 = vunpack.c.l.bf16 %v28
    %v45 = vunpack.c.l.bf16 %v29
    %v46 = vunpack.c.l.bf16 %v30
    %v47 = vadd.f32 %v31, %v32
    %v48 = vadd.f32 %v47, %v33
    %v49 = vadd.f32 %v48, %v34
    %v50 = vadd.f32 %v49, %v35
    %v51 = vadd.f32 %v50, %v36
    %v52 = vadd.f32 %v51, %v37
    %v53 = vadd.f32 %v52, %v38
    %v54 = vrot.slane %v53, 4
    %v55 = vadd.f32 %v53, %v54
    %v56 = vrot.slane %v55, 2
    %v57 = vadd.f32 %v55, %v56
    %v58 = vrot.slane %v57, 1
    %v59 = vadd.f32 %v57, %v58
    %v60 = vadd.f32 %v39, %v40
    %v61 = vadd.f32 %v60, %v41
    %v62 = vadd.f32 %v61, %v42
    %v63 = vadd.f32 %v62, %v43
    %v64 = vadd.f32 %v63, %v44
    %v65 = vadd.f32 %v64, %v45
    %v66 = vadd.f32 %v65, %v46
    %v67 = vrot.slane %v66, 4
    %v68 = vadd.f32 %v66, %v67
    %v69 = vrot.slane %v68, 2
    %v70 = vadd.f32 %v68, %v69
    %v71 = vrot.slane %v70, 1
    %v72 = vadd.f32 %v70, %v71
    %v73 = vrcp.pop 64.0
    %v74 = vmul.f32 %v59, %v73
    %v75 = vmul.f32 %v72, %v73
    %v76 = vld [vmem:[%s1] sm:$0xff]
    %v77 = vld [vmem:[%s1 + $0x8] sm:$0xff]
    %v78 = vld [vmem:[%s1 + $0x10] sm:$0xff]
    %v79 = vld [vmem:[%s1 + $0x18] sm:$0xff]
    %v80 = vld [vmem:[%s1 + $0x20] sm:$0xff]
    %v81 = vld [vmem:[%s1 + $0x28] sm:$0xff]
    %v82 = vld [vmem:[%s1 + $0x30] sm:$0xff]
    %v83 = vld [vmem:[%s1 + $0x38] sm:$0xff]
    %v84 = vld [vmem:[%s1 + $0x40] sm:$0xff]
    %v85 = vld [vmem:[%s1 + $0x48] sm:$0xff]
    %v86 = vld [vmem:[%s1 + $0x50] sm:$0xff]
    %v87 = vld [vmem:[%s1 + $0x58] sm:$0xff]
    %v88 = vld [vmem:[%s1 + $0x60] sm:$0xff]
    %v89 = vld [vmem:[%s1 + $0x68] sm:$0xff]
    %v90 = vld [vmem:[%s1 + $0x70] sm:$0xff]
    %v91 = vld [vmem:[%s1 + $0x78] sm:$0xff]
    %v92 = vld [vmem:[%s2] sm:$0x1]
    %v94 = vlaneseq
    %v95 = vshrl.u32 %v94, 7
    %v96 = vsub.s32 0, %v95
    %v97 = vrot.slane %v92, %v96
    %vm101 = vcmask 1041409
    %v102 = vsel %vm101, %v75, %v74
    %104 = vmatprep.subr.mxu0 0.0
    %105 = vmatpush1.msra.mxu0 %v91
    %106 = vmatprep.subr.mxu0 0.0
    %107 = vmatpush1.msra.mxu0 %v90
    %108 = vmatprep.subr.mxu0 0.0
    %109 = vmatpush1.msra.mxu0 %v89
    %110 = vmatprep.subr.mxu0 0.0
    %111 = vmatpush1.msra.mxu0 %v88
    %112 = vmatprep.subr.mxu0 0.0
    %113 = vmatpush1.msra.mxu0 %v87
    %114 = vmatprep.subr.mxu0 0.0
    %115 = vmatpush1.msra.mxu0 %v86
    %116 = vmatprep.subr.mxu0 0.0
    %117 = vmatpush1.msra.mxu0 %v85
    %118 = vmatprep.subr.mxu0 0.0
    %119 = vmatpush1.msra.mxu0 %v84
    %120 = vmatprep.subr.mxu0 0.0
    %121 = vmatpush1.msra.mxu0 %v83
    %122 = vmatprep.subr.mxu0 0.0
    %123 = vmatpush1.msra.mxu0 %v82
    %124 = vmatprep.subr.mxu0 0.0
    %125 = vmatpush1.msra.mxu0 %v81
    %126 = vmatprep.subr.mxu0 0.0
    %127 = vmatpush1.msra.mxu0 %v80
    %128 = vmatprep.subr.mxu0 0.0
    %129 = vmatpush1.msra.mxu0 %v79
    %130 = vmatprep.subr.mxu0 0.0
    %131 = vmatpush1.msra.mxu0 %v78
    %132 = vmatprep.subr.mxu0 0.0
    %133 = vmatpush1.msra.mxu0 %v77
    %134 = vmatprep.subr.mxu0 0.0
    %135 = vmatpush1.msra.mxu0 %v76
    %136 = vmatprep.subr.mxu0 0.0
    %137 = vmatpush2.msra.mxu0 0.0
    %138 = vmatprep.subr.mxu0 0.0
    %139 = vmatpush2.msra.mxu0 0.0
    %140 = vmatprep.subr.mxu0 0.0
    %141 = vmatpush2.msra.mxu0 0.0
    %142 = vmatprep.subr.mxu0 0.0
    %143 = vmatpush2.msra.mxu0 0.0
    %144 = vmatprep.subr.mxu0 0.0
    %145 = vmatpush2.msra.mxu0 0.0
    %146 = vmatprep.subr.mxu0 0.0
    %147 = vmatpush2.msra.mxu0 0.0
    %148 = vmatprep.subr.mxu0 0.0
    %149 = vmatpush2.msra.mxu0 0.0
    %150 = vmatprep.subr.mxu0 0.0
    %151 = vmatpush2.msra.mxu0 0.0
    %152 = vmatprep.subr.mxu0 0.0
    %153 = vmatpush2.msra.mxu0 0.0
    %154 = vmatprep.subr.mxu0 0.0
    %155 = vmatpush2.msra.mxu0 0.0
    %156 = vmatprep.subr.mxu0 0.0
    %157 = vmatpush2.msra.mxu0 0.0
    %158 = vmatprep.subr.mxu0 0.0
    %159 = vmatpush2.msra.mxu0 0.0
    %160 = vmatprep.subr.mxu0 0.0
    %161 = vmatpush2.msra.mxu0 0.0
    %162 = vmatprep.subr.mxu0 0.0
    %163 = vmatpush2.msra.mxu0 0.0
    %164 = vmatprep.subr.mxu0 0.0
    %165 = vmatpush2.msra.mxu0 0.0
    %166 = vmatprep.subr.mxu0 0.0
    %167 = vmatpush2.msra.mxu0 0.0
    %168 = vmatprep.mubr.f32.mxu0 0.0
    %169 = vmatmul.mubr.f32.gmra.mxu0 %v102
    %v170 = vpop.f32.mrf.mxu0
    %v171 = vadd.f32 %v97, %v170
    %v172 = vpop.f32.mrf.mxu0
    %173 = vdwg.mxu0
    %174 = vst [vmem:[#allocation2] sm:$0x3] %v171
    // Predicated region
    $region14: #{encoder_cnn_forward.19} parent=1 // pred_check
      _
    $region15: #{encoder_cnn_forward.19} parent=1 // pred_check_branch
      %176 = sbr.rel (0) target = $region17
    $region16: #{encoder_cnn_forward.19} parent=1 // pred_region
      %s178 = ssub.s32 32, 32
      %179 = vsyncadd [#allocation3], %s178
      %s181 = sshll.u32 [#allocation2], 4
      %s182 = int_to_ptr.vmem [resolvable:$true] %s181
      %184 = dma.vmem_to_hbm [thread:$0]  %s182, 32, %s3, [#allocation3]
    $region17: #{encoder_cnn_forward.19} parent=1 // pred_fallthru
      _
    // Predicated region
    $region18: #{encoder_cnn_forward.19} parent=1 // pred_check
      _
    $region19: #{encoder_cnn_forward.19} parent=1 // pred_check_branch
      %186 = sbr.rel (0) target = $region21
    $region20: #{encoder_cnn_forward.19} parent=1 // pred_region
      %187 = dma.done [#allocation3], 32
    $region21: #{encoder_cnn_forward.19} parent=1 // pred_fallthru
      _
    %188 = vsyncpa [#allocation3], 1

// kernel: encoder_cnn_forward.13
$region0: #{encoder_cnn_forward.13}
  #allocation0 [shape = 'u32[]', space=smem, size = 0x4, offset = 0x4, fixed_abs, tag = 'smem constant byte address 0x4 - core index']
  #allocation1 [shape = 'u32[144,128]{1,0:T(1,128)}', space=vmem, size = 0x12000, scoped, tag = 'internal scratch']
  #allocation2 [shape = 'f32[64,128]{1,0:T(8,128)}', space=vmem, size = 0x8000, scoped, tag = 'scratch operand']
  %s0 = inlined_call_operand.vmem [shape: bf16[2,10,10,128], index: 0, kind: input, shape index: {}]
  %s1 = inlined_call_operand.vmem [shape: bf16[9,128,128], index: 1, kind: input, shape index: {}]
  %s2 = inlined_call_operand.vmem [shape: f32[1,128], index: 2, kind: input, shape index: {}]
  %s3 = inlined_call_operand.vmem [shape: bf16[2,64,128], index: 3, kind: output, shape index: {}]
  %s4 = sld [smem:[#allocation0]]
  $region45: #{encoder_cnn_forward.13} parent=0
    _
  %s6 = ssub.s32 1, %s4
  %s7 = scalar_select 0, %s6, %s4
  loop: start=0, step=1, limit=4
  $region2: #{encoder_cnn_forward.13} parent=0 // loop_pre_header
    _
  $region3: #{encoder_cnn_forward.13} parent=0 // loop_header
    %s9 = sphi 0, %s13
    %p10 = scmp.ge.s32.totalorder %s9, 4
    %s19 = sphi 0, %s21
    %s22 = sphi 0, %s19
    %s23 = sphi 0, %s22
    %s39 = sphi 0, %s23
    %s43 = sphi 0, %s43
    %s45 = sphi 0, %s43
    %s46 = sphi 0, %s45
    %s60 = sphi 0, %s46
    %s64 = sphi 0, %s64
    %s66 = sphi 0, %s64
    %s67 = sphi 0, %s66
    %s81 = sphi 0, %s67
    %s87 = sphi 0, %s89
    %s90 = sphi 0, %s87
    %s91 = sphi 0, %s90
    %s107 = sphi 0, %s91
  $region4: #{encoder_cnn_forward.13} parent=0 // loop_header_branch
    %12 = sbr.rel (%p10) target = $region8
  $region5: #{encoder_cnn_forward.13} parent=0 // loop_body
    %s14 = ssub.s32 %s9, 1
    %s15 = ssub.s32 %s9, 2
    %s16 = sadd.s32 %s9, 1
    %s17 = ssub.s32 %s9, %s16
    %p18 = scmp.eq.s32.totalorder %s17, 0
    %s20 = sadd.s32 %s19, 1
    %s21 = scalar_select %p18, %s19, %s20
    %p24 = pneg %p18
    %p25 = scmp.eq.s32.totalorder %s9, 1
    %p26 = por %p24, %p25
    %p27 = scmp.ne.s32.totalorder %s19, %s22
    %p28 = scmp.eq.s32.totalorder %s9, 0
    %p29 = por %p27, %p28
    %p30 = scmp.ne.s32.totalorder %s19, %s22
    %p31 = scmp.eq.s32.totalorder %s14, 1
    %p32 = por %p30, %p31
    %p33 = scmp.ne.s32.totalorder %s22, %s23
    %p34 = scmp.eq.s32.totalorder %s14, 0
    %p35 = por %p33, %p34
    %p36 = scmp.ne.s32.totalorder %s22, %s23
    %p37 = scmp.eq.s32.totalorder %s15, 1
    %p38 = por %p36, %p37
    %p40 = scmp.ne.s32.totalorder %s23, %s39
    %p41 = scmp.eq.s32.totalorder %s15, 0
    %p42 = por %p40, %p41
    %s44 = sadd.s32 %s43, 1
    %p47 = scmp.eq.s32.totalorder %s9, 1
    %p48 = scmp.ne.s32.totalorder %s43, %s45
    %p49 = scmp.eq.s32.totalorder %s9, 0
    %p50 = por %p48, %p49
    %p51 = scmp.ne.s32.totalorder %s43, %s45
    %p52 = scmp.eq.s32.totalorder %s14, 1
    %p53 = por %p51, %p52
    %p54 = scmp.ne.s32.totalorder %s45, %s46
    %p55 = scmp.eq.s32.totalorder %s14, 0
    %p56 = por %p54, %p55
    %p57 = scmp.ne.s32.totalorder %s45, %s46
    %p58 = scmp.eq.s32.totalorder %s15, 1
    %p59 = por %p57, %p58
    %p61 = scmp.ne.s32.totalorder %s46, %s60
    %p62 = scmp.eq.s32.totalorder %s15, 0
    %p63 = por %p61, %p62
    %s65 = sadd.s32 %s64, 1
    %p68 = scmp.eq.s32.totalorder %s9, 1
    %p69 = scmp.ne.s32.totalorder %s64, %s66
    %p70 = scmp.eq.s32.totalorder %s9, 0
    %p71 = por %p69, %p70
    %p72 = scmp.ne.s32.totalorder %s64, %s66
    %p73 = scmp.eq.s32.totalorder %s14, 1
    %p74 = por %p72, %p73
    %p75 = scmp.ne.s32.totalorder %s66, %s67
    %p76 = scmp.eq.s32.totalorder %s14, 0
    %p77 = por %p75, %p76
    %p78 = scmp.ne.s32.totalorder %s66, %s67
    %p79 = scmp.eq.s32.totalorder %s15, 1
    %p80 = por %p78, %p79
    %p82 = scmp.ne.s32.totalorder %s67, %s81
    %p83 = scmp.eq.s32.totalorder %s15, 0
    %p84 = por %p82, %p83
    %s85 = ssub.s32 %s9, %s16
    %p86 = scmp.eq.s32.totalorder %s85, 0
    %s88 = sadd.s32 %s87, 1
    %s89 = scalar_select %p86, %s87, %s88
    %p92 = pneg %p86
    %p93 = scmp.eq.s32.totalorder %s9, 1
    %p94 = por %p92, %p93
    %p95 = scmp.ne.s32.totalorder %s87, %s90
    %p96 = scmp.eq.s32.totalorder %s9, 0
    %p97 = por %p95, %p96
    %p98 = scmp.ne.s32.totalorder %s87, %s90
    %p99 = scmp.eq.s32.totalorder %s14, 1
    %p100 = por %p98, %p99
    %p101 = scmp.ne.s32.totalorder %s90, %s91
    %p102 = scmp.eq.s32.totalorder %s14, 0
    %p103 = por %p101, %p102
    %p104 = scmp.ne.s32.totalorder %s90, %s91
    %p105 = scmp.eq.s32.totalorder %s15, 1
    %p106 = por %p104, %p105
    %p108 = scmp.ne.s32.totalorder %s91, %s107
    %p109 = scmp.eq.s32.totalorder %s15, 0
    %p110 = por %p108, %p109
    %p111 = scmp.le.s32.totalorder 1, %s9
    %p112 = scmp.lt.s32.totalorder %s9, 3
    %p113 = pnand %p111, %p112
    %p114 = pneg %p113
    // Predicated region
    $region9: #{encoder_cnn_forward.13} parent=5 // pred_check
      _
    $region10: #{encoder_cnn_forward.13} parent=5 // pred_check_branch
      %116 = sbr.rel (%p113) target = $region12
    $region11: #{encoder_cnn_forward.13} parent=5 // pred_region
      %s117 = ssub.s32 %s9, 1
      // Predicated region
      $region13: #{encoder_cnn_forward.13} parent=11 // pred_check
        %p118 = pneg %p56
      $region14: #{encoder_cnn_forward.13} parent=11 // pred_check_branch
        %120 = sbr.rel (%p118) target = $region16
      $region15: #{encoder_cnn_forward.13} parent=11 // pred_region
        _
      $region16: #{encoder_cnn_forward.13} parent=11 // pred_fallthru
        _
      // Predicated region
      $region17: #{encoder_cnn_forward.13} parent=11 // pred_check
        %p121 = pneg %p77
      $region18: #{encoder_cnn_forward.13} parent=11 // pred_check_branch
        %123 = sbr.rel (%p121) target = $region20
      $region19: #{encoder_cnn_forward.13} parent=11 // pred_region
        _
      $region20: #{encoder_cnn_forward.13} parent=11 // pred_fallthru
        _
    $region12: #{encoder_cnn_forward.13} parent=5 // pred_fallthru
      _
    %p124 = scmp.lt.s32.totalorder %s9, 2
    // Predicated region
    $region21: #{encoder_cnn_forward.13} parent=5 // pred_check
      %p125 = pneg %p124
    $region22: #{encoder_cnn_forward.13} parent=5 // pred_check_branch
      %127 = sbr.rel (%p125) target = $region24
    $region23: #{encoder_cnn_forward.13} parent=5 // pred_region
      // Predicated region
      $region25: #{encoder_cnn_forward.13} parent=23 // pred_check
        %p128 = pneg %p29
      $region26: #{encoder_cnn_forward.13} parent=23 // pred_check_branch
        %130 = sbr.rel (%p128) target = $region28
      $region27: #{encoder_cnn_forward.13} parent=23 // pred_region
        %p131 = scmp.lt.s32.totalorder %s9, 1
        %s132 = scalar_select %p131, %s9, 1
        %s133 = smul.addr %s132, 20
        %s134 = smul.addr %s133, 4
        %s135 = scalar_lea.vmem %s0, %s134
      $region28: #{encoder_cnn_forward.13} parent=23 // pred_fallthru
        _
    $region24: #{encoder_cnn_forward.13} parent=5 // pred_fallthru
      _
    %p136 = scmp.le.s32.totalorder 1, %s9
    %p137 = scmp.lt.s32.totalorder %s9, 3
    %p138 = pnand %p136, %p137
    %p139 = pneg %p138
    // Predicated region
    $region29: #{encoder_cnn_forward.13} parent=5 // pred_check
      _
    $region30: #{encoder_cnn_forward.13} parent=5 // pred_check_branch
      %141 = sbr.rel (%p138) target = $region32
    $region31: #{encoder_cnn_forward.13} parent=5 // pred_region
      %s142 = ssub.s32 %s9, 1
      %p143 = scmp.lt.s32.totalorder %s14, 1
      %s144 = scalar_select %p143, %s14, 1
      %s145 = smul.addr %s144, 20
      %s146 = smul.addr %s145, 4
      %s147 = scalar_lea.vmem %s0, %s146
      %p148 = pneg %p35
      %p149 = pneg %p32
      %p150 = pneg %p56
      %p151 = pneg %p53
      %p152 = pneg %p77
      %p153 = pneg %p74
      %p154 = pneg %p103
      %p155 = pneg %p100
      %p156 = scmp.lt.s32.totalorder %s14, 1
      %s157 = scalar_select %p156, %s14, 1
      %s158 = smul.addr %s157, 8
      %s159 = smul.addr %s158, 4
      %s160 = scalar_lea.vmem %s3, %s159
      %p161 = scmp.lt.s32.totalorder %s14, 1
      %s162 = scalar_select %p161, %s14, 1
      %s163 = smul.addr %s162, 20
      %s164 = smul.addr %s163, 4
      %s165 = scalar_lea.vmem %s0, %s164
      %p166 = scmp.lt.s32.totalorder %s14, 1
      %s167 = scalar_select %p166, %s14, 1
      %s168 = smul.addr %s167, 8
      %s169 = smul.addr %s168, 4
      %s170 = scalar_lea.vmem %s3, %s169
      %172 = vst [vmem:[#allocation2] sm:$0xff] 0.0
      %173 = vst [vmem:[#allocation2 + $0x8] sm:$0xff] 0.0
      %174 = vst [vmem:[#allocation2 + $0x10] sm:$0xff] 0.0
      %175 = vst [vmem:[#allocation2 + $0x18] sm:$0xff] 0.0
      %176 = vst [vmem:[#allocation2 + $0x20] sm:$0xff] 0.0
      %177 = vst [vmem:[#allocation2 + $0x28] sm:$0xff] 0.0
      %178 = vst [vmem:[#allocation2 + $0x30] sm:$0xff] 0.0
      %179 = vst [vmem:[#allocation2 + $0x38] sm:$0xff] 0.0
      %v180 = vld [vmem:[%s165] sm:$0xf]
      %v181 = vld [vmem:[%s165 + $0x8] sm:$0xf]
      %v182 = vld [vmem:[%s165 + $0x10] sm:$0xf]
      %v183 = vld [vmem:[%s165 + $0x18] sm:$0xf]
      %v184 = vld [vmem:[%s165 + $0x20] sm:$0xf]
      %v185 = vld [vmem:[%s165 + $0x28] sm:$0xf]
      %v186 = vld [vmem:[%s165 + $0x30] sm:$0xf]
      %v187 = vld [vmem:[%s165 + $0x38] sm:$0xf]
      %v188 = vld [vmem:[#allocation2] sm:$0xff]
      %v189 = vld [vmem:[#allocation2 + $0x8] sm:$0xff]
      %v190 = vld [vmem:[#allocation2 + $0x10] sm:$0xff]
      %v191 = vld [vmem:[#allocation2 + $0x18] sm:$0xff]
      %v192 = vld [vmem:[#allocation2 + $0x20] sm:$0xff]
      %v193 = vld [vmem:[#allocation2 + $0x28] sm:$0xff]
      %v194 = vld [vmem:[#allocation2 + $0x30] sm:$0xff]
      %v195 = vld [vmem:[#allocation2 + $0x38] sm:$0xff]
      %v196 = vld [vmem:[%s1] sm:$0xf]
      %v197 = vld [vmem:[%s1 + $0x4] sm:$0xf]
      %v198 = vld [vmem:[%s1 + $0x8] sm:$0xf]
      %v199 = vld [vmem:[%s1 + $0xc] sm:$0xf]
      %v200 = vld [vmem:[%s1 + $0x10] sm:$0xf]
      %v201 = vld [vmem:[%s1 + $0x14] sm:$0xf]
      %v202 = vld [vmem:[%s1 + $0x18] sm:$0xf]
      %v203 = vld [vmem:[%s1 + $0x1c] sm:$0xf]
      %v204 = vld [vmem:[%s1 + $0x20] sm:$0xf]
      %v205 = vld [vmem:[%s1 + $0x24] sm:$0xf]
      %v206 = vld [vmem:[%s1 + $0x28] sm:$0xf]
      %v207 = vld [vmem:[%s1 + $0x2c] sm:$0xf]
      %v208 = vld [vmem:[%s1 + $0x30] sm:$0xf]
      %v209 = vld [vmem:[%s1 + $0x34] sm:$0xf]
      %v210 = vld [vmem:[%s1 + $0x38] sm:$0xf]
      %v211 = vld [vmem:[%s1 + $0x3c] sm:$0xf]
      %v220 = vunpack.c.l.b16 %v180
      %v221 = vunpack.c.l.b16 %v181
      %v222 = vunpack.c.l.b16 %v182
      %v223 = vunpack.c.l.b16 %v183
      %v224 = vunpack.c.l.b16 %v184
      %v225 = vunpack.c.l.b16 %v185
      %v226 = vunpack.c.l.b16 %v186
      %v227 = vunpack.c.l.b16 %v187
      %v228 = vpack.c.b16 %v221, %v220
      %v229 = vpack.c.b16 %v223, %v222
      %v230 = vpack.c.b16 %v225, %v224
      %v231 = vpack.c.b16 %v227, %v226
      %v252 = vunpack.c.l.b16 %v196
      %v253 = vunpack.c.l.b16 %v197
      %v254 = vunpack.c.l.b16 %v198
      %v255 = vunpack.c.l.b16 %v199
      %v256 = vunpack.c.l.b16 %v200
      %v257 = vunpack.c.l.b16 %v201
      %v258 = vunpack.c.l.b16 %v202
      %v259 = vunpack.c.l.b16 %v203
      %v260 = vunpack.c.l.b16 %v204
      %v261 = vunpack.c.l.b16 %v205
      %v262 = vunpack.c.l.b16 %v206
      %v263 = vunpack.c.l.b16 %v207
      %v264 = vunpack.c.l.b16 %v208
      %v265 = vunpack.c.l.b16 %v209
      %v266 = vunpack.c.l.b16 %v210
      %v267 = vunpack.c.l.b16 %v211
      %v268 = vpack.c.b16 %v253, %v252
      %v269 = vpack.c.b16 %v255, %v254
      %v270 = vpack.c.b16 %v257, %v256
      %v271 = vpack.c.b16 %v259, %v258
      %v272 = vpack.c.b16 %v261, %v260
      %v273 = vpack.c.b16 %v263, %v262
      %v274 = vpack.c.b16 %v265, %v264
      %v275 = vpack.c.b16 %v267, %v266
      %284 = vmatprep.subr.bf16.mxu0 0
      %285 = vmatpush1.bf16.msra.mxu0 %v275
      %286 = vmatprep.subr.bf16.mxu0 0
      %287 = vmatpush1.bf16.msra.mxu0 %v274
      %288 = vmatprep.subr.bf16.mxu0 0
      %289 = vmatpush1.bf16.msra.mxu0 %v273
      %290 = vmatprep.subr.bf16.mxu0 0
      %291 = vmatpush1.bf16.msra.mxu0 %v272
      %292 = vmatprep.subr.bf16.mxu0 0
      %293 = vmatpush1.bf16.msra.mxu0 %v271
      %294 = vmatprep.subr.bf16.mxu0 0
      %295 = vmatpush1.bf16.msra.mxu0 %v270
      %296 = vmatprep.subr.bf16.mxu0 0
      %297 = vmatpush1.bf16.msra.mxu0 %v269
      %298 = vmatprep.subr.bf16.mxu0 0
      %299 = vmatpush1.bf16.msra.mxu0 %v268
      %300 = vmatprep.subr.bf16.mxu0 0
      %301 = vmatpush2.bf16.msra.mxu0 0
      %302 = vmatprep.subr.bf16.mxu0 0
      %303 = vmatpush2.bf16.msra.mxu0 0
      %304 = vmatprep.subr.bf16.mxu0 0
      %305 = vmatpush2.bf16.msra.mxu0 0
      %306 = vmatprep.subr.bf16.mxu0 0
      %307 = vmatpush2.bf16.msra.mxu0 0
      %308 = vmatprep.subr.bf16.mxu0 0
      %309 = vmatpush2.bf16.msra.mxu0 0
      %310 = vmatprep.subr.bf16.mxu0 0
      %311 = vmatpush2.bf16.msra.mxu0 0
      %312 = vmatprep.subr.bf16.mxu0 0
      %313 = vmatpush2.bf16.msra.mxu0 0
      %314 = vmatprep.subr.bf16.mxu0 0
      %315 = vmatpush2.bf16.msra.mxu0 0
      %316 = vmatprep.mubr.bf16.mxu0 0
      %317 = vmatmul.mubr.bf16.gmra.mxu0 %v228
      %v318 = vpop.f32.mrf.mxu0
      %v319 = vadd.f32 0.0, %v318
      %v320 = vpop.f32.mrf.mxu0
      %v321 = vpop.f32.mrf.mxu0
      %v322 = vadd.f32 0.0, %v321
      %v323 = vpop.f32.mrf.mxu0
      %324 = vmatprep.mubr.bf16.mxu0 0
      %325 = vmatmul.mubr.bf16.gmra.mxu0 %v229
      %v326 = vpop.f32.mrf.mxu0
      %v327 = vadd.f32 0.0, %v326
      %v328 = vpop.f32.mrf.mxu0
      %v329 = vpop.f32.mrf.mxu0
      %v330 = vadd.f32 0.0, %v329
      %v331 = vpop.f32.mrf.mxu0
      %332 = vmatprep.mubr.bf16.mxu0 0
      %333 = vmatmul.mubr.bf16.gmra.mxu0 %v230
      %v334 = vpop.f32.mrf.mxu0
      %v335 = vadd.f32 0.0, %v334
      %v336 = vpop.f32.mrf.mxu0
      %v337 = vpop.f32.mrf.mxu0
      %v338 = vadd.f32 0.0, %v337
      %v339 = vpop.f32.mrf.mxu0
      %340 = vmatprep.mubr.bf16.mxu0 0
      %341 = vmatmul.mubr.bf16.gmra.mxu0 %v231
      %v342 = vpop.f32.mrf.mxu0
      %v343 = vadd.f32 0.0, %v342
      %v344 = vpop.f32.mrf.mxu0
      %v345 = vpop.f32.mrf.mxu0
      %v346 = vadd.f32 0.0, %v345
      %v347 = vpop.f32.mrf.mxu0
      %348 = vdwg.mxu0
      %v349 = vadd.f32 %v188, %v319
      %v350 = vadd.f32 %v189, %v322
      %v351 = vadd.f32 %v190, %v327
      %v352 = vadd.f32 %v191, %v330
      %v353 = vadd.f32 %v192, %v335
      %v354 = vadd.f32 %v193, %v338
      %v355 = vadd.f32 %v194, %v343
      %v356 = vadd.f32 %v195, %v346
      %357 = vst [vmem:[#allocation2] sm:$0xff] %v349
      %358 = vst [vmem:[#allocation2 + $0x8] sm:$0xff] %v350
      %359 = vst [vmem:[#allocation2 + $0x10] sm:$0xff] %v351
      %360 = vst [vmem:[#allocation2 + $0x18] sm:$0xff] %v352
      %361 = vst [vmem:[#allocation2 + $0x20] sm:$0xff] %v353
      %362 = vst [vmem:[#allocation2 + $0x28] sm:$0xff] %v354
      %363 = vst [vmem:[#allocation2 + $0x30] sm:$0xff] %v355
      %364 = vst [vmem:[#allocation2 + $0x38] sm:$0xff] %v356
      %v365 = vld [vmem:[%s165] sm:$0xf]
      %v366 = vld [vmem:[%s165 + $0x4] sm:$0x1]
      %v367 = vld [vmem:[%s165 + $0x8] sm:$0xf]
      %v368 = vld [vmem:[%s165 + $0xc] sm:$0x1]
      %v369 = vld [vmem:[%s165 + $0x10] sm:$0xf]
      %v370 = vld [vmem:[%s165 + $0x14] sm:$0x1]
      %v371 = vld [vmem:[%s165 + $0x18] sm:$0xf]
      %v372 = vld [vmem:[%s165 + $0x1c] sm:$0x1]
      %v373 = vld [vmem:[%s165 + $0x20] sm:$0xf]
      %v374 = vld [vmem:[%s165 + $0x24] sm:$0x1]
      %v375 = vld [vmem:[%s165 + $0x28] sm:$0xf]
      %v376 = vld [vmem:[%s165 + $0x2c] sm:$0x1]
      %v377 = vld [vmem:[%s165 + $0x30] sm:$0xf]
      %v378 = vld [vmem:[%s165 + $0x34] sm:$0x1]
      %v379 = vld [vmem:[%s165 + $0x38] sm:$0xf]
      %v380 = vld [vmem:[%s165 + $0x3c] sm:$0x1]
      %vm381 = vsmask.f32 3328
      %vm382 = vsmask.f32 7440
      %vm383 = vmor %vm381, %vm382
      %v385 = vshrl.u32 %v365, 16
      %v387 = vrot.slane %v385, 4
      %v388 = vshll.u32 %v365, 16
      %v390 = vrot.slane %v388, 5
      %v391 = vor.u32 %v387, %v390
      %v392 = vrot.slane %v391, 4
      %v394 = vshll.u32 %v366, 16
      %v396 = vrot.slane %v394, 5
      %v397 = vsel %vm383, %v392, %v396
      %v399 = vshrl.u32 %v367, 16
      %v401 = vrot.slane %v399, 4
      %v402 = vshll.u32 %v367, 16
      %v404 = vrot.slane %v402, 5
      %v405 = vor.u32 %v401, %v404
      %v406 = vrot.slane %v405, 4
      %v408 = vshll.u32 %v368, 16
      %v410 = vrot.slane %v408, 5
      %v411 = vsel %vm383, %v406, %v410
      %v413 = vshrl.u32 %v369, 16
      %v415 = vrot.slane %v413, 4
      %v416 = vshll.u32 %v369, 16
      %v418 = vrot.slane %v416, 5
      %v419 = vor.u32 %v415, %v418
      %v420 = vrot.slane %v419, 4
      %v422 = vshll.u32 %v370, 16
      %v424 = vrot.slane %v422, 5
      %v425 = vsel %vm383, %v420, %v424
      %v427 = vshrl.u32 %v371, 16
      %v429 = vrot.slane %v427, 4
      %v430 = vshll.u32 %v371, 16
      %v432 = vrot.slane %v430, 5
      %v433 = vor.u32 %v429, %v432
      %v434 = vrot.slane %v433, 4
      %v436 = vshll.u32 %v372, 16
      %v438 = vrot.slane %v436, 5
      %v439 = vsel %vm383, %v434, %v438
      %v441 = vshrl.u32 %v373, 16
      %v443 = vrot.slane %v441, 4
      %v444 = vshll.u32 %v373, 16
      %v446 = vrot.slane %v444, 5
      %v447 = vor.u32 %v443, %v446
      %v448 = vrot.slane %v447, 4
      %v450 = vshll.u32 %v374, 16
      %v452 = vrot.slane %v450, 5
      %v453 = vsel %vm383, %v448, %v452
      %v455 = vshrl.u32 %v375, 16
      %v457 = vrot.slane %v455, 4
      %v458 = vshll.u32 %v375, 16
      %v460 = vrot.slane %v458, 5
      %v461 = vor.u32 %v457, %v460
      %v462 = vrot.slane %v461, 4
      %v464 = vshll.u32 %v376, 16
      %v466 = vrot.slane %v464, 5
      %v467 = vsel %vm383, %v462, %v466
      %v469 = vshrl.u32 %v377, 16
      %v471 = vrot.slane %v469, 4
      %v472 = vshll.u32 %v377, 16
      %v474 = vrot.slane %v472, 5
      %v475 = vor.u32 %v471, %v474
      %v476 = vrot.slane %v475, 4
      %v478 = vshll.u32 %v378, 16
      %v480 = vrot.slane %v478, 5
      %v481 = vsel %vm383, %v476, %v480
      %v483 = vshrl.u32 %v379, 16
      %v485 = vrot.slane %v483, 4
      %v486 = vshll.u32 %v379, 16
      %v488 = vrot.slane %v486, 5
      %v489 = vor.u32 %v485, %v488
      %v490 = vrot.slane %v489, 4
      %v492 = vshll.u32 %v380, 16
      %v494 = vrot.slane %v492, 5
      %v495 = vsel %vm383, %v490, %v494
      %v496 = vld [vmem:[#allocation2] sm:$0xff]
      %v497 = vld [vmem:[#allocation2 + $0x8] sm:$0xff]
      %v498 = vld [vmem:[#allocation2 + $0x10] sm:$0xff]
      %v499 = vld [vmem:[#allocation2 + $0x18] sm:$0xff]
      %v500 = vld [vmem:[#allocation2 + $0x20] sm:$0xff]
      %v501 = vld [vmem:[#allocation2 + $0x28] sm:$0xff]
      %v502 = vld [vmem:[#allocation2 + $0x30] sm:$0xff]
      %v503 = vld [vmem:[#allocation2 + $0x38] sm:$0xff]
      %s504 = scalar_lea.vmem %s1, 64
      %v505 = vld [vmem:[%s504] sm:$0xf]
      %v506 = vld [vmem:[%s504 + $0x4] sm:$0xf]
      %v507 = vld [vmem:[%s504 + $0x8] sm:$0xf]
      %v508 = vld [vmem:[%s504 + $0xc] sm:$0xf]
      %v509 = vld [vmem:[%s504 + $0x10] sm:$0xf]
      %v510 = vld [vmem:[%s504 + $0x14] sm:$0xf]
      %v511 = vld [vmem:[%s504 + $0x18] sm:$0xf]
      %v512 = vld [vmem:[%s504 + $0x1c] sm:$0xf]
      %v513 = vld [vmem:[%s504 + $0x20] sm:$0xf]
      %v514 = vld [vmem:[%s504 + $0x24] sm:$0xf]
      %v515 = vld [vmem:[%s504 + $0x28] sm:$0xf]
      %v516 = vld [vmem:[%s504 + $0x2c] sm:$0xf]
      %v517 = vld [vmem:[%s504 + $0x30] sm:$0xf]
      %v518 = vld [vmem:[%s504 + $0x34] sm:$0xf]
      %v519 = vld [vmem:[%s504 + $0x38] sm:$0xf]
      %v520 = vld [vmem:[%s504 + $0x3c] sm:$0xf]
      %v521 = vunpack.c.l.b16 %v397
      %v522 = vunpack.c.l.b16 %v411
      %v523 = vunpack.c.l.b16 %v425
      %v524 = vunpack.c.l.b16 %v439
      %v525 = vunpack.c.l.b16 %v453
      %v526 = vunpack.c.l.b16 %v467
      %v527 = vunpack.c.l.b16 %v481
      %v528 = vunpack.c.l.b16 %v495
      %v529 = vpack.c.b16 %v522, %v521
      %v530 = vpack.c.b16 %v524, %v523
      %v531 = vpack.c.b16 %v526, %v525
      %v532 = vpack.c.b16 %v528, %v527
      %v553 = vunpack.c.l.b16 %v505
      %v554 = vunpack.c.l.b16 %v506
      %v555 = vunpack.c.l.b16 %v507
      %v556 = vunpack.c.l.b16 %v508
      %v557 = vunpack.c.l.b16 %v509
      %v558 = vunpack.c.l.b16 %v510
      %v559 = vunpack.c.l.b16 %v511
      %v560 = vunpack.c.l.b16 %v512
      %v561 = vunpack.c.l.b16 %v513
      %v562 = vunpack.c.l.b16 %v514
      %v563 = vunpack.c.l.b16 %v515
      %v564 = vunpack.c.l.b16 %v516
      %v565 = vunpack.c.l.b16 %v517
      %v566 = vunpack.c.l.b16 %v518
      %v567 = vunpack.c.l.b16 %v519
      %v568 = vunpack.c.l.b16 %v520
      %v569 = vpack.c.b16 %v554, %v553
      %v570 = vpack.c.b16 %v556, %v555
      %v571 = vpack.c.b16 %v558, %v557
      %v572 = vpack.c.b16 %v560, %v559
      %v573 = vpack.c.b16 %v562, %v561
      %v574 = vpack.c.b16 %v564, %v563
      %v575 = vpack.c.b16 %v566, %v565
      %v576 = vpack.c.b16 %v568, %v567
      %585 = vmatprep.subr.bf16.mxu0 0
      %586 = vmatpush1.bf16.msra.mxu0 %v576
      %587 = vmatprep.subr.bf16.mxu0 0
      %588 = vmatpush1.bf16.msra.mxu0 %v575
      %589 = vmatprep.subr.bf16.mxu0 0
      %590 = vmatpush1.bf16.msra.mxu0 %v574
      %591 = vmatprep.subr.bf16.mxu0 0
      %592 = vmatpush1.bf16.msra.mxu0 %v573
      %593 = vmatprep.subr.bf16.mxu0 0
      %594 = vmatpush1.bf16.msra.mxu0 %v572
      %595 = vmatprep.subr.bf16.mxu0 0
      %596 = vmatpush1.bf16.msra.mxu0 %v571
      %597 = vmatprep.subr.bf16.mxu0 0
      %598 = vmatpush1.bf16.msra.mxu0 %v570
      %599 = vmatprep.subr.bf16.mxu0 0
      %600 = vmatpush1.bf16.msra.mxu0 %v569
      %601 = vmatprep.subr.bf16.mxu0 0
      %602 = vmatpush2.bf16.msra.mxu0 0
      %603 = vmatprep.subr.bf16.mxu0 0
      %604 = vmatpush2.bf16.msra.mxu0 0
      %605 = vmatprep.subr.bf16.mxu0 0
      %606 = vmatpush2.bf16.msra.mxu0 0
      %607 = vmatprep.subr.bf16.mxu0 0
      %608 = vmatpush2.bf16.msra.mxu0 0
      %609 = vmatprep.subr.bf16.mxu0 0
      %610 = vmatpush2.bf16.msra.mxu0 0
      %611 = vmatprep.subr.bf16.mxu0 0
      %612 = vmatpush2.bf16.msra.mxu0 0
      %613 = vmatprep.subr.bf16.mxu0 0
      %614 = vmatpush2.bf16.msra.mxu0 0
      %615 = vmatprep.subr.bf16.mxu0 0
      %616 = vmatpush2.bf16.msra.mxu0 0
      %617 = vmatprep.mubr.bf16.mxu0 0
      %618 = vmatmul.mubr.bf16.gmra.mxu0 %v529
      %v619 = vpop.f32.mrf.mxu0
      %v620 = vadd.f32 0.0, %v619
      %v621 = vpop.f32.mrf.mxu0
      %v622 = vpop.f32.mrf.mxu0
      %v623 = vadd.f32 0.0, %v622
      %v624 = vpop.f32.mrf.mxu0
      %625 = vmatprep.mubr.bf16.mxu0 0
      %626 = vmatmul.mubr.bf16.gmra.mxu0 %v530
      %v627 = vpop.f32.mrf.mxu0
      %v628 = vadd.f32 0.0, %v627
      %v629 = vpop.f32.mrf.mxu0
      %v630 = vpop.f32.mrf.mxu0
      %v631 = vadd.f32 0.0, %v630
      %v632 = vpop.f32.mrf.mxu0
      %633 = vmatprep.mubr.bf16.mxu0 0
      %634 = vmatmul.mubr.bf16.gmra.mxu0 %v531
      %v635 = vpop.f32.mrf.mxu0
      %v636 = vadd.f32 0.0, %v635
      %v637 = vpop.f32.mrf.mxu0
      %v638 = vpop.f32.mrf.mxu0
      %v639 = vadd.f32 0.0, %v638
      %v640 = vpop.f32.mrf.mxu0
      %641 = vmatprep.mubr.bf16.mxu0 0
      %642 = vmatmul.mubr.bf16.gmra.mxu0 %v532
      %v643 = vpop.f32.mrf.mxu0
      %v644 = vadd.f32 0.0, %v643
      %v645 = vpop.f32.mrf.mxu0
      %v646 = vpop.f32.mrf.mxu0
      %v647 = vadd.f32 0.0, %v646
      %v648 = vpop.f32.mrf.mxu0
      %649 = vdwg.mxu0
      %v650 = vadd.f32 %v496, %v620
      %v651 = vadd.f32 %v497, %v623
      %v652 = vadd.f32 %v498, %v628
      %v653 = vadd.f32 %v499, %v631
      %v654 = vadd.f32 %v500, %v636
      %v655 = vadd.f32 %v501, %v639
      %v656 = vadd.f32 %v502, %v644
      %v657 = vadd.f32 %v503, %v647
      %658 = vst [vmem:[#allocation2] sm:$0xff] %v650
      %659 = vst [vmem:[#allocation2 + $0x8] sm:$0xff] %v651
      %660 = vst [vmem:[#allocation2 + $0x10] sm:$0xff] %v652
      %661 = vst [vmem:[#allocation2 + $0x18] sm:$0xff] %v653
      %662 = vst [vmem:[#allocation2 + $0x20] sm:$0xff] %v654
      %663 = vst [vmem:[#allocation2 + $0x28] sm:$0xff] %v655
      %664 = vst [vmem:[#allocation2 + $0x30] sm:$0xff] %v656
      %665 = vst [vmem:[#allocation2 + $0x38] sm:$0xff] %v657
      %v666 = vld [vmem:[%s165] sm:$0xe]
      %v667 = vld [vmem:[%s165 + $0x4] sm:$0x1]
      %v668 = vld [vmem:[%s165 + $0x8] sm:$0xe]
      %v669 = vld [vmem:[%s165 + $0xc] sm:$0x1]
      %v670 = vld [vmem:[%s165 + $0x10] sm:$0xe]
      %v671 = vld [vmem:[%s165 + $0x14] sm:$0x1]
      %v672 = vld [vmem:[%s165 + $0x18] sm:$0xe]
      %v673 = vld [vmem:[%s165 + $0x1c] sm:$0x1]
      %v674 = vld [vmem:[%s165 + $0x20] sm:$0xe]
      %v675 = vld [vmem:[%s165 + $0x24] sm:$0x1]
      %v676 = vld [vmem:[%s165 + $0x28] sm:$0xe]
      %v677 = vld [vmem:[%s165 + $0x2c] sm:$0x1]
      %v678 = vld [vmem:[%s165 + $0x30] sm:$0xe]
      %v679 = vld [vmem:[%s165 + $0x34] sm:$0x1]
      %v680 = vld [vmem:[%s165 + $0x38] sm:$0xe]
      %v681 = vld [vmem:[%s165 + $0x3c] sm:$0x1]
      %vm698 = vcmask 1042432
      %vm699 = vcmask 1046532
      %vm700 = vmor %vm698, %vm699
      %v701 = vrot.slane %v666, 5
      %v702 = vrot.slane %v701, 4
      %v703 = vrot.slane %v667, 5
      %v704 = vsel %vm700, %v702, %v703
      %v705 = vrot.slane %v668, 5
      %v706 = vrot.slane %v705, 4
      %v707 = vrot.slane %v669, 5
      %v708 = vsel %vm700, %v706, %v707
      %v709 = vrot.slane %v670, 5
      %v710 = vrot.slane %v709, 4
      %v711 = vrot.slane %v671, 5
      %v712 = vsel %vm700, %v710, %v711
      %v713 = vrot.slane %v672, 5
      %v714 = vrot.slane %v713, 4
      %v715 = vrot.slane %v673, 5
      %v716 = vsel %vm700, %v714, %v715
      %v717 = vrot.slane %v674, 5
      %v718 = vrot.slane %v717, 4
      %v719 = vrot.slane %v675, 5
      %v720 = vsel %vm700, %v718, %v719
      %v721 = vrot.slane %v676, 5
      %v722 = vrot.slane %v721, 4
      %v723 = vrot.slane %v677, 5
      %v724 = vsel %vm700, %v722, %v723
      %v725 = vrot.slane %v678, 5
      %v726 = vrot.slane %v725, 4
      %v727 = vrot.slane %v679, 5
      %v728 = vsel %vm700, %v726, %v727
      %v729 = vrot.slane %v680, 5
      %v730 = vrot.slane %v729, 4
      %v731 = vrot.slane %v681, 5
      %v732 = vsel %vm700, %v730, %v731
      %v733 = vld [vmem:[#allocation2] sm:$0xff]
      %v734 = vld [vmem:[#allocation2 + $0x8] sm:$0xff]
      %v735 = vld [vmem:[#allocation2 + $0x10] sm:$0xff]
      %v736 = vld [vmem:[#allocation2 + $0x18] sm:$0xff]
      %v737 = vld [vmem:[#allocation2 + $0x20] sm:$0xff]
      %v738 = vld [vmem:[#allocation2 + $0x28] sm:$0xff]
      %v739 = vld [vmem:[#allocation2 + $0x30] sm:$0xff]
      %v740 = vld [vmem:[#allocation2 + $0x38] sm:$0xff]
      %s741 = scalar_lea.vmem %s1, 128
      %v742 = vld [vmem:[%s741] sm:$0xf]
      %v743 = vld [vmem:[%s741 + $0x4] sm:$0xf]
      %v744 = vld [vmem:[%s741 + $0x8] sm:$0xf]
      %v745 = vld [vmem:[%s741 + $0xc] sm:$0xf]
      %v746 = vld [vmem:[%s741 + $0x10] sm:$0xf]
      %v747 = vld [vmem:[%s741 + $0x14] sm:$0xf]
      %v748 = vld [vmem:[%s741 + $0x18] sm:$0xf]
      %v749 = vld [vmem:[%s741 + $0x1c] sm:$0xf]
      %v750 = vld [vmem:[%s741 + $0x20] sm:$0xf]
      %v751 = vld [vmem:[%s741 + $0x24] sm:$0xf]
      %v752 = vld [vmem:[%s741 + $0x28] sm:$0xf]
      %v753 = vld [vmem:[%s741 + $0x2c] sm:$0xf]
      %v754 = vld [vmem:[%s741 + $0x30] sm:$0xf]
      %v755 = vld [vmem:[%s741 + $0x34] sm:$0xf]
      %v756 = vld [vmem:[%s741 + $0x38] sm:$0xf]
      %v757 = vld [vmem:[%s741 + $0x3c] sm:$0xf]
      %v758 = vunpack.c.l.b16 %v704
      %v759 = vunpack.c.l.b16 %v708
      %v760 = vunpack.c.l.b16 %v712
      %v761 = vunpack.c.l.b16 %v716
      %v762 = vunpack.c.l.b16 %v720
      %v763 = vunpack.c.l.b16 %v724
      %v764 = vunpack.c.l.b16 %v728
      %v765 = vunpack.c.l.b16 %v732
      %v766 = vpack.c.b16 %v759, %v758
      %v767 = vpack.c.b16 %v761, %v760
      %v768 = vpack.c.b16 %v763, %v762
      %v769 = vpack.c.b16 %v765, %v764
      %v790 = vunpack.c.l.b16 %v742
      %v791 = vunpack.c.l.b16 %v743
      %v792 = vunpack.c.l.b16 %v744
      %v793 = vunpack.c.l.b16 %v745
      %v794 = vunpack.c.l.b16 %v746
      %v795 = vunpack.c.l.b16 %v747
      %v796 = vunpack.c.l.b16 %v748
      %v797 = vunpack.c.l.b16 %v749
      %v798 = vunpack.c.l.b16 %v750
      %v799 = vunpack.c.l.b16 %v751
      %v800 = vunpack.c.l.b16 %v752
      %v801 = vunpack.c.l.b16 %v753
      %v802 = vunpack.c.l.b16 %v754
      %v803 = vunpack.c.l.b16 %v755
      %v804 = vunpack.c.l.b16 %v756
      %v805 = vunpack.c.l.b16 %v757
      %v806 = vpack.c.b16 %v791, %v790
      %v807 = vpack.c.b16 %v793, %v792
      %v808 = vpack.c.b16 %v795, %v794
      %v809 = vpack.c.b16 %v797, %v796
      %v810 = vpack.c.b16 %v799, %v798
      %v811 = vpack.c.b16 %v801, %v800
      %v812 = vpack.c.b16 %v803, %v802
      %v813 = vpack.c.b16 %v805, %v804
      %822 = vmatprep.subr.bf16.mxu0 0
      %823 = vmatpush1.bf16.msra.mxu0 %v813
      %824 = vmatprep.subr.bf16.mxu0 0
      %825 = vmatpush1.bf16.msra.mxu0 %v812
      %826 = vmatprep.subr.bf16.mxu0 0
      %827 = vmatpush1.bf16.msra.mxu0 %v811
      %828 = vmatprep.subr.bf16.mxu0 0
      %829 = vmatpush1.bf16.msra.mxu0 %v810
      %830 = vmatprep.subr.bf16.mxu0 0
      %831 = vmatpush1.bf16.msra.mxu0 %v809
      %832 = vmatprep.subr.bf16.mxu0 0
      %833 = vmatpush1.bf16.msra.mxu0 %v808
      %834 = vmatprep.subr.bf16.mxu0 0
      %835 = vmatpush1.bf16.msra.mxu0 %v807
      %836 = vmatprep.subr.bf16.mxu0 0
      %837 = vmatpush1.bf16.msra.mxu0 %v806
      %838 = vmatprep.subr.bf16.mxu0 0
      %839 = vmatpush2.bf16.msra.mxu0 0
      %840 = vmatprep.subr.bf16.mxu0 0
      %841 = vmatpush2.bf16.msra.mxu0 0
      %842 = vmatprep.subr.bf16.mxu0 0
      %843 = vmatpush2.bf16.msra.mxu0 0
      %844 = vmatprep.subr.bf16.mxu0 0
      %845 = vmatpush2.bf16.msra.mxu0 0
      %846 = vmatprep.subr.bf16.mxu0 0
      %847 = vmatpush2.bf16.msra.mxu0 0
      %848 = vmatprep.subr.bf16.mxu0 0
      %849 = vmatpush2.bf16.msra.mxu0 0
      %850 = vmatprep.subr.bf16.mxu0 0
      %851 = vmatpush2.bf16.msra.mxu0 0
      %852 = vmatprep.subr.bf16.mxu0 0
      %853 = vmatpush2.bf16.msra.mxu0 0
      %854 = vmatprep.mubr.bf16.mxu0 0
      %855 = vmatmul.mubr.bf16.gmra.mxu0 %v766
      %v856 = vpop.f32.mrf.mxu0
      %v857 = vadd.f32 0.0, %v856
      %v858 = vpop.f32.mrf.mxu0
      %v859 = vpop.f32.mrf.mxu0
      %v860 = vadd.f32 0.0, %v859
      %v861 = vpop.f32.mrf.mxu0
      %862 = vmatprep.mubr.bf16.mxu0 0
      %863 = vmatmul.mubr.bf16.gmra.mxu0 %v767
      %v864 = vpop.f32.mrf.mxu0
      %v865 = vadd.f32 0.0, %v864
      %v866 = vpop.f32.mrf.mxu0
      %v867 = vpop.f32.mrf.mxu0
      %v868 = vadd.f32 0.0, %v867
      %v869 = vpop.f32.mrf.mxu0
      %870 = vmatprep.mubr.bf16.mxu0 0
      %871 = vmatmul.mubr.bf16.gmra.mxu0 %v768
      %v872 = vpop.f32.mrf.mxu0
      %v873 = vadd.f32 0.0, %v872
      %v874 = vpop.f32.mrf.mxu0
      %v875 = vpop.f32.mrf.mxu0
      %v876 = vadd.f32 0.0, %v875
      %v877 = vpop.f32.mrf.mxu0
      %878 = vmatprep.mubr.bf16.mxu0 0
      %879 = vmatmul.mubr.bf16.gmra.mxu0 %v769
      %v880 = vpop.f32.mrf.mxu0
      %v881 = vadd.f32 0.0, %v880
      %v882 = vpop.f32.mrf.mxu0
      %v883 = vpop.f32.mrf.mxu0
      %v884 = vadd.f32 0.0, %v883
      %v885 = vpop.f32.mrf.mxu0
      %886 = vdwg.mxu0
      %v887 = vadd.f32 %v733, %v857
      %v888 = vadd.f32 %v734, %v860
      %v889 = vadd.f32 %v735, %v865
      %v890 = vadd.f32 %v736, %v868
      %v891 = vadd.f32 %v737, %v873
      %v892 = vadd.f32 %v738, %v876
      %v893 = vadd.f32 %v739, %v881
      %v894 = vadd.f32 %v740, %v884
      %895 = vst [vmem:[#allocation2] sm:$0xff] %v887
      %896 = vst [vmem:[#allocation2 + $0x8] sm:$0xff] %v888
      %897 = vst [vmem:[#allocation2 + $0x10] sm:$0xff] %v889
      %898 = vst [vmem:[#allocation2 + $0x18] sm:$0xff] %v890
      %899 = vst [vmem:[#allocation2 + $0x20] sm:$0xff] %v891
      %900 = vst [vmem:[#allocation2 + $0x28] sm:$0xff] %v892
      %901 = vst [vmem:[#allocation2 + $0x30] sm:$0xff] %v893
      %902 = vst [vmem:[#allocation2 + $0x38] sm:$0xff] %v894
      %s903 = scalar_lea.vmem %s165, 8
      %v904 = vld [vmem:[%s903] sm:$0xf]
      %v905 = vld [vmem:[%s903 + $0x8] sm:$0xf]
      %v906 = vld [vmem:[%s903 + $0x10] sm:$0xf]
      %v907 = vld [vmem:[%s903 + $0x18] sm:$0xf]
      %v908 = vld [vmem:[%s903 + $0x20] sm:$0xf]
      %v909 = vld [vmem:[%s903 + $0x28] sm:$0xf]
      %v910 = vld [vmem:[%s903 + $0x30] sm:$0xf]
      %v911 = vld [vmem:[%s903 + $0x38] sm:$0xf]
      %v912 = vld [vmem:[#allocation2] sm:$0xff]
      %v913 = vld [vmem:[#allocation2 + $0x8] sm:$0xff]
      %v914 = vld [vmem:[#allocation2 + $0x10] sm:$0xff]
      %v915 = vld [vmem:[#allocation2 + $0x18] sm:$0xff]
      %v916 = vld [vmem:[#allocation2 + $0x20] sm:$0xff]
      %v917 = vld [vmem:[#allocation2 + $0x28] sm:$0xff]
      %v918 = vld [vmem:[#allocation2 + $0x30] sm:$0xff]
      %v919 = vld [vmem:[#allocation2 + $0x38] sm:$0xff]
      %s920 = scalar_lea.vmem %s1, 192
      %v921 = vld [vmem:[%s920] sm:$0xf]
      %v922 = vld [vmem:[%s920 + $0x4] sm:$0xf]
      %v923 = vld [vmem:[%s920 + $0x8] sm:$0xf]
      %v924 = vld [vmem:[%s920 + $0xc] sm:$0xf]
      %v925 = vld [vmem:[%s920 + $0x10] sm:$0xf]
      %v926 = vld [vmem:[%s920 + $0x14] sm:$0xf]
      %v927 = vld [vmem:[%s920 + $0x18] sm:$0xf]
      %v928 = vld [vmem:[%s920 + $0x1c] sm:$0xf]
      %v929 = vld [vmem:[%s920 + $0x20] sm:$0xf]
      %v930 = vld [vmem:[%s920 + $0x24] sm:$0xf]
      %v931 = vld [vmem:[%s920 + $0x28] sm:$0xf]
      %v932 = vld [vmem:[%s920 + $0x2c] sm:$0xf]
      %v933 = vld [vmem:[%s920 + $0x30] sm:$0xf]
      %v934 = vld [vmem:[%s920 + $0x34] sm:$0xf]
      %v935 = vld [vmem:[%s920 + $0x38] sm:$0xf]
      %v936 = vld [vmem:[%s920 + $0x3c] sm:$0xf]
      %v945 = vunpack.c.l.b16 %v904
      %v946 = vunpack.c.l.b16 %v905
      %v947 = vunpack.c.l.b16 %v906
      %v948 = vunpack.c.l.b16 %v907
      %v949 = vunpack.c.l.b16 %v908
      %v950 = vunpack.c.l.b16 %v909
      %v951 = vunpack.c.l.b16 %v910
      %v952 = vunpack.c.l.b16 %v911
      %v953 = vpack.c.b16 %v946, %v945
      %v954 = vpack.c.b16 %v948, %v947
      %v955 = vpack.c.b16 %v950, %v949
      %v956 = vpack.c.b16 %v952, %v951
      %v977 = vunpack.c.l.b16 %v921
      %v978 = vunpack.c.l.b16 %v922
      %v979 = vunpack.c.l.b16 %v923
      %v980 = vunpack.c.l.b16 %v924
      %v981 = vunpack.c.l.b16 %v925
      %v982 = vunpack.c.l.b16 %v926
      %v983 = vunpack.c.l.b16 %v927
      %v984 = vunpack.c.l.b16 %v928
      %v985 = vunpack.c.l.b16 %v929
      %v986 = vunpack.c.l.b16 %v930
      %v987 = vunpack.c.l.b16 %v931
      %v988 = vunpack.c.l.b16 %v932
      %v989 = vunpack.c.l.b16 %v933
      %v990 = vunpack.c.l.b16 %v934
      %v991 = vunpack.c.l.b16 %v935
      %v992 = vunpack.c.l.b16 %v936
      %v993 = vpack.c.b16 %v978, %v977
      %v994 = vpack.c.b16 %v980, %v979
      %v995 = vpack.c.b16 %v982, %v981
      %v996 = vpack.c.b16 %v984, %v983
      %v997 = vpack.c.b16 %v986, %v985
      %v998 = vpack.c.b16 %v988, %v987
      %v999 = vpack.c.b16 %v990, %v989
      %v1000 = vpack.c.b16 %v992, %v991
      %1009 = vmatprep.subr.bf16.mxu0 0
      %1010 = vmatpush1.bf16.msra.mxu0 %v1000
      %1011 = vmatprep.subr.bf16.mxu0 0
      %1012 = vmatpush1.bf16.msra.mxu0 %v999
      %1013 = vmatprep.subr.bf16.mxu0 0
      %1014 = vmatpush1.bf16.msra.mxu0 %v998
      %1015 = vmatprep.subr.bf16.mxu0 0
      %1016 = vmatpush1.bf16.msra.mxu0 %v997
      %1017 = vmatprep.subr.bf16.mxu0 0
      %1018 = vmatpush1.bf16.msra.mxu0 %v996
      %1019 = vmatprep.subr.bf16.mxu0 0
      %1020 = vmatpush1.bf16.msra.mxu0 %v995
      %1021 = vmatprep.subr.bf16.mxu0 0
      %1022 = vmatpush1.bf16.msra.mxu0 %v994
      %1023 = vmatprep.subr.bf16.mxu0 0
      %1024 = vmatpush1.bf16.msra.mxu0 %v993
      %1025 = vmatprep.subr.bf16.mxu0 0
      %1026 = vmatpush2.bf16.msra.mxu0 0
      %1027 = vmatprep.subr.bf16.mxu0 0
      %1028 = vmatpush2.bf16.msra.mxu0 0
      %1029 = vmatprep.subr.bf16.mxu0 0
      %1030 = vmatpush2.bf16.msra.mxu0 0
      %1031 = vmatprep.subr.bf16.mxu0 0
      %1032 = vmatpush2.bf16.msra.mxu0 0
      %1033 = vmatprep.subr.bf16.mxu0 0
      %1034 = vmatpush2.bf16.msra.mxu0 0
      %1035 = vmatprep.subr.bf16.mxu0 0
      %1036 = vmatpush2.bf16.msra.mxu0 0
      %1037 = vmatprep.subr.bf16.mxu0 0
      %1038 = vmatpush2.bf16.msra.mxu0 0
      %1039 = vmatprep.subr.bf16.mxu0 0
      %1040 = vmatpush2.bf16.msra.mxu0 0
      %1041 = vmatprep.mubr.bf16.mxu0 0
      %1042 = vmatmul.mubr.bf16.gmra.mxu0 %v953
      %v1043 = vpop.f32.mrf.mxu0
      %v1044 = vadd.f32 0.0, %v1043
      %v1045 = vpop.f32.mrf.mxu0
      %v1046 = vpop.f32.mrf.mxu0
      %v1047 = vadd.f32 0.0, %v1046
      %v1048 = vpop.f32.mrf.mxu0
      %1049 = vmatprep.mubr.bf16.mxu0 0
      %1050 = vmatmul.mubr.bf16.gmra.mxu0 %v954
      %v1051 = vpop.f32.mrf.mxu0
      %v1052 = vadd.f32 0.0, %v1051
      %v1053 = vpop.f32.mrf.mxu0
      %v1054 = vpop.f32.mrf.mxu0
      %v1055 = vadd.f32 0.0, %v1054
      %v1056 = vpop.f32.mrf.mxu0
      %1057 = vmatprep.mubr.bf16.mxu0 0
      %1058 = vmatmul.mubr.bf16.gmra.mxu0 %v955
      %v1059 = vpop.f32.mrf.mxu0
      %v1060 = vadd.f32 0.0, %v1059
      %v1061 = vpop.f32.mrf.mxu0
      %v1062 = vpop.f32.mrf.mxu0
      %v1063 = vadd.f32 0.0, %v1062
      %v1064 = vpop.f32.mrf.mxu0
      %1065 = vmatprep.mubr.bf16.mxu0 0
      %1066 = vmatmul.mubr.bf16.gmra.mxu0 %v956
      %v1067 = vpop.f32.mrf.mxu0
      %v1068 = vadd.f32 0.0, %v1067
      %v1069 = vpop.f32.mrf.mxu0
      %v1070 = vpop.f32.mrf.mxu0
      %v1071 = vadd.f32 0.0, %v1070
      %v1072 = vpop.f32.mrf.mxu0
      %1073 = vdwg.mxu0
      %v1074 = vadd.f32 %v912, %v1044
      %v1075 = vadd.f32 %v913, %v1047
      %v1076 = vadd.f32 %v914, %v1052
      %v1077 = vadd.f32 %v915, %v1055
      %v1078 = vadd.f32 %v916, %v1060
      %v1079 = vadd.f32 %v917, %v1063
      %v1080 = vadd.f32 %v918, %v1068
      %v1081 = vadd.f32 %v919, %v1071
      %1082 = vst [vmem:[#allocation2] sm:$0xff] %v1074
      %1083 = vst [vmem:[#allocation2 + $0x8] sm:$0xff] %v1075
      %1084 = vst [vmem:[#allocation2 + $0x10] sm:$0xff] %v1076
      %1085 = vst [vmem:[#allocation2 + $0x18] sm:$0xff] %v1077
      %1086 = vst [vmem:[#allocation2 + $0x20] sm:$0xff] %v1078
      %1087 = vst [vmem:[#allocation2 + $0x28] sm:$0xff] %v1079
      %1088 = vst [vmem:[#allocation2 + $0x30] sm:$0xff] %v1080
      %1089 = vst [vmem:[#allocation2 + $0x38] sm:$0xff] %v1081
      %v1090 = vld [vmem:[%s903] sm:$0xf]
      %v1091 = vld [vmem:[%s903 + $0x4] sm:$0x1]
      %v1092 = vld [vmem:[%s903 + $0x8] sm:$0xf]
      %v1093 = vld [vmem:[%s903 + $0xc] sm:$0x1]
      %v1094 = vld [vmem:[%s903 + $0x10] sm:$0xf]
      %v1095 = vld [vmem:[%s903 + $0x14] sm:$0x1]
      %v1096 = vld [vmem:[%s903 + $0x18] sm:$0xf]
      %v1097 = vld [vmem:[%s903 + $0x1c] sm:$0x1]
      %v1098 = vld [vmem:[%s903 + $0x20] sm:$0xf]
      %v1099 = vld [vmem:[%s903 + $0x24] sm:$0x1]
      %v1100 = vld [vmem:[%s903 + $0x28] sm:$0xf]
      %v1101 = vld [vmem:[%s903 + $0x2c] sm:$0x1]
      %v1102 = vld [vmem:[%s903 + $0x30] sm:$0xf]
      %v1103 = vld [vmem:[%s903 + $0x34] sm:$0x1]
      %v1104 = vld [vmem:[%s903 + $0x38] sm:$0xf]
      %v1105 = vld [vmem:[%s903 + $0x3c] sm:$0x1]
      %v1107 = vshrl.u32 %v1090, 16
      %v1109 = vrot.slane %v1107, 4
      %v1110 = vshll.u32 %v1090, 16
      %v1112 = vrot.slane %v1110, 5
      %v1113 = vor.u32 %v1109, %v1112
      %v1114 = vrot.slane %v1113, 4
      %v1116 = vshll.u32 %v1091, 16
      %v1118 = vrot.slane %v1116, 5
      %v1119 = vsel %vm383, %v1114, %v1118
      %v1121 = vshrl.u32 %v1092, 16
      %v1123 = vrot.slane %v1121, 4
      %v1124 = vshll.u32 %v1092, 16
      %v1126 = vrot.slane %v1124, 5
      %v1127 = vor.u32 %v1123, %v1126
      %v1128 = vrot.slane %v1127, 4
      %v1130 = vshll.u32 %v1093, 16
      %v1132 = vrot.slane %v1130, 5
      %v1133 = vsel %vm383, %v1128, %v1132
      %v1135 = vshrl.u32 %v1094, 16
      %v1137 = vrot.slane %v1135, 4
      %v1138 = vshll.u32 %v1094, 16
      %v1140 = vrot.slane %v1138, 5
      %v1141 = vor.u32 %v1137, %v1140
      %v1142 = vrot.slane %v1141, 4
      %v1144 = vshll.u32 %v1095, 16
      %v1146 = vrot.slane %v1144, 5
      %v1147 = vsel %vm383, %v1142, %v1146
      %v1149 = vshrl.u32 %v1096, 16
      %v1151 = vrot.slane %v1149, 4
      %v1152 = vshll.u32 %v1096, 16
      %v1154 = vrot.slane %v1152, 5
      %v1155 = vor.u32 %v1151, %v1154
      %v1156 = vrot.slane %v1155, 4
      %v1158 = vshll.u32 %v1097, 16
      %v1160 = vrot.slane %v1158, 5
      %v1161 = vsel %vm383, %v1156, %v1160
      %v1163 = vshrl.u32 %v1098, 16
      %v1165 = vrot.slane %v1163, 4
      %v1166 = vshll.u32 %v1098, 16
      %v1168 = vrot.slane %v1166, 5
      %v1169 = vor.u32 %v1165, %v1168
      %v1170 = vrot.slane %v1169, 4
      %v1172 = vshll.u32 %v1099, 16
      %v1174 = vrot.slane %v1172, 5
      %v1175 = vsel %vm383, %v1170, %v1174
      %v1177 = vshrl.u32 %v1100, 16
      %v1179 = vrot.slane %v1177, 4
      %v1180 = vshll.u32 %v1100, 16
      %v1182 = vrot.slane %v1180, 5
      %v1183 = vor.u32 %v1179, %v1182
      %v1184 = vrot.slane %v1183, 4
      %v1186 = vshll.u32 %v1101, 16
      %v1188 = vrot.slane %v1186, 5
      %v1189 = vsel %vm383, %v1184, %v1188
      %v1191 = vshrl.u32 %v1102, 16
      %v1193 = vrot.slane %v1191, 4
      %v1194 = vshll.u32 %v1102, 16
      %v1196 = vrot.slane %v1194, 5
      %v1197 = vor.u32 %v1193, %v1196
      %v1198 = vrot.slane %v1197, 4
      %v1200 = vshll.u32 %v1103, 16
      %v1202 = vrot.slane %v1200, 5
      %v1203 = vsel %vm383, %v1198, %v1202
      %v1205 = vshrl.u32 %v1104, 16
      %v1207 = vrot.slane %v1205, 4
      %v1208 = vshll.u32 %v1104, 16
      %v1210 = vrot.slane %v1208, 5
      %v1211 = vor.u32 %v1207, %v1210
      %v1212 = vrot.slane %v1211, 4
      %v1214 = vshll.u32 %v1105, 16
      %v1216 = vrot.slane %v1214, 5
      %v1217 = vsel %vm383, %v1212, %v1216
      %v1218 = vld [vmem:[#allocation2] sm:$0xff]
      %v1219 = vld [vmem:[#allocation2 + $0x8] sm:$0xff]
      %v1220 = vld [vmem:[#allocation2 + $0x10] sm:$0xff]
      %v1221 = vld [vmem:[#allocation2 + $0x18] sm:$0xff]
      %v1222 = vld [vmem:[#allocation2 + $0x20] sm:$0xff]
      %v1223 = vld [vmem:[#allocation2 + $0x28] sm:$0xff]
      %v1224 = vld [vmem:[#allocation2 + $0x30] sm:$0xff]
      %v1225 = vld [vmem:[#allocation2 + $0x38] sm:$0xff]
      %s1226 = scalar_lea.vmem %s1, 256
      %v1227 = vld [vmem:[%s1226] sm:$0xf]
      %v1228 = vld [vmem:[%s1226 + $0x4] sm:$0xf]
      %v1229 = vld [vmem:[%s1226 + $0x8] sm:$0xf]
      %v1230 = vld [vmem:[%s1226 + $0xc] sm:$0xf]
      %v1231 = vld [vmem:[%s1226 + $0x10] sm:$0xf]
      %v1232 = vld [vmem:[%s1226 + $0x14] sm:$0xf]
      %v1233 = vld [vmem:[%s1226 + $0x18] sm:$0xf]
      %v1234 = vld [vmem:[%s1226 + $0x1c] sm:$0xf]
      %v1235 = vld [vmem:[%s1226 + $0x20] sm:$0xf]
      %v1236 = vld [vmem:[%s1226 + $0x24] sm:$0xf]
      %v1237 = vld [vmem:[%s1226 + $0x28] sm:$0xf]
      %v1238 = vld [vmem:[%s1226 + $0x2c] sm:$0xf]
      %v1239 = vld [vmem:[%s1226 + $0x30] sm:$0xf]
      %v1240 = vld [vmem:[%s1226 + $0x34] sm:$0xf]
      %v1241 = vld [vmem:[%s1226 + $0x38] sm:$0xf]
      %v1242 = vld [vmem:[%s1226 + $0x3c] sm:$0xf]
      %v1243 = vunpack.c.l.b16 %v1119
      %v1244 = vunpack.c.l.b16 %v1133
      %v1245 = vunpack.c.l.b16 %v1147
      %v1246 = vunpack.c.l.b16 %v1161
      %v1247 = vunpack.c.l.b16 %v1175
      %v1248 = vunpack.c.l.b16 %v1189
      %v1249 = vunpack.c.l.b16 %v1203
      %v1250 = vunpack.c.l.b16 %v1217
      %v1251 = vpack.c.b16 %v1244, %v1243
      %v1252 = vpack.c.b16 %v1246, %v1245
      %v1253 = vpack.c.b16 %v1248, %v1247
      %v1254 = vpack.c.b16 %v1250, %v1249
      %v1275 = vunpack.c.l.b16 %v1227
      %v1276 = vunpack.c.l.b16 %v1228
      %v1277 = vunpack.c.l.b16 %v1229
      %v1278 = vunpack.c.l.b16 %v1230
      %v1279 = vunpack.c.l.b16 %v1231
      %v1280 = vunpack.c.l.b16 %v1232
      %v1281 = vunpack.c.l.b16 %v1233
      %v1282 = vunpack.c.l.b16 %v1234
      %v1283 = vunpack.c.l.b16 %v1235
      %v1284 = vunpack.c.l.b16 %v1236
      %v1285 = vunpack.c.l.b16 %v1237
      %v1286 = vunpack.c.l.b16 %v1238
      %v1287 = vunpack.c.l.b16 %v1239
      %v1288 = vunpack.c.l.b16 %v1240
      %v1289 = vunpack.c.l.b16 %v1241
      %v1290 = vunpack.c.l.b16 %v1242
      %v1291 = vpack.c.b16 %v1276, %v1275
      %v1292 = vpack.c.b16 %v1278, %v1277
      %v1293 = vpack.c.b16 %v1280, %v1279
      %v1294 = vpack.c.b16 %v1282, %v1281
      %v1295 = vpack.c.b16 %v1284, %v1283
      %v1296 = vpack.c.b16 %v1286, %v1285
      %v1297 = vpack.c.b16 %v1288, %v1287
      %v1298 = vpack.c.b16 %v1290, %v1289
      %1307 = vmatprep.subr.bf16.mxu0 0
      %1308 = vmatpush1.bf16.msra.mxu0 %v1298
      %1309 = vmatprep.subr.bf16.mxu0 0
      %1310 = vmatpush1.bf16.msra.mxu0 %v1297
      %1311 = vmatprep.subr.bf16.mxu0 0
      %1312 = vmatpush1.bf16.msra.mxu0 %v1296
      %1313 = vmatprep.subr.bf16.mxu0 0
      %1314 = vmatpush1.bf16.msra.mxu0 %v1295
      %1315 = vmatprep.subr.bf16.mxu0 0
      %1316 = vmatpush1.bf16.msra.mxu0 %v1294
      %1317 = vmatprep.subr.bf16.mxu0 0
      %1318 = vmatpush1.bf16.msra.mxu0 %v1293
      %1319 = vmatprep.subr.bf16.mxu0 0
      %1320 = vmatpush1.bf16.msra.mxu0 %v1292
      %1321 = vmatprep.subr.bf16.mxu0 0
      %1322 = vmatpush1.bf16.msra.mxu0 %v1291
      %1323 = vmatprep.subr.bf16.mxu0 0
      %1324 = vmatpush2.bf16.msra.mxu0 0
      %1325 = vmatprep.subr.bf16.mxu0 0
      %1326 = vmatpush2.bf16.msra.mxu0 0
      %1327 = vmatprep.subr.bf16.mxu0 0
      %1328 = vmatpush2.bf16.msra.mxu0 0
      %1329 = vmatprep.subr.bf16.mxu0 0
      %1330 = vmatpush2.bf16.msra.mxu0 0
      %1331 = vmatprep.subr.bf16.mxu0 0
      %1332 = vmatpush2.bf16.msra.mxu0 0
      %1333 = vmatprep.subr.bf16.mxu0 0
      %1334 = vmatpush2.bf16.msra.mxu0 0
      %1335 = vmatprep.subr.bf16.mxu0 0
      %1336 = vmatpush2.bf16.msra.mxu0 0
      %1337 = vmatprep.subr.bf16.mxu0 0
      %1338 = vmatpush2.bf16.msra.mxu0 0
      %1339 = vmatprep.mubr.bf16.mxu0 0
      %1340 = vmatmul.mubr.bf16.gmra.mxu0 %v1251
      %v1341 = vpop.f32.mrf.mxu0
      %v1342 = vadd.f32 0.0, %v1341
      %v1343 = vpop.f32.mrf.mxu0
      %v1344 = vpop.f32.mrf.mxu0
      %v1345 = vadd.f32 0.0, %v1344
      %v1346 = vpop.f32.mrf.mxu0
      %1347 = vmatprep.mubr.bf16.mxu0 0
      %1348 = vmatmul.mubr.bf16.gmra.mxu0 %v1252
      %v1349 = vpop.f32.mrf.mxu0
      %v1350 = vadd.f32 0.0, %v1349
      %v1351 = vpop.f32.mrf.mxu0
      %v1352 = vpop.f32.mrf.mxu0
      %v1353 = vadd.f32 0.0, %v1352
      %v1354 = vpop.f32.mrf.mxu0
      %1355 = vmatprep.mubr.bf16.mxu0 0
      %1356 = vmatmul.mubr.bf16.gmra.mxu0 %v1253
      %v1357 = vpop.f32.mrf.mxu0
      %v1358 = vadd.f32 0.0, %v1357
      %v1359 = vpop.f32.mrf.mxu0
      %v1360 = vpop.f32.mrf.mxu0
      %v1361 = vadd.f32 0.0, %v1360
      %v1362 = vpop.f32.mrf.mxu0
      %1363 = vmatprep.mubr.bf16.mxu0 0
      %1364 = vmatmul.mubr.bf16.gmra.mxu0 %v1254
      %v1365 = vpop.f32.mrf.mxu0
      %v1366 = vadd.f32 0.0, %v1365
      %v1367 = vpop.f32.mrf.mxu0
      %v1368 = vpop.f32.mrf.mxu0
      %v1369 = vadd.f32 0.0, %v1368
      %v1370 = vpop.f32.mrf.mxu0
      %1371 = vdwg.mxu0
      %v1372 = vadd.f32 %v1218, %v1342
      %v1373 = vadd.f32 %v1219, %v1345
      %v1374 = vadd.f32 %v1220, %v1350
      %v1375 = vadd.f32 %v1221, %v1353
      %v1376 = vadd.f32 %v1222, %v1358
      %v1377 = vadd.f32 %v1223, %v1361
      %v1378 = vadd.f32 %v1224, %v1366
      %v1379 = vadd.f32 %v1225, %v1369
      %1380 = vst [vmem:[#allocation2] sm:$0xff] %v1372
      %1381 = vst [vmem:[#allocation2 + $0x8] sm:$0xff] %v1373
      %1382 = vst [vmem:[#allocation2 + $0x10] sm:$0xff] %v1374
      %1383 = vst [vmem:[#allocation2 + $0x18] sm:$0xff] %v1375
      %1384 = vst [vmem:[#allocation2 + $0x20] sm:$0xff] %v1376
      %1385 = vst [vmem:[#allocation2 + $0x28] sm:$0xff] %v1377
      %1386 = vst [vmem:[#allocation2 + $0x30] sm:$0xff] %v1378
      %1387 = vst [vmem:[#allocation2 + $0x38] sm:$0xff] %v1379
      %v1388 = vld [vmem:[%s903] sm:$0xe]
      %v1389 = vld [vmem:[%s903 + $0x4] sm:$0x1]
      %v1390 = vld [vmem:[%s903 + $0x8] sm:$0xe]
      %v1391 = vld [vmem:[%s903 + $0xc] sm:$0x1]
      %v1392 = vld [vmem:[%s903 + $0x10] sm:$0xe]
      %v1393 = vld [vmem:[%s903 + $0x14] sm:$0x1]
      %v1394 = vld [vmem:[%s903 + $0x18] sm:$0xe]
      %v1395 = vld [vmem:[%s903 + $0x1c] sm:$0x1]
      %v1396 = vld [vmem:[%s903 + $0x20] sm:$0xe]
      %v1397 = vld [vmem:[%s903 + $0x24] sm:$0x1]
      %v1398 = vld [vmem:[%s903 + $0x28] sm:$0xe]
      %v1399 = vld [vmem:[%s903 + $0x2c] sm:$0x1]
      %v1400 = vld [vmem:[%s903 + $0x30] sm:$0xe]
      %v1401 = vld [vmem:[%s903 + $0x34] sm:$0x1]
      %v1402 = vld [vmem:[%s903 + $0x38] sm:$0xe]
      %v1403 = vld [vmem:[%s903 + $0x3c] sm:$0x1]
      %v1420 = vrot.slane %v1388, 5
      %v1421 = vrot.slane %v1420, 4
      %v1422 = vrot.slane %v1389, 5
      %v1423 = vsel %vm700, %v1421, %v1422
      %v1424 = vrot.slane %v1390, 5
      %v1425 = vrot.slane %v1424, 4
      %v1426 = vrot.slane %v1391, 5
      %v1427 = vsel %vm700, %v1425, %v1426
      %v1428 = vrot.slane %v1392, 5
      %v1429 = vrot.slane %v1428, 4
      %v1430 = vrot.slane %v1393, 5
      %v1431 = vsel %vm700, %v1429, %v1430
      %v1432 = vrot.slane %v1394, 5
      %v1433 = vrot.slane %v1432, 4
      %v1434 = vrot.slane %v1395, 5
      %v1435 = vsel %vm700, %v1433, %v1434
      %v1436 = vrot.slane %v1396, 5
      %v1437 = vrot.slane %v1436, 4
      %v1438 = vrot.slane %v1397, 5
      %v1439 = vsel %vm700, %v1437, %v1438
      %v1440 = vrot.slane %v1398, 5
      %v1441 = vrot.slane %v1440, 4
      %v1442 = vrot.slane %v1399, 5
      %v1443 = vsel %vm700, %v1441, %v1442
      %v1444 = vrot.slane %v1400, 5
      %v1445 = vrot.slane %v1444, 4
      %v1446 = vrot.slane %v1401, 5
      %v1447 = vsel %vm700, %v1445, %v1446
      %v1448 = vrot.slane %v1402, 5
      %v1449 = vrot.slane %v1448, 4
      %v1450 = vrot.slane %v1403, 5
      %v1451 = vsel %vm700, %v1449, %v1450
      %v1452 = vld [vmem:[#allocation2] sm:$0xff]
      %v1453 = vld [vmem:[#allocation2 + $0x8] sm:$0xff]
      %v1454 = vld [vmem:[#allocation2 + $0x10] sm:$0xff]
      %v1455 = vld [vmem:[#allocation2 + $0x18] sm:$0xff]
      %v1456 = vld [vmem:[#allocation2 + $0x20] sm:$0xff]
      %v1457 = vld [vmem:[#allocation2 + $0x28] sm:$0xff]
      %v1458 = vld [vmem:[#allocation2 + $0x30] sm:$0xff]
      %v1459 = vld [vmem:[#allocation2 + $0x38] sm:$0xff]
      %s1460 = scalar_lea.vmem %s1, 320
      %v1461 = vld [vmem:[%s1460] sm:$0xf]
      %v1462 = vld [vmem:[%s1460 + $0x4] sm:$0xf]
      %v1463 = vld [vmem:[%s1460 + $0x8] sm:$0xf]
      %v1464 = vld [vmem:[%s1460 + $0xc] sm:$0xf]
      %v1465 = vld [vmem:[%s1460 + $0x10] sm:$0xf]
      %v1466 = vld [vmem:[%s1460 + $0x14] sm:$0xf]
      %v1467 = vld [vmem:[%s1460 + $0x18] sm:$0xf]
      %v1468 = vld [vmem:[%s1460 + $0x1c] sm:$0xf]
      %v1469 = vld [vmem:[%s1460 + $0x20] sm:$0xf]
      %v1470 = vld [vmem:[%s1460 + $0x24] sm:$0xf]
      %v1471 = vld [vmem:[%s1460 + $0x28] sm:$0xf]
      %v1472 = vld [vmem:[%s1460 + $0x2c] sm:$0xf]
      %v1473 = vld [vmem:[%s1460 + $0x30] sm:$0xf]
      %v1474 = vld [vmem:[%s1460 + $0x34] sm:$0xf]
      %v1475 = vld [vmem:[%s1460 + $0x38] sm:$0xf]
      %v1476 = vld [vmem:[%s1460 + $0x3c] sm:$0xf]
      %v1477 = vunpack.c.l.b16 %v1423
      %v1478 = vunpack.c.l.b16 %v1427
      %v1479 = vunpack.c.l.b16 %v1431
      %v1480 = vunpack.c.l.b16 %v1435
      %v1481 = vunpack.c.l.b16 %v1439
      %v1482 = vunpack.c.l.b16 %v1443
      %v1483 = vunpack.c.l.b16 %v1447
      %v1484 = vunpack.c.l.b16 %v1451
      %v1485 = vpack.c.b16 %v1478, %v1477
      %v1486 = vpack.c.b16 %v1480, %v1479
      %v1487 = vpack.c.b16 %v1482, %v1481
      %v1488 = vpack.c.b16 %v1484, %v1483
      %v1509 = vunpack.c.l.b16 %v1461
      %v1510 = vunpack.c.l.b16 %v1462
      %v1511 = vunpack.c.l.b16 %v1463
      %v1512 = vunpack.c.l.b16 %v1464
      %v1513 = vunpack.c.l.b16 %v1465
      %v1514 = vunpack.c.l.b16 %v1466
      %v1515 = vunpack.c.l.b16 %v1467
      %v1516 = vunpack.c.l.b16 %v1468
      %v1517 = vunpack.c.l.b16 %v1469
      %v1518 = vunpack.c.l.b16 %v1470
      %v1519 = vunpack.c.l.b16 %v1471
      %v1520 = vunpack.c.l.b16 %v1472
      %v1521 = vunpack.c.l.b16 %v1473
      %v1522 = vunpack.c.l.b16 %v1474
      %v1523 = vunpack.c.l.b16 %v1475
      %v1524 = vunpack.c.l.b16 %v1476
      %v1525 = vpack.c.b16 %v1510, %v1509
      %v1526 = vpack.c.b16 %v1512, %v1511
      %v1527 = vpack.c.b16 %v1514, %v1513
      %v1528 = vpack.c.b16 %v1516, %v1515
      %v1529 = vpack.c.b16 %v1518, %v1517
      %v1530 = vpack.c.b16 %v1520, %v1519
      %v1531 = vpack.c.b16 %v1522, %v1521
      %v1532 = vpack.c.b16 %v1524, %v1523
      %1541 = vmatprep.subr.bf16.mxu0 0
      %1542 = vmatpush1.bf16.msra.mxu0 %v1532
      %1543 = vmatprep.subr.bf16.mxu0 0
      %1544 = vmatpush1.bf16.msra.mxu0 %v1531
      %1545 = vmatprep.subr.bf16.mxu0 0
      %1546 = vmatpush1.bf16.msra.mxu0 %v1530
      %1547 = vmatprep.subr.bf16.mxu0 0
      %1548 = vmatpush1.bf16.msra.mxu0 %v1529
      %1549 = vmatprep.subr.bf16.mxu0 0
      %1550 = vmatpush1.bf16.msra.mxu0 %v1528
      %1551 = vmatprep.subr.bf16.mxu0 0
      %1552 = vmatpush1.bf16.msra.mxu0 %v1527
      %1553 = vmatprep.subr.bf16.mxu0 0
      %1554 = vmatpush1.bf16.msra.mxu0 %v1526
      %1555 = vmatprep.subr.bf16.mxu0 0
      %1556 = vmatpush1.bf16.msra.mxu0 %v1525
      %1557 = vmatprep.subr.bf16.mxu0 0
      %1558 = vmatpush2.bf16.msra.mxu0 0
      %1559 = vmatprep.subr.bf16.mxu0 0
      %1560 = vmatpush2.bf16.msra.mxu0 0
      %1561 = vmatprep.subr.bf16.mxu0 0
      %1562 = vmatpush2.bf16.msra.mxu0 0
      %1563 = vmatprep.subr.bf16.mxu0 0
      %1564 = vmatpush2.bf16.msra.mxu0 0
      %1565 = vmatprep.subr.bf16.mxu0 0
      %1566 = vmatpush2.bf16.msra.mxu0 0
      %1567 = vmatprep.subr.bf16.mxu0 0
      %1568 = vmatpush2.bf16.msra.mxu0 0
      %1569 = vmatprep.subr.bf16.mxu0 0
      %1570 = vmatpush2.bf16.msra.mxu0 0
      %1571 = vmatprep.subr.bf16.mxu0 0
      %1572 = vmatpush2.bf16.msra.mxu0 0
      %1573 = vmatprep.mubr.bf16.mxu0 0
      %1574 = vmatmul.mubr.bf16.gmra.mxu0 %v1485
      %v1575 = vpop.f32.mrf.mxu0
      %v1576 = vadd.f32 0.0, %v1575
      %v1577 = vpop.f32.mrf.mxu0
      %v1578 = vpop.f32.mrf.mxu0
      %v1579 = vadd.f32 0.0, %v1578
      %v1580 = vpop.f32.mrf.mxu0
      %1581 = vmatprep.mubr.bf16.mxu0 0
      %1582 = vmatmul.mubr.bf16.gmra.mxu0 %v1486
      %v1583 = vpop.f32.mrf.mxu0
      %v1584 = vadd.f32 0.0, %v1583
      %v1585 = vpop.f32.mrf.mxu0
      %v1586 = vpop.f32.mrf.mxu0
      %v1587 = vadd.f32 0.0, %v1586
      %v1588 = vpop.f32.mrf.mxu0
      %1589 = vmatprep.mubr.bf16.mxu0 0
      %1590 = vmatmul.mubr.bf16.gmra.mxu0 %v1487
      %v1591 = vpop.f32.mrf.mxu0
      %v1592 = vadd.f32 0.0, %v1591
      %v1593 = vpop.f32.mrf.mxu0
      %v1594 = vpop.f32.mrf.mxu0
      %v1595 = vadd.f32 0.0, %v1594
      %v1596 = vpop.f32.mrf.mxu0
      %1597 = vmatprep.mubr.bf16.mxu0 0
      %1598 = vmatmul.mubr.bf16.gmra.mxu0 %v1488
      %v1599 = vpop.f32.mrf.mxu0
      %v1600 = vadd.f32 0.0, %v1599
      %v1601 = vpop.f32.mrf.mxu0
      %v1602 = vpop.f32.mrf.mxu0
      %v1603 = vadd.f32 0.0, %v1602
      %v1604 = vpop.f32.mrf.mxu0
      %1605 = vdwg.mxu0
      %v1606 = vadd.f32 %v1452, %v1576
      %v1607 = vadd.f32 %v1453, %v1579
      %v1608 = vadd.f32 %v1454, %v1584
      %v1609 = vadd.f32 %v1455, %v1587
      %v1610 = vadd.f32 %v1456, %v1592
      %v1611 = vadd.f32 %v1457, %v1595
      %v1612 = vadd.f32 %v1458, %v1600
      %v1613 = vadd.f32 %v1459, %v1603
      %1614 = vst [vmem:[#allocation2] sm:$0xff] %v1606
      %1615 = vst [vmem:[#allocation2 + $0x8] sm:$0xff] %v1607
      %1616 = vst [vmem:[#allocation2 + $0x10] sm:$0xff] %v1608
      %1617 = vst [vmem:[#allocation2 + $0x18] sm:$0xff] %v1609
      %1618 = vst [vmem:[#allocation2 + $0x20] sm:$0xff] %v1610
      %1619 = vst [vmem:[#allocation2 + $0x28] sm:$0xff] %v1611
      %1620 = vst [vmem:[#allocation2 + $0x30] sm:$0xff] %v1612
      %1621 = vst [vmem:[#allocation2 + $0x38] sm:$0xff] %v1613
      %s1622 = scalar_lea.vmem %s165, 16
      %v1623 = vld [vmem:[%s1622] sm:$0xf]
      %v1624 = vld [vmem:[%s1622 + $0x8] sm:$0xf]
      %v1625 = vld [vmem:[%s1622 + $0x10] sm:$0xf]
      %v1626 = vld [vmem:[%s1622 + $0x18] sm:$0xf]
      %v1627 = vld [vmem:[%s1622 + $0x20] sm:$0xf]
      %v1628 = vld [vmem:[%s1622 + $0x28] sm:$0xf]
      %v1629 = vld [vmem:[%s1622 + $0x30] sm:$0xf]
      %v1630 = vld [vmem:[%s1622 + $0x38] sm:$0xf]
      %v1631 = vld [vmem:[#allocation2] sm:$0xff]
      %v1632 = vld [vmem:[#allocation2 + $0x8] sm:$0xff]
      %v1633 = vld [vmem:[#allocation2 + $0x10] sm:$0xff]
      %v1634 = vld [vmem:[#allocation2 + $0x18] sm:$0xff]
      %v1635 = vld [vmem:[#allocation2 + $0x20] sm:$0xff]
      %v1636 = vld [vmem:[#allocation2 + $0x28] sm:$0xff]
      %v1637 = vld [vmem:[#allocation2 + $0x30] sm:$0xff]
      %v1638 = vld [vmem:[#allocation2 + $0x38] sm:$0xff]
      %s1639 = scalar_lea.vmem %s1, 384
      %v1640 = vld [vmem:[%s1639] sm:$0xf]
      %v1641 = vld [vmem:[%s1639 + $0x4] sm:$0xf]
      %v1642 = vld [vmem:[%s1639 + $0x8] sm:$0xf]
      %v1643 = vld [vmem:[%s1639 + $0xc] sm:$0xf]
      %v1644 = vld [vmem:[%s1639 + $0x10] sm:$0xf]
      %v1645 = vld [vmem:[%s1639 + $0x14] sm:$0xf]
      %v1646 = vld [vmem:[%s1639 + $0x18] sm:$0xf]
      %v1647 = vld [vmem:[%s1639 + $0x1c] sm:$0xf]
      %v1648 = vld [vmem:[%s1639 + $0x20] sm:$0xf]
      %v1649 = vld [vmem:[%s1639 + $0x24] sm:$0xf]
      %v1650 = vld [vmem:[%s1639 + $0x28] sm:$0xf]
      %v1651 = vld [vmem:[%s1639 + $0x2c] sm:$0xf]
      %v1652 = vld [vmem:[%s1639 + $0x30] sm:$0xf]
      %v1653 = vld [vmem:[%s1639 + $0x34] sm:$0xf]
      %v1654 = vld [vmem:[%s1639 + $0x38] sm:$0xf]
      %v1655 = vld [vmem:[%s1639 + $0x3c] sm:$0xf]
      %v1664 = vunpack.c.l.b16 %v1623
      %v1665 = vunpack.c.l.b16 %v1624
      %v1666 = vunpack.c.l.b16 %v1625
      %v1667 = vunpack.c.l.b16 %v1626
      %v1668 = vunpack.c.l.b16 %v1627
      %v1669 = vunpack.c.l.b16 %v1628
      %v1670 = vunpack.c.l.b16 %v1629
      %v1671 = vunpack.c.l.b16 %v1630
      %v1672 = vpack.c.b16 %v1665, %v1664
      %v1673 = vpack.c.b16 %v1667, %v1666
      %v1674 = vpack.c.b16 %v1669, %v1668
      %v1675 = vpack.c.b16 %v1671, %v1670
      %v1696 = vunpack.c.l.b16 %v1640
      %v1697 = vunpack.c.l.b16 %v1641
      %v1698 = vunpack.c.l.b16 %v1642
      %v1699 = vunpack.c.l.b16 %v1643
      %v1700 = vunpack.c.l.b16 %v1644
      %v1701 = vunpack.c.l.b16 %v1645
      %v1702 = vunpack.c.l.b16 %v1646
      %v1703 = vunpack.c.l.b16 %v1647
      %v1704 = vunpack.c.l.b16 %v1648
      %v1705 = vunpack.c.l.b16 %v1649
      %v1706 = vunpack.c.l.b16 %v1650
      %v1707 = vunpack.c.l.b16 %v1651
      %v1708 = vunpack.c.l.b16 %v1652
      %v1709 = vunpack.c.l.b16 %v1653
      %v1710 = vunpack.c.l.b16 %v1654
      %v1711 = vunpack.c.l.b16 %v1655
      %v1712 = vpack.c.b16 %v1697, %v1696
      %v1713 = vpack.c.b16 %v1699, %v1698
      %v1714 = vpack.c.b16 %v1701, %v1700
      %v1715 = vpack.c.b16 %v1703, %v1702
      %v1716 = vpack.c.b16 %v1705, %v1704
      %v1717 = vpack.c.b16 %v1707, %v1706
      %v1718 = vpack.c.b16 %v1709, %v1708
      %v1719 = vpack.c.b16 %v1711, %v1710
      %1728 = vmatprep.subr.bf16.mxu0 0
      %1729 = vmatpush1.bf16.msra.mxu0 %v1719
      %1730 = vmatprep.subr.bf16.mxu0 0
      %1731 = vmatpush1.bf16.msra.mxu0 %v1718
      %1732 = vmatprep.subr.bf16.mxu0 0
      %1733 = vmatpush1.bf16.msra.mxu0 %v1717
      %1734 = vmatprep.subr.bf16.mxu0 0
      %1735 = vmatpush1.bf16.msra.mxu0 %v1716
      %1736 = vmatprep.subr.bf16.mxu0 0
      %1737 = vmatpush1.bf16.msra.mxu0 %v1715
      %1738 = vmatprep.subr.bf16.mxu0 0
      %1739 = vmatpush1.bf16.msra.mxu0 %v1714
      %1740 = vmatprep.subr.bf16.mxu0 0
      %1741 = vmatpush1.bf16.msra.mxu0 %v1713
      %1742 = vmatprep.subr.bf16.mxu0 0
      %1743 = vmatpush1.bf16.msra.mxu0 %v1712
      %1744 = vmatprep.subr.bf16.mxu0 0
      %1745 = vmatpush2.bf16.msra.mxu0 0
      %1746 = vmatprep.subr.bf16.mxu0 0
      %1747 = vmatpush2.bf16.msra.mxu0 0
      %1748 = vmatprep.subr.bf16.mxu0 0
      %1749 = vmatpush2.bf16.msra.mxu0 0
      %1750 = vmatprep.subr.bf16.mxu0 0
      %1751 = vmatpush2.bf16.msra.mxu0 0
      %1752 = vmatprep.subr.bf16.mxu0 0
      %1753 = vmatpush2.bf16.msra.mxu0 0
      %1754 = vmatprep.subr.bf16.mxu0 0
      %1755 = vmatpush2.bf16.msra.mxu0 0
      %1756 = vmatprep.subr.bf16.mxu0 0
      %1757 = vmatpush2.bf16.msra.mxu0 0
      %1758 = vmatprep.subr.bf16.mxu0 0
      %1759 = vmatpush2.bf16.msra.mxu0 0
      %1760 = vmatprep.mubr.bf16.mxu0 0
      %1761 = vmatmul.mubr.bf16.gmra.mxu0 %v1672
      %v1762 = vpop.f32.mrf.mxu0
      %v1763 = vadd.f32 0.0, %v1762
      %v1764 = vpop.f32.mrf.mxu0
      %v1765 = vpop.f32.mrf.mxu0
      %v1766 = vadd.f32 0.0, %v1765
      %v1767 = vpop.f32.mrf.mxu0
      %1768 = vmatprep.mubr.bf16.mxu0 0
      %1769 = vmatmul.mubr.bf16.gmra.mxu0 %v1673
      %v1770 = vpop.f32.mrf.mxu0
      %v1771 = vadd.f32 0.0, %v1770
      %v1772 = vpop.f32.mrf.mxu0
      %v1773 = vpop.f32.mrf.mxu0
      %v1774 = vadd.f32 0.0, %v1773
      %v1775 = vpop.f32.mrf.mxu0
      %1776 = vmatprep.mubr.bf16.mxu0 0
      %1777 = vmatmul.mubr.bf16.gmra.mxu0 %v1674
      %v1778 = vpop.f32.mrf.mxu0
      %v1779 = vadd.f32 0.0, %v1778
      %v1780 = vpop.f32.mrf.mxu0
      %v1781 = vpop.f32.mrf.mxu0
      %v1782 = vadd.f32 0.0, %v1781
      %v1783 = vpop.f32.mrf.mxu0
      %1784 = vmatprep.mubr.bf16.mxu0 0
      %1785 = vmatmul.mubr.bf16.gmra.mxu0 %v1675
      %v1786 = vpop.f32.mrf.mxu0
      %v1787 = vadd.f32 0.0, %v1786
      %v1788 = vpop.f32.mrf.mxu0
      %v1789 = vpop.f32.mrf.mxu0
      %v1790 = vadd.f32 0.0, %v1789
      %v1791 = vpop.f32.mrf.mxu0
      %1792 = vdwg.mxu0
      %v1793 = vadd.f32 %v1631, %v1763
      %v1794 = vadd.f32 %v1632, %v1766
      %v1795 = vadd.f32 %v1633, %v1771
      %v1796 = vadd.f32 %v1634, %v1774
      %v1797 = vadd.f32 %v1635, %v1779
      %v1798 = vadd.f32 %v1636, %v1782
      %v1799 = vadd.f32 %v1637, %v1787
      %v1800 = vadd.f32 %v1638, %v1790
      %1801 = vst [vmem:[#allocation2] sm:$0xff] %v1793
      %1802 = vst [vmem:[#allocation2 + $0x8] sm:$0xff] %v1794
      %1803 = vst [vmem:[#allocation2 + $0x10] sm:$0xff] %v1795
      %1804 = vst [vmem:[#allocation2 + $0x18] sm:$0xff] %v1796
      %1805 = vst [vmem:[#allocation2 + $0x20] sm:$0xff] %v1797
      %1806 = vst [vmem:[#allocation2 + $0x28] sm:$0xff] %v1798
      %1807 = vst [vmem:[#allocation2 + $0x30] sm:$0xff] %v1799
      %1808 = vst [vmem:[#allocation2 + $0x38] sm:$0xff] %v1800
      %v1809 = vld [vmem:[%s1622] sm:$0xf]
      %v1810 = vld [vmem:[%s1622 + $0x4] sm:$0x1]
      %v1811 = vld [vmem:[%s1622 + $0x8] sm:$0xf]
      %v1812 = vld [vmem:[%s1622 + $0xc] sm:$0x1]
      %v1813 = vld [vmem:[%s1622 + $0x10] sm:$0xf]
      %v1814 = vld [vmem:[%s1622 + $0x14] sm:$0x1]
      %v1815 = vld [vmem:[%s1622 + $0x18] sm:$0xf]
      %v1816 = vld [vmem:[%s1622 + $0x1c] sm:$0x1]
      %v1817 = vld [vmem:[%s1622 + $0x20] sm:$0xf]
      %v1818 = vld [vmem:[%s1622 + $0x24] sm:$0x1]
      %v1819 = vld [vmem:[%s1622 + $0x28] sm:$0xf]
      %v1820 = vld [vmem:[%s1622 + $0x2c] sm:$0x1]
      %v1821 = vld [vmem:[%s1622 + $0x30] sm:$0xf]
      %v1822 = vld [vmem:[%s1622 + $0x34] sm:$0x1]
      %v1823 = vld [vmem:[%s1622 + $0x38] sm:$0xf]
      %v1824 = vld [vmem:[%s1622 + $0x3c] sm:$0x1]
      %v1826 = vshrl.u32 %v1809, 16
      %v1828 = vrot.slane %v1826, 4
      %v1829 = vshll.u32 %v1809, 16
      %v1831 = vrot.slane %v1829, 5
      %v1832 = vor.u32 %v1828, %v1831
      %v1833 = vrot.slane %v1832, 4
      %v1835 = vshll.u32 %v1810, 16
      %v1837 = vrot.slane %v1835, 5
      %v1838 = vsel %vm383, %v1833, %v1837
      %v1840 = vshrl.u32 %v1811, 16
      %v1842 = vrot.slane %v1840, 4
      %v1843 = vshll.u32 %v1811, 16
      %v1845 = vrot.slane %v1843, 5
      %v1846 = vor.u32 %v1842, %v1845
      %v1847 = vrot.slane %v1846, 4
      %v1849 = vshll.u32 %v1812, 16
      %v1851 = vrot.slane %v1849, 5
      %v1852 = vsel %vm383, %v1847, %v1851
      %v1854 = vshrl.u32 %v1813, 16
      %v1856 = vrot.slane %v1854, 4
      %v1857 = vshll.u32 %v1813, 16
      %v1859 = vrot.slane %v1857, 5
      %v1860 = vor.u32 %v1856, %v1859
      %v1861 = vrot.slane %v1860, 4
      %v1863 = vshll.u32 %v1814, 16
      %v1865 = vrot.slane %v1863, 5
      %v1866 = vsel %vm383, %v1861, %v1865
      %v1868 = vshrl.u32 %v1815, 16
      %v1870 = vrot.slane %v1868, 4
      %v1871 = vshll.u32 %v1815, 16
      %v1873 = vrot.slane %v1871, 5
      %v1874 = vor.u32 %v1870, %v1873
      %v1875 = vrot.slane %v1874, 4
      %v1877 = vshll.u32 %v1816, 16
      %v1879 = vrot.slane %v1877, 5
      %v1880 = vsel %vm383, %v1875, %v1879
      %v1882 = vshrl.u32 %v1817, 16
      %v1884 = vrot.slane %v1882, 4
      %v1885 = vshll.u32 %v1817, 16
      %v1887 = vrot.slane %v1885, 5
      %v1888 = vor.u32 %v1884, %v1887
      %v1889 = vrot.slane %v1888, 4
      %v1891 = vshll.u32 %v1818, 16
      %v1893 = vrot.slane %v1891, 5
      %v1894 = vsel %vm383, %v1889, %v1893
      %v1896 = vshrl.u32 %v1819, 16
      %v1898 = vrot.slane %v1896, 4
      %v1899 = vshll.u32 %v1819, 16
      %v1901 = vrot.slane %v1899, 5
      %v1902 = vor.u32 %v1898, %v1901
      %v1903 = vrot.slane %v1902, 4
      %v1905 = vshll.u32 %v1820, 16
      %v1907 = vrot.slane %v1905, 5
      %v1908 = vsel %vm383, %v1903, %v1907
      %v1910 = vshrl.u32 %v1821, 16
      %v1912 = vrot.slane %v1910, 4
      %v1913 = vshll.u32 %v1821, 16
      %v1915 = vrot.slane %v1913, 5
      %v1916 = vor.u32 %v1912, %v1915
      %v1917 = vrot.slane %v1916, 4
      %v1919 = vshll.u32 %v1822, 16
      %v1921 = vrot.slane %v1919, 5
      %v1922 = vsel %vm383, %v1917, %v1921
      %v1924 = vshrl.u32 %v1823, 16
      %v1926 = vrot.slane %v1924, 4
      %v1927 = vshll.u32 %v1823, 16
      %v1929 = vrot.slane %v1927, 5
      %v1930 = vor.u32 %v1926, %v1929
      %v1931 = vrot.slane %v1930, 4
      %v1933 = vshll.u32 %v1824, 16
      %v1935 = vrot.slane %v1933, 5
      %v1936 = vsel %vm383, %v1931, %v1935
      %v1937 = vld [vmem:[#allocation2] sm:$0xff]
      %v1938 = vld [vmem:[#allocation2 + $0x8] sm:$0xff]
      %v1939 = vld [vmem:[#allocation2 + $0x10] sm:$0xff]
      %v1940 = vld [vmem:[#allocation2 + $0x18] sm:$0xff]
      %v1941 = vld [vmem:[#allocation2 + $0x20] sm:$0xff]
      %v1942 = vld [vmem:[#allocation2 + $0x28] sm:$0xff]
      %v1943 = vld [vmem:[#allocation2 + $0x30] sm:$0xff]
      %v1944 = vld [vmem:[#allocation2 + $0x38] sm:$0xff]
      %s1945 = scalar_lea.vmem %s1, 448
      %v1946 = vld [vmem:[%s1945] sm:$0xf]
      %v1947 = vld [vmem:[%s1945 + $0x4] sm:$0xf]
      %v1948 = vld [vmem:[%s1945 + $0x8] sm:$0xf]
      %v1949 = vld [vmem:[%s1945 + $0xc] sm:$0xf]
      %v1950 = vld [vmem:[%s1945 + $0x10] sm:$0xf]
      %v1951 = vld [vmem:[%s1945 + $0x14] sm:$0xf]
      %v1952 = vld [vmem:[%s1945 + $0x18] sm:$0xf]
      %v1953 = vld [vmem:[%s1945 + $0x1c] sm:$0xf]
      %v1954 = vld [vmem:[%s1945 + $0x20] sm:$0xf]
      %v1955 = vld [vmem:[%s1945 + $0x24] sm:$0xf]
      %v1956 = vld [vmem:[%s1945 + $0x28] sm:$0xf]
      %v1957 = vld [vmem:[%s1945 + $0x2c] sm:$0xf]
      %v1958 = vld [vmem:[%s1945 + $0x30] sm:$0xf]
      %v1959 = vld [vmem:[%s1945 + $0x34] sm:$0xf]
      %v1960 = vld [vmem:[%s1945 + $0x38] sm:$0xf]
      %v1961 = vld [vmem:[%s1945 + $0x3c] sm:$0xf]
      %v1962 = vunpack.c.l.b16 %v1838
      %v1963 = vunpack.c.l.b16 %v1852
      %v1964 = vunpack.c.l.b16 %v1866
      %v1965 = vunpack.c.l.b16 %v1880
      %v1966 = vunpack.c.l.b16 %v1894
      %v1967 = vunpack.c.l.b16 %v1908
      %v1968 = vunpack.c.l.b16 %v1922
      %v1969 = vunpack.c.l.b16 %v1936
      %v1970 = vpack.c.b16 %v1963, %v1962
      %v1971 = vpack.c.b16 %v1965, %v1964
      %v1972 = vpack.c.b16 %v1967, %v1966
      %v1973 = vpack.c.b16 %v1969, %v1968
      %v1994 = vunpack.c.l.b16 %v1946
      %v1995 = vunpack.c.l.b16 %v1947
      %v1996 = vunpack.c.l.b16 %v1948
      %v1997 = vunpack.c.l.b16 %v1949
      %v1998 = vunpack.c.l.b16 %v1950
      %v1999 = vunpack.c.l.b16 %v1951
      %v2000 = vunpack.c.l.b16 %v1952
      %v2001 = vunpack.c.l.b16 %v1953
      %v2002 = vunpack.c.l.b16 %v1954
      %v2003 = vunpack.c.l.b16 %v1955
      %v2004 = vunpack.c.l.b16 %v1956
      %v2005 = vunpack.c.l.b16 %v1957
      %v2006 = vunpack.c.l.b16 %v1958
      %v2007 = vunpack.c.l.b16 %v1959
      %v2008 = vunpack.c.l.b16 %v1960
      %v2009 = vunpack.c.l.b16 %v1961
      %v2010 = vpack.c.b16 %v1995, %v1994
      %v2011 = vpack.c.b16 %v1997, %v1996
      %v2012 = vpack.c.b16 %v1999, %v1998
      %v2013 = vpack.c.b16 %v2001, %v2000
      %v2014 = vpack.c.b16 %v2003, %v2002
      %v2015 = vpack.c.b16 %v2005, %v2004
      %v2016 = vpack.c.b16 %v2007, %v2006
      %v2017 = vpack.c.b16 %v2009, %v2008
      %2026 = vmatprep.subr.bf16.mxu0 0
      %2027 = vmatpush1.bf16.msra.mxu0 %v2017
      %2028 = vmatprep.subr.bf16.mxu0 0
      %2029 = vmatpush1.bf16.msra.mxu0 %v2016
      %2030 = vmatprep.subr.bf16.mxu0 0
      %2031 = vmatpush1.bf16.msra.mxu0 %v2015
      %2032 = vmatprep.subr.bf16.mxu0 0
      %2033 = vmatpush1.bf16.msra.mxu0 %v2014
      %2034 = vmatprep.subr.bf16.mxu0 0
      %2035 = vmatpush1.bf16.msra.mxu0 %v2013
      %2036 = vmatprep.subr.bf16.mxu0 0
      %2037 = vmatpush1.bf16.msra.mxu0 %v2012
      %2038 = vmatprep.subr.bf16.mxu0 0
      %2039 = vmatpush1.bf16.msra.mxu0 %v2011
      %2040 = vmatprep.subr.bf16.mxu0 0
      %2041 = vmatpush1.bf16.msra.mxu0 %v2010
      %2042 = vmatprep.subr.bf16.mxu0 0
      %2043 = vmatpush2.bf16.msra.mxu0 0
      %2044 = vmatprep.subr.bf16.mxu0 0
      %2045 = vmatpush2.bf16.msra.mxu0 0
      %2046 = vmatprep.subr.bf16.mxu0 0
      %2047 = vmatpush2.bf16.msra.mxu0 0
      %2048 = vmatprep.subr.bf16.mxu0 0
      %2049 = vmatpush2.bf16.msra.mxu0 0
      %2050 = vmatprep.subr.bf16.mxu0 0
      %2051 = vmatpush2.bf16.msra.mxu0 0
      %2052 = vmatprep.subr.bf16.mxu0 0
      %2053 = vmatpush2.bf16.msra.mxu0 0
      %2054 = vmatprep.subr.bf16.mxu0 0
      %2055 = vmatpush2.bf16.msra.mxu0 0
      %2056 = vmatprep.subr.bf16.mxu0 0
      %2057 = vmatpush2.bf16.msra.mxu0 0
      %2058 = vmatprep.mubr.bf16.mxu0 0
      %2059 = vmatmul.mubr.bf16.gmra.mxu0 %v1970
      %v2060 = vpop.f32.mrf.mxu0
      %v2061 = vadd.f32 0.0, %v2060
      %v2062 = vpop.f32.mrf.mxu0
      %v2063 = vpop.f32.mrf.mxu0
      %v2064 = vadd.f32 0.0, %v2063
      %v2065 = vpop.f32.mrf.mxu0
      %2066 = vmatprep.mubr.bf16.mxu0 0
      %2067 = vmatmul.mubr.bf16.gmra.mxu0 %v1971
      %v2068 = vpop.f32.mrf.mxu0
      %v2069 = vadd.f32 0.0, %v2068
      %v2070 = vpop.f32.mrf.mxu0
      %v2071 = vpop.f32.mrf.mxu0
      %v2072 = vadd.f32 0.0, %v2071
      %v2073 = vpop.f32.mrf.mxu0
      %2074 = vmatprep.mubr.bf16.mxu0 0
      %2075 = vmatmul.mubr.bf16.gmra.mxu0 %v1972
      %v2076 = vpop.f32.mrf.mxu0
      %v2077 = vadd.f32 0.0, %v2076
      %v2078 = vpop.f32.mrf.mxu0
      %v2079 = vpop.f32.mrf.mxu0
      %v2080 = vadd.f32 0.0, %v2079
      %v2081 = vpop.f32.mrf.mxu0
      %2082 = vmatprep.mubr.bf16.mxu0 0
      %2083 = vmatmul.mubr.bf16.gmra.mxu0 %v1973
      %v2084 = vpop.f32.mrf.mxu0
      %v2085 = vadd.f32 0.0, %v2084
      %v2086 = vpop.f32.mrf.mxu0
      %v2087 = vpop.f32.mrf.mxu0
      %v2088 = vadd.f32 0.0, %v2087
      %v2089 = vpop.f32.mrf.mxu0
      %2090 = vdwg.mxu0
      %v2091 = vadd.f32 %v1937, %v2061
      %v2092 = vadd.f32 %v1938, %v2064
      %v2093 = vadd.f32 %v1939, %v2069
      %v2094 = vadd.f32 %v1940, %v2072
      %v2095 = vadd.f32 %v1941, %v2077
      %v2096 = vadd.f32 %v1942, %v2080
      %v2097 = vadd.f32 %v1943, %v2085
      %v2098 = vadd.f32 %v1944, %v2088
      %2099 = vst [vmem:[#allocation2] sm:$0xff] %v2091
      %2100 = vst [vmem:[#allocation2 + $0x8] sm:$0xff] %v2092
      %2101 = vst [vmem:[#allocation2 + $0x10] sm:$0xff] %v2093
      %2102 = vst [vmem:[#allocation2 + $0x18] sm:$0xff] %v2094
      %2103 = vst [vmem:[#allocation2 + $0x20] sm:$0xff] %v2095
      %2104 = vst [vmem:[#allocation2 + $0x28] sm:$0xff] %v2096
      %2105 = vst [vmem:[#allocation2 + $0x30] sm:$0xff] %v2097
      %2106 = vst [vmem:[#allocation2 + $0x38] sm:$0xff] %v2098
      %v2107 = vld [vmem:[%s1622] sm:$0xe]
      %v2108 = vld [vmem:[%s1622 + $0x4] sm:$0x1]
      %v2109 = vld [vmem:[%s1622 + $0x8] sm:$0xe]
      %v2110 = vld [vmem:[%s1622 + $0xc] sm:$0x1]
      %v2111 = vld [vmem:[%s1622 + $0x10] sm:$0xe]
      %v2112 = vld [vmem:[%s1622 + $0x14] sm:$0x1]
      %v2113 = vld [vmem:[%s1622 + $0x18] sm:$0xe]
      %v2114 = vld [vmem:[%s1622 + $0x1c] sm:$0x1]
      %v2115 = vld [vmem:[%s1622 + $0x20] sm:$0xe]
      %v2116 = vld [vmem:[%s1622 + $0x24] sm:$0x1]
      %v2117 = vld [vmem:[%s1622 + $0x28] sm:$0xe]
      %v2118 = vld [vmem:[%s1622 + $0x2c] sm:$0x1]
      %v2119 = vld [vmem:[%s1622 + $0x30] sm:$0xe]
      %v2120 = vld [vmem:[%s1622 + $0x34] sm:$0x1]
      %v2121 = vld [vmem:[%s1622 + $0x38] sm:$0xe]
      %v2122 = vld [vmem:[%s1622 + $0x3c] sm:$0x1]
      %v2139 = vrot.slane %v2107, 5
      %v2140 = vrot.slane %v2139, 4
      %v2141 = vrot.slane %v2108, 5
      %v2142 = vsel %vm700, %v2140, %v2141
      %v2143 = vrot.slane %v2109, 5
      %v2144 = vrot.slane %v2143, 4
      %v2145 = vrot.slane %v2110, 5
      %v2146 = vsel %vm700, %v2144, %v2145
      %v2147 = vrot.slane %v2111, 5
      %v2148 = vrot.slane %v2147, 4
      %v2149 = vrot.slane %v2112, 5
      %v2150 = vsel %vm700, %v2148, %v2149
      %v2151 = vrot.slane %v2113, 5
      %v2152 = vrot.slane %v2151, 4
      %v2153 = vrot.slane %v2114, 5
      %v2154 = vsel %vm700, %v2152, %v2153
      %v2155 = vrot.slane %v2115, 5
      %v2156 = vrot.slane %v2155, 4
      %v2157 = vrot.slane %v2116, 5
      %v2158 = vsel %vm700, %v2156, %v2157
      %v2159 = vrot.slane %v2117, 5
      %v2160 = vrot.slane %v2159, 4
      %v2161 = vrot.slane %v2118, 5
      %v2162 = vsel %vm700, %v2160, %v2161
      %v2163 = vrot.slane %v2119, 5
      %v2164 = vrot.slane %v2163, 4
      %v2165 = vrot.slane %v2120, 5
      %v2166 = vsel %vm700, %v2164, %v2165
      %v2167 = vrot.slane %v2121, 5
      %v2168 = vrot.slane %v2167, 4
      %v2169 = vrot.slane %v2122, 5
      %v2170 = vsel %vm700, %v2168, %v2169
      %v2171 = vld [vmem:[#allocation2] sm:$0xff]
      %v2172 = vld [vmem:[#allocation2 + $0x8] sm:$0xff]
      %v2173 = vld [vmem:[#allocation2 + $0x10] sm:$0xff]
      %v2174 = vld [vmem:[#allocation2 + $0x18] sm:$0xff]
      %v2175 = vld [vmem:[#allocation2 + $0x20] sm:$0xff]
      %v2176 = vld [vmem:[#allocation2 + $0x28] sm:$0xff]
      %v2177 = vld [vmem:[#allocation2 + $0x30] sm:$0xff]
      %v2178 = vld [vmem:[#allocation2 + $0x38] sm:$0xff]
      %s2179 = scalar_lea.vmem %s1, 512
      %v2180 = vld [vmem:[%s2179] sm:$0xf]
      %v2181 = vld [vmem:[%s2179 + $0x4] sm:$0xf]
      %v2182 = vld [vmem:[%s2179 + $0x8] sm:$0xf]
      %v2183 = vld [vmem:[%s2179 + $0xc] sm:$0xf]
      %v2184 = vld [vmem:[%s2179 + $0x10] sm:$0xf]
      %v2185 = vld [vmem:[%s2179 + $0x14] sm:$0xf]
      %v2186 = vld [vmem:[%s2179 + $0x18] sm:$0xf]
      %v2187 = vld [vmem:[%s2179 + $0x1c] sm:$0xf]
      %v2188 = vld [vmem:[%s2179 + $0x20] sm:$0xf]
      %v2189 = vld [vmem:[%s2179 + $0x24] sm:$0xf]
      %v2190 = vld [vmem:[%s2179 + $0x28] sm:$0xf]
      %v2191 = vld [vmem:[%s2179 + $0x2c] sm:$0xf]
      %v2192 = vld [vmem:[%s2179 + $0x30] sm:$0xf]
      %v2193 = vld [vmem:[%s2179 + $0x34] sm:$0xf]
      %v2194 = vld [vmem:[%s2179 + $0x38] sm:$0xf]
      %v2195 = vld [vmem:[%s2179 + $0x3c] sm:$0xf]
      %v2196 = vunpack.c.l.b16 %v2142
      %v2197 = vunpack.c.l.b16 %v2146
      %v2198 = vunpack.c.l.b16 %v2150
      %v2199 = vunpack.c.l.b16 %v2154
      %v2200 = vunpack.c.l.b16 %v2158
      %v2201 = vunpack.c.l.b16 %v2162
      %v2202 = vunpack.c.l.b16 %v2166
      %v2203 = vunpack.c.l.b16 %v2170
      %v2204 = vpack.c.b16 %v2197, %v2196
      %v2205 = vpack.c.b16 %v2199, %v2198
      %v2206 = vpack.c.b16 %v2201, %v2200
      %v2207 = vpack.c.b16 %v2203, %v2202
      %v2228 = vunpack.c.l.b16 %v2180
      %v2229 = vunpack.c.l.b16 %v2181
      %v2230 = vunpack.c.l.b16 %v2182
      %v2231 = vunpack.c.l.b16 %v2183
      %v2232 = vunpack.c.l.b16 %v2184
      %v2233 = vunpack.c.l.b16 %v2185
      %v2234 = vunpack.c.l.b16 %v2186
      %v2235 = vunpack.c.l.b16 %v2187
      %v2236 = vunpack.c.l.b16 %v2188
      %v2237 = vunpack.c.l.b16 %v2189
      %v2238 = vunpack.c.l.b16 %v2190
      %v2239 = vunpack.c.l.b16 %v2191
      %v2240 = vunpack.c.l.b16 %v2192
      %v2241 = vunpack.c.l.b16 %v2193
      %v2242 = vunpack.c.l.b16 %v2194
      %v2243 = vunpack.c.l.b16 %v2195
      %v2244 = vpack.c.b16 %v2229, %v2228
      %v2245 = vpack.c.b16 %v2231, %v2230
      %v2246 = vpack.c.b16 %v2233, %v2232
      %v2247 = vpack.c.b16 %v2235, %v2234
      %v2248 = vpack.c.b16 %v2237, %v2236
      %v2249 = vpack.c.b16 %v2239, %v2238
      %v2250 = vpack.c.b16 %v2241, %v2240
      %v2251 = vpack.c.b16 %v2243, %v2242
      %2260 = vmatprep.subr.bf16.mxu0 0
      %2261 = vmatpush1.bf16.msra.mxu0 %v2251
      %2262 = vmatprep.subr.bf16.mxu0 0
      %2263 = vmatpush1.bf16.msra.mxu0 %v2250
      %2264 = vmatprep.subr.bf16.mxu0 0
      %2265 = vmatpush1.bf16.msra.mxu0 %v2249
      %2266 = vmatprep.subr.bf16.mxu0 0
      %2267 = vmatpush1.bf16.msra.mxu0 %v2248
      %2268 = vmatprep.subr.bf16.mxu0 0
      %2269 = vmatpush1.bf16.msra.mxu0 %v2247
      %2270 = vmatprep.subr.bf16.mxu0 0
      %2271 = vmatpush1.bf16.msra.mxu0 %v2246
      %2272 = vmatprep.subr.bf16.mxu0 0
      %2273 = vmatpush1.bf16.msra.mxu0 %v2245
      %2274 = vmatprep.subr.bf16.mxu0 0
      %2275 = vmatpush1.bf16.msra.mxu0 %v2244
      %2276 = vmatprep.subr.bf16.mxu0 0
      %2277 = vmatpush2.bf16.msra.mxu0 0
      %2278 = vmatprep.subr.bf16.mxu0 0
      %2279 = vmatpush2.bf16.msra.mxu0 0
      %2280 = vmatprep.subr.bf16.mxu0 0
      %2281 = vmatpush2.bf16.msra.mxu0 0
      %2282 = vmatprep.subr.bf16.mxu0 0
      %2283 = vmatpush2.bf16.msra.mxu0 0
      %2284 = vmatprep.subr.bf16.mxu0 0
      %2285 = vmatpush2.bf16.msra.mxu0 0
      %2286 = vmatprep.subr.bf16.mxu0 0
      %2287 = vmatpush2.bf16.msra.mxu0 0
      %2288 = vmatprep.subr.bf16.mxu0 0
      %2289 = vmatpush2.bf16.msra.mxu0 0
      %2290 = vmatprep.subr.bf16.mxu0 0
      %2291 = vmatpush2.bf16.msra.mxu0 0
      %2292 = vmatprep.mubr.bf16.mxu0 0
      %2293 = vmatmul.mubr.bf16.gmra.mxu0 %v2204
      %v2294 = vpop.f32.mrf.mxu0
      %v2295 = vadd.f32 0.0, %v2294
      %v2296 = vpop.f32.mrf.mxu0
      %v2297 = vpop.f32.mrf.mxu0
      %v2298 = vadd.f32 0.0, %v2297
      %v2299 = vpop.f32.mrf.mxu0
      %2300 = vmatprep.mubr.bf16.mxu0 0
      %2301 = vmatmul.mubr.bf16.gmra.mxu0 %v2205
      %v2302 = vpop.f32.mrf.mxu0
      %v2303 = vadd.f32 0.0, %v2302
      %v2304 = vpop.f32.mrf.mxu0
      %v2305 = vpop.f32.mrf.mxu0
      %v2306 = vadd.f32 0.0, %v2305
      %v2307 = vpop.f32.mrf.mxu0
      %2308 = vmatprep.mubr.bf16.mxu0 0
      %2309 = vmatmul.mubr.bf16.gmra.mxu0 %v2206
      %v2310 = vpop.f32.mrf.mxu0
      %v2311 = vadd.f32 0.0, %v2310
      %v2312 = vpop.f32.mrf.mxu0
      %v2313 = vpop.f32.mrf.mxu0
      %v2314 = vadd.f32 0.0, %v2313
      %v2315 = vpop.f32.mrf.mxu0
      %2316 = vmatprep.mubr.bf16.mxu0 0
      %2317 = vmatmul.mubr.bf16.gmra.mxu0 %v2207
      %v2318 = vpop.f32.mrf.mxu0
      %v2319 = vadd.f32 0.0, %v2318
      %v2320 = vpop.f32.mrf.mxu0
      %v2321 = vpop.f32.mrf.mxu0
      %v2322 = vadd.f32 0.0, %v2321
      %v2323 = vpop.f32.mrf.mxu0
      %2324 = vdwg.mxu0
      %v2325 = vadd.f32 %v2171, %v2295
      %v2326 = vadd.f32 %v2172, %v2298
      %v2327 = vadd.f32 %v2173, %v2303
      %v2328 = vadd.f32 %v2174, %v2306
      %v2329 = vadd.f32 %v2175, %v2311
      %v2330 = vadd.f32 %v2176, %v2314
      %v2331 = vadd.f32 %v2177, %v2319
      %v2332 = vadd.f32 %v2178, %v2322
      %2333 = vst [vmem:[#allocation2] sm:$0xff] %v2325
      %2334 = vst [vmem:[#allocation2 + $0x8] sm:$0xff] %v2326
      %2335 = vst [vmem:[#allocation2 + $0x10] sm:$0xff] %v2327
      %2336 = vst [vmem:[#allocation2 + $0x18] sm:$0xff] %v2328
      %2337 = vst [vmem:[#allocation2 + $0x20] sm:$0xff] %v2329
      %2338 = vst [vmem:[#allocation2 + $0x28] sm:$0xff] %v2330
      %2339 = vst [vmem:[#allocation2 + $0x30] sm:$0xff] %v2331
      %2340 = vst [vmem:[#allocation2 + $0x38] sm:$0xff] %v2332
      %v2341 = vld [vmem:[#allocation2] sm:$0xff]
      %v2342 = vld [vmem:[#allocation2 + $0x8] sm:$0xff]
      %v2343 = vld [vmem:[#allocation2 + $0x10] sm:$0xff]
      %v2344 = vld [vmem:[#allocation2 + $0x18] sm:$0xff]
      %v2345 = vld [vmem:[#allocation2 + $0x20] sm:$0xff]
      %v2346 = vld [vmem:[#allocation2 + $0x28] sm:$0xff]
      %v2347 = vld [vmem:[#allocation2 + $0x30] sm:$0xff]
      %v2348 = vld [vmem:[#allocation2 + $0x38] sm:$0xff]
      %v2349 = vld [vmem:[%s2] sm:$0x1]
      %v2351 = vlaneseq
      %v2352 = vshrl.u32 %v2351, 7
      %v2353 = vsub.s32 0, %v2352
      %v2354 = vrot.slane %v2349, %v2353
      %v2356 = vadd.f32 %v2341, %v2354
      %v2357 = vadd.f32 %v2342, %v2354
      %v2358 = vadd.f32 %v2343, %v2354
      %v2359 = vadd.f32 %v2344, %v2354
      %v2360 = vadd.f32 %v2345, %v2354
      %v2361 = vadd.f32 %v2346, %v2354
      %v2362 = vadd.f32 %v2347, %v2354
      %v2363 = vadd.f32 %v2348, %v2354
      %v2364 = vmax.f32 %v2356, 0.0
      %v2365 = vmax.f32 %v2357, 0.0
      %v2366 = vmax.f32 %v2358, 0.0
      %v2367 = vmax.f32 %v2359, 0.0
      %v2368 = vmax.f32 %v2360, 0.0
      %v2369 = vmax.f32 %v2361, 0.0
      %v2370 = vmax.f32 %v2362, 0.0
      %v2371 = vmax.f32 %v2363, 0.0
      %v2372 = vpack.c.bf16 %v2365, %v2364
      %v2373 = vpack.c.bf16 %v2367, %v2366
      %v2374 = vpack.c.bf16 %v2369, %v2368
      %v2375 = vpack.c.bf16 %v2371, %v2370
      %v2380 = vunpack.c.l.b16 %v2372
      %v2381 = vunpack.c.h.b16 %v2372
      %v2382 = vunpack.c.l.b16 %v2373
      %v2383 = vunpack.c.h.b16 %v2373
      %v2384 = vunpack.c.l.b16 %v2374
      %v2385 = vunpack.c.h.b16 %v2374
      %v2386 = vunpack.c.l.b16 %v2375
      %v2387 = vunpack.c.h.b16 %v2375
      %v2388 = vpack.c.b16 %v2380, %v2380
      %v2389 = vpack.c.b16 %v2381, %v2381
      %v2390 = vpack.c.b16 %v2382, %v2382
      %v2391 = vpack.c.b16 %v2383, %v2383
      %v2392 = vpack.c.b16 %v2384, %v2384
      %v2393 = vpack.c.b16 %v2385, %v2385
      %v2394 = vpack.c.b16 %v2386, %v2386
      %v2395 = vpack.c.b16 %v2387, %v2387
      %2404 = vst [vmem:[%s170] sm:$0xf] %v2388
      %2405 = vst [vmem:[%s170 + $0x4] sm:$0xf] %v2389
      %2406 = vst [vmem:[%s170 + $0x8] sm:$0xf] %v2390
      %2407 = vst [vmem:[%s170 + $0xc] sm:$0xf] %v2391
      %2408 = vst [vmem:[%s170 + $0x10] sm:$0xf] %v2392
      %2409 = vst [vmem:[%s170 + $0x14] sm:$0xf] %v2393
      %2410 = vst [vmem:[%s170 + $0x18] sm:$0xf] %v2394
      %2411 = vst [vmem:[%s170 + $0x1c] sm:$0xf] %v2395
      %p2412 = scmp.lt.s32.totalorder %s14, 1
      %s2413 = scalar_select %p2412, %s14, 1
      %s2414 = smul.addr %s2413, 8
      %s2415 = smul.addr %s2414, 4
      %s2416 = scalar_lea.vmem %s3, %s2415
      // Predicated region
      $region33: #{encoder_cnn_forward.13} parent=31 // pred_check
        %p2417 = pneg %p100
      $region34: #{encoder_cnn_forward.13} parent=31 // pred_check_branch
        %2419 = sbr.rel (%p2417) target = $region36
      $region35: #{encoder_cnn_forward.13} parent=31 // pred_region
        _
      $region36: #{encoder_cnn_forward.13} parent=31 // pred_fallthru
        _
    $region32: #{encoder_cnn_forward.13} parent=5 // pred_fallthru
      _
    %p2420 = scmp.le.s32.totalorder 2, %s9
    // Predicated region
    $region37: #{encoder_cnn_forward.13} parent=5 // pred_check
      %p2421 = pneg %p2420
    $region38: #{encoder_cnn_forward.13} parent=5 // pred_check_branch
      %2423 = sbr.rel (%p2421) target = $region40
    $region39: #{encoder_cnn_forward.13} parent=5 // pred_region
      %s2424 = ssub.s32 %s9, 2
      // Predicated region
      $region41: #{encoder_cnn_forward.13} parent=39 // pred_check
        %p2425 = pneg %p106
      $region42: #{encoder_cnn_forward.13} parent=39 // pred_check_branch
        %2427 = sbr.rel (%p2425) target = $region44
      $region43: #{encoder_cnn_forward.13} parent=39 // pred_region
        %p2428 = scmp.lt.s32.totalorder %s15, 1
        %s2429 = scalar_select %p2428, %s15, 1
        %s2430 = smul.addr %s2429, 8
        %s2431 = smul.addr %s2430, 4
        %s2432 = scalar_lea.vmem %s3, %s2431
      $region44: #{encoder_cnn_forward.13} parent=39 // pred_fallthru
        _
    $region40: #{encoder_cnn_forward.13} parent=5 // pred_fallthru
      _
  $region6: #{encoder_cnn_forward.13} parent=0 // loop_footer
    %s13 = sadd.s32 1, %s9
  $region7: #{encoder_cnn_forward.13} parent=0 // loop_footer_branch
    %8 = sbr.rel target = $region3
  $region8: #{encoder_cnn_forward.13} parent=0 // loop_exit
    _

</llo_original>
